<compile_context>
chip_gen: v5e
topology: v5e:2x2
jax: 0.10.0
libtpu: 0.0.40
codegen_flags: <defaults>
</compile_context>

<pallas_src>
import functools

import jax
import jax.numpy as jnp
from jax.experimental import pallas as pl
from jax.experimental.pallas import tpu as pltpu

LANE = 128            # lane width / output-channel padding unit
TK_FALLBACK = 512     # K tile for the (rarely used) K-tiled fallback


def _round_up(v, m):
    return (v + m - 1) // m * m


def _cdiv(a, b):
    return -(-a // b)


def _vmem_capacity_bytes():
    try:
        info = pltpu.get_tpu_info()
        cap = int(getattr(info, "vmem_capacity_bytes", 0) or 0)
        if cap > 0:
            return cap
    except Exception:
        pass
    return 64 << 20   # conservative default (v7x-sized)


_VMEM_CAP = _vmem_capacity_bytes()
if _VMEM_CAP >= (96 << 20):            # v5e / v6e: 128 MiB VMEM
    TM_MAX = 1024
    RESIDENT_VMEM_BUDGET = 88 << 20
    VMEM_LIMIT_CAP = 100 << 20
else:                                  # v7x: 64 MiB per TensorCore
    TM_MAX = 512
    RESIDENT_VMEM_BUDGET = 26 << 20
    VMEM_LIMIT_CAP = 56 << 20


# ---------------------------------------------------------------------------
# Pallas kernels
# ---------------------------------------------------------------------------
def _gemm_resident_kernel(*refs, prologue_affine, prologue_act, emit_stats,
                          m_valid, tm):
    """One M tile; weight fully VMEM-resident.

    Prologue (optional): per-K-column affine (previous layer's BN) + LeakyReLU
    applied to the raw patch tile before the matmul.
    Epilogue: store the raw f32 accumulator (cast to the output dtype) and,
    optionally, per-channel sum / sum-of-squares with ragged rows masked.
    """
    it = iter(refs)
    x_ref = next(it)
    w_ref = next(it)
    ps_ref = pb_ref = None
    if prologue_affine:
        ps_ref = next(it)
        pb_ref = next(it)
    o_ref = next(it)
    sum_ref = ssq_ref = None
    if emit_stats:
        sum_ref = next(it)
        ssq_ref = next(it)

    x = x_ref[...]
    if prologue_affine or prologue_act:
        xf = x.astype(jnp.float32)
        if prologue_affine:
            xf = xf * ps_ref[...] + pb_ref[...]
        if prologue_act:
            xf = jnp.maximum(xf, 0.2 * xf)          # LeakyReLU(0.2)
        x = xf.astype(jnp.bfloat16)

    acc = jnp.dot(x, w_ref[...], preferred_element_type=jnp.float32)

    if emit_stats:
        row = (jax.lax.broadcasted_iota(jnp.int32, (tm, 1), 0)
               + pl.program_id(0) * tm)
        accm = jnp.where(row < m_valid, acc, 0.0)   # mask ragged last tile
        sum_ref[...] = jnp.sum(accm, axis=0, keepdims=True)[None]
        ssq_ref[...] = jnp.sum(accm * accm, axis=0, keepdims=True)[None]

    o_ref[...] = acc.astype(o_ref.dtype)


def _gemm_ktiled_kernel(*refs, prologue_affine, prologue_act, emit_stats,
                        m_valid, tm):
    """K-tiled fallback for weights too large for VMEM residency."""
    acc_ref = refs[-1]
    it = iter(refs[:-1])
    x_ref = next(it)
    w_ref = next(it)
    ps_ref = pb_ref = None
    if prologue_affine:
        ps_ref = next(it)
        pb_ref = next(it)
    o_ref = next(it)
    sum_ref = ssq_ref = None
    if emit_stats:
        sum_ref = next(it)
        ssq_ref = next(it)

    k = pl.program_id(1)

    @pl.when(k == 0)
    def _():
        acc_ref[...] = jnp.zeros_like(acc_ref)

    x = x_ref[...]
    if prologue_affine or prologue_act:
        xf = x.astype(jnp.float32)
        if prologue_affine:
            xf = xf * ps_ref[...] + pb_ref[...]
        if prologue_act:
            xf = jnp.maximum(xf, 0.2 * xf)          # LeakyReLU(0.2)
        x = xf.astype(jnp.bfloat16)

    acc_ref[...] += jnp.dot(x, w_ref[...], preferred_element_type=jnp.float32)

    @pl.when(k == pl.num_programs(1) - 1)
    def _():
        acc = acc_ref[...]
        if emit_stats:
            row = (jax.lax.broadcasted_iota(jnp.int32, (tm, 1), 0)
                   + pl.program_id(0) * tm)
            accm = jnp.where(row < m_valid, acc, 0.0)
            sum_ref[...] = jnp.sum(accm, axis=0, keepdims=True)[None]
            ssq_ref[...] = jnp.sum(accm * accm, axis=0, keepdims=True)[None]
        o_ref[...] = acc.astype(o_ref.dtype)


# ---------------------------------------------------------------------------
# GEMM driver
# ---------------------------------------------------------------------------
def _pick_tm(M):
    tm = min(TM_MAX, max(16, _round_up(M, 16)))
    if M > 16 and _cdiv(M, tm) < 2:
        # >= 2 M blocks so a 2-TensorCore chip (v7x) gets work on both cores.
        tm = max(16, _round_up(_cdiv(M, 2), 16))
    return tm


def gemm_fused(patches, wmat, pscale, pshift, *, prologue_affine, prologue_act,
               emit_stats, out_dtype):
    """out_raw = (prologue(patches)) @ wmat; optionally per-channel stats."""
    M, K = patches.shape
    _, NPp = wmat.shape
    out_bytes = jnp.dtype(out_dtype).itemsize

    tm = _pick_tm(M)
    nM = _cdiv(M, tm)

    # VMEM accounting: double-buffered bf16 x tiles + resident bf16 weight +
    # double-buffered output + f32 accumulator + f32 prologue temp + margin.
    resident_need = (2 * tm * K * 2 + K * NPp * 2 + 2 * tm * NPp * out_bytes
                     + tm * NPp * 4 + tm * K * 4 + (2 << 20))
    resident = resident_need <= RESIDENT_VMEM_BUDGET

    out_shapes = [jax.ShapeDtypeStruct((M, NPp), out_dtype)]
    if emit_stats:
        out_shapes += [jax.ShapeDtypeStruct((nM, 1, NPp), jnp.float32)] * 2

    if resident:
        grid = (nM,)
        in_specs = [pl.BlockSpec((tm, K), lambda i: (i, 0)),
                    pl.BlockSpec((K, NPp), lambda i: (0, 0))]
        args = [patches, wmat]
        if prologue_affine:
            in_specs += [pl.BlockSpec((1, K), lambda i: (0, 0))] * 2
            args += [pscale, pshift]
        out_specs = [pl.BlockSpec((tm, NPp), lambda i: (i, 0))]
        if emit_stats:
            out_specs += [pl.BlockSpec((1, 1, NPp), lambda i: (i, 0, 0))] * 2
        kernel = functools.partial(_gemm_resident_kernel,
                                   prologue_affine=prologue_affine,
                                   prologue_act=prologue_act,
                                   emit_stats=emit_stats, m_valid=M, tm=tm)
        scratch = ()
        dims = ("parallel",)
        need = resident_need
    else:
        tk = TK_FALLBACK
        Kp = _round_up(K, tk)
        patches = jnp.pad(patches, ((0, 0), (0, Kp - K)))
        wmat = jnp.pad(wmat, ((0, Kp - K), (0, 0)))
        if prologue_affine:
            pscale = jnp.pad(pscale, ((0, 0), (0, Kp - K)))
            pshift = jnp.pad(pshift, ((0, 0), (0, Kp - K)))
        nK = Kp // tk
        grid = (nM, nK)
        in_specs = [pl.BlockSpec((tm, tk), lambda i, k: (i, k)),
                    pl.BlockSpec((tk, NPp), lambda i, k: (k, 0),
                                 pipeline_mode=pl.Buffered(3))]
        args = [patches, wmat]
        if prologue_affine:
            in_specs += [pl.BlockSpec((1, tk), lambda i, k: (0, k))] * 2
            args += [pscale, pshift]
        out_specs = [pl.BlockSpec((tm, NPp), lambda i, k: (i, 0))]
        if emit_stats:
            out_specs += [pl.BlockSpec((1, 1, NPp), lambda i, k: (i, 0, 0))] * 2
        kernel = functools.partial(_gemm_ktiled_kernel,
                                   prologue_affine=prologue_affine,
                                   prologue_act=prologue_act,
                                   emit_stats=emit_stats, m_valid=M, tm=tm)
        scratch = (pltpu.VMEM((tm, NPp), jnp.float32),)
        dims = ("parallel", "arbitrary")
        need = (3 * tm * tk * 2 + 3 * tk * NPp * 2 + 2 * tm * NPp * out_bytes
                + tm * NPp * 4 + tm * tk * 4 + (2 << 20))

    vmem_limit = int(min(VMEM_LIMIT_CAP, max(need + (4 << 20), 32 << 20)))

    outs = pl.pallas_call(
        kernel,
        out_shape=tuple(out_shapes) if emit_stats else out_shapes[0],
        grid_spec=pltpu.PrefetchScalarGridSpec(
            num_scalar_prefetch=0,
            grid=grid,
            in_specs=in_specs,
            out_specs=tuple(out_specs) if emit_stats else out_specs[0],
            scratch_shapes=scratch),
        compiler_params=pltpu.CompilerParams(
            dimension_semantics=dims,
            vmem_limit_bytes=vmem_limit),
    )(*args)

    if emit_stats:
        return outs
    return outs, None, None


# ---------------------------------------------------------------------------
# Conv layers via NHWC bf16 im2col + Pallas GEMM
# ---------------------------------------------------------------------------
def _im2col(x, kh, kw, stride, pad, pad_value_c=None):
    """x: (N, H, W, C) bf16 raw image -> (N*Ho*Wo, kh*kw*C) bf16 patches.

    pad_value_c: optional per-channel padding value (the raw value the next
    GEMM's prologue maps to 0, so conv zero-padding survives the deferral of
    the previous layer's BN affine + LeakyReLU).
    """
    N, H, W, C = x.shape
    if pad > 0:
        Hp, Wp = H + 2 * pad, W + 2 * pad
        if pad_value_c is None:
            xp = jnp.pad(x, ((0, 0), (pad, pad), (pad, pad), (0, 0)))
        else:
            pv = pad_value_c.astype(x.dtype)
            xp = jnp.broadcast_to(pv, (N, Hp, Wp, C))
            xp = xp.at[:, pad:pad + H, pad:pad + W, :].set(x)
    else:
        xp = x
    Hout = (H + 2 * pad - kh) // stride + 1
    Wout = (W + 2 * pad - kw) // stride + 1
    taps = []
    for i in range(kh):
        for j in range(kw):
            taps.append(xp[:, i:i + stride * (Hout - 1) + 1:stride,
                           j:j + stride * (Wout - 1) + 1:stride, :])
    p = jnp.stack(taps, axis=3)                     # (N, Ho, Wo, kh*kw, C)
    return p.reshape(N * Hout * Wout, kh * kw * C), Hout, Wout


def conv_layer(x_raw, w, stride, pad, *, prologue_scale=None,
               prologue_shift=None, prologue_act=False, emit_stats=False,
               out_dtype=jnp.bfloat16):
    """One conv layer.

    x_raw holds the *raw* (pre-BN / pre-activation) bf16 output of the
    previous layer (or the network input); the previous layer's BN affine
    (prologue_scale/shift) and LeakyReLU (prologue_act) are applied inside
    this layer's Pallas GEMM prologue.  Returns (raw_image_bf16, stats) where
    stats = (per-channel sum, per-channel sum-of-squares, row count) or None.
    """
    N = x_raw.shape[0]
    Cout, Cin, kh, kw = w.shape
    prologue_affine = prologue_scale is not None

    pad_val = None
    if pad > 0 and prologue_affine:
        safe_scale = jnp.where(prologue_scale != 0, prologue_scale, 1.0)
        pad_val = jnp.where(prologue_scale != 0,
                            -prologue_shift / safe_scale, 0.0)
    patches, Hout, Wout = _im2col(x_raw, kh, kw, stride, pad, pad_val)

    NPp = _round_up(Cout, LANE)
    wmat = jnp.transpose(w, (0, 2, 3, 1)).reshape(Cout, kh * kw * Cin).T
    wmat = jnp.pad(wmat.astype(jnp.bfloat16), ((0, 0), (0, NPp - Cout)))

    pscale = pshift = None
    if prologue_affine:
        K = kh * kw * Cin
        pscale = jnp.tile(prologue_scale.astype(jnp.float32),
                          kh * kw).reshape(1, K)
        pshift = jnp.tile(prologue_shift.astype(jnp.float32),
                          kh * kw).reshape(1, K)

    raw, s, ss = gemm_fused(patches, wmat, pscale, pshift,
                            prologue_affine=prologue_affine,
                            prologue_act=prologue_act,
                            emit_stats=emit_stats, out_dtype=out_dtype)

    M = N * Hout * Wout
    # Channel slice + reshape feed the next layer's patch gather lazily (no
    # forced materialisation of an unpadded copy).
    img = raw[:, :Cout].reshape(N, Hout, Wout, Cout)

    if emit_stats:
        sum_c = s.sum(axis=0)[0, :Cout]
        ssq_c = ss.sum(axis=0)[0, :Cout]
        return img, (sum_c, ssq_c, M)
    return img, None


def bn_affine_from_stats(stats, gamma, beta, eps=1e-5):
    """BatchNorm2d training mode: batch statistics over N*H*W, biased var."""
    s, ss, count = stats
    mean = s / count
    var = jnp.maximum(ss / count - mean * mean, 0.0)
    a = gamma / jnp.sqrt(var + eps)
    b = beta - mean * a
    return a, b


# ---------------------------------------------------------------------------
# Discriminator: params + forward
# ---------------------------------------------------------------------------
def init_params(key, num_channels, ndf):
    ks = jax.random.split(key, 8)

    def conv_w(k, cout, cin, kh, kw):
        return 0.02 * jax.random.normal(k, (cout, cin, kh, kw), jnp.float32)

    return {
        "w1": conv_w(ks[0], ndf, num_channels, 4, 4),
        "w2": conv_w(ks[1], ndf * 2, ndf, 4, 4),
        "g2": 1.0 + 0.02 * jax.random.normal(ks[2], (ndf * 2,), jnp.float32),
        "b2": jnp.zeros((ndf * 2,), jnp.float32),
        "w3": conv_w(ks[3], ndf * 4, ndf * 2, 4, 4),
        "g3": 1.0 + 0.02 * jax.random.normal(ks[4], (ndf * 4,), jnp.float32),
        "b3": jnp.zeros((ndf * 4,), jnp.float32),
        "w4": conv_w(ks[5], ndf * 8, ndf * 4, 4, 4),
        "g4": 1.0 + 0.02 * jax.random.normal(ks[6], (ndf * 8,), jnp.float32),
        "b4": jnp.zeros((ndf * 8,), jnp.float32),
        "w5": conv_w(ks[7], 1, ndf * 8, 7, 7),
    }


def discriminator_forward(params, x_nchw):
    # Single NCHW -> NHWC transpose and f32 -> bf16 cast at the model boundary.
    x = jnp.transpose(x_nchw, (0, 2, 3, 1)).astype(jnp.bfloat16)

    # Layer 1: conv (its LeakyReLU is deferred to layer 2's GEMM prologue).
    h1, _ = conv_layer(x, params["w1"], 2, 1)
    # Layer 2: LReLU(h1) -> conv -> (BN stats emitted by the GEMM epilogue).
    h2, st2 = conv_layer(h1, params["w2"], 2, 1,
                         prologue_act=True, emit_stats=True)
    a2, b2 = bn_affine_from_stats(st2, params["g2"], params["b2"])
    # Layer 3: BN2-affine + LReLU applied in-prologue -> conv -> stats.
    h3, st3 = conv_layer(h2, params["w3"], 2, 1, prologue_scale=a2,
                         prologue_shift=b2, prologue_act=True, emit_stats=True)
    a3, b3 = bn_affine_from_stats(st3, params["g3"], params["b3"])
    h4, st4 = conv_layer(h3, params["w4"], 2, 1, prologue_scale=a3,
                         prologue_shift=b3, prologue_act=True, emit_stats=True)
    a4, b4 = bn_affine_from_stats(st4, params["g4"], params["b4"])
    # Layer 5: BN4-affine + LReLU in-prologue -> 7x7 valid conv (f32 out).
    out, _ = conv_layer(h4, params["w5"], 1, 0, prologue_scale=a4,
                        prologue_shift=b4, prologue_act=True,
                        emit_stats=False, out_dtype=jnp.float32)

    # PyTorch: out.mean([2, 3]).view(-1)  (out is (N, 1, Hf, Wf)).
    N = out.shape[0]
    return out.reshape(N, -1).mean(axis=1)


if __name__ == "__main__":
    key = jax.random.PRNGKey(0)
    kx, kp = jax.random.split(key)
    N, num_channels, ndf = 2, 3, 8
    H = W = 112  # smallest spatial size the final 7x7 valid conv admits
    x = jax.random.normal(kx, (N, num_channels, H, W), jnp.float32)
    params = init_params(kp, num_channels, ndf)

    fwd = jax.jit(discriminator_forward)
    out = jax.block_until_ready(fwd(params, x))

    assert out.shape == (N,), out.shape
    assert bool(jnp.all(jnp.isfinite(out)))
    print("KERNEL_OK")
</pallas_src>

<mosaic_0001>
module attributes {stable_mosaic.version = 11 : i64} {
  func.func @_gemm_resident_kernel(%arg0: i32, %arg1: memref<512x48xbf16, #tpu.memory_space<vmem>>, %arg2: memref<48x128xbf16, #tpu.memory_space<vmem>>, %arg3: memref<512x128xbf16, #tpu.memory_space<vmem>>) attributes {dimension_semantics = [#tpu.dimension_semantics<parallel>], iteration_bounds = array<i64: 13>, scalar_prefetch = 0 : i64, scratch_operands = 0 : i64, tpu.core_type = #tpu.core_type<tc>, window_params = [{transform_indices = @transform_0, window_bounds = array<i64: 512, 48>}, {pipeline_mode = #tpu.pipeline_mode<synchronous>, transform_indices = @transform_1, window_bounds = array<i64: 48, 128>}, {transform_indices = @transform_2, window_bounds = array<i64: 512, 128>}]} {
    %c0 = arith.constant 0 : index
    %c0_0 = arith.constant 0 : index
    %0 = vector.load %arg1[%c0, %c0_0] : memref<512x48xbf16, #tpu.memory_space<vmem>>, vector<512x48xbf16>
    %c0_1 = arith.constant 0 : index
    %c0_2 = arith.constant 0 : index
    %1 = vector.load %arg2[%c0_1, %c0_2] : memref<48x128xbf16, #tpu.memory_space<vmem>>, vector<48x128xbf16>
    %cst = arith.constant dense<0.000000e+00> : vector<512x128xf32>
    %2 = tpu.matmul %0, %1, %cst {dimension_numbers = #tpu.dot_dimension_numbers<[1], [0], [0], [1], [0, 0, 1, 1], [], []>} : vector<512x48xbf16>, vector<48x128xbf16>, vector<512x128xf32> -> vector<512x128xf32>
    %3 = arith.truncf %2 : vector<512x128xf32> to vector<512x128xbf16>
    %c0_3 = arith.constant 0 : index
    %c0_4 = arith.constant 0 : index
    %4 = vector.load %arg3[%c0_3, %c0_4] : memref<512x128xbf16, #tpu.memory_space<vmem>>, vector<512x128xbf16>
    tpu.vector_store %arg3[%c0_3, %c0_4], %3 {strides = array<i32>} : memref<512x128xbf16, #tpu.memory_space<vmem>>, vector<512x128xbf16>,
    return
  }
  func.func @transform_0(%arg0: i32) -> (i32, i32) {
    %c0_i32 = arith.constant 0 : i32
    %c0_i32_0 = arith.constant 0 : i32
    return %arg0, %c0_i32 : i32, i32
  }
  func.func @transform_1(%arg0: i32) -> (i32, i32) {
    %c0_i32 = arith.constant 0 : i32
    %c0_i32_0 = arith.constant 0 : i32
    %c0_i32_1 = arith.constant 0 : i32
    return %c0_i32, %c0_i32_0 : i32, i32
  }
  func.func @transform_2(%arg0: i32) -> (i32, i32) {
    %c0_i32 = arith.constant 0 : i32
    %c0_i32_0 = arith.constant 0 : i32
    return %arg0, %c0_i32 : i32, i32
  }
}

module attributes {stable_mosaic.version = 11 : i64} {
  func.func @_gemm_resident_kernel(%arg0: i32, %arg1: memref<512x128xbf16, #tpu.memory_space<vmem>>, %arg2: memref<128x128xbf16, #tpu.memory_space<vmem>>, %arg3: memref<512x128xbf16, #tpu.memory_space<vmem>>, %arg4: memref<1x1x128xf32, #tpu.memory_space<vmem>>, %arg5: memref<1x1x128xf32, #tpu.memory_space<vmem>>) attributes {dimension_semantics = [#tpu.dimension_semantics<parallel>], iteration_bounds = array<i64: 4>, scalar_prefetch = 0 : i64, scratch_operands = 0 : i64, tpu.core_type = #tpu.core_type<tc>, window_params = [{transform_indices = @transform_0, window_bounds = array<i64: 512, 128>}, {pipeline_mode = #tpu.pipeline_mode<synchronous>, transform_indices = @transform_1, window_bounds = array<i64: 128, 128>}, {transform_indices = @transform_2, window_bounds = array<i64: 512, 128>}, {transform_indices = @transform_3, window_bounds = array<i64: 1, 1, 128>}, {transform_indices = @transform_4, window_bounds = array<i64: 1, 1, 128>}]} {
    %c0 = arith.constant 0 : index
    %c0_0 = arith.constant 0 : index
    %0 = vector.load %arg1[%c0, %c0_0] : memref<512x128xbf16, #tpu.memory_space<vmem>>, vector<512x128xbf16>
    %1 = arith.extf %0 : vector<512x128xbf16> to vector<512x128xf32>
    %cst = arith.constant 2.000000e-01 : f32
    %2 = vector.broadcast %cst : f32 to vector<512x128xf32>
    %3 = arith.mulf %2, %1 : vector<512x128xf32>
    %4 = arith.maximumf %1, %3 : vector<512x128xf32>
    %5 = arith.truncf %4 : vector<512x128xf32> to vector<512x128xbf16>
    %c0_1 = arith.constant 0 : index
    %c0_2 = arith.constant 0 : index
    %6 = vector.load %arg2[%c0_1, %c0_2] : memref<128x128xbf16, #tpu.memory_space<vmem>>, vector<128x128xbf16>
    %cst_3 = arith.constant dense<0.000000e+00> : vector<512x128xf32>
    %7 = tpu.matmul %5, %6, %cst_3 {dimension_numbers = #tpu.dot_dimension_numbers<[1], [0], [0], [1], [0, 0, 1, 1], [], []>} : vector<512x128xbf16>, vector<128x128xbf16>, vector<512x128xf32> -> vector<512x128xf32>
    %8 = tpu.iota {dimensions = array<i32: 0>} : vector<512x1xi32>
    %c512_i32 = arith.constant 512 : i32
    %9 = arith.muli %arg0, %c512_i32 : i32
    %10 = vector.broadcast %9 : i32 to vector<512x1xi32>
    %11 = arith.addi %8, %10 : vector<512x1xi32>
    %c1568_i32 = arith.constant 1568 : i32
    %12 = vector.broadcast %c1568_i32 : i32 to vector<512x1xi32>
    %13 = arith.cmpi slt, %11, %12 : vector<512x1xi32>
    %cst_4 = arith.constant 0.000000e+00 : f32
    %14 = vector.shape_cast %13 : vector<512x1xi1> to vector<512x1xi1>
    %15 = vector.broadcast %14 : vector<512x1xi1> to vector<512x128xi1>
    %16 = vector.broadcast %cst_4 : f32 to vector<512x128xf32>
    %17 = arith.select %15, %7, %16 : vector<512x128xi1>, vector<512x128xf32>
    %cst_5 = arith.constant dense<0.000000e+00> : vector<128xf32>
    %18 = vector.multi_reduction <add>, %17, %cst_5 [0] : vector<512x128xf32> to vector<128xf32>
    %19 = vector.shape_cast %18 : vector<128xf32> to vector<1x128xf32>
    %20 = vector.shape_cast %19 : vector<1x128xf32> to vector<1x1x128xf32>
    %c0_6 = arith.constant 0 : index
    %c0_7 = arith.constant 0 : index
    %c0_8 = arith.constant 0 : index
    %21 = vector.load %arg4[%c0_6, %c0_7, %c0_8] : memref<1x1x128xf32, #tpu.memory_space<vmem>>, vector<1x1x128xf32>
    tpu.vector_store %arg4[%c0_6, %c0_7, %c0_8], %20 {strides = array<i32>} : memref<1x1x128xf32, #tpu.memory_space<vmem>>, vector<1x1x128xf32>,
    %22 = arith.mulf %17, %17 : vector<512x128xf32>
    %cst_9 = arith.constant dense<0.000000e+00> : vector<128xf32>
    %23 = vector.multi_reduction <add>, %22, %cst_9 [0] : vector<512x128xf32> to vector<128xf32>
    %24 = vector.shape_cast %23 : vector<128xf32> to vector<1x128xf32>
    %25 = vector.shape_cast %24 : vector<1x128xf32> to vector<1x1x128xf32>
    %c0_10 = arith.constant 0 : index
    %c0_11 = arith.constant 0 : index
    %c0_12 = arith.constant 0 : index
    %26 = vector.load %arg5[%c0_10, %c0_11, %c0_12] : memref<1x1x128xf32, #tpu.memory_space<vmem>>, vector<1x1x128xf32>
    tpu.vector_store %arg5[%c0_10, %c0_11, %c0_12], %25 {strides = array<i32>} : memref<1x1x128xf32, #tpu.memory_space<vmem>>, vector<1x1x128xf32>,
    %27 = arith.truncf %7 : vector<512x128xf32> to vector<512x128xbf16>
    %c0_13 = arith.constant 0 : index
    %c0_14 = arith.constant 0 : index
    %28 = vector.load %arg3[%c0_13, %c0_14] : memref<512x128xbf16, #tpu.memory_space<vmem>>, vector<512x128xbf16>
    tpu.vector_store %arg3[%c0_13, %c0_14], %27 {strides = array<i32>} : memref<512x128xbf16, #tpu.memory_space<vmem>>, vector<512x128xbf16>,
    return
  }
  func.func @transform_0(%arg0: i32) -> (i32, i32) {
    %c0_i32 = arith.constant 0 : i32
    %c0_i32_0 = arith.constant 0 : i32
    return %arg0, %c0_i32 : i32, i32
  }
  func.func @transform_1(%arg0: i32) -> (i32, i32) {
    %c0_i32 = arith.constant 0 : i32
    %c0_i32_0 = arith.constant 0 : i32
    %c0_i32_1 = arith.constant 0 : i32
    return %c0_i32, %c0_i32_0 : i32, i32
  }
  func.func @transform_2(%arg0: i32) -> (i32, i32) {
    %c0_i32 = arith.constant 0 : i32
    %c0_i32_0 = arith.constant 0 : i32
    return %arg0, %c0_i32 : i32, i32
  }
  func.func @transform_3(%arg0: i32) -> (i32, i32, i32) {
    %c0_i32 = arith.constant 0 : i32
    %c0_i32_0 = arith.constant 0 : i32
    %c0_i32_1 = arith.constant 0 : i32
    return %arg0, %c0_i32, %c0_i32_0 : i32, i32, i32
  }
  func.func @transform_4(%arg0: i32) -> (i32, i32, i32) {
    %c0_i32 = arith.constant 0 : i32
    %c0_i32_0 = arith.constant 0 : i32
    %c0_i32_1 = arith.constant 0 : i32
    return %arg0, %c0_i32, %c0_i32_0 : i32, i32, i32
  }
}

module attributes {stable_mosaic.version = 11 : i64} {
  func.func @_gemm_resident_kernel(%arg0: i32, %arg1: memref<208x256xbf16, #tpu.memory_space<vmem>>, %arg2: memref<256x128xbf16, #tpu.memory_space<vmem>>, %arg3: memref<1x256xf32, #tpu.memory_space<vmem>>, %arg4: memref<1x256xf32, #tpu.memory_space<vmem>>, %arg5: memref<208x128xbf16, #tpu.memory_space<vmem>>, %arg6: memref<1x1x128xf32, #tpu.memory_space<vmem>>, %arg7: memref<1x1x128xf32, #tpu.memory_space<vmem>>) attributes {dimension_semantics = [#tpu.dimension_semantics<parallel>], iteration_bounds = array<i64: 2>, scalar_prefetch = 0 : i64, scratch_operands = 0 : i64, tpu.core_type = #tpu.core_type<tc>, window_params = [{transform_indices = @transform_0, window_bounds = array<i64: 208, 256>}, {pipeline_mode = #tpu.pipeline_mode<synchronous>, transform_indices = @transform_1, window_bounds = array<i64: 256, 128>}, {pipeline_mode = #tpu.pipeline_mode<synchronous>, transform_indices = @transform_2, window_bounds = array<i64: 1, 256>}, {pipeline_mode = #tpu.pipeline_mode<synchronous>, transform_indices = @transform_3, window_bounds = array<i64: 1, 256>}, {transform_indices = @transform_4, window_bounds = array<i64: 208, 128>}, {transform_indices = @transform_5, window_bounds = array<i64: 1, 1, 128>}, {transform_indices = @transform_6, window_bounds = array<i64: 1, 1, 128>}]} {
    %c0 = arith.constant 0 : index
    %c0_0 = arith.constant 0 : index
    %0 = vector.load %arg1[%c0, %c0_0] : memref<208x256xbf16, #tpu.memory_space<vmem>>, vector<208x256xbf16>
    %1 = arith.extf %0 : vector<208x256xbf16> to vector<208x256xf32>
    %c0_1 = arith.constant 0 : index
    %c0_2 = arith.constant 0 : index
    %2 = vector.load %arg3[%c0_1, %c0_2] : memref<1x256xf32, #tpu.memory_space<vmem>>, vector<1x256xf32>
    %3 = vector.broadcast %2 : vector<1x256xf32> to vector<208x256xf32>
    %4 = arith.mulf %1, %3 : vector<208x256xf32>
    %c0_3 = arith.constant 0 : index
    %c0_4 = arith.constant 0 : index
    %5 = vector.load %arg4[%c0_3, %c0_4] : memref<1x256xf32, #tpu.memory_space<vmem>>, vector<1x256xf32>
    %6 = vector.broadcast %5 : vector<1x256xf32> to vector<208x256xf32>
    %7 = arith.addf %4, %6 : vector<208x256xf32>
    %cst = arith.constant 2.000000e-01 : f32
    %8 = vector.broadcast %cst : f32 to vector<208x256xf32>
    %9 = arith.mulf %8, %7 : vector<208x256xf32>
    %10 = arith.maximumf %7, %9 : vector<208x256xf32>
    %11 = arith.truncf %10 : vector<208x256xf32> to vector<208x256xbf16>
    %c0_5 = arith.constant 0 : index
    %c0_6 = arith.constant 0 : index
    %12 = vector.load %arg2[%c0_5, %c0_6] : memref<256x128xbf16, #tpu.memory_space<vmem>>, vector<256x128xbf16>
    %cst_7 = arith.constant dense<0.000000e+00> : vector<208x128xf32>
    %13 = tpu.matmul %11, %12, %cst_7 {dimension_numbers = #tpu.dot_dimension_numbers<[1], [0], [0], [1], [0, 0, 1, 1], [], []>} : vector<208x256xbf16>, vector<256x128xbf16>, vector<208x128xf32> -> vector<208x128xf32>
    %14 = tpu.iota {dimensions = array<i32: 0>} : vector<208x1xi32>
    %c208_i32 = arith.constant 208 : i32
    %15 = arith.muli %arg0, %c208_i32 : i32
    %16 = vector.broadcast %15 : i32 to vector<208x1xi32>
    %17 = arith.addi %14, %16 : vector<208x1xi32>
    %c392_i32 = arith.constant 392 : i32
    %18 = vector.broadcast %c392_i32 : i32 to vector<208x1xi32>
    %19 = arith.cmpi slt, %17, %18 : vector<208x1xi32>
    %cst_8 = arith.constant 0.000000e+00 : f32
    %20 = vector.shape_cast %19 : vector<208x1xi1> to vector<208x1xi1>
    %21 = vector.broadcast %20 : vector<208x1xi1> to vector<208x128xi1>
    %22 = vector.broadcast %cst_8 : f32 to vector<208x128xf32>
    %23 = arith.select %21, %13, %22 : vector<208x128xi1>, vector<208x128xf32>
    %cst_9 = arith.constant dense<0.000000e+00> : vector<128xf32>
    %24 = vector.multi_reduction <add>, %23, %cst_9 [0] : vector<208x128xf32> to vector<128xf32>
    %25 = vector.shape_cast %24 : vector<128xf32> to vector<1x128xf32>
    %26 = vector.shape_cast %25 : vector<1x128xf32> to vector<1x1x128xf32>
    %c0_10 = arith.constant 0 : index
    %c0_11 = arith.constant 0 : index
    %c0_12 = arith.constant 0 : index
    %27 = vector.load %arg6[%c0_10, %c0_11, %c0_12] : memref<1x1x128xf32, #tpu.memory_space<vmem>>, vector<1x1x128xf32>
    tpu.vector_store %arg6[%c0_10, %c0_11, %c0_12], %26 {strides = array<i32>} : memref<1x1x128xf32, #tpu.memory_space<vmem>>, vector<1x1x128xf32>,
    %28 = arith.mulf %23, %23 : vector<208x128xf32>
    %cst_13 = arith.constant dense<0.000000e+00> : vector<128xf32>
    %29 = vector.multi_reduction <add>, %28, %cst_13 [0] : vector<208x128xf32> to vector<128xf32>
    %30 = vector.shape_cast %29 : vector<128xf32> to vector<1x128xf32>
    %31 = vector.shape_cast %30 : vector<1x128xf32> to vector<1x1x128xf32>
    %c0_14 = arith.constant 0 : index
    %c0_15 = arith.constant 0 : index
    %c0_16 = arith.constant 0 : index
    %32 = vector.load %arg7[%c0_14, %c0_15, %c0_16] : memref<1x1x128xf32, #tpu.memory_space<vmem>>, vector<1x1x128xf32>
    tpu.vector_store %arg7[%c0_14, %c0_15, %c0_16], %31 {strides = array<i32>} : memref<1x1x128xf32, #tpu.memory_space<vmem>>, vector<1x1x128xf32>,
    %33 = arith.truncf %13 : vector<208x128xf32> to vector<208x128xbf16>
    %c0_17 = arith.constant 0 : index
    %c0_18 = arith.constant 0 : index
    %34 = vector.load %arg5[%c0_17, %c0_18] : memref<208x128xbf16, #tpu.memory_space<vmem>>, vector<208x128xbf16>
    tpu.vector_store %arg5[%c0_17, %c0_18], %33 {strides = array<i32>} : memref<208x128xbf16, #tpu.memory_space<vmem>>, vector<208x128xbf16>,
    return
  }
  func.func @transform_0(%arg0: i32) -> (i32, i32) {
    %c0_i32 = arith.constant 0 : i32
    %c0_i32_0 = arith.constant 0 : i32
    return %arg0, %c0_i32 : i32, i32
  }
  func.func @transform_1(%arg0: i32) -> (i32, i32) {
    %c0_i32 = arith.constant 0 : i32
    %c0_i32_0 = arith.constant 0 : i32
    %c0_i32_1 = arith.constant 0 : i32
    return %c0_i32, %c0_i32_0 : i32, i32
  }
  func.func @transform_2(%arg0: i32) -> (i32, i32) {
    %c0_i32 = arith.constant 0 : i32
    %c0_i32_0 = arith.constant 0 : i32
    %c0_i32_1 = arith.constant 0 : i32
    return %c0_i32, %c0_i32_0 : i32, i32
  }
  func.func @transform_3(%arg0: i32) -> (i32, i32) {
    %c0_i32 = arith.constant 0 : i32
    %c0_i32_0 = arith.constant 0 : i32
    %c0_i32_1 = arith.constant 0 : i32
    return %c0_i32, %c0_i32_0 : i32, i32
  }
  func.func @transform_4(%arg0: i32) -> (i32, i32) {
    %c0_i32 = arith.constant 0 : i32
    %c0_i32_0 = arith.constant 0 : i32
    return %arg0, %c0_i32 : i32, i32
  }
  func.func @transform_5(%arg0: i32) -> (i32, i32, i32) {
    %c0_i32 = arith.constant 0 : i32
    %c0_i32_0 = arith.constant 0 : i32
    %c0_i32_1 = arith.constant 0 : i32
    return %arg0, %c0_i32, %c0_i32_0 : i32, i32, i32
  }
  func.func @transform_6(%arg0: i32) -> (i32, i32, i32) {
    %c0_i32 = arith.constant 0 : i32
    %c0_i32_0 = arith.constant 0 : i32
    %c0_i32_1 = arith.constant 0 : i32
    return %arg0, %c0_i32, %c0_i32_0 : i32, i32, i32
  }
}

module attributes {stable_mosaic.version = 11 : i64} {
  func.func @_gemm_resident_kernel(%arg0: i32, %arg1: memref<64x512xbf16, #tpu.memory_space<vmem>>, %arg2: memref<512x128xbf16, #tpu.memory_space<vmem>>, %arg3: memref<1x512xf32, #tpu.memory_space<vmem>>, %arg4: memref<1x512xf32, #tpu.memory_space<vmem>>, %arg5: memref<64x128xbf16, #tpu.memory_space<vmem>>, %arg6: memref<1x1x128xf32, #tpu.memory_space<vmem>>, %arg7: memref<1x1x128xf32, #tpu.memory_space<vmem>>) attributes {dimension_semantics = [#tpu.dimension_semantics<parallel>], iteration_bounds = array<i64: 2>, scalar_prefetch = 0 : i64, scratch_operands = 0 : i64, tpu.core_type = #tpu.core_type<tc>, window_params = [{transform_indices = @transform_0, window_bounds = array<i64: 64, 512>}, {pipeline_mode = #tpu.pipeline_mode<synchronous>, transform_indices = @transform_1, window_bounds = array<i64: 512, 128>}, {pipeline_mode = #tpu.pipeline_mode<synchronous>, transform_indices = @transform_2, window_bounds = array<i64: 1, 512>}, {pipeline_mode = #tpu.pipeline_mode<synchronous>, transform_indices = @transform_3, window_bounds = array<i64: 1, 512>}, {transform_indices = @transform_4, window_bounds = array<i64: 64, 128>}, {transform_indices = @transform_5, window_bounds = array<i64: 1, 1, 128>}, {transform_indices = @transform_6, window_bounds = array<i64: 1, 1, 128>}]} {
    %c0 = arith.constant 0 : index
    %c0_0 = arith.constant 0 : index
    %0 = vector.load %arg1[%c0, %c0_0] : memref<64x512xbf16, #tpu.memory_space<vmem>>, vector<64x512xbf16>
    %1 = arith.extf %0 : vector<64x512xbf16> to vector<64x512xf32>
    %c0_1 = arith.constant 0 : index
    %c0_2 = arith.constant 0 : index
    %2 = vector.load %arg3[%c0_1, %c0_2] : memref<1x512xf32, #tpu.memory_space<vmem>>, vector<1x512xf32>
    %3 = vector.broadcast %2 : vector<1x512xf32> to vector<64x512xf32>
    %4 = arith.mulf %1, %3 : vector<64x512xf32>
    %c0_3 = arith.constant 0 : index
    %c0_4 = arith.constant 0 : index
    %5 = vector.load %arg4[%c0_3, %c0_4] : memref<1x512xf32, #tpu.memory_space<vmem>>, vector<1x512xf32>
    %6 = vector.broadcast %5 : vector<1x512xf32> to vector<64x512xf32>
    %7 = arith.addf %4, %6 : vector<64x512xf32>
    %cst = arith.constant 2.000000e-01 : f32
    %8 = vector.broadcast %cst : f32 to vector<64x512xf32>
    %9 = arith.mulf %8, %7 : vector<64x512xf32>
    %10 = arith.maximumf %7, %9 : vector<64x512xf32>
    %11 = arith.truncf %10 : vector<64x512xf32> to vector<64x512xbf16>
    %c0_5 = arith.constant 0 : index
    %c0_6 = arith.constant 0 : index
    %12 = vector.load %arg2[%c0_5, %c0_6] : memref<512x128xbf16, #tpu.memory_space<vmem>>, vector<512x128xbf16>
    %cst_7 = arith.constant dense<0.000000e+00> : vector<64x128xf32>
    %13 = tpu.matmul %11, %12, %cst_7 {dimension_numbers = #tpu.dot_dimension_numbers<[1], [0], [0], [1], [0, 0, 1, 1], [], []>} : vector<64x512xbf16>, vector<512x128xbf16>, vector<64x128xf32> -> vector<64x128xf32>
    %14 = tpu.iota {dimensions = array<i32: 0>} : vector<64x1xi32>
    %c64_i32 = arith.constant 64 : i32
    %15 = arith.muli %arg0, %c64_i32 : i32
    %16 = vector.broadcast %15 : i32 to vector<64x1xi32>
    %17 = arith.addi %14, %16 : vector<64x1xi32>
    %c98_i32 = arith.constant 98 : i32
    %18 = vector.broadcast %c98_i32 : i32 to vector<64x1xi32>
    %19 = arith.cmpi slt, %17, %18 : vector<64x1xi32>
    %cst_8 = arith.constant 0.000000e+00 : f32
    %20 = vector.shape_cast %19 : vector<64x1xi1> to vector<64x1xi1>
    %21 = vector.broadcast %20 : vector<64x1xi1> to vector<64x128xi1>
    %22 = vector.broadcast %cst_8 : f32 to vector<64x128xf32>
    %23 = arith.select %21, %13, %22 : vector<64x128xi1>, vector<64x128xf32>
    %cst_9 = arith.constant dense<0.000000e+00> : vector<128xf32>
    %24 = vector.multi_reduction <add>, %23, %cst_9 [0] : vector<64x128xf32> to vector<128xf32>
    %25 = vector.shape_cast %24 : vector<128xf32> to vector<1x128xf32>
    %26 = vector.shape_cast %25 : vector<1x128xf32> to vector<1x1x128xf32>
    %c0_10 = arith.constant 0 : index
    %c0_11 = arith.constant 0 : index
    %c0_12 = arith.constant 0 : index
    %27 = vector.load %arg6[%c0_10, %c0_11, %c0_12] : memref<1x1x128xf32, #tpu.memory_space<vmem>>, vector<1x1x128xf32>
    tpu.vector_store %arg6[%c0_10, %c0_11, %c0_12], %26 {strides = array<i32>} : memref<1x1x128xf32, #tpu.memory_space<vmem>>, vector<1x1x128xf32>,
    %28 = arith.mulf %23, %23 : vector<64x128xf32>
    %cst_13 = arith.constant dense<0.000000e+00> : vector<128xf32>
    %29 = vector.multi_reduction <add>, %28, %cst_13 [0] : vector<64x128xf32> to vector<128xf32>
    %30 = vector.shape_cast %29 : vector<128xf32> to vector<1x128xf32>
    %31 = vector.shape_cast %30 : vector<1x128xf32> to vector<1x1x128xf32>
    %c0_14 = arith.constant 0 : index
    %c0_15 = arith.constant 0 : index
    %c0_16 = arith.constant 0 : index
    %32 = vector.load %arg7[%c0_14, %c0_15, %c0_16] : memref<1x1x128xf32, #tpu.memory_space<vmem>>, vector<1x1x128xf32>
    tpu.vector_store %arg7[%c0_14, %c0_15, %c0_16], %31 {strides = array<i32>} : memref<1x1x128xf32, #tpu.memory_space<vmem>>, vector<1x1x128xf32>,
    %33 = arith.truncf %13 : vector<64x128xf32> to vector<64x128xbf16>
    %c0_17 = arith.constant 0 : index
    %c0_18 = arith.constant 0 : index
    %34 = vector.load %arg5[%c0_17, %c0_18] : memref<64x128xbf16, #tpu.memory_space<vmem>>, vector<64x128xbf16>
    tpu.vector_store %arg5[%c0_17, %c0_18], %33 {strides = array<i32>} : memref<64x128xbf16, #tpu.memory_space<vmem>>, vector<64x128xbf16>,
    return
  }
  func.func @transform_0(%arg0: i32) -> (i32, i32) {
    %c0_i32 = arith.constant 0 : i32
    %c0_i32_0 = arith.constant 0 : i32
    return %arg0, %c0_i32 : i32, i32
  }
  func.func @transform_1(%arg0: i32) -> (i32, i32) {
    %c0_i32 = arith.constant 0 : i32
    %c0_i32_0 = arith.constant 0 : i32
    %c0_i32_1 = arith.constant 0 : i32
    return %c0_i32, %c0_i32_0 : i32, i32
  }
  func.func @transform_2(%arg0: i32) -> (i32, i32) {
    %c0_i32 = arith.constant 0 : i32
    %c0_i32_0 = arith.constant 0 : i32
    %c0_i32_1 = arith.constant 0 : i32
    return %c0_i32, %c0_i32_0 : i32, i32
  }
  func.func @transform_3(%arg0: i32) -> (i32, i32) {
    %c0_i32 = arith.constant 0 : i32
    %c0_i32_0 = arith.constant 0 : i32
    %c0_i32_1 = arith.constant 0 : i32
    return %c0_i32, %c0_i32_0 : i32, i32
  }
  func.func @transform_4(%arg0: i32) -> (i32, i32) {
    %c0_i32 = arith.constant 0 : i32
    %c0_i32_0 = arith.constant 0 : i32
    return %arg0, %c0_i32 : i32, i32
  }
  func.func @transform_5(%arg0: i32) -> (i32, i32, i32) {
    %c0_i32 = arith.constant 0 : i32
    %c0_i32_0 = arith.constant 0 : i32
    %c0_i32_1 = arith.constant 0 : i32
    return %arg0, %c0_i32, %c0_i32_0 : i32, i32, i32
  }
  func.func @transform_6(%arg0: i32) -> (i32, i32, i32) {
    %c0_i32 = arith.constant 0 : i32
    %c0_i32_0 = arith.constant 0 : i32
    %c0_i32_1 = arith.constant 0 : i32
    return %arg0, %c0_i32, %c0_i32_0 : i32, i32, i32
  }
}

module attributes {stable_mosaic.version = 11 : i64} {
  func.func @_gemm_resident_kernel(%arg0: i32, %arg1: memref<16x3136xbf16, #tpu.memory_space<vmem>>, %arg2: memref<3136x128xbf16, #tpu.memory_space<vmem>>, %arg3: memref<1x3136xf32, #tpu.memory_space<vmem>>, %arg4: memref<1x3136xf32, #tpu.memory_space<vmem>>, %arg5: memref<16x128xf32, #tpu.memory_space<vmem>>) attributes {dimension_semantics = [#tpu.dimension_semantics<parallel>], iteration_bounds = array<i64: 1>, scalar_prefetch = 0 : i64, scratch_operands = 0 : i64, tpu.core_type = #tpu.core_type<tc>, window_params = [{transform_indices = @transform_0, window_bounds = array<i64: 16, 3136>}, {pipeline_mode = #tpu.pipeline_mode<synchronous>, transform_indices = @transform_1, window_bounds = array<i64: 3136, 128>}, {pipeline_mode = #tpu.pipeline_mode<synchronous>, transform_indices = @transform_2, window_bounds = array<i64: 1, 3136>}, {pipeline_mode = #tpu.pipeline_mode<synchronous>, transform_indices = @transform_3, window_bounds = array<i64: 1, 3136>}, {transform_indices = @transform_4, window_bounds = array<i64: 16, 128>}]} {
    %c0 = arith.constant 0 : index
    %c0_0 = arith.constant 0 : index
    %0 = vector.load %arg1[%c0, %c0_0] : memref<16x3136xbf16, #tpu.memory_space<vmem>>, vector<16x3136xbf16>
    %1 = arith.extf %0 : vector<16x3136xbf16> to vector<16x3136xf32>
    %c0_1 = arith.constant 0 : index
    %c0_2 = arith.constant 0 : index
    %2 = vector.load %arg3[%c0_1, %c0_2] : memref<1x3136xf32, #tpu.memory_space<vmem>>, vector<1x3136xf32>
    %3 = vector.broadcast %2 : vector<1x3136xf32> to vector<16x3136xf32>
    %4 = arith.mulf %1, %3 : vector<16x3136xf32>
    %c0_3 = arith.constant 0 : index
    %c0_4 = arith.constant 0 : index
    %5 = vector.load %arg4[%c0_3, %c0_4] : memref<1x3136xf32, #tpu.memory_space<vmem>>, vector<1x3136xf32>
    %6 = vector.broadcast %5 : vector<1x3136xf32> to vector<16x3136xf32>
    %7 = arith.addf %4, %6 : vector<16x3136xf32>
    %cst = arith.constant 2.000000e-01 : f32
    %8 = vector.broadcast %cst : f32 to vector<16x3136xf32>
    %9 = arith.mulf %8, %7 : vector<16x3136xf32>
    %10 = arith.maximumf %7, %9 : vector<16x3136xf32>
    %11 = arith.truncf %10 : vector<16x3136xf32> to vector<16x3136xbf16>
    %c0_5 = arith.constant 0 : index
    %c0_6 = arith.constant 0 : index
    %12 = vector.load %arg2[%c0_5, %c0_6] : memref<3136x128xbf16, #tpu.memory_space<vmem>>, vector<3136x128xbf16>
    %cst_7 = arith.constant dense<0.000000e+00> : vector<16x128xf32>
    %13 = tpu.matmul %11, %12, %cst_7 {dimension_numbers = #tpu.dot_dimension_numbers<[1], [0], [0], [1], [0, 0, 1, 1], [], []>} : vector<16x3136xbf16>, vector<3136x128xbf16>, vector<16x128xf32> -> vector<16x128xf32>
    %c0_8 = arith.constant 0 : index
    %c0_9 = arith.constant 0 : index
    %14 = vector.load %arg5[%c0_8, %c0_9] : memref<16x128xf32, #tpu.memory_space<vmem>>, vector<16x128xf32>
    tpu.vector_store %arg5[%c0_8, %c0_9], %13 {strides = array<i32>} : memref<16x128xf32, #tpu.memory_space<vmem>>, vector<16x128xf32>,
    return
  }
  func.func @transform_0(%arg0: i32) -> (i32, i32) {
    %c0_i32 = arith.constant 0 : i32
    %c0_i32_0 = arith.constant 0 : i32
    return %arg0, %c0_i32 : i32, i32
  }
  func.func @transform_1(%arg0: i32) -> (i32, i32) {
    %c0_i32 = arith.constant 0 : i32
    %c0_i32_0 = arith.constant 0 : i32
    %c0_i32_1 = arith.constant 0 : i32
    return %c0_i32, %c0_i32_0 : i32, i32
  }
  func.func @transform_2(%arg0: i32) -> (i32, i32) {
    %c0_i32 = arith.constant 0 : i32
    %c0_i32_0 = arith.constant 0 : i32
    %c0_i32_1 = arith.constant 0 : i32
    return %c0_i32, %c0_i32_0 : i32, i32
  }
  func.func @transform_3(%arg0: i32) -> (i32, i32) {
    %c0_i32 = arith.constant 0 : i32
    %c0_i32_0 = arith.constant 0 : i32
    %c0_i32_1 = arith.constant 0 : i32
    return %c0_i32, %c0_i32_0 : i32, i32
  }
  func.func @transform_4(%arg0: i32) -> (i32, i32) {
    %c0_i32 = arith.constant 0 : i32
    %c0_i32_0 = arith.constant 0 : i32
    return %arg0, %c0_i32 : i32, i32
  }
}

</mosaic_0001>

<llo_original>
// kernel: discriminator_forward.5
$region0: #{discriminator_forward.5}
  #allocation0 [shape = 'u32[]', space=smem, size = 0x4, offset = 0x4, fixed_abs, tag = 'smem constant byte address 0x4 - core index']
  #allocation1 [shape = 'u32[72,128]{1,0:T(1,128)}', space=vmem, size = 0x9000, scoped, tag = 'internal scratch']
  %s0 = inlined_call_operand.vmem [shape: bf16[6272,48], index: 0, kind: input, shape index: {}]
  %s1 = inlined_call_operand.vmem [shape: bf16[48,128], index: 1, kind: input, shape index: {}]
  %s2 = inlined_call_operand.vmem [shape: bf16[6272,128], index: 2, kind: output, shape index: {}]
  %s3 = sld [smem:[#allocation0]]
  $region85: #{discriminator_forward.5} parent=0
    _
  %s5 = ssub.s32 1, %s3
  %s6 = scalar_select 0, %s5, %s3
  $region1: #{discriminator_forward.5} parent=0
    #allocation2 [shape = 'u8[262144]{0}', space=vmem, size = 0x40000, scoped, tag = 'output window, operand 0']
    loop: start=0, step=1, limit=15
    $region2: #{discriminator_forward.5} parent=1 // loop_pre_header
      _
    $region3: #{discriminator_forward.5} parent=1 // loop_header
      %s8 = sphi 0, %s12
      %p9 = scmp.ge.s32.totalorder %s8, 15
      %s18 = sphi 0, %s20
      %s21 = sphi 0, %s18
      %s22 = sphi 0, %s21
      %s38 = sphi 0, %s22
      %s42 = sphi 0, %s42
      %s44 = sphi 0, %s42
      %s45 = sphi 0, %s44
      %s59 = sphi 0, %s45
      %s65 = sphi 0, %s67
      %s68 = sphi 0, %s65
      %s69 = sphi 0, %s68
      %s85 = sphi 0, %s69
    $region4: #{discriminator_forward.5} parent=1 // loop_header_branch
      %11 = sbr.rel (%p9) target = $region8
    $region5: #{discriminator_forward.5} parent=1 // loop_body
      %s13 = ssub.s32 %s8, 1
      %s14 = ssub.s32 %s8, 2
      %s15 = sadd.s32 %s8, 1
      %s16 = ssub.s32 %s8, %s15
      %p17 = scmp.eq.s32.totalorder %s16, 0
      %s19 = sadd.s32 %s18, 1
      %s20 = scalar_select %p17, %s18, %s19
      %p23 = pneg %p17
      %p24 = scmp.eq.s32.totalorder %s8, 12
      %p25 = por %p23, %p24
      %p26 = scmp.ne.s32.totalorder %s18, %s21
      %p27 = scmp.eq.s32.totalorder %s8, 0
      %p28 = por %p26, %p27
      %p29 = scmp.ne.s32.totalorder %s18, %s21
      %p30 = scmp.eq.s32.totalorder %s13, 12
      %p31 = por %p29, %p30
      %p32 = scmp.ne.s32.totalorder %s21, %s22
      %p33 = scmp.eq.s32.totalorder %s13, 0
      %p34 = por %p32, %p33
      %p35 = scmp.ne.s32.totalorder %s21, %s22
      %p36 = scmp.eq.s32.totalorder %s14, 12
      %p37 = por %p35, %p36
      %p39 = scmp.ne.s32.totalorder %s22, %s38
      %p40 = scmp.eq.s32.totalorder %s14, 0
      %p41 = por %p39, %p40
      %s43 = sadd.s32 %s42, 1
      %p46 = scmp.eq.s32.totalorder %s8, 12
      %p47 = scmp.ne.s32.totalorder %s42, %s44
      %p48 = scmp.eq.s32.totalorder %s8, 0
      %p49 = por %p47, %p48
      %p50 = scmp.ne.s32.totalorder %s42, %s44
      %p51 = scmp.eq.s32.totalorder %s13, 12
      %p52 = por %p50, %p51
      %p53 = scmp.ne.s32.totalorder %s44, %s45
      %p54 = scmp.eq.s32.totalorder %s13, 0
      %p55 = por %p53, %p54
      %p56 = scmp.ne.s32.totalorder %s44, %s45
      %p57 = scmp.eq.s32.totalorder %s14, 12
      %p58 = por %p56, %p57
      %p60 = scmp.ne.s32.totalorder %s45, %s59
      %p61 = scmp.eq.s32.totalorder %s14, 0
      %p62 = por %p60, %p61
      %s63 = ssub.s32 %s8, %s15
      %p64 = scmp.eq.s32.totalorder %s63, 0
      %s66 = sadd.s32 %s65, 1
      %s67 = scalar_select %p64, %s65, %s66
      %p70 = pneg %p64
      %p71 = scmp.eq.s32.totalorder %s8, 12
      %p72 = por %p70, %p71
      %p73 = scmp.ne.s32.totalorder %s65, %s68
      %p74 = scmp.eq.s32.totalorder %s8, 0
      %p75 = por %p73, %p74
      %p76 = scmp.ne.s32.totalorder %s65, %s68
      %p77 = scmp.eq.s32.totalorder %s13, 12
      %p78 = por %p76, %p77
      %p79 = scmp.ne.s32.totalorder %s68, %s69
      %p80 = scmp.eq.s32.totalorder %s13, 0
      %p81 = por %p79, %p80
      %p82 = scmp.ne.s32.totalorder %s68, %s69
      %p83 = scmp.eq.s32.totalorder %s14, 12
      %p84 = por %p82, %p83
      %p86 = scmp.ne.s32.totalorder %s69, %s85
      %p87 = scmp.eq.s32.totalorder %s14, 0
      %p88 = por %p86, %p87
      %p89 = scmp.le.s32.totalorder 1, %s8
      %p90 = scmp.lt.s32.totalorder %s8, 14
      %p91 = pnand %p89, %p90
      %p92 = pneg %p91
      // Predicated region
      $region9: #{discriminator_forward.5} parent=5 // pred_check
        _
      $region10: #{discriminator_forward.5} parent=5 // pred_check_branch
        %94 = sbr.rel (%p91) target = $region12
      $region11: #{discriminator_forward.5} parent=5 // pred_region
        %s95 = ssub.s32 %s8, 1
        // Predicated region
        $region13: #{discriminator_forward.5} parent=11 // pred_check
          %p96 = pneg %p55
        $region14: #{discriminator_forward.5} parent=11 // pred_check_branch
          %98 = sbr.rel (%p96) target = $region16
        $region15: #{discriminator_forward.5} parent=11 // pred_region
          _
        $region16: #{discriminator_forward.5} parent=11 // pred_fallthru
          _
      $region12: #{discriminator_forward.5} parent=5 // pred_fallthru
        _
      %p99 = scmp.lt.s32.totalorder %s8, 13
      // Predicated region
      $region17: #{discriminator_forward.5} parent=5 // pred_check
        %p100 = pneg %p99
      $region18: #{discriminator_forward.5} parent=5 // pred_check_branch
        %102 = sbr.rel (%p100) target = $region20
      $region19: #{discriminator_forward.5} parent=5 // pred_region
        // Predicated region
        $region21: #{discriminator_forward.5} parent=19 // pred_check
          %p103 = pneg %p28
        $region22: #{discriminator_forward.5} parent=19 // pred_check_branch
          %105 = sbr.rel (%p103) target = $region24
        $region23: #{discriminator_forward.5} parent=19 // pred_region
          %s106 = smul.u32 64, %s8
          %s107 = ssub.s32 784, %s106
          %p108 = scmp.lt.s32.totalorder %s107, 64
          %s109 = scalar_select %p108, %s107, 64
          %s110 = smul.u32 4, %s109
          %p111 = scmp.lt.s32.totalorder %s106, 783
          %s112 = scalar_select %p111, %s106, 783
          %s113 = smul.addr %s112, 4
          %s114 = scalar_lea.vmem %s0, %s113
          %s115 = smul.u32 64, %s8
          %s116 = ssub.s32 784, %s115
          %p117 = scmp.lt.s32.totalorder %s116, 64
          %s118 = scalar_select %p117, %s116, 64
          %s119 = smul.u32 4, %s118
        $region24: #{discriminator_forward.5} parent=19 // pred_fallthru
          _
      $region20: #{discriminator_forward.5} parent=5 // pred_fallthru
        _
      %p120 = scmp.le.s32.totalorder 1, %s8
      %p121 = scmp.lt.s32.totalorder %s8, 14
      %p122 = pnand %p120, %p121
      %p123 = pneg %p122
      // Predicated region
      $region25: #{discriminator_forward.5} parent=5 // pred_check
        _
      $region26: #{discriminator_forward.5} parent=5 // pred_check_branch
        %125 = sbr.rel (%p122) target = $region28
      $region27: #{discriminator_forward.5} parent=5 // pred_region
        %s126 = ssub.s32 %s8, 1
        %s127 = smul.u32 64, %s13
        %s128 = ssub.s32 784, %s127
        %p129 = scmp.lt.s32.totalorder %s128, 64
        %s130 = scalar_select %p129, %s128, 64
        %s131 = smul.u32 4, %s130
        %p132 = scmp.lt.s32.totalorder %s127, 783
        %s133 = scalar_select %p132, %s127, 783
        %s134 = smul.addr %s133, 4
        %s135 = scalar_lea.vmem %s0, %s134
        %p136 = pneg %p34
        %p137 = pneg %p31
        %p138 = pneg %p55
        %p139 = pneg %p52
        %p140 = pneg %p81
        %p141 = pneg %p78
        %s142 = sand.u32 %s68, 1
        %s143 = sand.u32 %s68, 1
        %s144 = smul.addr %s143, 256
        %s145 = scalar_lea.vmem [#allocation2], %s144
        %s146 = smul.u32 64, %s13
        %s147 = ssub.s32 784, %s146
        %p148 = scmp.lt.s32.totalorder %s147, 64
        %s149 = scalar_select %p148, %s147, 64
        %s150 = smul.u32 4, %s149
        %p151 = scmp.lt.s32.totalorder %s146, 783
        %s152 = scalar_select %p151, %s146, 783
        %s153 = smul.addr %s152, 4
        %s154 = scalar_lea.vmem %s0, %s153
        %s155 = smul.u32 64, %s13
        %s156 = ssub.s32 784, %s155
        %p157 = scmp.lt.s32.totalorder %s156, 64
        %s158 = scalar_select %p157, %s156, 64
        %s159 = smul.u32 4, %s158
        %s160 = smul.u32 64, %s13
        %s161 = ssub.s32 784, %s160
        %p162 = scmp.lt.s32.totalorder %s161, 64
        %s163 = scalar_select %p162, %s161, 64
        %s164 = smul.u32 4, %s163
        %v166 = vld [vmem:[%s154] sm:$0xf]
        %v167 = vld [vmem:[%s154 + $0x4] sm:$0xf]
        %v168 = vld [vmem:[%s154 + $0x8] sm:$0xf]
        %v169 = vld [vmem:[%s154 + $0xc] sm:$0xf]
        %v170 = vld [vmem:[%s154 + $0x10] sm:$0xf]
        %v171 = vld [vmem:[%s154 + $0x14] sm:$0xf]
        %v172 = vld [vmem:[%s154 + $0x18] sm:$0xf]
        %v173 = vld [vmem:[%s154 + $0x1c] sm:$0xf]
        %v174 = vld [vmem:[%s154 + $0x20] sm:$0xf]
        %v175 = vld [vmem:[%s154 + $0x24] sm:$0xf]
        %v176 = vld [vmem:[%s154 + $0x28] sm:$0xf]
        %v177 = vld [vmem:[%s154 + $0x2c] sm:$0xf]
        %v178 = vld [vmem:[%s154 + $0x30] sm:$0xf]
        %v179 = vld [vmem:[%s154 + $0x34] sm:$0xf]
        %v180 = vld [vmem:[%s154 + $0x38] sm:$0xf]
        %v181 = vld [vmem:[%s154 + $0x3c] sm:$0xf]
        %v182 = vld [vmem:[%s154 + $0x40] sm:$0xf]
        %v183 = vld [vmem:[%s154 + $0x44] sm:$0xf]
        %v184 = vld [vmem:[%s154 + $0x48] sm:$0xf]
        %v185 = vld [vmem:[%s154 + $0x4c] sm:$0xf]
        %v186 = vld [vmem:[%s154 + $0x50] sm:$0xf]
        %v187 = vld [vmem:[%s154 + $0x54] sm:$0xf]
        %v188 = vld [vmem:[%s154 + $0x58] sm:$0xf]
        %v189 = vld [vmem:[%s154 + $0x5c] sm:$0xf]
        %v190 = vld [vmem:[%s154 + $0x60] sm:$0xf]
        %v191 = vld [vmem:[%s154 + $0x64] sm:$0xf]
        %v192 = vld [vmem:[%s154 + $0x68] sm:$0xf]
        %v193 = vld [vmem:[%s154 + $0x6c] sm:$0xf]
        %v194 = vld [vmem:[%s154 + $0x70] sm:$0xf]
        %v195 = vld [vmem:[%s154 + $0x74] sm:$0xf]
        %v196 = vld [vmem:[%s154 + $0x78] sm:$0xf]
        %v197 = vld [vmem:[%s154 + $0x7c] sm:$0xf]
        %v198 = vld [vmem:[%s154 + $0x80] sm:$0xf]
        %v199 = vld [vmem:[%s154 + $0x84] sm:$0xf]
        %v200 = vld [vmem:[%s154 + $0x88] sm:$0xf]
        %v201 = vld [vmem:[%s154 + $0x8c] sm:$0xf]
        %v202 = vld [vmem:[%s154 + $0x90] sm:$0xf]
        %v203 = vld [vmem:[%s154 + $0x94] sm:$0xf]
        %v204 = vld [vmem:[%s154 + $0x98] sm:$0xf]
        %v205 = vld [vmem:[%s154 + $0x9c] sm:$0xf]
        %v206 = vld [vmem:[%s154 + $0xa0] sm:$0xf]
        %v207 = vld [vmem:[%s154 + $0xa4] sm:$0xf]
        %v208 = vld [vmem:[%s154 + $0xa8] sm:$0xf]
        %v209 = vld [vmem:[%s154 + $0xac] sm:$0xf]
        %v210 = vld [vmem:[%s154 + $0xb0] sm:$0xf]
        %v211 = vld [vmem:[%s154 + $0xb4] sm:$0xf]
        %v212 = vld [vmem:[%s154 + $0xb8] sm:$0xf]
        %v213 = vld [vmem:[%s154 + $0xbc] sm:$0xf]
        %v214 = vld [vmem:[%s154 + $0xc0] sm:$0xf]
        %v215 = vld [vmem:[%s154 + $0xc4] sm:$0xf]
        %v216 = vld [vmem:[%s154 + $0xc8] sm:$0xf]
        %v217 = vld [vmem:[%s154 + $0xcc] sm:$0xf]
        %v218 = vld [vmem:[%s154 + $0xd0] sm:$0xf]
        %v219 = vld [vmem:[%s154 + $0xd4] sm:$0xf]
        %v220 = vld [vmem:[%s154 + $0xd8] sm:$0xf]
        %v221 = vld [vmem:[%s154 + $0xdc] sm:$0xf]
        %v222 = vld [vmem:[%s154 + $0xe0] sm:$0xf]
        %v223 = vld [vmem:[%s154 + $0xe4] sm:$0xf]
        %v224 = vld [vmem:[%s154 + $0xe8] sm:$0xf]
        %v225 = vld [vmem:[%s154 + $0xec] sm:$0xf]
        %v226 = vld [vmem:[%s154 + $0xf0] sm:$0xf]
        %v227 = vld [vmem:[%s154 + $0xf4] sm:$0xf]
        %v228 = vld [vmem:[%s154 + $0xf8] sm:$0xf]
        %v229 = vld [vmem:[%s154 + $0xfc] sm:$0xf]
        %v230 = vld [vmem:[%s1] sm:$0xf]
        %v231 = vld [vmem:[%s1 + $0x4] sm:$0xf]
        %v232 = vld [vmem:[%s1 + $0x8] sm:$0xf]
        %v233 = vld [vmem:[%s1 + $0xc] sm:$0xf]
        %v234 = vld [vmem:[%s1 + $0x10] sm:$0xf]
        %v235 = vld [vmem:[%s1 + $0x14] sm:$0xf]
        %v300 = vunpack.c.l.b16 %v166
        %v301 = vunpack.c.l.b16 %v167
        %v302 = vunpack.c.l.b16 %v168
        %v303 = vunpack.c.l.b16 %v169
        %v304 = vunpack.c.l.b16 %v170
        %v305 = vunpack.c.l.b16 %v171
        %v306 = vunpack.c.l.b16 %v172
        %v307 = vunpack.c.l.b16 %v173
        %v308 = vunpack.c.l.b16 %v174
        %v309 = vunpack.c.l.b16 %v175
        %v310 = vunpack.c.l.b16 %v176
        %v311 = vunpack.c.l.b16 %v177
        %v312 = vunpack.c.l.b16 %v178
        %v313 = vunpack.c.l.b16 %v179
        %v314 = vunpack.c.l.b16 %v180
        %v315 = vunpack.c.l.b16 %v181
        %v316 = vunpack.c.l.b16 %v182
        %v317 = vunpack.c.l.b16 %v183
        %v318 = vunpack.c.l.b16 %v184
        %v319 = vunpack.c.l.b16 %v185
        %v320 = vunpack.c.l.b16 %v186
        %v321 = vunpack.c.l.b16 %v187
        %v322 = vunpack.c.l.b16 %v188
        %v323 = vunpack.c.l.b16 %v189
        %v324 = vunpack.c.l.b16 %v190
        %v325 = vunpack.c.l.b16 %v191
        %v326 = vunpack.c.l.b16 %v192
        %v327 = vunpack.c.l.b16 %v193
        %v328 = vunpack.c.l.b16 %v194
        %v329 = vunpack.c.l.b16 %v195
        %v330 = vunpack.c.l.b16 %v196
        %v331 = vunpack.c.l.b16 %v197
        %v332 = vunpack.c.l.b16 %v198
        %v333 = vunpack.c.l.b16 %v199
        %v334 = vunpack.c.l.b16 %v200
        %v335 = vunpack.c.l.b16 %v201
        %v336 = vunpack.c.l.b16 %v202
        %v337 = vunpack.c.l.b16 %v203
        %v338 = vunpack.c.l.b16 %v204
        %v339 = vunpack.c.l.b16 %v205
        %v340 = vunpack.c.l.b16 %v206
        %v341 = vunpack.c.l.b16 %v207
        %v342 = vunpack.c.l.b16 %v208
        %v343 = vunpack.c.l.b16 %v209
        %v344 = vunpack.c.l.b16 %v210
        %v345 = vunpack.c.l.b16 %v211
        %v346 = vunpack.c.l.b16 %v212
        %v347 = vunpack.c.l.b16 %v213
        %v348 = vunpack.c.l.b16 %v214
        %v349 = vunpack.c.l.b16 %v215
        %v350 = vunpack.c.l.b16 %v216
        %v351 = vunpack.c.l.b16 %v217
        %v352 = vunpack.c.l.b16 %v218
        %v353 = vunpack.c.l.b16 %v219
        %v354 = vunpack.c.l.b16 %v220
        %v355 = vunpack.c.l.b16 %v221
        %v356 = vunpack.c.l.b16 %v222
        %v357 = vunpack.c.l.b16 %v223
        %v358 = vunpack.c.l.b16 %v224
        %v359 = vunpack.c.l.b16 %v225
        %v360 = vunpack.c.l.b16 %v226
        %v361 = vunpack.c.l.b16 %v227
        %v362 = vunpack.c.l.b16 %v228
        %v363 = vunpack.c.l.b16 %v229
        %v364 = vpack.c.b16 %v301, %v300
        %v365 = vpack.c.b16 %v303, %v302
        %v366 = vpack.c.b16 %v305, %v304
        %v367 = vpack.c.b16 %v307, %v306
        %v368 = vpack.c.b16 %v309, %v308
        %v369 = vpack.c.b16 %v311, %v310
        %v370 = vpack.c.b16 %v313, %v312
        %v371 = vpack.c.b16 %v315, %v314
        %v372 = vpack.c.b16 %v317, %v316
        %v373 = vpack.c.b16 %v319, %v318
        %v374 = vpack.c.b16 %v321, %v320
        %v375 = vpack.c.b16 %v323, %v322
        %v376 = vpack.c.b16 %v325, %v324
        %v377 = vpack.c.b16 %v327, %v326
        %v378 = vpack.c.b16 %v329, %v328
        %v379 = vpack.c.b16 %v331, %v330
        %v380 = vpack.c.b16 %v333, %v332
        %v381 = vpack.c.b16 %v335, %v334
        %v382 = vpack.c.b16 %v337, %v336
        %v383 = vpack.c.b16 %v339, %v338
        %v384 = vpack.c.b16 %v341, %v340
        %v385 = vpack.c.b16 %v343, %v342
        %v386 = vpack.c.b16 %v345, %v344
        %v387 = vpack.c.b16 %v347, %v346
        %v388 = vpack.c.b16 %v349, %v348
        %v389 = vpack.c.b16 %v351, %v350
        %v390 = vpack.c.b16 %v353, %v352
        %v391 = vpack.c.b16 %v355, %v354
        %v392 = vpack.c.b16 %v357, %v356
        %v393 = vpack.c.b16 %v359, %v358
        %v394 = vpack.c.b16 %v361, %v360
        %v395 = vpack.c.b16 %v363, %v362
        %v402 = vunpack.c.l.b16 %v230
        %v403 = vunpack.c.l.b16 %v231
        %v404 = vunpack.c.l.b16 %v232
        %v405 = vunpack.c.l.b16 %v233
        %v406 = vunpack.c.l.b16 %v234
        %v407 = vunpack.c.l.b16 %v235
        %v408 = vpack.c.b16 %v403, %v402
        %v409 = vpack.c.b16 %v405, %v404
        %v410 = vpack.c.b16 %v407, %v406
        %vm414 = vcmask 392192
        %v416 = vsel %vm414, %v364, 0
        %v419 = vsel %vm414, %v365, 0
        %v422 = vsel %vm414, %v366, 0
        %v425 = vsel %vm414, %v367, 0
        %v428 = vsel %vm414, %v368, 0
        %v431 = vsel %vm414, %v369, 0
        %v434 = vsel %vm414, %v370, 0
        %v437 = vsel %vm414, %v371, 0
        %v440 = vsel %vm414, %v372, 0
        %v443 = vsel %vm414, %v373, 0
        %v446 = vsel %vm414, %v374, 0
        %v449 = vsel %vm414, %v375, 0
        %v452 = vsel %vm414, %v376, 0
        %v455 = vsel %vm414, %v377, 0
        %v458 = vsel %vm414, %v378, 0
        %v461 = vsel %vm414, %v379, 0
        %v464 = vsel %vm414, %v380, 0
        %v467 = vsel %vm414, %v381, 0
        %v470 = vsel %vm414, %v382, 0
        %v473 = vsel %vm414, %v383, 0
        %v476 = vsel %vm414, %v384, 0
        %v479 = vsel %vm414, %v385, 0
        %v482 = vsel %vm414, %v386, 0
        %v485 = vsel %vm414, %v387, 0
        %v488 = vsel %vm414, %v388, 0
        %v491 = vsel %vm414, %v389, 0
        %v494 = vsel %vm414, %v390, 0
        %v497 = vsel %vm414, %v391, 0
        %v500 = vsel %vm414, %v392, 0
        %v503 = vsel %vm414, %v393, 0
        %v506 = vsel %vm414, %v394, 0
        %v509 = vsel %vm414, %v395, 0
        %511 = vmatpush.bf16.msra.mxu0 0
        %512 = vmatpush.bf16.msra.mxu0 0
        %513 = vmatpush.bf16.msra.mxu0 0
        %514 = vmatpush.bf16.msra.mxu0 0
        %515 = vmatpush.bf16.msra.mxu0 0
        %516 = vmatpush.bf16.msra.mxu0 %v410
        %517 = vmatpush.bf16.msra.mxu0 %v409
        %518 = vmatpush.bf16.msra.mxu0 %v408
        %519 = vmatmul.bf16.gmra.mxu0 %v416
        %v520 = vpop.f32.mrf.mxu0
        %v521 = vadd.f32 0.0, %v520
        %v522 = vpop.f32.mrf.mxu0
        %v523 = vadd.f32 0.0, %v522
        %524 = vmatmul.bf16.gmra.mxu0 %v419
        %v525 = vpop.f32.mrf.mxu0
        %v526 = vadd.f32 0.0, %v525
        %v527 = vpop.f32.mrf.mxu0
        %v528 = vadd.f32 0.0, %v527
        %529 = vmatmul.bf16.gmra.mxu0 %v422
        %v530 = vpop.f32.mrf.mxu0
        %v531 = vadd.f32 0.0, %v530
        %v532 = vpop.f32.mrf.mxu0
        %v533 = vadd.f32 0.0, %v532
        %534 = vmatmul.bf16.gmra.mxu0 %v425
        %v535 = vpop.f32.mrf.mxu0
        %v536 = vadd.f32 0.0, %v535
        %v537 = vpop.f32.mrf.mxu0
        %v538 = vadd.f32 0.0, %v537
        %539 = vmatmul.bf16.gmra.mxu0 %v428
        %v540 = vpop.f32.mrf.mxu0
        %v541 = vadd.f32 0.0, %v540
        %v542 = vpop.f32.mrf.mxu0
        %v543 = vadd.f32 0.0, %v542
        %544 = vmatmul.bf16.gmra.mxu0 %v431
        %v545 = vpop.f32.mrf.mxu0
        %v546 = vadd.f32 0.0, %v545
        %v547 = vpop.f32.mrf.mxu0
        %v548 = vadd.f32 0.0, %v547
        %549 = vmatmul.bf16.gmra.mxu0 %v434
        %v550 = vpop.f32.mrf.mxu0
        %v551 = vadd.f32 0.0, %v550
        %v552 = vpop.f32.mrf.mxu0
        %v553 = vadd.f32 0.0, %v552
        %554 = vmatmul.bf16.gmra.mxu0 %v437
        %v555 = vpop.f32.mrf.mxu0
        %v556 = vadd.f32 0.0, %v555
        %v557 = vpop.f32.mrf.mxu0
        %v558 = vadd.f32 0.0, %v557
        %559 = vmatmul.bf16.gmra.mxu0 %v440
        %v560 = vpop.f32.mrf.mxu0
        %v561 = vadd.f32 0.0, %v560
        %v562 = vpop.f32.mrf.mxu0
        %v563 = vadd.f32 0.0, %v562
        %564 = vmatmul.bf16.gmra.mxu0 %v443
        %v565 = vpop.f32.mrf.mxu0
        %v566 = vadd.f32 0.0, %v565
        %v567 = vpop.f32.mrf.mxu0
        %v568 = vadd.f32 0.0, %v567
        %569 = vmatmul.bf16.gmra.mxu0 %v446
        %v570 = vpop.f32.mrf.mxu0
        %v571 = vadd.f32 0.0, %v570
        %v572 = vpop.f32.mrf.mxu0
        %v573 = vadd.f32 0.0, %v572
        %574 = vmatmul.bf16.gmra.mxu0 %v449
        %v575 = vpop.f32.mrf.mxu0
        %v576 = vadd.f32 0.0, %v575
        %v577 = vpop.f32.mrf.mxu0
        %v578 = vadd.f32 0.0, %v577
        %579 = vmatmul.bf16.gmra.mxu0 %v452
        %v580 = vpop.f32.mrf.mxu0
        %v581 = vadd.f32 0.0, %v580
        %v582 = vpop.f32.mrf.mxu0
        %v583 = vadd.f32 0.0, %v582
        %584 = vmatmul.bf16.gmra.mxu0 %v455
        %v585 = vpop.f32.mrf.mxu0
        %v586 = vadd.f32 0.0, %v585
        %v587 = vpop.f32.mrf.mxu0
        %v588 = vadd.f32 0.0, %v587
        %589 = vmatmul.bf16.gmra.mxu0 %v458
        %v590 = vpop.f32.mrf.mxu0
        %v591 = vadd.f32 0.0, %v590
        %v592 = vpop.f32.mrf.mxu0
        %v593 = vadd.f32 0.0, %v592
        %594 = vmatmul.bf16.gmra.mxu0 %v461
        %v595 = vpop.f32.mrf.mxu0
        %v596 = vadd.f32 0.0, %v595
        %v597 = vpop.f32.mrf.mxu0
        %v598 = vadd.f32 0.0, %v597
        %599 = vmatmul.bf16.gmra.mxu0 %v464
        %v600 = vpop.f32.mrf.mxu0
        %v601 = vadd.f32 0.0, %v600
        %v602 = vpop.f32.mrf.mxu0
        %v603 = vadd.f32 0.0, %v602
        %604 = vmatmul.bf16.gmra.mxu0 %v467
        %v605 = vpop.f32.mrf.mxu0
        %v606 = vadd.f32 0.0, %v605
        %v607 = vpop.f32.mrf.mxu0
        %v608 = vadd.f32 0.0, %v607
        %609 = vmatmul.bf16.gmra.mxu0 %v470
        %v610 = vpop.f32.mrf.mxu0
        %v611 = vadd.f32 0.0, %v610
        %v612 = vpop.f32.mrf.mxu0
        %v613 = vadd.f32 0.0, %v612
        %614 = vmatmul.bf16.gmra.mxu0 %v473
        %v615 = vpop.f32.mrf.mxu0
        %v616 = vadd.f32 0.0, %v615
        %v617 = vpop.f32.mrf.mxu0
        %v618 = vadd.f32 0.0, %v617
        %619 = vmatmul.bf16.gmra.mxu0 %v476
        %v620 = vpop.f32.mrf.mxu0
        %v621 = vadd.f32 0.0, %v620
        %v622 = vpop.f32.mrf.mxu0
        %v623 = vadd.f32 0.0, %v622
        %624 = vmatmul.bf16.gmra.mxu0 %v479
        %v625 = vpop.f32.mrf.mxu0
        %v626 = vadd.f32 0.0, %v625
        %v627 = vpop.f32.mrf.mxu0
        %v628 = vadd.f32 0.0, %v627
        %629 = vmatmul.bf16.gmra.mxu0 %v482
        %v630 = vpop.f32.mrf.mxu0
        %v631 = vadd.f32 0.0, %v630
        %v632 = vpop.f32.mrf.mxu0
        %v633 = vadd.f32 0.0, %v632
        %634 = vmatmul.bf16.gmra.mxu0 %v485
        %v635 = vpop.f32.mrf.mxu0
        %v636 = vadd.f32 0.0, %v635
        %v637 = vpop.f32.mrf.mxu0
        %v638 = vadd.f32 0.0, %v637
        %639 = vmatmul.bf16.gmra.mxu0 %v488
        %v640 = vpop.f32.mrf.mxu0
        %v641 = vadd.f32 0.0, %v640
        %v642 = vpop.f32.mrf.mxu0
        %v643 = vadd.f32 0.0, %v642
        %644 = vmatmul.bf16.gmra.mxu0 %v491
        %v645 = vpop.f32.mrf.mxu0
        %v646 = vadd.f32 0.0, %v645
        %v647 = vpop.f32.mrf.mxu0
        %v648 = vadd.f32 0.0, %v647
        %649 = vmatmul.bf16.gmra.mxu0 %v494
        %v650 = vpop.f32.mrf.mxu0
        %v651 = vadd.f32 0.0, %v650
        %v652 = vpop.f32.mrf.mxu0
        %v653 = vadd.f32 0.0, %v652
        %654 = vmatmul.bf16.gmra.mxu0 %v497
        %v655 = vpop.f32.mrf.mxu0
        %v656 = vadd.f32 0.0, %v655
        %v657 = vpop.f32.mrf.mxu0
        %v658 = vadd.f32 0.0, %v657
        %659 = vmatmul.bf16.gmra.mxu0 %v500
        %v660 = vpop.f32.mrf.mxu0
        %v661 = vadd.f32 0.0, %v660
        %v662 = vpop.f32.mrf.mxu0
        %v663 = vadd.f32 0.0, %v662
        %664 = vmatmul.bf16.gmra.mxu0 %v503
        %v665 = vpop.f32.mrf.mxu0
        %v666 = vadd.f32 0.0, %v665
        %v667 = vpop.f32.mrf.mxu0
        %v668 = vadd.f32 0.0, %v667
        %669 = vmatmul.bf16.gmra.mxu0 %v506
        %v670 = vpop.f32.mrf.mxu0
        %v671 = vadd.f32 0.0, %v670
        %v672 = vpop.f32.mrf.mxu0
        %v673 = vadd.f32 0.0, %v672
        %674 = vmatmul.bf16.gmra.mxu0 %v509
        %v675 = vpop.f32.mrf.mxu0
        %v676 = vadd.f32 0.0, %v675
        %v677 = vpop.f32.mrf.mxu0
        %v678 = vadd.f32 0.0, %v677
        %679 = vdwg.mxu0
        %v680 = vpack.c.bf16 %v521, %v521
        %v681 = vpack.c.bf16 %v523, %v523
        %v682 = vpack.c.bf16 %v526, %v526
        %v683 = vpack.c.bf16 %v528, %v528
        %v684 = vpack.c.bf16 %v531, %v531
        %v685 = vpack.c.bf16 %v533, %v533
        %v686 = vpack.c.bf16 %v536, %v536
        %v687 = vpack.c.bf16 %v538, %v538
        %v688 = vpack.c.bf16 %v541, %v541
        %v689 = vpack.c.bf16 %v543, %v543
        %v690 = vpack.c.bf16 %v546, %v546
        %v691 = vpack.c.bf16 %v548, %v548
        %v692 = vpack.c.bf16 %v551, %v551
        %v693 = vpack.c.bf16 %v553, %v553
        %v694 = vpack.c.bf16 %v556, %v556
        %v695 = vpack.c.bf16 %v558, %v558
        %v696 = vpack.c.bf16 %v561, %v561
        %v697 = vpack.c.bf16 %v563, %v563
        %v698 = vpack.c.bf16 %v566, %v566
        %v699 = vpack.c.bf16 %v568, %v568
        %v700 = vpack.c.bf16 %v571, %v571
        %v701 = vpack.c.bf16 %v573, %v573
        %v702 = vpack.c.bf16 %v576, %v576
        %v703 = vpack.c.bf16 %v578, %v578
        %v704 = vpack.c.bf16 %v581, %v581
        %v705 = vpack.c.bf16 %v583, %v583
        %v706 = vpack.c.bf16 %v586, %v586
        %v707 = vpack.c.bf16 %v588, %v588
        %v708 = vpack.c.bf16 %v591, %v591
        %v709 = vpack.c.bf16 %v593, %v593
        %v710 = vpack.c.bf16 %v596, %v596
        %v711 = vpack.c.bf16 %v598, %v598
        %v712 = vpack.c.bf16 %v601, %v601
        %v713 = vpack.c.bf16 %v603, %v603
        %v714 = vpack.c.bf16 %v606, %v606
        %v715 = vpack.c.bf16 %v608, %v608
        %v716 = vpack.c.bf16 %v611, %v611
        %v717 = vpack.c.bf16 %v613, %v613
        %v718 = vpack.c.bf16 %v616, %v616
        %v719 = vpack.c.bf16 %v618, %v618
        %v720 = vpack.c.bf16 %v621, %v621
        %v721 = vpack.c.bf16 %v623, %v623
        %v722 = vpack.c.bf16 %v626, %v626
        %v723 = vpack.c.bf16 %v628, %v628
        %v724 = vpack.c.bf16 %v631, %v631
        %v725 = vpack.c.bf16 %v633, %v633
        %v726 = vpack.c.bf16 %v636, %v636
        %v727 = vpack.c.bf16 %v638, %v638
        %v728 = vpack.c.bf16 %v641, %v641
        %v729 = vpack.c.bf16 %v643, %v643
        %v730 = vpack.c.bf16 %v646, %v646
        %v731 = vpack.c.bf16 %v648, %v648
        %v732 = vpack.c.bf16 %v651, %v651
        %v733 = vpack.c.bf16 %v653, %v653
        %v734 = vpack.c.bf16 %v656, %v656
        %v735 = vpack.c.bf16 %v658, %v658
        %v736 = vpack.c.bf16 %v661, %v661
        %v737 = vpack.c.bf16 %v663, %v663
        %v738 = vpack.c.bf16 %v666, %v666
        %v739 = vpack.c.bf16 %v668, %v668
        %v740 = vpack.c.bf16 %v671, %v671
        %v741 = vpack.c.bf16 %v673, %v673
        %v742 = vpack.c.bf16 %v676, %v676
        %v743 = vpack.c.bf16 %v678, %v678
        %744 = vst [vmem:[%s145] sm:$0xf] %v680
        %745 = vst [vmem:[%s145 + $0x4] sm:$0xf] %v681
        %746 = vst [vmem:[%s145 + $0x8] sm:$0xf] %v682
        %747 = vst [vmem:[%s145 + $0xc] sm:$0xf] %v683
        %748 = vst [vmem:[%s145 + $0x10] sm:$0xf] %v684
        %749 = vst [vmem:[%s145 + $0x14] sm:$0xf] %v685
        %750 = vst [vmem:[%s145 + $0x18] sm:$0xf] %v686
        %751 = vst [vmem:[%s145 + $0x1c] sm:$0xf] %v687
        %752 = vst [vmem:[%s145 + $0x20] sm:$0xf] %v688
        %753 = vst [vmem:[%s145 + $0x24] sm:$0xf] %v689
        %754 = vst [vmem:[%s145 + $0x28] sm:$0xf] %v690
        %755 = vst [vmem:[%s145 + $0x2c] sm:$0xf] %v691
        %756 = vst [vmem:[%s145 + $0x30] sm:$0xf] %v692
        %757 = vst [vmem:[%s145 + $0x34] sm:$0xf] %v693
        %758 = vst [vmem:[%s145 + $0x38] sm:$0xf] %v694
        %759 = vst [vmem:[%s145 + $0x3c] sm:$0xf] %v695
        %760 = vst [vmem:[%s145 + $0x40] sm:$0xf] %v696
        %761 = vst [vmem:[%s145 + $0x44] sm:$0xf] %v697
        %762 = vst [vmem:[%s145 + $0x48] sm:$0xf] %v698
        %763 = vst [vmem:[%s145 + $0x4c] sm:$0xf] %v699
        %764 = vst [vmem:[%s145 + $0x50] sm:$0xf] %v700
        %765 = vst [vmem:[%s145 + $0x54] sm:$0xf] %v701
        %766 = vst [vmem:[%s145 + $0x58] sm:$0xf] %v702
        %767 = vst [vmem:[%s145 + $0x5c] sm:$0xf] %v703
        %768 = vst [vmem:[%s145 + $0x60] sm:$0xf] %v704
        %769 = vst [vmem:[%s145 + $0x64] sm:$0xf] %v705
        %770 = vst [vmem:[%s145 + $0x68] sm:$0xf] %v706
        %771 = vst [vmem:[%s145 + $0x6c] sm:$0xf] %v707
        %772 = vst [vmem:[%s145 + $0x70] sm:$0xf] %v708
        %773 = vst [vmem:[%s145 + $0x74] sm:$0xf] %v709
        %774 = vst [vmem:[%s145 + $0x78] sm:$0xf] %v710
        %775 = vst [vmem:[%s145 + $0x7c] sm:$0xf] %v711
        %776 = vst [vmem:[%s145 + $0x80] sm:$0xf] %v712
        %777 = vst [vmem:[%s145 + $0x84] sm:$0xf] %v713
        %778 = vst [vmem:[%s145 + $0x88] sm:$0xf] %v714
        %779 = vst [vmem:[%s145 + $0x8c] sm:$0xf] %v715
        %780 = vst [vmem:[%s145 + $0x90] sm:$0xf] %v716
        %781 = vst [vmem:[%s145 + $0x94] sm:$0xf] %v717
        %782 = vst [vmem:[%s145 + $0x98] sm:$0xf] %v718
        %783 = vst [vmem:[%s145 + $0x9c] sm:$0xf] %v719
        %784 = vst [vmem:[%s145 + $0xa0] sm:$0xf] %v720
        %785 = vst [vmem:[%s145 + $0xa4] sm:$0xf] %v721
        %786 = vst [vmem:[%s145 + $0xa8] sm:$0xf] %v722
        %787 = vst [vmem:[%s145 + $0xac] sm:$0xf] %v723
        %788 = vst [vmem:[%s145 + $0xb0] sm:$0xf] %v724
        %789 = vst [vmem:[%s145 + $0xb4] sm:$0xf] %v725
        %790 = vst [vmem:[%s145 + $0xb8] sm:$0xf] %v726
        %791 = vst [vmem:[%s145 + $0xbc] sm:$0xf] %v727
        %792 = vst [vmem:[%s145 + $0xc0] sm:$0xf] %v728
        %793 = vst [vmem:[%s145 + $0xc4] sm:$0xf] %v729
        %794 = vst [vmem:[%s145 + $0xc8] sm:$0xf] %v730
        %795 = vst [vmem:[%s145 + $0xcc] sm:$0xf] %v731
        %796 = vst [vmem:[%s145 + $0xd0] sm:$0xf] %v732
        %797 = vst [vmem:[%s145 + $0xd4] sm:$0xf] %v733
        %798 = vst [vmem:[%s145 + $0xd8] sm:$0xf] %v734
        %799 = vst [vmem:[%s145 + $0xdc] sm:$0xf] %v735
        %800 = vst [vmem:[%s145 + $0xe0] sm:$0xf] %v736
        %801 = vst [vmem:[%s145 + $0xe4] sm:$0xf] %v737
        %802 = vst [vmem:[%s145 + $0xe8] sm:$0xf] %v738
        %803 = vst [vmem:[%s145 + $0xec] sm:$0xf] %v739
        %804 = vst [vmem:[%s145 + $0xf0] sm:$0xf] %v740
        %805 = vst [vmem:[%s145 + $0xf4] sm:$0xf] %v741
        %806 = vst [vmem:[%s145 + $0xf8] sm:$0xf] %v742
        %807 = vst [vmem:[%s145 + $0xfc] sm:$0xf] %v743
        %s808 = sand.u32 %s68, 1
        %s809 = sand.u32 %s68, 1
        %s810 = smul.addr %s809, 256
        %s811 = scalar_lea.vmem [#allocation2], %s810
        // Predicated region
        $region29: #{discriminator_forward.5} parent=27 // pred_check
          %p812 = pneg %p78
        $region30: #{discriminator_forward.5} parent=27 // pred_check_branch
          %814 = sbr.rel (%p812) target = $region32
        $region31: #{discriminator_forward.5} parent=27 // pred_region
          %s815 = smul.u32 64, %s13
          %s816 = ssub.s32 784, %s815
          %p817 = scmp.lt.s32.totalorder %s816, 64
          %s818 = scalar_select %p817, %s816, 64
          %s819 = smul.u32 4, %s818
          %p820 = scmp.ne.s32.totalorder 0, %s819
          %s821 = smul.addr %s815, 4
          %s822 = scalar_lea.vmem %s2, %s821
          // Predicated region
          $region33: #{discriminator_forward.5} parent=31 // pred_check
            %p823 = pneg %p820
          $region34: #{discriminator_forward.5} parent=31 // pred_check_branch
            %825 = sbr.rel (%p823) target = $region36
          $region35: #{discriminator_forward.5} parent=31 // pred_region
            // Predicated region
            $region37: #{discriminator_forward.5} parent=35 // pred_check
              _
            $region38: #{discriminator_forward.5} parent=35 // pred_check_branch
              %827 = sbr.rel target = $region40
            $region39: #{discriminator_forward.5} parent=35 // pred_region
              // Predicated region
              $region59: #{discriminator_forward.5} parent=39 // pred_check
                _
              $region60: #{discriminator_forward.5} parent=39 // pred_check_branch
                %939 = sbr.rel (0) target = $region62
              $region61: #{discriminator_forward.5} parent=39 // pred_region
                %s941 = ssub.s32 16, 1
                %s942 = sshrl.u32 %s818, 5
                // While loop
                $region63: #{discriminator_forward.5} parent=61 // loop_pre_header
                  _
                $region64: #{discriminator_forward.5} parent=61 // loop_header
                  %s944 = sphi 0, %s946
                  %p945 = scmp.ge.s32.totalorder %s944, %s942
                  %s949 = sphi 0, %s1018
                  %s950 = sphi %s811, %s1021
                  %s951 = sphi %s822, %s1022
                $region65: #{discriminator_forward.5} parent=61 // loop_header_branch
                  %948 = sbr.rel (%p945) target = $region69
                $region66: #{discriminator_forward.5} parent=61 // loop_body
                  %v952 = vld [vmem:[%s950] sm:%s941]
                  %953 = vst [vmem:[%s951] sm:%s941] %v952
                  %v954 = vld [vmem:[%s950 + $0x4] sm:%s941]
                  %955 = vst [vmem:[%s951 + $0x4] sm:%s941] %v954
                  %v956 = vld [vmem:[%s950 + $0x8] sm:%s941]
                  %957 = vst [vmem:[%s951 + $0x8] sm:%s941] %v956
                  %v958 = vld [vmem:[%s950 + $0xc] sm:%s941]
                  %959 = vst [vmem:[%s951 + $0xc] sm:%s941] %v958
                  %v960 = vld [vmem:[%s950 + $0x10] sm:%s941]
                  %961 = vst [vmem:[%s951 + $0x10] sm:%s941] %v960
                  %v962 = vld [vmem:[%s950 + $0x14] sm:%s941]
                  %963 = vst [vmem:[%s951 + $0x14] sm:%s941] %v962
                  %v964 = vld [vmem:[%s950 + $0x18] sm:%s941]
                  %965 = vst [vmem:[%s951 + $0x18] sm:%s941] %v964
                  %v966 = vld [vmem:[%s950 + $0x1c] sm:%s941]
                  %967 = vst [vmem:[%s951 + $0x1c] sm:%s941] %v966
                  %v968 = vld [vmem:[%s950 + $0x20] sm:%s941]
                  %969 = vst [vmem:[%s951 + $0x20] sm:%s941] %v968
                  %v970 = vld [vmem:[%s950 + $0x24] sm:%s941]
                  %971 = vst [vmem:[%s951 + $0x24] sm:%s941] %v970
                  %v972 = vld [vmem:[%s950 + $0x28] sm:%s941]
                  %973 = vst [vmem:[%s951 + $0x28] sm:%s941] %v972
                  %v974 = vld [vmem:[%s950 + $0x2c] sm:%s941]
                  %975 = vst [vmem:[%s951 + $0x2c] sm:%s941] %v974
                  %v976 = vld [vmem:[%s950 + $0x30] sm:%s941]
                  %977 = vst [vmem:[%s951 + $0x30] sm:%s941] %v976
                  %v978 = vld [vmem:[%s950 + $0x34] sm:%s941]
                  %979 = vst [vmem:[%s951 + $0x34] sm:%s941] %v978
                  %v980 = vld [vmem:[%s950 + $0x38] sm:%s941]
                  %981 = vst [vmem:[%s951 + $0x38] sm:%s941] %v980
                  %v982 = vld [vmem:[%s950 + $0x3c] sm:%s941]
                  %983 = vst [vmem:[%s951 + $0x3c] sm:%s941] %v982
                  %v984 = vld [vmem:[%s950 + $0x40] sm:%s941]
                  %985 = vst [vmem:[%s951 + $0x40] sm:%s941] %v984
                  %v986 = vld [vmem:[%s950 + $0x44] sm:%s941]
                  %987 = vst [vmem:[%s951 + $0x44] sm:%s941] %v986
                  %v988 = vld [vmem:[%s950 + $0x48] sm:%s941]
                  %989 = vst [vmem:[%s951 + $0x48] sm:%s941] %v988
                  %v990 = vld [vmem:[%s950 + $0x4c] sm:%s941]
                  %991 = vst [vmem:[%s951 + $0x4c] sm:%s941] %v990
                  %v992 = vld [vmem:[%s950 + $0x50] sm:%s941]
                  %993 = vst [vmem:[%s951 + $0x50] sm:%s941] %v992
                  %v994 = vld [vmem:[%s950 + $0x54] sm:%s941]
                  %995 = vst [vmem:[%s951 + $0x54] sm:%s941] %v994
                  %v996 = vld [vmem:[%s950 + $0x58] sm:%s941]
                  %997 = vst [vmem:[%s951 + $0x58] sm:%s941] %v996
                  %v998 = vld [vmem:[%s950 + $0x5c] sm:%s941]
                  %999 = vst [vmem:[%s951 + $0x5c] sm:%s941] %v998
                  %v1000 = vld [vmem:[%s950 + $0x60] sm:%s941]
                  %1001 = vst [vmem:[%s951 + $0x60] sm:%s941] %v1000
                  %v1002 = vld [vmem:[%s950 + $0x64] sm:%s941]
                  %1003 = vst [vmem:[%s951 + $0x64] sm:%s941] %v1002
                  %v1004 = vld [vmem:[%s950 + $0x68] sm:%s941]
                  %1005 = vst [vmem:[%s951 + $0x68] sm:%s941] %v1004
                  %v1006 = vld [vmem:[%s950 + $0x6c] sm:%s941]
                  %1007 = vst [vmem:[%s951 + $0x6c] sm:%s941] %v1006
                  %v1008 = vld [vmem:[%s950 + $0x70] sm:%s941]
                  %1009 = vst [vmem:[%s951 + $0x70] sm:%s941] %v1008
                  %v1010 = vld [vmem:[%s950 + $0x74] sm:%s941]
                  %1011 = vst [vmem:[%s951 + $0x74] sm:%s941] %v1010
                  %v1012 = vld [vmem:[%s950 + $0x78] sm:%s941]
                  %1013 = vst [vmem:[%s951 + $0x78] sm:%s941] %v1012
                  %v1014 = vld [vmem:[%s950 + $0x7c] sm:%s941]
                  %1015 = vst [vmem:[%s951 + $0x7c] sm:%s941] %v1014
                  %s1016 = sadd.s32 1, %s949
                  %p1017 = scmp.ge.s32.totalorder %s1016, %s942
                  %s1018 = scalar_select %p1017, 0, %s1016
                  %s1019 = smul.u32 %s1018, 128
                  %s1020 = smul.u32 %s1018, 128
                  %s1021 = scalar_lea.vmem %s811, %s1019 [#allocation2]
                  %s1022 = scalar_lea.vmem %s822, %s1020
                $region67: #{discriminator_forward.5} parent=61 // loop_footer
                  %s946 = sadd.s32 %s944, 1
                $region68: #{discriminator_forward.5} parent=61 // loop_footer_branch
                  %943 = sbr.rel target = $region64
                $region69: #{discriminator_forward.5} parent=61 // loop_exit
                  _
                %s1023 = sshrl.u32 %s818, 5
                %s1024 = sand.u32 %s818, 31
                %s1025 = smul.u32 %s1023, 32
                %s1026 = smul.u32 4, %s1025
                %s1027 = scalar_lea.vmem %s811, %s1026 [#allocation2]
                %s1028 = smul.u32 4, %s1025
                %s1029 = scalar_lea.vmem %s822, %s1028
                // While loop
                $region70: #{discriminator_forward.5} parent=61 // loop_pre_header
                  _
                $region71: #{discriminator_forward.5} parent=61 // loop_header
                  %s1031 = sphi 0, %s1033
                  %p1032 = scmp.ge.s32.totalorder %s1031, %s1024
                  %s1036 = sphi 0, %s1043
                  %s1037 = sphi %s1027, %s1046
                  %s1038 = sphi %s1029, %s1047
                $region72: #{discriminator_forward.5} parent=61 // loop_header_branch
                  %1035 = sbr.rel (%p1032) target = $region76
                $region73: #{discriminator_forward.5} parent=61 // loop_body
                  %v1039 = vld [vmem:[%s1037] sm:%s941]
                  %1040 = vst [vmem:[%s1038] sm:%s941] %v1039
                  %s1041 = sadd.s32 1, %s1036
                  %p1042 = scmp.ge.s32.totalorder %s1041, %s1024
                  %s1043 = scalar_select %p1042, 0, %s1041
                  %s1044 = smul.u32 %s1043, 4
                  %s1045 = smul.u32 %s1043, 4
                  %s1046 = scalar_lea.vmem %s1027, %s1044 [#allocation2]
                  %s1047 = scalar_lea.vmem %s1029, %s1045
                $region74: #{discriminator_forward.5} parent=61 // loop_footer
                  %s1033 = sadd.s32 %s1031, 1
                $region75: #{discriminator_forward.5} parent=61 // loop_footer_branch
                  %1030 = sbr.rel target = $region71
                $region76: #{discriminator_forward.5} parent=61 // loop_exit
                  _
              $region62: #{discriminator_forward.5} parent=39 // pred_fallthru
                _
            $region40: #{discriminator_forward.5} parent=35 // pred_fallthru
              _
            // Predicated region
            $region41: #{discriminator_forward.5} parent=35 // pred_check
              _
            $region42: #{discriminator_forward.5} parent=35 // pred_check_branch
              %829 = sbr.rel (0) target = $region44
            $region43: #{discriminator_forward.5} parent=35 // pred_region
              %s831 = ssub.s32 16, 1
              %s832 = sshrl.u32 %s818, 5
              // While loop
              $region45: #{discriminator_forward.5} parent=43 // loop_pre_header
                _
              $region46: #{discriminator_forward.5} parent=43 // loop_header
                %s834 = sphi 0, %s836
                %p835 = scmp.ge.s32.totalorder %s834, %s832
                %s839 = sphi 0, %s908
                %s840 = sphi %s811, %s911
                %s841 = sphi %s822, %s912
              $region47: #{discriminator_forward.5} parent=43 // loop_header_branch
                %838 = sbr.rel (%p835) target = $region51
              $region48: #{discriminator_forward.5} parent=43 // loop_body
                %v842 = vld [vmem:[%s840] sm:%s831]
                %843 = vst [vmem:[%s841] sm:%s831] %v842
                %v844 = vld [vmem:[%s840 + $0x4] sm:%s831]
                %845 = vst [vmem:[%s841 + $0x4] sm:%s831] %v844
                %v846 = vld [vmem:[%s840 + $0x8] sm:%s831]
                %847 = vst [vmem:[%s841 + $0x8] sm:%s831] %v846
                %v848 = vld [vmem:[%s840 + $0xc] sm:%s831]
                %849 = vst [vmem:[%s841 + $0xc] sm:%s831] %v848
                %v850 = vld [vmem:[%s840 + $0x10] sm:%s831]
                %851 = vst [vmem:[%s841 + $0x10] sm:%s831] %v850
                %v852 = vld [vmem:[%s840 + $0x14] sm:%s831]
                %853 = vst [vmem:[%s841 + $0x14] sm:%s831] %v852
                %v854 = vld [vmem:[%s840 + $0x18] sm:%s831]
                %855 = vst [vmem:[%s841 + $0x18] sm:%s831] %v854
                %v856 = vld [vmem:[%s840 + $0x1c] sm:%s831]
                %857 = vst [vmem:[%s841 + $0x1c] sm:%s831] %v856
                %v858 = vld [vmem:[%s840 + $0x20] sm:%s831]
                %859 = vst [vmem:[%s841 + $0x20] sm:%s831] %v858
                %v860 = vld [vmem:[%s840 + $0x24] sm:%s831]
                %861 = vst [vmem:[%s841 + $0x24] sm:%s831] %v860
                %v862 = vld [vmem:[%s840 + $0x28] sm:%s831]
                %863 = vst [vmem:[%s841 + $0x28] sm:%s831] %v862
                %v864 = vld [vmem:[%s840 + $0x2c] sm:%s831]
                %865 = vst [vmem:[%s841 + $0x2c] sm:%s831] %v864
                %v866 = vld [vmem:[%s840 + $0x30] sm:%s831]
                %867 = vst [vmem:[%s841 + $0x30] sm:%s831] %v866
                %v868 = vld [vmem:[%s840 + $0x34] sm:%s831]
                %869 = vst [vmem:[%s841 + $0x34] sm:%s831] %v868
                %v870 = vld [vmem:[%s840 + $0x38] sm:%s831]
                %871 = vst [vmem:[%s841 + $0x38] sm:%s831] %v870
                %v872 = vld [vmem:[%s840 + $0x3c] sm:%s831]
                %873 = vst [vmem:[%s841 + $0x3c] sm:%s831] %v872
                %v874 = vld [vmem:[%s840 + $0x40] sm:%s831]
                %875 = vst [vmem:[%s841 + $0x40] sm:%s831] %v874
                %v876 = vld [vmem:[%s840 + $0x44] sm:%s831]
                %877 = vst [vmem:[%s841 + $0x44] sm:%s831] %v876
                %v878 = vld [vmem:[%s840 + $0x48] sm:%s831]
                %879 = vst [vmem:[%s841 + $0x48] sm:%s831] %v878
                %v880 = vld [vmem:[%s840 + $0x4c] sm:%s831]
                %881 = vst [vmem:[%s841 + $0x4c] sm:%s831] %v880
                %v882 = vld [vmem:[%s840 + $0x50] sm:%s831]
                %883 = vst [vmem:[%s841 + $0x50] sm:%s831] %v882
                %v884 = vld [vmem:[%s840 + $0x54] sm:%s831]
                %885 = vst [vmem:[%s841 + $0x54] sm:%s831] %v884
                %v886 = vld [vmem:[%s840 + $0x58] sm:%s831]
                %887 = vst [vmem:[%s841 + $0x58] sm:%s831] %v886
                %v888 = vld [vmem:[%s840 + $0x5c] sm:%s831]
                %889 = vst [vmem:[%s841 + $0x5c] sm:%s831] %v888
                %v890 = vld [vmem:[%s840 + $0x60] sm:%s831]
                %891 = vst [vmem:[%s841 + $0x60] sm:%s831] %v890
                %v892 = vld [vmem:[%s840 + $0x64] sm:%s831]
                %893 = vst [vmem:[%s841 + $0x64] sm:%s831] %v892
                %v894 = vld [vmem:[%s840 + $0x68] sm:%s831]
                %895 = vst [vmem:[%s841 + $0x68] sm:%s831] %v894
                %v896 = vld [vmem:[%s840 + $0x6c] sm:%s831]
                %897 = vst [vmem:[%s841 + $0x6c] sm:%s831] %v896
                %v898 = vld [vmem:[%s840 + $0x70] sm:%s831]
                %899 = vst [vmem:[%s841 + $0x70] sm:%s831] %v898
                %v900 = vld [vmem:[%s840 + $0x74] sm:%s831]
                %901 = vst [vmem:[%s841 + $0x74] sm:%s831] %v900
                %v902 = vld [vmem:[%s840 + $0x78] sm:%s831]
                %903 = vst [vmem:[%s841 + $0x78] sm:%s831] %v902
                %v904 = vld [vmem:[%s840 + $0x7c] sm:%s831]
                %905 = vst [vmem:[%s841 + $0x7c] sm:%s831] %v904
                %s906 = sadd.s32 1, %s839
                %p907 = scmp.ge.s32.totalorder %s906, %s832
                %s908 = scalar_select %p907, 0, %s906
                %s909 = smul.u32 %s908, 128
                %s910 = smul.u32 %s908, 128
                %s911 = scalar_lea.vmem %s811, %s909 [#allocation2]
                %s912 = scalar_lea.vmem %s822, %s910
              $region49: #{discriminator_forward.5} parent=43 // loop_footer
                %s836 = sadd.s32 %s834, 1
              $region50: #{discriminator_forward.5} parent=43 // loop_footer_branch
                %833 = sbr.rel target = $region46
              $region51: #{discriminator_forward.5} parent=43 // loop_exit
                _
              %s913 = sshrl.u32 %s818, 5
              %s914 = sand.u32 %s818, 31
              %s915 = smul.u32 %s913, 32
              %s916 = smul.u32 4, %s915
              %s917 = scalar_lea.vmem %s811, %s916 [#allocation2]
              %s918 = smul.u32 4, %s915
              %s919 = scalar_lea.vmem %s822, %s918
              // While loop
              $region52: #{discriminator_forward.5} parent=43 // loop_pre_header
                _
              $region53: #{discriminator_forward.5} parent=43 // loop_header
                %s921 = sphi 0, %s923
                %p922 = scmp.ge.s32.totalorder %s921, %s914
                %s926 = sphi 0, %s933
                %s927 = sphi %s917, %s936
                %s928 = sphi %s919, %s937
              $region54: #{discriminator_forward.5} parent=43 // loop_header_branch
                %925 = sbr.rel (%p922) target = $region58
              $region55: #{discriminator_forward.5} parent=43 // loop_body
                %v929 = vld [vmem:[%s927] sm:%s831]
                %930 = vst [vmem:[%s928] sm:%s831] %v929
                %s931 = sadd.s32 1, %s926
                %p932 = scmp.ge.s32.totalorder %s931, %s914
                %s933 = scalar_select %p932, 0, %s931
                %s934 = smul.u32 %s933, 4
                %s935 = smul.u32 %s933, 4
                %s936 = scalar_lea.vmem %s917, %s934 [#allocation2]
                %s937 = scalar_lea.vmem %s919, %s935
              $region56: #{discriminator_forward.5} parent=43 // loop_footer
                %s923 = sadd.s32 %s921, 1
              $region57: #{discriminator_forward.5} parent=43 // loop_footer_branch
                %920 = sbr.rel target = $region53
              $region58: #{discriminator_forward.5} parent=43 // loop_exit
                _
            $region44: #{discriminator_forward.5} parent=35 // pred_fallthru
              _
          $region36: #{discriminator_forward.5} parent=31 // pred_fallthru
            _
          %1048 = vnop
        $region32: #{discriminator_forward.5} parent=27 // pred_fallthru
          _
      $region28: #{discriminator_forward.5} parent=5 // pred_fallthru
        _
      %p1049 = scmp.le.s32.totalorder 2, %s8
      // Predicated region
      $region77: #{discriminator_forward.5} parent=5 // pred_check
        %p1050 = pneg %p1049
      $region78: #{discriminator_forward.5} parent=5 // pred_check_branch
        %1052 = sbr.rel (%p1050) target = $region80
      $region79: #{discriminator_forward.5} parent=5 // pred_region
        %s1053 = ssub.s32 %s8, 2
        // Predicated region
        $region81: #{discriminator_forward.5} parent=79 // pred_check
          %p1054 = pneg %p84
        $region82: #{discriminator_forward.5} parent=79 // pred_check_branch
          %1056 = sbr.rel (%p1054) target = $region84
        $region83: #{discriminator_forward.5} parent=79 // pred_region
          %s1057 = sand.u32 %s69, 1
          %s1058 = sand.u32 %s69, 1
          %s1059 = smul.addr %s1058, 256
          %s1060 = scalar_lea.vmem [#allocation2], %s1059
        $region84: #{discriminator_forward.5} parent=79 // pred_fallthru
          _
      $region80: #{discriminator_forward.5} parent=5 // pred_fallthru
        _
    $region6: #{discriminator_forward.5} parent=1 // loop_footer
      %s12 = sadd.s32 1, %s8
    $region7: #{discriminator_forward.5} parent=1 // loop_footer_branch
      %7 = sbr.rel target = $region3
    $region8: #{discriminator_forward.5} parent=1 // loop_exit
      _

// kernel: discriminator_forward.6
$region0: #{discriminator_forward.6}
  #allocation0 [shape = 'u32[]', space=smem, size = 0x4, offset = 0x4, fixed_abs, tag = 'smem constant byte address 0x4 - core index']
  #allocation1 [shape = 'u32[72,128]{1,0:T(1,128)}', space=vmem, size = 0x9000, scoped, tag = 'internal scratch']
  %s0 = inlined_call_operand.vmem [shape: bf16[1568,128], index: 0, kind: input, shape index: {}]
  %s1 = inlined_call_operand.vmem [shape: bf16[128,128], index: 1, kind: input, shape index: {}]
  %s2 = inlined_call_operand.vmem [shape: bf16[1568,128], index: 2, kind: output, shape index: {0}]
  %s3 = inlined_call_operand.vmem [shape: f32[4,1,128], index: 3, kind: output, shape index: {1}]
  %s4 = inlined_call_operand.vmem [shape: f32[4,1,128], index: 4, kind: output, shape index: {2}]
  %5 = xla_tuple %s2, %s3, %s4
  %s6 = sld [smem:[#allocation0]]
  $region101: #{discriminator_forward.6} parent=0
    _
  %s8 = ssub.s32 1, %s6
  %s9 = scalar_select 0, %s8, %s6
  $region1: #{discriminator_forward.6} parent=0
    #allocation2 [shape = 'u8[262144]{0}', space=vmem, size = 0x40000, scoped, tag = 'output window, operand 0']
    loop: start=0, step=1, limit=6
    $region2: #{discriminator_forward.6} parent=1 // loop_pre_header
      _
    $region3: #{discriminator_forward.6} parent=1 // loop_header
      %s11 = sphi 0, %s15
      %p12 = scmp.ge.s32.totalorder %s11, 6
      %s21 = sphi 0, %s23
      %s24 = sphi 0, %s21
      %s25 = sphi 0, %s24
      %s41 = sphi 0, %s25
      %s45 = sphi 0, %s45
      %s47 = sphi 0, %s45
      %s48 = sphi 0, %s47
      %s62 = sphi 0, %s48
      %s68 = sphi 0, %s70
      %s71 = sphi 0, %s68
      %s72 = sphi 0, %s71
      %s88 = sphi 0, %s72
      %s94 = sphi 0, %s96
      %s97 = sphi 0, %s94
      %s98 = sphi 0, %s97
      %s114 = sphi 0, %s98
      %s120 = sphi 0, %s122
      %s123 = sphi 0, %s120
      %s124 = sphi 0, %s123
      %s140 = sphi 0, %s124
    $region4: #{discriminator_forward.6} parent=1 // loop_header_branch
      %14 = sbr.rel (%p12) target = $region8
    $region5: #{discriminator_forward.6} parent=1 // loop_body
      %s16 = ssub.s32 %s11, 1
      %s17 = ssub.s32 %s11, 2
      %s18 = sadd.s32 %s11, 1
      %s19 = ssub.s32 %s11, %s18
      %p20 = scmp.eq.s32.totalorder %s19, 0
      %s22 = sadd.s32 %s21, 1
      %s23 = scalar_select %p20, %s21, %s22
      %p26 = pneg %p20
      %p27 = scmp.eq.s32.totalorder %s11, 3
      %p28 = por %p26, %p27
      %p29 = scmp.ne.s32.totalorder %s21, %s24
      %p30 = scmp.eq.s32.totalorder %s11, 0
      %p31 = por %p29, %p30
      %p32 = scmp.ne.s32.totalorder %s21, %s24
      %p33 = scmp.eq.s32.totalorder %s16, 3
      %p34 = por %p32, %p33
      %p35 = scmp.ne.s32.totalorder %s24, %s25
      %p36 = scmp.eq.s32.totalorder %s16, 0
      %p37 = por %p35, %p36
      %p38 = scmp.ne.s32.totalorder %s24, %s25
      %p39 = scmp.eq.s32.totalorder %s17, 3
      %p40 = por %p38, %p39
      %p42 = scmp.ne.s32.totalorder %s25, %s41
      %p43 = scmp.eq.s32.totalorder %s17, 0
      %p44 = por %p42, %p43
      %s46 = sadd.s32 %s45, 1
      %p49 = scmp.eq.s32.totalorder %s11, 3
      %p50 = scmp.ne.s32.totalorder %s45, %s47
      %p51 = scmp.eq.s32.totalorder %s11, 0
      %p52 = por %p50, %p51
      %p53 = scmp.ne.s32.totalorder %s45, %s47
      %p54 = scmp.eq.s32.totalorder %s16, 3
      %p55 = por %p53, %p54
      %p56 = scmp.ne.s32.totalorder %s47, %s48
      %p57 = scmp.eq.s32.totalorder %s16, 0
      %p58 = por %p56, %p57
      %p59 = scmp.ne.s32.totalorder %s47, %s48
      %p60 = scmp.eq.s32.totalorder %s17, 3
      %p61 = por %p59, %p60
      %p63 = scmp.ne.s32.totalorder %s48, %s62
      %p64 = scmp.eq.s32.totalorder %s17, 0
      %p65 = por %p63, %p64
      %s66 = ssub.s32 %s11, %s18
      %p67 = scmp.eq.s32.totalorder %s66, 0
      %s69 = sadd.s32 %s68, 1
      %s70 = scalar_select %p67, %s68, %s69
      %p73 = pneg %p67
      %p74 = scmp.eq.s32.totalorder %s11, 3
      %p75 = por %p73, %p74
      %p76 = scmp.ne.s32.totalorder %s68, %s71
      %p77 = scmp.eq.s32.totalorder %s11, 0
      %p78 = por %p76, %p77
      %p79 = scmp.ne.s32.totalorder %s68, %s71
      %p80 = scmp.eq.s32.totalorder %s16, 3
      %p81 = por %p79, %p80
      %p82 = scmp.ne.s32.totalorder %s71, %s72
      %p83 = scmp.eq.s32.totalorder %s16, 0
      %p84 = por %p82, %p83
      %p85 = scmp.ne.s32.totalorder %s71, %s72
      %p86 = scmp.eq.s32.totalorder %s17, 3
      %p87 = por %p85, %p86
      %p89 = scmp.ne.s32.totalorder %s72, %s88
      %p90 = scmp.eq.s32.totalorder %s17, 0
      %p91 = por %p89, %p90
      %s92 = ssub.s32 %s11, %s18
      %p93 = scmp.eq.s32.totalorder %s92, 0
      %s95 = sadd.s32 %s94, 1
      %s96 = scalar_select %p93, %s94, %s95
      %p99 = pneg %p93
      %p100 = scmp.eq.s32.totalorder %s11, 3
      %p101 = por %p99, %p100
      %p102 = scmp.ne.s32.totalorder %s94, %s97
      %p103 = scmp.eq.s32.totalorder %s11, 0
      %p104 = por %p102, %p103
      %p105 = scmp.ne.s32.totalorder %s94, %s97
      %p106 = scmp.eq.s32.totalorder %s16, 3
      %p107 = por %p105, %p106
      %p108 = scmp.ne.s32.totalorder %s97, %s98
      %p109 = scmp.eq.s32.totalorder %s16, 0
      %p110 = por %p108, %p109
      %p111 = scmp.ne.s32.totalorder %s97, %s98
      %p112 = scmp.eq.s32.totalorder %s17, 3
      %p113 = por %p111, %p112
      %p115 = scmp.ne.s32.totalorder %s98, %s114
      %p116 = scmp.eq.s32.totalorder %s17, 0
      %p117 = por %p115, %p116
      %s118 = ssub.s32 %s11, %s18
      %p119 = scmp.eq.s32.totalorder %s118, 0
      %s121 = sadd.s32 %s120, 1
      %s122 = scalar_select %p119, %s120, %s121
      %p125 = pneg %p119
      %p126 = scmp.eq.s32.totalorder %s11, 3
      %p127 = por %p125, %p126
      %p128 = scmp.ne.s32.totalorder %s120, %s123
      %p129 = scmp.eq.s32.totalorder %s11, 0
      %p130 = por %p128, %p129
      %p131 = scmp.ne.s32.totalorder %s120, %s123
      %p132 = scmp.eq.s32.totalorder %s16, 3
      %p133 = por %p131, %p132
      %p134 = scmp.ne.s32.totalorder %s123, %s124
      %p135 = scmp.eq.s32.totalorder %s16, 0
      %p136 = por %p134, %p135
      %p137 = scmp.ne.s32.totalorder %s123, %s124
      %p138 = scmp.eq.s32.totalorder %s17, 3
      %p139 = por %p137, %p138
      %p141 = scmp.ne.s32.totalorder %s124, %s140
      %p142 = scmp.eq.s32.totalorder %s17, 0
      %p143 = por %p141, %p142
      %p144 = scmp.le.s32.totalorder 1, %s11
      %p145 = scmp.lt.s32.totalorder %s11, 5
      %p146 = pnand %p144, %p145
      %p147 = pneg %p146
      // Predicated region
      $region9: #{discriminator_forward.6} parent=5 // pred_check
        _
      $region10: #{discriminator_forward.6} parent=5 // pred_check_branch
        %149 = sbr.rel (%p146) target = $region12
      $region11: #{discriminator_forward.6} parent=5 // pred_region
        %s150 = ssub.s32 %s11, 1
        // Predicated region
        $region13: #{discriminator_forward.6} parent=11 // pred_check
          %p151 = pneg %p58
        $region14: #{discriminator_forward.6} parent=11 // pred_check_branch
          %153 = sbr.rel (%p151) target = $region16
        $region15: #{discriminator_forward.6} parent=11 // pred_region
          _
        $region16: #{discriminator_forward.6} parent=11 // pred_fallthru
          _
      $region12: #{discriminator_forward.6} parent=5 // pred_fallthru
        _
      %p154 = scmp.lt.s32.totalorder %s11, 4
      // Predicated region
      $region17: #{discriminator_forward.6} parent=5 // pred_check
        %p155 = pneg %p154
      $region18: #{discriminator_forward.6} parent=5 // pred_check_branch
        %157 = sbr.rel (%p155) target = $region20
      $region19: #{discriminator_forward.6} parent=5 // pred_region
        // Predicated region
        $region21: #{discriminator_forward.6} parent=19 // pred_check
          %p158 = pneg %p31
        $region22: #{discriminator_forward.6} parent=19 // pred_check_branch
          %160 = sbr.rel (%p158) target = $region24
        $region23: #{discriminator_forward.6} parent=19 // pred_region
          %s161 = smul.u32 64, %s11
          %s162 = ssub.s32 196, %s161
          %p163 = scmp.lt.s32.totalorder %s162, 64
          %s164 = scalar_select %p163, %s162, 64
          %s165 = smul.u32 4, %s164
          %p166 = scmp.lt.s32.totalorder %s161, 195
          %s167 = scalar_select %p166, %s161, 195
          %s168 = smul.addr %s167, 4
          %s169 = scalar_lea.vmem %s0, %s168
          %s170 = smul.u32 64, %s11
          %s171 = ssub.s32 196, %s170
          %p172 = scmp.lt.s32.totalorder %s171, 64
          %s173 = scalar_select %p172, %s171, 64
          %s174 = smul.u32 4, %s173
        $region24: #{discriminator_forward.6} parent=19 // pred_fallthru
          _
      $region20: #{discriminator_forward.6} parent=5 // pred_fallthru
        _
      %p175 = scmp.le.s32.totalorder 1, %s11
      %p176 = scmp.lt.s32.totalorder %s11, 5
      %p177 = pnand %p175, %p176
      %p178 = pneg %p177
      // Predicated region
      $region25: #{discriminator_forward.6} parent=5 // pred_check
        _
      $region26: #{discriminator_forward.6} parent=5 // pred_check_branch
        %180 = sbr.rel (%p177) target = $region28
      $region27: #{discriminator_forward.6} parent=5 // pred_region
        %s181 = ssub.s32 %s11, 1
        %s182 = smul.u32 64, %s16
        %s183 = ssub.s32 196, %s182
        %p184 = scmp.lt.s32.totalorder %s183, 64
        %s185 = scalar_select %p184, %s183, 64
        %s186 = smul.u32 4, %s185
        %p187 = scmp.lt.s32.totalorder %s182, 195
        %s188 = scalar_select %p187, %s182, 195
        %s189 = smul.addr %s188, 4
        %s190 = scalar_lea.vmem %s0, %s189
        %p191 = pneg %p37
        %p192 = pneg %p34
        %p193 = pneg %p58
        %p194 = pneg %p55
        %p195 = pneg %p84
        %p196 = pneg %p81
        %s197 = sand.u32 %s71, 1
        %s198 = sand.u32 %s71, 1
        %s199 = smul.addr %s198, 256
        %s200 = scalar_lea.vmem [#allocation2], %s199
        %p201 = pneg %p110
        %p202 = pneg %p107
        %p203 = scmp.lt.s32.totalorder %s16, 3
        %s204 = scalar_select %p203, %s16, 3
        %s205 = scalar_lea.vmem %s3, %s204
        %p206 = pneg %p136
        %p207 = pneg %p133
        %p208 = scmp.lt.s32.totalorder %s16, 3
        %s209 = scalar_select %p208, %s16, 3
        %s210 = scalar_lea.vmem %s4, %s209
        %s211 = smul.u32 64, %s16
        %s212 = ssub.s32 196, %s211
        %p213 = scmp.lt.s32.totalorder %s212, 64
        %s214 = scalar_select %p213, %s212, 64
        %s215 = smul.u32 4, %s214
        %p216 = scmp.lt.s32.totalorder %s211, 195
        %s217 = scalar_select %p216, %s211, 195
        %s218 = smul.addr %s217, 4
        %s219 = scalar_lea.vmem %s0, %s218
        %s220 = smul.u32 64, %s16
        %s221 = ssub.s32 196, %s220
        %p222 = scmp.lt.s32.totalorder %s221, 64
        %s223 = scalar_select %p222, %s221, 64
        %s224 = smul.u32 4, %s223
        %s225 = smul.u32 64, %s16
        %s226 = ssub.s32 196, %s225
        %p227 = scmp.lt.s32.totalorder %s226, 64
        %s228 = scalar_select %p227, %s226, 64
        %s229 = smul.u32 4, %s228
        %p230 = scmp.lt.s32.totalorder %s16, 3
        %s231 = scalar_select %p230, %s16, 3
        %s232 = scalar_lea.vmem %s3, %s231
        %p233 = scmp.lt.s32.totalorder %s16, 3
        %s234 = scalar_select %p233, %s16, 3
        %s235 = scalar_lea.vmem %s4, %s234
        %v236 = vld [vmem:[%s219] sm:$0xf]
        %v237 = vld [vmem:[%s219 + $0x4] sm:$0xf]
        %v238 = vld [vmem:[%s219 + $0x8] sm:$0xf]
        %v239 = vld [vmem:[%s219 + $0xc] sm:$0xf]
        %v240 = vld [vmem:[%s219 + $0x10] sm:$0xf]
        %v241 = vld [vmem:[%s219 + $0x14] sm:$0xf]
        %v242 = vld [vmem:[%s219 + $0x18] sm:$0xf]
        %v243 = vld [vmem:[%s219 + $0x1c] sm:$0xf]
        %v244 = vld [vmem:[%s219 + $0x20] sm:$0xf]
        %v245 = vld [vmem:[%s219 + $0x24] sm:$0xf]
        %v246 = vld [vmem:[%s219 + $0x28] sm:$0xf]
        %v247 = vld [vmem:[%s219 + $0x2c] sm:$0xf]
        %v248 = vld [vmem:[%s219 + $0x30] sm:$0xf]
        %v249 = vld [vmem:[%s219 + $0x34] sm:$0xf]
        %v250 = vld [vmem:[%s219 + $0x38] sm:$0xf]
        %v251 = vld [vmem:[%s219 + $0x3c] sm:$0xf]
        %v252 = vld [vmem:[%s219 + $0x40] sm:$0xf]
        %v253 = vld [vmem:[%s219 + $0x44] sm:$0xf]
        %v254 = vld [vmem:[%s219 + $0x48] sm:$0xf]
        %v255 = vld [vmem:[%s219 + $0x4c] sm:$0xf]
        %v256 = vld [vmem:[%s219 + $0x50] sm:$0xf]
        %v257 = vld [vmem:[%s219 + $0x54] sm:$0xf]
        %v258 = vld [vmem:[%s219 + $0x58] sm:$0xf]
        %v259 = vld [vmem:[%s219 + $0x5c] sm:$0xf]
        %v260 = vld [vmem:[%s219 + $0x60] sm:$0xf]
        %v261 = vld [vmem:[%s219 + $0x64] sm:$0xf]
        %v262 = vld [vmem:[%s219 + $0x68] sm:$0xf]
        %v263 = vld [vmem:[%s219 + $0x6c] sm:$0xf]
        %v264 = vld [vmem:[%s219 + $0x70] sm:$0xf]
        %v265 = vld [vmem:[%s219 + $0x74] sm:$0xf]
        %v266 = vld [vmem:[%s219 + $0x78] sm:$0xf]
        %v267 = vld [vmem:[%s219 + $0x7c] sm:$0xf]
        %v268 = vld [vmem:[%s219 + $0x80] sm:$0xf]
        %v269 = vld [vmem:[%s219 + $0x84] sm:$0xf]
        %v270 = vld [vmem:[%s219 + $0x88] sm:$0xf]
        %v271 = vld [vmem:[%s219 + $0x8c] sm:$0xf]
        %v272 = vld [vmem:[%s219 + $0x90] sm:$0xf]
        %v273 = vld [vmem:[%s219 + $0x94] sm:$0xf]
        %v274 = vld [vmem:[%s219 + $0x98] sm:$0xf]
        %v275 = vld [vmem:[%s219 + $0x9c] sm:$0xf]
        %v276 = vld [vmem:[%s219 + $0xa0] sm:$0xf]
        %v277 = vld [vmem:[%s219 + $0xa4] sm:$0xf]
        %v278 = vld [vmem:[%s219 + $0xa8] sm:$0xf]
        %v279 = vld [vmem:[%s219 + $0xac] sm:$0xf]
        %v280 = vld [vmem:[%s219 + $0xb0] sm:$0xf]
        %v281 = vld [vmem:[%s219 + $0xb4] sm:$0xf]
        %v282 = vld [vmem:[%s219 + $0xb8] sm:$0xf]
        %v283 = vld [vmem:[%s219 + $0xbc] sm:$0xf]
        %v284 = vld [vmem:[%s219 + $0xc0] sm:$0xf]
        %v285 = vld [vmem:[%s219 + $0xc4] sm:$0xf]
        %v286 = vld [vmem:[%s219 + $0xc8] sm:$0xf]
        %v287 = vld [vmem:[%s219 + $0xcc] sm:$0xf]
        %v288 = vld [vmem:[%s219 + $0xd0] sm:$0xf]
        %v289 = vld [vmem:[%s219 + $0xd4] sm:$0xf]
        %v290 = vld [vmem:[%s219 + $0xd8] sm:$0xf]
        %v291 = vld [vmem:[%s219 + $0xdc] sm:$0xf]
        %v292 = vld [vmem:[%s219 + $0xe0] sm:$0xf]
        %v293 = vld [vmem:[%s219 + $0xe4] sm:$0xf]
        %v294 = vld [vmem:[%s219 + $0xe8] sm:$0xf]
        %v295 = vld [vmem:[%s219 + $0xec] sm:$0xf]
        %v296 = vld [vmem:[%s219 + $0xf0] sm:$0xf]
        %v297 = vld [vmem:[%s219 + $0xf4] sm:$0xf]
        %v298 = vld [vmem:[%s219 + $0xf8] sm:$0xf]
        %v299 = vld [vmem:[%s219 + $0xfc] sm:$0xf]
        %v300 = vunpack.c.l.bf16 %v236
        %v301 = vunpack.c.l.bf16 %v237
        %v302 = vunpack.c.l.bf16 %v238
        %v303 = vunpack.c.l.bf16 %v239
        %v304 = vunpack.c.l.bf16 %v240
        %v305 = vunpack.c.l.bf16 %v241
        %v306 = vunpack.c.l.bf16 %v242
        %v307 = vunpack.c.l.bf16 %v243
        %v308 = vunpack.c.l.bf16 %v244
        %v309 = vunpack.c.l.bf16 %v245
        %v310 = vunpack.c.l.bf16 %v246
        %v311 = vunpack.c.l.bf16 %v247
        %v312 = vunpack.c.l.bf16 %v248
        %v313 = vunpack.c.l.bf16 %v249
        %v314 = vunpack.c.l.bf16 %v250
        %v315 = vunpack.c.l.bf16 %v251
        %v316 = vunpack.c.l.bf16 %v252
        %v317 = vunpack.c.l.bf16 %v253
        %v318 = vunpack.c.l.bf16 %v254
        %v319 = vunpack.c.l.bf16 %v255
        %v320 = vunpack.c.l.bf16 %v256
        %v321 = vunpack.c.l.bf16 %v257
        %v322 = vunpack.c.l.bf16 %v258
        %v323 = vunpack.c.l.bf16 %v259
        %v324 = vunpack.c.l.bf16 %v260
        %v325 = vunpack.c.l.bf16 %v261
        %v326 = vunpack.c.l.bf16 %v262
        %v327 = vunpack.c.l.bf16 %v263
        %v328 = vunpack.c.l.bf16 %v264
        %v329 = vunpack.c.l.bf16 %v265
        %v330 = vunpack.c.l.bf16 %v266
        %v331 = vunpack.c.l.bf16 %v267
        %v332 = vunpack.c.l.bf16 %v268
        %v333 = vunpack.c.l.bf16 %v269
        %v334 = vunpack.c.l.bf16 %v270
        %v335 = vunpack.c.l.bf16 %v271
        %v336 = vunpack.c.l.bf16 %v272
        %v337 = vunpack.c.l.bf16 %v273
        %v338 = vunpack.c.l.bf16 %v274
        %v339 = vunpack.c.l.bf16 %v275
        %v340 = vunpack.c.l.bf16 %v276
        %v341 = vunpack.c.l.bf16 %v277
        %v342 = vunpack.c.l.bf16 %v278
        %v343 = vunpack.c.l.bf16 %v279
        %v344 = vunpack.c.l.bf16 %v280
        %v345 = vunpack.c.l.bf16 %v281
        %v346 = vunpack.c.l.bf16 %v282
        %v347 = vunpack.c.l.bf16 %v283
        %v348 = vunpack.c.l.bf16 %v284
        %v349 = vunpack.c.l.bf16 %v285
        %v350 = vunpack.c.l.bf16 %v286
        %v351 = vunpack.c.l.bf16 %v287
        %v352 = vunpack.c.l.bf16 %v288
        %v353 = vunpack.c.l.bf16 %v289
        %v354 = vunpack.c.l.bf16 %v290
        %v355 = vunpack.c.l.bf16 %v291
        %v356 = vunpack.c.l.bf16 %v292
        %v357 = vunpack.c.l.bf16 %v293
        %v358 = vunpack.c.l.bf16 %v294
        %v359 = vunpack.c.l.bf16 %v295
        %v360 = vunpack.c.l.bf16 %v296
        %v361 = vunpack.c.l.bf16 %v297
        %v362 = vunpack.c.l.bf16 %v298
        %v363 = vunpack.c.l.bf16 %v299
        %v364 = vmul.f32 %v300, 0.2
        %v365 = vmul.f32 %v301, 0.2
        %v366 = vmul.f32 %v302, 0.2
        %v367 = vmul.f32 %v303, 0.2
        %v368 = vmul.f32 %v304, 0.2
        %v369 = vmul.f32 %v305, 0.2
        %v370 = vmul.f32 %v306, 0.2
        %v371 = vmul.f32 %v307, 0.2
        %v372 = vmul.f32 %v308, 0.2
        %v373 = vmul.f32 %v309, 0.2
        %v374 = vmul.f32 %v310, 0.2
        %v375 = vmul.f32 %v311, 0.2
        %v376 = vmul.f32 %v312, 0.2
        %v377 = vmul.f32 %v313, 0.2
        %v378 = vmul.f32 %v314, 0.2
        %v379 = vmul.f32 %v315, 0.2
        %v380 = vmul.f32 %v316, 0.2
        %v381 = vmul.f32 %v317, 0.2
        %v382 = vmul.f32 %v318, 0.2
        %v383 = vmul.f32 %v319, 0.2
        %v384 = vmul.f32 %v320, 0.2
        %v385 = vmul.f32 %v321, 0.2
        %v386 = vmul.f32 %v322, 0.2
        %v387 = vmul.f32 %v323, 0.2
        %v388 = vmul.f32 %v324, 0.2
        %v389 = vmul.f32 %v325, 0.2
        %v390 = vmul.f32 %v326, 0.2
        %v391 = vmul.f32 %v327, 0.2
        %v392 = vmul.f32 %v328, 0.2
        %v393 = vmul.f32 %v329, 0.2
        %v394 = vmul.f32 %v330, 0.2
        %v395 = vmul.f32 %v331, 0.2
        %v396 = vmul.f32 %v332, 0.2
        %v397 = vmul.f32 %v333, 0.2
        %v398 = vmul.f32 %v334, 0.2
        %v399 = vmul.f32 %v335, 0.2
        %v400 = vmul.f32 %v336, 0.2
        %v401 = vmul.f32 %v337, 0.2
        %v402 = vmul.f32 %v338, 0.2
        %v403 = vmul.f32 %v339, 0.2
        %v404 = vmul.f32 %v340, 0.2
        %v405 = vmul.f32 %v341, 0.2
        %v406 = vmul.f32 %v342, 0.2
        %v407 = vmul.f32 %v343, 0.2
        %v408 = vmul.f32 %v344, 0.2
        %v409 = vmul.f32 %v345, 0.2
        %v410 = vmul.f32 %v346, 0.2
        %v411 = vmul.f32 %v347, 0.2
        %v412 = vmul.f32 %v348, 0.2
        %v413 = vmul.f32 %v349, 0.2
        %v414 = vmul.f32 %v350, 0.2
        %v415 = vmul.f32 %v351, 0.2
        %v416 = vmul.f32 %v352, 0.2
        %v417 = vmul.f32 %v353, 0.2
        %v418 = vmul.f32 %v354, 0.2
        %v419 = vmul.f32 %v355, 0.2
        %v420 = vmul.f32 %v356, 0.2
        %v421 = vmul.f32 %v357, 0.2
        %v422 = vmul.f32 %v358, 0.2
        %v423 = vmul.f32 %v359, 0.2
        %v424 = vmul.f32 %v360, 0.2
        %v425 = vmul.f32 %v361, 0.2
        %v426 = vmul.f32 %v362, 0.2
        %v427 = vmul.f32 %v363, 0.2
        %v428 = vmax.f32 %v300, %v364
        %v429 = vmax.f32 %v301, %v365
        %v430 = vmax.f32 %v302, %v366
        %v431 = vmax.f32 %v303, %v367
        %v432 = vmax.f32 %v304, %v368
        %v433 = vmax.f32 %v305, %v369
        %v434 = vmax.f32 %v306, %v370
        %v435 = vmax.f32 %v307, %v371
        %v436 = vmax.f32 %v308, %v372
        %v437 = vmax.f32 %v309, %v373
        %v438 = vmax.f32 %v310, %v374
        %v439 = vmax.f32 %v311, %v375
        %v440 = vmax.f32 %v312, %v376
        %v441 = vmax.f32 %v313, %v377
        %v442 = vmax.f32 %v314, %v378
        %v443 = vmax.f32 %v315, %v379
        %v444 = vmax.f32 %v316, %v380
        %v445 = vmax.f32 %v317, %v381
        %v446 = vmax.f32 %v318, %v382
        %v447 = vmax.f32 %v319, %v383
        %v448 = vmax.f32 %v320, %v384
        %v449 = vmax.f32 %v321, %v385
        %v450 = vmax.f32 %v322, %v386
        %v451 = vmax.f32 %v323, %v387
        %v452 = vmax.f32 %v324, %v388
        %v453 = vmax.f32 %v325, %v389
        %v454 = vmax.f32 %v326, %v390
        %v455 = vmax.f32 %v327, %v391
        %v456 = vmax.f32 %v328, %v392
        %v457 = vmax.f32 %v329, %v393
        %v458 = vmax.f32 %v330, %v394
        %v459 = vmax.f32 %v331, %v395
        %v460 = vmax.f32 %v332, %v396
        %v461 = vmax.f32 %v333, %v397
        %v462 = vmax.f32 %v334, %v398
        %v463 = vmax.f32 %v335, %v399
        %v464 = vmax.f32 %v336, %v400
        %v465 = vmax.f32 %v337, %v401
        %v466 = vmax.f32 %v338, %v402
        %v467 = vmax.f32 %v339, %v403
        %v468 = vmax.f32 %v340, %v404
        %v469 = vmax.f32 %v341, %v405
        %v470 = vmax.f32 %v342, %v406
        %v471 = vmax.f32 %v343, %v407
        %v472 = vmax.f32 %v344, %v408
        %v473 = vmax.f32 %v345, %v409
        %v474 = vmax.f32 %v346, %v410
        %v475 = vmax.f32 %v347, %v411
        %v476 = vmax.f32 %v348, %v412
        %v477 = vmax.f32 %v349, %v413
        %v478 = vmax.f32 %v350, %v414
        %v479 = vmax.f32 %v351, %v415
        %v480 = vmax.f32 %v352, %v416
        %v481 = vmax.f32 %v353, %v417
        %v482 = vmax.f32 %v354, %v418
        %v483 = vmax.f32 %v355, %v419
        %v484 = vmax.f32 %v356, %v420
        %v485 = vmax.f32 %v357, %v421
        %v486 = vmax.f32 %v358, %v422
        %v487 = vmax.f32 %v359, %v423
        %v488 = vmax.f32 %v360, %v424
        %v489 = vmax.f32 %v361, %v425
        %v490 = vmax.f32 %v362, %v426
        %v491 = vmax.f32 %v363, %v427
        %v492 = vpack.c.bf16 %v429, %v428
        %v493 = vpack.c.bf16 %v431, %v430
        %v494 = vpack.c.bf16 %v433, %v432
        %v495 = vpack.c.bf16 %v435, %v434
        %v496 = vpack.c.bf16 %v437, %v436
        %v497 = vpack.c.bf16 %v439, %v438
        %v498 = vpack.c.bf16 %v441, %v440
        %v499 = vpack.c.bf16 %v443, %v442
        %v500 = vpack.c.bf16 %v445, %v444
        %v501 = vpack.c.bf16 %v447, %v446
        %v502 = vpack.c.bf16 %v449, %v448
        %v503 = vpack.c.bf16 %v451, %v450
        %v504 = vpack.c.bf16 %v453, %v452
        %v505 = vpack.c.bf16 %v455, %v454
        %v506 = vpack.c.bf16 %v457, %v456
        %v507 = vpack.c.bf16 %v459, %v458
        %v508 = vpack.c.bf16 %v461, %v460
        %v509 = vpack.c.bf16 %v463, %v462
        %v510 = vpack.c.bf16 %v465, %v464
        %v511 = vpack.c.bf16 %v467, %v466
        %v512 = vpack.c.bf16 %v469, %v468
        %v513 = vpack.c.bf16 %v471, %v470
        %v514 = vpack.c.bf16 %v473, %v472
        %v515 = vpack.c.bf16 %v475, %v474
        %v516 = vpack.c.bf16 %v477, %v476
        %v517 = vpack.c.bf16 %v479, %v478
        %v518 = vpack.c.bf16 %v481, %v480
        %v519 = vpack.c.bf16 %v483, %v482
        %v520 = vpack.c.bf16 %v485, %v484
        %v521 = vpack.c.bf16 %v487, %v486
        %v522 = vpack.c.bf16 %v489, %v488
        %v523 = vpack.c.bf16 %v491, %v490
        %v524 = vld [vmem:[%s1] sm:$0xf]
        %v525 = vld [vmem:[%s1 + $0x4] sm:$0xf]
        %v526 = vld [vmem:[%s1 + $0x8] sm:$0xf]
        %v527 = vld [vmem:[%s1 + $0xc] sm:$0xf]
        %v528 = vld [vmem:[%s1 + $0x10] sm:$0xf]
        %v529 = vld [vmem:[%s1 + $0x14] sm:$0xf]
        %v530 = vld [vmem:[%s1 + $0x18] sm:$0xf]
        %v531 = vld [vmem:[%s1 + $0x1c] sm:$0xf]
        %v532 = vld [vmem:[%s1 + $0x20] sm:$0xf]
        %v533 = vld [vmem:[%s1 + $0x24] sm:$0xf]
        %v534 = vld [vmem:[%s1 + $0x28] sm:$0xf]
        %v535 = vld [vmem:[%s1 + $0x2c] sm:$0xf]
        %v536 = vld [vmem:[%s1 + $0x30] sm:$0xf]
        %v537 = vld [vmem:[%s1 + $0x34] sm:$0xf]
        %v538 = vld [vmem:[%s1 + $0x38] sm:$0xf]
        %v539 = vld [vmem:[%s1 + $0x3c] sm:$0xf]
        %v556 = vunpack.c.l.b16 %v524
        %v557 = vunpack.c.l.b16 %v525
        %v558 = vunpack.c.l.b16 %v526
        %v559 = vunpack.c.l.b16 %v527
        %v560 = vunpack.c.l.b16 %v528
        %v561 = vunpack.c.l.b16 %v529
        %v562 = vunpack.c.l.b16 %v530
        %v563 = vunpack.c.l.b16 %v531
        %v564 = vunpack.c.l.b16 %v532
        %v565 = vunpack.c.l.b16 %v533
        %v566 = vunpack.c.l.b16 %v534
        %v567 = vunpack.c.l.b16 %v535
        %v568 = vunpack.c.l.b16 %v536
        %v569 = vunpack.c.l.b16 %v537
        %v570 = vunpack.c.l.b16 %v538
        %v571 = vunpack.c.l.b16 %v539
        %v572 = vpack.c.b16 %v557, %v556
        %v573 = vpack.c.b16 %v559, %v558
        %v574 = vpack.c.b16 %v561, %v560
        %v575 = vpack.c.b16 %v563, %v562
        %v576 = vpack.c.b16 %v565, %v564
        %v577 = vpack.c.b16 %v567, %v566
        %v578 = vpack.c.b16 %v569, %v568
        %v579 = vpack.c.b16 %v571, %v570
        %588 = vmatpush.bf16.msra.mxu0 %v579
        %589 = vmatpush.bf16.msra.mxu0 %v578
        %590 = vmatpush.bf16.msra.mxu0 %v577
        %591 = vmatpush.bf16.msra.mxu0 %v576
        %592 = vmatpush.bf16.msra.mxu0 %v575
        %593 = vmatpush.bf16.msra.mxu0 %v574
        %594 = vmatpush.bf16.msra.mxu0 %v573
        %595 = vmatpush.bf16.msra.mxu0 %v572
        %596 = vmatmul.bf16.gmra.mxu0 %v492
        %v597 = vpop.f32.mrf.mxu0
        %v598 = vadd.f32 0.0, %v597
        %v599 = vpop.f32.mrf.mxu0
        %v600 = vadd.f32 0.0, %v599
        %601 = vmatmul.bf16.gmra.mxu0 %v493
        %v602 = vpop.f32.mrf.mxu0
        %v603 = vadd.f32 0.0, %v602
        %v604 = vpop.f32.mrf.mxu0
        %v605 = vadd.f32 0.0, %v604
        %606 = vmatmul.bf16.gmra.mxu0 %v494
        %v607 = vpop.f32.mrf.mxu0
        %v608 = vadd.f32 0.0, %v607
        %v609 = vpop.f32.mrf.mxu0
        %v610 = vadd.f32 0.0, %v609
        %611 = vmatmul.bf16.gmra.mxu0 %v495
        %v612 = vpop.f32.mrf.mxu0
        %v613 = vadd.f32 0.0, %v612
        %v614 = vpop.f32.mrf.mxu0
        %v615 = vadd.f32 0.0, %v614
        %616 = vmatmul.bf16.gmra.mxu0 %v496
        %v617 = vpop.f32.mrf.mxu0
        %v618 = vadd.f32 0.0, %v617
        %v619 = vpop.f32.mrf.mxu0
        %v620 = vadd.f32 0.0, %v619
        %621 = vmatmul.bf16.gmra.mxu0 %v497
        %v622 = vpop.f32.mrf.mxu0
        %v623 = vadd.f32 0.0, %v622
        %v624 = vpop.f32.mrf.mxu0
        %v625 = vadd.f32 0.0, %v624
        %626 = vmatmul.bf16.gmra.mxu0 %v498
        %v627 = vpop.f32.mrf.mxu0
        %v628 = vadd.f32 0.0, %v627
        %v629 = vpop.f32.mrf.mxu0
        %v630 = vadd.f32 0.0, %v629
        %631 = vmatmul.bf16.gmra.mxu0 %v499
        %v632 = vpop.f32.mrf.mxu0
        %v633 = vadd.f32 0.0, %v632
        %v634 = vpop.f32.mrf.mxu0
        %v635 = vadd.f32 0.0, %v634
        %636 = vmatmul.bf16.gmra.mxu0 %v500
        %v637 = vpop.f32.mrf.mxu0
        %v638 = vadd.f32 0.0, %v637
        %v639 = vpop.f32.mrf.mxu0
        %v640 = vadd.f32 0.0, %v639
        %641 = vmatmul.bf16.gmra.mxu0 %v501
        %v642 = vpop.f32.mrf.mxu0
        %v643 = vadd.f32 0.0, %v642
        %v644 = vpop.f32.mrf.mxu0
        %v645 = vadd.f32 0.0, %v644
        %646 = vmatmul.bf16.gmra.mxu0 %v502
        %v647 = vpop.f32.mrf.mxu0
        %v648 = vadd.f32 0.0, %v647
        %v649 = vpop.f32.mrf.mxu0
        %v650 = vadd.f32 0.0, %v649
        %651 = vmatmul.bf16.gmra.mxu0 %v503
        %v652 = vpop.f32.mrf.mxu0
        %v653 = vadd.f32 0.0, %v652
        %v654 = vpop.f32.mrf.mxu0
        %v655 = vadd.f32 0.0, %v654
        %656 = vmatmul.bf16.gmra.mxu0 %v504
        %v657 = vpop.f32.mrf.mxu0
        %v658 = vadd.f32 0.0, %v657
        %v659 = vpop.f32.mrf.mxu0
        %v660 = vadd.f32 0.0, %v659
        %661 = vmatmul.bf16.gmra.mxu0 %v505
        %v662 = vpop.f32.mrf.mxu0
        %v663 = vadd.f32 0.0, %v662
        %v664 = vpop.f32.mrf.mxu0
        %v665 = vadd.f32 0.0, %v664
        %666 = vmatmul.bf16.gmra.mxu0 %v506
        %v667 = vpop.f32.mrf.mxu0
        %v668 = vadd.f32 0.0, %v667
        %v669 = vpop.f32.mrf.mxu0
        %v670 = vadd.f32 0.0, %v669
        %671 = vmatmul.bf16.gmra.mxu0 %v507
        %v672 = vpop.f32.mrf.mxu0
        %v673 = vadd.f32 0.0, %v672
        %v674 = vpop.f32.mrf.mxu0
        %v675 = vadd.f32 0.0, %v674
        %676 = vmatmul.bf16.gmra.mxu0 %v508
        %v677 = vpop.f32.mrf.mxu0
        %v678 = vadd.f32 0.0, %v677
        %v679 = vpop.f32.mrf.mxu0
        %v680 = vadd.f32 0.0, %v679
        %681 = vmatmul.bf16.gmra.mxu0 %v509
        %v682 = vpop.f32.mrf.mxu0
        %v683 = vadd.f32 0.0, %v682
        %v684 = vpop.f32.mrf.mxu0
        %v685 = vadd.f32 0.0, %v684
        %686 = vmatmul.bf16.gmra.mxu0 %v510
        %v687 = vpop.f32.mrf.mxu0
        %v688 = vadd.f32 0.0, %v687
        %v689 = vpop.f32.mrf.mxu0
        %v690 = vadd.f32 0.0, %v689
        %691 = vmatmul.bf16.gmra.mxu0 %v511
        %v692 = vpop.f32.mrf.mxu0
        %v693 = vadd.f32 0.0, %v692
        %v694 = vpop.f32.mrf.mxu0
        %v695 = vadd.f32 0.0, %v694
        %696 = vmatmul.bf16.gmra.mxu0 %v512
        %v697 = vpop.f32.mrf.mxu0
        %v698 = vadd.f32 0.0, %v697
        %v699 = vpop.f32.mrf.mxu0
        %v700 = vadd.f32 0.0, %v699
        %701 = vmatmul.bf16.gmra.mxu0 %v513
        %v702 = vpop.f32.mrf.mxu0
        %v703 = vadd.f32 0.0, %v702
        %v704 = vpop.f32.mrf.mxu0
        %v705 = vadd.f32 0.0, %v704
        %706 = vmatmul.bf16.gmra.mxu0 %v514
        %v707 = vpop.f32.mrf.mxu0
        %v708 = vadd.f32 0.0, %v707
        %v709 = vpop.f32.mrf.mxu0
        %v710 = vadd.f32 0.0, %v709
        %711 = vmatmul.bf16.gmra.mxu0 %v515
        %v712 = vpop.f32.mrf.mxu0
        %v713 = vadd.f32 0.0, %v712
        %v714 = vpop.f32.mrf.mxu0
        %v715 = vadd.f32 0.0, %v714
        %716 = vmatmul.bf16.gmra.mxu0 %v516
        %v717 = vpop.f32.mrf.mxu0
        %v718 = vadd.f32 0.0, %v717
        %v719 = vpop.f32.mrf.mxu0
        %v720 = vadd.f32 0.0, %v719
        %721 = vmatmul.bf16.gmra.mxu0 %v517
        %v722 = vpop.f32.mrf.mxu0
        %v723 = vadd.f32 0.0, %v722
        %v724 = vpop.f32.mrf.mxu0
        %v725 = vadd.f32 0.0, %v724
        %726 = vmatmul.bf16.gmra.mxu0 %v518
        %v727 = vpop.f32.mrf.mxu0
        %v728 = vadd.f32 0.0, %v727
        %v729 = vpop.f32.mrf.mxu0
        %v730 = vadd.f32 0.0, %v729
        %731 = vmatmul.bf16.gmra.mxu0 %v519
        %v732 = vpop.f32.mrf.mxu0
        %v733 = vadd.f32 0.0, %v732
        %v734 = vpop.f32.mrf.mxu0
        %v735 = vadd.f32 0.0, %v734
        %736 = vmatmul.bf16.gmra.mxu0 %v520
        %v737 = vpop.f32.mrf.mxu0
        %v738 = vadd.f32 0.0, %v737
        %v739 = vpop.f32.mrf.mxu0
        %v740 = vadd.f32 0.0, %v739
        %741 = vmatmul.bf16.gmra.mxu0 %v521
        %v742 = vpop.f32.mrf.mxu0
        %v743 = vadd.f32 0.0, %v742
        %v744 = vpop.f32.mrf.mxu0
        %v745 = vadd.f32 0.0, %v744
        %746 = vmatmul.bf16.gmra.mxu0 %v522
        %v747 = vpop.f32.mrf.mxu0
        %v748 = vadd.f32 0.0, %v747
        %v749 = vpop.f32.mrf.mxu0
        %v750 = vadd.f32 0.0, %v749
        %751 = vmatmul.bf16.gmra.mxu0 %v523
        %v752 = vpop.f32.mrf.mxu0
        %v753 = vadd.f32 0.0, %v752
        %v754 = vpop.f32.mrf.mxu0
        %v755 = vadd.f32 0.0, %v754
        %756 = vdwg.mxu0
        %v757 = vlaneseq
        %v758 = vshrl.u32 %v757, 7
        %v759 = vadd.s32 %v758, 8
        %v760 = vadd.s32 %v758, 16
        %v761 = vadd.s32 %v758, 24
        %v762 = vadd.s32 %v758, 32
        %v763 = vadd.s32 %v758, 40
        %v764 = vadd.s32 %v758, 48
        %v765 = vadd.s32 %v758, 56
        %v766 = vadd.s32 %v758, 64
        %v767 = vadd.s32 %v758, 72
        %v768 = vadd.s32 %v758, 80
        %v769 = vadd.s32 %v758, 88
        %v770 = vadd.s32 %v758, 96
        %v771 = vadd.s32 %v758, 104
        %v772 = vadd.s32 %v758, 112
        %v773 = vadd.s32 %v758, 120
        %v774 = vadd.s32 %v758, 128
        %v775 = vadd.s32 %v758, 136
        %v776 = vadd.s32 %v758, 144
        %v777 = vadd.s32 %v758, 152
        %v778 = vadd.s32 %v758, 160
        %v779 = vadd.s32 %v758, 168
        %v780 = vadd.s32 %v758, 176
        %v781 = vadd.s32 %v758, 184
        %v782 = vadd.s32 %v758, 192
        %v783 = vadd.s32 %v758, 200
        %v784 = vadd.s32 %v758, 208
        %v785 = vadd.s32 %v758, 216
        %v786 = vadd.s32 %v758, 224
        %v787 = vadd.s32 %v758, 232
        %v788 = vadd.s32 %v758, 240
        %v789 = vadd.s32 %v758, 248
        %v790 = vadd.s32 %v758, 256
        %v791 = vadd.s32 %v758, 264
        %v792 = vadd.s32 %v758, 272
        %v793 = vadd.s32 %v758, 280
        %v794 = vadd.s32 %v758, 288
        %v795 = vadd.s32 %v758, 296
        %v796 = vadd.s32 %v758, 304
        %v797 = vadd.s32 %v758, 312
        %v798 = vadd.s32 %v758, 320
        %v799 = vadd.s32 %v758, 328
        %v800 = vadd.s32 %v758, 336
        %v801 = vadd.s32 %v758, 344
        %v802 = vadd.s32 %v758, 352
        %v803 = vadd.s32 %v758, 360
        %v804 = vadd.s32 %v758, 368
        %v805 = vadd.s32 %v758, 376
        %v806 = vadd.s32 %v758, 384
        %v807 = vadd.s32 %v758, 392
        %v808 = vadd.s32 %v758, 400
        %v809 = vadd.s32 %v758, 408
        %v810 = vadd.s32 %v758, 416
        %v811 = vadd.s32 %v758, 424
        %v812 = vadd.s32 %v758, 432
        %v813 = vadd.s32 %v758, 440
        %v814 = vadd.s32 %v758, 448
        %v815 = vadd.s32 %v758, 456
        %v816 = vadd.s32 %v758, 464
        %v817 = vadd.s32 %v758, 472
        %v818 = vadd.s32 %v758, 480
        %v819 = vadd.s32 %v758, 488
        %v820 = vadd.s32 %v758, 496
        %v821 = vadd.s32 %v758, 504
        %s822 = smul.u32 %s16, 512
        %v823 = vstv %s822
        %v824 = vadd.s32 %v758, %v823
        %v825 = vadd.s32 %v759, %v823
        %v826 = vadd.s32 %v760, %v823
        %v827 = vadd.s32 %v761, %v823
        %v828 = vadd.s32 %v762, %v823
        %v829 = vadd.s32 %v763, %v823
        %v830 = vadd.s32 %v764, %v823
        %v831 = vadd.s32 %v765, %v823
        %v832 = vadd.s32 %v766, %v823
        %v833 = vadd.s32 %v767, %v823
        %v834 = vadd.s32 %v768, %v823
        %v835 = vadd.s32 %v769, %v823
        %v836 = vadd.s32 %v770, %v823
        %v837 = vadd.s32 %v771, %v823
        %v838 = vadd.s32 %v772, %v823
        %v839 = vadd.s32 %v773, %v823
        %v840 = vadd.s32 %v774, %v823
        %v841 = vadd.s32 %v775, %v823
        %v842 = vadd.s32 %v776, %v823
        %v843 = vadd.s32 %v777, %v823
        %v844 = vadd.s32 %v778, %v823
        %v845 = vadd.s32 %v779, %v823
        %v846 = vadd.s32 %v780, %v823
        %v847 = vadd.s32 %v781, %v823
        %v848 = vadd.s32 %v782, %v823
        %v849 = vadd.s32 %v783, %v823
        %v850 = vadd.s32 %v784, %v823
        %v851 = vadd.s32 %v785, %v823
        %v852 = vadd.s32 %v786, %v823
        %v853 = vadd.s32 %v787, %v823
        %v854 = vadd.s32 %v788, %v823
        %v855 = vadd.s32 %v789, %v823
        %v856 = vadd.s32 %v790, %v823
        %v857 = vadd.s32 %v791, %v823
        %v858 = vadd.s32 %v792, %v823
        %v859 = vadd.s32 %v793, %v823
        %v860 = vadd.s32 %v794, %v823
        %v861 = vadd.s32 %v795, %v823
        %v862 = vadd.s32 %v796, %v823
        %v863 = vadd.s32 %v797, %v823
        %v864 = vadd.s32 %v798, %v823
        %v865 = vadd.s32 %v799, %v823
        %v866 = vadd.s32 %v800, %v823
        %v867 = vadd.s32 %v801, %v823
        %v868 = vadd.s32 %v802, %v823
        %v869 = vadd.s32 %v803, %v823
        %v870 = vadd.s32 %v804, %v823
        %v871 = vadd.s32 %v805, %v823
        %v872 = vadd.s32 %v806, %v823
        %v873 = vadd.s32 %v807, %v823
        %v874 = vadd.s32 %v808, %v823
        %v875 = vadd.s32 %v809, %v823
        %v876 = vadd.s32 %v810, %v823
        %v877 = vadd.s32 %v811, %v823
        %v878 = vadd.s32 %v812, %v823
        %v879 = vadd.s32 %v813, %v823
        %v880 = vadd.s32 %v814, %v823
        %v881 = vadd.s32 %v815, %v823
        %v882 = vadd.s32 %v816, %v823
        %v883 = vadd.s32 %v817, %v823
        %v884 = vadd.s32 %v818, %v823
        %v885 = vadd.s32 %v819, %v823
        %v886 = vadd.s32 %v820, %v823
        %v887 = vadd.s32 %v821, %v823
        %vm888 = vcmp.lt.s32.totalorder %v824, 1568
        %vm889 = vcmp.lt.s32.totalorder %v825, 1568
        %vm890 = vcmp.lt.s32.totalorder %v826, 1568
        %vm891 = vcmp.lt.s32.totalorder %v827, 1568
        %vm892 = vcmp.lt.s32.totalorder %v828, 1568
        %vm893 = vcmp.lt.s32.totalorder %v829, 1568
        %vm894 = vcmp.lt.s32.totalorder %v830, 1568
        %vm895 = vcmp.lt.s32.totalorder %v831, 1568
        %vm896 = vcmp.lt.s32.totalorder %v832, 1568
        %vm897 = vcmp.lt.s32.totalorder %v833, 1568
        %vm898 = vcmp.lt.s32.totalorder %v834, 1568
        %vm899 = vcmp.lt.s32.totalorder %v835, 1568
        %vm900 = vcmp.lt.s32.totalorder %v836, 1568
        %vm901 = vcmp.lt.s32.totalorder %v837, 1568
        %vm902 = vcmp.lt.s32.totalorder %v838, 1568
        %vm903 = vcmp.lt.s32.totalorder %v839, 1568
        %vm904 = vcmp.lt.s32.totalorder %v840, 1568
        %vm905 = vcmp.lt.s32.totalorder %v841, 1568
        %vm906 = vcmp.lt.s32.totalorder %v842, 1568
        %vm907 = vcmp.lt.s32.totalorder %v843, 1568
        %vm908 = vcmp.lt.s32.totalorder %v844, 1568
        %vm909 = vcmp.lt.s32.totalorder %v845, 1568
        %vm910 = vcmp.lt.s32.totalorder %v846, 1568
        %vm911 = vcmp.lt.s32.totalorder %v847, 1568
        %vm912 = vcmp.lt.s32.totalorder %v848, 1568
        %vm913 = vcmp.lt.s32.totalorder %v849, 1568
        %vm914 = vcmp.lt.s32.totalorder %v850, 1568
        %vm915 = vcmp.lt.s32.totalorder %v851, 1568
        %vm916 = vcmp.lt.s32.totalorder %v852, 1568
        %vm917 = vcmp.lt.s32.totalorder %v853, 1568
        %vm918 = vcmp.lt.s32.totalorder %v854, 1568
        %vm919 = vcmp.lt.s32.totalorder %v855, 1568
        %vm920 = vcmp.lt.s32.totalorder %v856, 1568
        %vm921 = vcmp.lt.s32.totalorder %v857, 1568
        %vm922 = vcmp.lt.s32.totalorder %v858, 1568
        %vm923 = vcmp.lt.s32.totalorder %v859, 1568
        %vm924 = vcmp.lt.s32.totalorder %v860, 1568
        %vm925 = vcmp.lt.s32.totalorder %v861, 1568
        %vm926 = vcmp.lt.s32.totalorder %v862, 1568
        %vm927 = vcmp.lt.s32.totalorder %v863, 1568
        %vm928 = vcmp.lt.s32.totalorder %v864, 1568
        %vm929 = vcmp.lt.s32.totalorder %v865, 1568
        %vm930 = vcmp.lt.s32.totalorder %v866, 1568
        %vm931 = vcmp.lt.s32.totalorder %v867, 1568
        %vm932 = vcmp.lt.s32.totalorder %v868, 1568
        %vm933 = vcmp.lt.s32.totalorder %v869, 1568
        %vm934 = vcmp.lt.s32.totalorder %v870, 1568
        %vm935 = vcmp.lt.s32.totalorder %v871, 1568
        %vm936 = vcmp.lt.s32.totalorder %v872, 1568
        %vm937 = vcmp.lt.s32.totalorder %v873, 1568
        %vm938 = vcmp.lt.s32.totalorder %v874, 1568
        %vm939 = vcmp.lt.s32.totalorder %v875, 1568
        %vm940 = vcmp.lt.s32.totalorder %v876, 1568
        %vm941 = vcmp.lt.s32.totalorder %v877, 1568
        %vm942 = vcmp.lt.s32.totalorder %v878, 1568
        %vm943 = vcmp.lt.s32.totalorder %v879, 1568
        %vm944 = vcmp.lt.s32.totalorder %v880, 1568
        %vm945 = vcmp.lt.s32.totalorder %v881, 1568
        %vm946 = vcmp.lt.s32.totalorder %v882, 1568
        %vm947 = vcmp.lt.s32.totalorder %v883, 1568
        %vm948 = vcmp.lt.s32.totalorder %v884, 1568
        %vm949 = vcmp.lt.s32.totalorder %v885, 1568
        %vm950 = vcmp.lt.s32.totalorder %v886, 1568
        %vm951 = vcmp.lt.s32.totalorder %v887, 1568
        %v952 = vsel %vm888, 1, 0
        %v953 = vsel %vm889, 1, 0
        %v954 = vsel %vm890, 1, 0
        %v955 = vsel %vm891, 1, 0
        %v956 = vsel %vm892, 1, 0
        %v957 = vsel %vm893, 1, 0
        %v958 = vsel %vm894, 1, 0
        %v959 = vsel %vm895, 1, 0
        %v960 = vsel %vm896, 1, 0
        %v961 = vsel %vm897, 1, 0
        %v962 = vsel %vm898, 1, 0
        %v963 = vsel %vm899, 1, 0
        %v964 = vsel %vm900, 1, 0
        %v965 = vsel %vm901, 1, 0
        %v966 = vsel %vm902, 1, 0
        %v967 = vsel %vm903, 1, 0
        %v968 = vsel %vm904, 1, 0
        %v969 = vsel %vm905, 1, 0
        %v970 = vsel %vm906, 1, 0
        %v971 = vsel %vm907, 1, 0
        %v972 = vsel %vm908, 1, 0
        %v973 = vsel %vm909, 1, 0
        %v974 = vsel %vm910, 1, 0
        %v975 = vsel %vm911, 1, 0
        %v976 = vsel %vm912, 1, 0
        %v977 = vsel %vm913, 1, 0
        %v978 = vsel %vm914, 1, 0
        %v979 = vsel %vm915, 1, 0
        %v980 = vsel %vm916, 1, 0
        %v981 = vsel %vm917, 1, 0
        %v982 = vsel %vm918, 1, 0
        %v983 = vsel %vm919, 1, 0
        %v984 = vsel %vm920, 1, 0
        %v985 = vsel %vm921, 1, 0
        %v986 = vsel %vm922, 1, 0
        %v987 = vsel %vm923, 1, 0
        %v988 = vsel %vm924, 1, 0
        %v989 = vsel %vm925, 1, 0
        %v990 = vsel %vm926, 1, 0
        %v991 = vsel %vm927, 1, 0
        %v992 = vsel %vm928, 1, 0
        %v993 = vsel %vm929, 1, 0
        %v994 = vsel %vm930, 1, 0
        %v995 = vsel %vm931, 1, 0
        %v996 = vsel %vm932, 1, 0
        %v997 = vsel %vm933, 1, 0
        %v998 = vsel %vm934, 1, 0
        %v999 = vsel %vm935, 1, 0
        %v1000 = vsel %vm936, 1, 0
        %v1001 = vsel %vm937, 1, 0
        %v1002 = vsel %vm938, 1, 0
        %v1003 = vsel %vm939, 1, 0
        %v1004 = vsel %vm940, 1, 0
        %v1005 = vsel %vm941, 1, 0
        %v1006 = vsel %vm942, 1, 0
        %v1007 = vsel %vm943, 1, 0
        %v1008 = vsel %vm944, 1, 0
        %v1009 = vsel %vm945, 1, 0
        %v1010 = vsel %vm946, 1, 0
        %v1011 = vsel %vm947, 1, 0
        %v1012 = vsel %vm948, 1, 0
        %v1013 = vsel %vm949, 1, 0
        %v1014 = vsel %vm950, 1, 0
        %v1015 = vsel %vm951, 1, 0
        %vm1016 = vcmp.eq.s32.totalorder %v952, 1
        %vm1017 = vcmp.eq.s32.totalorder %v953, 1
        %vm1018 = vcmp.eq.s32.totalorder %v954, 1
        %vm1019 = vcmp.eq.s32.totalorder %v955, 1
        %vm1020 = vcmp.eq.s32.totalorder %v956, 1
        %vm1021 = vcmp.eq.s32.totalorder %v957, 1
        %vm1022 = vcmp.eq.s32.totalorder %v958, 1
        %vm1023 = vcmp.eq.s32.totalorder %v959, 1
        %vm1024 = vcmp.eq.s32.totalorder %v960, 1
        %vm1025 = vcmp.eq.s32.totalorder %v961, 1
        %vm1026 = vcmp.eq.s32.totalorder %v962, 1
        %vm1027 = vcmp.eq.s32.totalorder %v963, 1
        %vm1028 = vcmp.eq.s32.totalorder %v964, 1
        %vm1029 = vcmp.eq.s32.totalorder %v965, 1
        %vm1030 = vcmp.eq.s32.totalorder %v966, 1
        %vm1031 = vcmp.eq.s32.totalorder %v967, 1
        %vm1032 = vcmp.eq.s32.totalorder %v968, 1
        %vm1033 = vcmp.eq.s32.totalorder %v969, 1
        %vm1034 = vcmp.eq.s32.totalorder %v970, 1
        %vm1035 = vcmp.eq.s32.totalorder %v971, 1
        %vm1036 = vcmp.eq.s32.totalorder %v972, 1
        %vm1037 = vcmp.eq.s32.totalorder %v973, 1
        %vm1038 = vcmp.eq.s32.totalorder %v974, 1
        %vm1039 = vcmp.eq.s32.totalorder %v975, 1
        %vm1040 = vcmp.eq.s32.totalorder %v976, 1
        %vm1041 = vcmp.eq.s32.totalorder %v977, 1
        %vm1042 = vcmp.eq.s32.totalorder %v978, 1
        %vm1043 = vcmp.eq.s32.totalorder %v979, 1
        %vm1044 = vcmp.eq.s32.totalorder %v980, 1
        %vm1045 = vcmp.eq.s32.totalorder %v981, 1
        %vm1046 = vcmp.eq.s32.totalorder %v982, 1
        %vm1047 = vcmp.eq.s32.totalorder %v983, 1
        %vm1048 = vcmp.eq.s32.totalorder %v984, 1
        %vm1049 = vcmp.eq.s32.totalorder %v985, 1
        %vm1050 = vcmp.eq.s32.totalorder %v986, 1
        %vm1051 = vcmp.eq.s32.totalorder %v987, 1
        %vm1052 = vcmp.eq.s32.totalorder %v988, 1
        %vm1053 = vcmp.eq.s32.totalorder %v989, 1
        %vm1054 = vcmp.eq.s32.totalorder %v990, 1
        %vm1055 = vcmp.eq.s32.totalorder %v991, 1
        %vm1056 = vcmp.eq.s32.totalorder %v992, 1
        %vm1057 = vcmp.eq.s32.totalorder %v993, 1
        %vm1058 = vcmp.eq.s32.totalorder %v994, 1
        %vm1059 = vcmp.eq.s32.totalorder %v995, 1
        %vm1060 = vcmp.eq.s32.totalorder %v996, 1
        %vm1061 = vcmp.eq.s32.totalorder %v997, 1
        %vm1062 = vcmp.eq.s32.totalorder %v998, 1
        %vm1063 = vcmp.eq.s32.totalorder %v999, 1
        %vm1064 = vcmp.eq.s32.totalorder %v1000, 1
        %vm1065 = vcmp.eq.s32.totalorder %v1001, 1
        %vm1066 = vcmp.eq.s32.totalorder %v1002, 1
        %vm1067 = vcmp.eq.s32.totalorder %v1003, 1
        %vm1068 = vcmp.eq.s32.totalorder %v1004, 1
        %vm1069 = vcmp.eq.s32.totalorder %v1005, 1
        %vm1070 = vcmp.eq.s32.totalorder %v1006, 1
        %vm1071 = vcmp.eq.s32.totalorder %v1007, 1
        %vm1072 = vcmp.eq.s32.totalorder %v1008, 1
        %vm1073 = vcmp.eq.s32.totalorder %v1009, 1
        %vm1074 = vcmp.eq.s32.totalorder %v1010, 1
        %vm1075 = vcmp.eq.s32.totalorder %v1011, 1
        %vm1076 = vcmp.eq.s32.totalorder %v1012, 1
        %vm1077 = vcmp.eq.s32.totalorder %v1013, 1
        %vm1078 = vcmp.eq.s32.totalorder %v1014, 1
        %vm1079 = vcmp.eq.s32.totalorder %v1015, 1
        %v1080 = vsel %vm1016, %v598, 0.0
        %v1081 = vsel %vm1017, %v600, 0.0
        %v1082 = vsel %vm1018, %v603, 0.0
        %v1083 = vsel %vm1019, %v605, 0.0
        %v1084 = vsel %vm1020, %v608, 0.0
        %v1085 = vsel %vm1021, %v610, 0.0
        %v1086 = vsel %vm1022, %v613, 0.0
        %v1087 = vsel %vm1023, %v615, 0.0
        %v1088 = vsel %vm1024, %v618, 0.0
        %v1089 = vsel %vm1025, %v620, 0.0
        %v1090 = vsel %vm1026, %v623, 0.0
        %v1091 = vsel %vm1027, %v625, 0.0
        %v1092 = vsel %vm1028, %v628, 0.0
        %v1093 = vsel %vm1029, %v630, 0.0
        %v1094 = vsel %vm1030, %v633, 0.0
        %v1095 = vsel %vm1031, %v635, 0.0
        %v1096 = vsel %vm1032, %v638, 0.0
        %v1097 = vsel %vm1033, %v640, 0.0
        %v1098 = vsel %vm1034, %v643, 0.0
        %v1099 = vsel %vm1035, %v645, 0.0
        %v1100 = vsel %vm1036, %v648, 0.0
        %v1101 = vsel %vm1037, %v650, 0.0
        %v1102 = vsel %vm1038, %v653, 0.0
        %v1103 = vsel %vm1039, %v655, 0.0
        %v1104 = vsel %vm1040, %v658, 0.0
        %v1105 = vsel %vm1041, %v660, 0.0
        %v1106 = vsel %vm1042, %v663, 0.0
        %v1107 = vsel %vm1043, %v665, 0.0
        %v1108 = vsel %vm1044, %v668, 0.0
        %v1109 = vsel %vm1045, %v670, 0.0
        %v1110 = vsel %vm1046, %v673, 0.0
        %v1111 = vsel %vm1047, %v675, 0.0
        %v1112 = vsel %vm1048, %v678, 0.0
        %v1113 = vsel %vm1049, %v680, 0.0
        %v1114 = vsel %vm1050, %v683, 0.0
        %v1115 = vsel %vm1051, %v685, 0.0
        %v1116 = vsel %vm1052, %v688, 0.0
        %v1117 = vsel %vm1053, %v690, 0.0
        %v1118 = vsel %vm1054, %v693, 0.0
        %v1119 = vsel %vm1055, %v695, 0.0
        %v1120 = vsel %vm1056, %v698, 0.0
        %v1121 = vsel %vm1057, %v700, 0.0
        %v1122 = vsel %vm1058, %v703, 0.0
        %v1123 = vsel %vm1059, %v705, 0.0
        %v1124 = vsel %vm1060, %v708, 0.0
        %v1125 = vsel %vm1061, %v710, 0.0
        %v1126 = vsel %vm1062, %v713, 0.0
        %v1127 = vsel %vm1063, %v715, 0.0
        %v1128 = vsel %vm1064, %v718, 0.0
        %v1129 = vsel %vm1065, %v720, 0.0
        %v1130 = vsel %vm1066, %v723, 0.0
        %v1131 = vsel %vm1067, %v725, 0.0
        %v1132 = vsel %vm1068, %v728, 0.0
        %v1133 = vsel %vm1069, %v730, 0.0
        %v1134 = vsel %vm1070, %v733, 0.0
        %v1135 = vsel %vm1071, %v735, 0.0
        %v1136 = vsel %vm1072, %v738, 0.0
        %v1137 = vsel %vm1073, %v740, 0.0
        %v1138 = vsel %vm1074, %v743, 0.0
        %v1139 = vsel %vm1075, %v745, 0.0
        %v1140 = vsel %vm1076, %v748, 0.0
        %v1141 = vsel %vm1077, %v750, 0.0
        %v1142 = vsel %vm1078, %v753, 0.0
        %v1143 = vsel %vm1079, %v755, 0.0
        %v1144 = vadd.f32 %v1080, %v1081
        %v1145 = vadd.f32 %v1144, %v1082
        %v1146 = vadd.f32 %v1145, %v1083
        %v1147 = vadd.f32 %v1146, %v1084
        %v1148 = vadd.f32 %v1147, %v1085
        %v1149 = vadd.f32 %v1148, %v1086
        %v1150 = vadd.f32 %v1149, %v1087
        %v1151 = vadd.f32 %v1150, %v1088
        %v1152 = vadd.f32 %v1151, %v1089
        %v1153 = vadd.f32 %v1152, %v1090
        %v1154 = vadd.f32 %v1153, %v1091
        %v1155 = vadd.f32 %v1154, %v1092
        %v1156 = vadd.f32 %v1155, %v1093
        %v1157 = vadd.f32 %v1156, %v1094
        %v1158 = vadd.f32 %v1157, %v1095
        %v1159 = vadd.f32 %v1158, %v1096
        %v1160 = vadd.f32 %v1159, %v1097
        %v1161 = vadd.f32 %v1160, %v1098
        %v1162 = vadd.f32 %v1161, %v1099
        %v1163 = vadd.f32 %v1162, %v1100
        %v1164 = vadd.f32 %v1163, %v1101
        %v1165 = vadd.f32 %v1164, %v1102
        %v1166 = vadd.f32 %v1165, %v1103
        %v1167 = vadd.f32 %v1166, %v1104
        %v1168 = vadd.f32 %v1167, %v1105
        %v1169 = vadd.f32 %v1168, %v1106
        %v1170 = vadd.f32 %v1169, %v1107
        %v1171 = vadd.f32 %v1170, %v1108
        %v1172 = vadd.f32 %v1171, %v1109
        %v1173 = vadd.f32 %v1172, %v1110
        %v1174 = vadd.f32 %v1173, %v1111
        %v1175 = vadd.f32 %v1174, %v1112
        %v1176 = vadd.f32 %v1175, %v1113
        %v1177 = vadd.f32 %v1176, %v1114
        %v1178 = vadd.f32 %v1177, %v1115
        %v1179 = vadd.f32 %v1178, %v1116
        %v1180 = vadd.f32 %v1179, %v1117
        %v1181 = vadd.f32 %v1180, %v1118
        %v1182 = vadd.f32 %v1181, %v1119
        %v1183 = vadd.f32 %v1182, %v1120
        %v1184 = vadd.f32 %v1183, %v1121
        %v1185 = vadd.f32 %v1184, %v1122
        %v1186 = vadd.f32 %v1185, %v1123
        %v1187 = vadd.f32 %v1186, %v1124
        %v1188 = vadd.f32 %v1187, %v1125
        %v1189 = vadd.f32 %v1188, %v1126
        %v1190 = vadd.f32 %v1189, %v1127
        %v1191 = vadd.f32 %v1190, %v1128
        %v1192 = vadd.f32 %v1191, %v1129
        %v1193 = vadd.f32 %v1192, %v1130
        %v1194 = vadd.f32 %v1193, %v1131
        %v1195 = vadd.f32 %v1194, %v1132
        %v1196 = vadd.f32 %v1195, %v1133
        %v1197 = vadd.f32 %v1196, %v1134
        %v1198 = vadd.f32 %v1197, %v1135
        %v1199 = vadd.f32 %v1198, %v1136
        %v1200 = vadd.f32 %v1199, %v1137
        %v1201 = vadd.f32 %v1200, %v1138
        %v1202 = vadd.f32 %v1201, %v1139
        %v1203 = vadd.f32 %v1202, %v1140
        %v1204 = vadd.f32 %v1203, %v1141
        %v1205 = vadd.f32 %v1204, %v1142
        %v1206 = vadd.f32 %v1205, %v1143
        %v1207 = vrot.slane %v1206, 4
        %v1208 = vadd.f32 %v1206, %v1207
        %v1209 = vrot.slane %v1208, 2
        %v1210 = vadd.f32 %v1208, %v1209
        %v1211 = vrot.slane %v1210, 1
        %v1212 = vadd.f32 %v1210, %v1211
        %1213 = vst [vmem:[%s232] sm:$0x1] %v1212
        %v1214 = vmul.f32 %v1080, %v1080
        %v1215 = vmul.f32 %v1081, %v1081
        %v1216 = vmul.f32 %v1082, %v1082
        %v1217 = vmul.f32 %v1083, %v1083
        %v1218 = vmul.f32 %v1084, %v1084
        %v1219 = vmul.f32 %v1085, %v1085
        %v1220 = vmul.f32 %v1086, %v1086
        %v1221 = vmul.f32 %v1087, %v1087
        %v1222 = vmul.f32 %v1088, %v1088
        %v1223 = vmul.f32 %v1089, %v1089
        %v1224 = vmul.f32 %v1090, %v1090
        %v1225 = vmul.f32 %v1091, %v1091
        %v1226 = vmul.f32 %v1092, %v1092
        %v1227 = vmul.f32 %v1093, %v1093
        %v1228 = vmul.f32 %v1094, %v1094
        %v1229 = vmul.f32 %v1095, %v1095
        %v1230 = vmul.f32 %v1096, %v1096
        %v1231 = vmul.f32 %v1097, %v1097
        %v1232 = vmul.f32 %v1098, %v1098
        %v1233 = vmul.f32 %v1099, %v1099
        %v1234 = vmul.f32 %v1100, %v1100
        %v1235 = vmul.f32 %v1101, %v1101
        %v1236 = vmul.f32 %v1102, %v1102
        %v1237 = vmul.f32 %v1103, %v1103
        %v1238 = vmul.f32 %v1104, %v1104
        %v1239 = vmul.f32 %v1105, %v1105
        %v1240 = vmul.f32 %v1106, %v1106
        %v1241 = vmul.f32 %v1107, %v1107
        %v1242 = vmul.f32 %v1108, %v1108
        %v1243 = vmul.f32 %v1109, %v1109
        %v1244 = vmul.f32 %v1110, %v1110
        %v1245 = vmul.f32 %v1111, %v1111
        %v1246 = vmul.f32 %v1112, %v1112
        %v1247 = vmul.f32 %v1113, %v1113
        %v1248 = vmul.f32 %v1114, %v1114
        %v1249 = vmul.f32 %v1115, %v1115
        %v1250 = vmul.f32 %v1116, %v1116
        %v1251 = vmul.f32 %v1117, %v1117
        %v1252 = vmul.f32 %v1118, %v1118
        %v1253 = vmul.f32 %v1119, %v1119
        %v1254 = vmul.f32 %v1120, %v1120
        %v1255 = vmul.f32 %v1121, %v1121
        %v1256 = vmul.f32 %v1122, %v1122
        %v1257 = vmul.f32 %v1123, %v1123
        %v1258 = vmul.f32 %v1124, %v1124
        %v1259 = vmul.f32 %v1125, %v1125
        %v1260 = vmul.f32 %v1126, %v1126
        %v1261 = vmul.f32 %v1127, %v1127
        %v1262 = vmul.f32 %v1128, %v1128
        %v1263 = vmul.f32 %v1129, %v1129
        %v1264 = vmul.f32 %v1130, %v1130
        %v1265 = vmul.f32 %v1131, %v1131
        %v1266 = vmul.f32 %v1132, %v1132
        %v1267 = vmul.f32 %v1133, %v1133
        %v1268 = vmul.f32 %v1134, %v1134
        %v1269 = vmul.f32 %v1135, %v1135
        %v1270 = vmul.f32 %v1136, %v1136
        %v1271 = vmul.f32 %v1137, %v1137
        %v1272 = vmul.f32 %v1138, %v1138
        %v1273 = vmul.f32 %v1139, %v1139
        %v1274 = vmul.f32 %v1140, %v1140
        %v1275 = vmul.f32 %v1141, %v1141
        %v1276 = vmul.f32 %v1142, %v1142
        %v1277 = vmul.f32 %v1143, %v1143
        %v1278 = vadd.f32 %v1214, %v1215
        %v1279 = vadd.f32 %v1278, %v1216
        %v1280 = vadd.f32 %v1279, %v1217
        %v1281 = vadd.f32 %v1280, %v1218
        %v1282 = vadd.f32 %v1281, %v1219
        %v1283 = vadd.f32 %v1282, %v1220
        %v1284 = vadd.f32 %v1283, %v1221
        %v1285 = vadd.f32 %v1284, %v1222
        %v1286 = vadd.f32 %v1285, %v1223
        %v1287 = vadd.f32 %v1286, %v1224
        %v1288 = vadd.f32 %v1287, %v1225
        %v1289 = vadd.f32 %v1288, %v1226
        %v1290 = vadd.f32 %v1289, %v1227
        %v1291 = vadd.f32 %v1290, %v1228
        %v1292 = vadd.f32 %v1291, %v1229
        %v1293 = vadd.f32 %v1292, %v1230
        %v1294 = vadd.f32 %v1293, %v1231
        %v1295 = vadd.f32 %v1294, %v1232
        %v1296 = vadd.f32 %v1295, %v1233
        %v1297 = vadd.f32 %v1296, %v1234
        %v1298 = vadd.f32 %v1297, %v1235
        %v1299 = vadd.f32 %v1298, %v1236
        %v1300 = vadd.f32 %v1299, %v1237
        %v1301 = vadd.f32 %v1300, %v1238
        %v1302 = vadd.f32 %v1301, %v1239
        %v1303 = vadd.f32 %v1302, %v1240
        %v1304 = vadd.f32 %v1303, %v1241
        %v1305 = vadd.f32 %v1304, %v1242
        %v1306 = vadd.f32 %v1305, %v1243
        %v1307 = vadd.f32 %v1306, %v1244
        %v1308 = vadd.f32 %v1307, %v1245
        %v1309 = vadd.f32 %v1308, %v1246
        %v1310 = vadd.f32 %v1309, %v1247
        %v1311 = vadd.f32 %v1310, %v1248
        %v1312 = vadd.f32 %v1311, %v1249
        %v1313 = vadd.f32 %v1312, %v1250
        %v1314 = vadd.f32 %v1313, %v1251
        %v1315 = vadd.f32 %v1314, %v1252
        %v1316 = vadd.f32 %v1315, %v1253
        %v1317 = vadd.f32 %v1316, %v1254
        %v1318 = vadd.f32 %v1317, %v1255
        %v1319 = vadd.f32 %v1318, %v1256
        %v1320 = vadd.f32 %v1319, %v1257
        %v1321 = vadd.f32 %v1320, %v1258
        %v1322 = vadd.f32 %v1321, %v1259
        %v1323 = vadd.f32 %v1322, %v1260
        %v1324 = vadd.f32 %v1323, %v1261
        %v1325 = vadd.f32 %v1324, %v1262
        %v1326 = vadd.f32 %v1325, %v1263
        %v1327 = vadd.f32 %v1326, %v1264
        %v1328 = vadd.f32 %v1327, %v1265
        %v1329 = vadd.f32 %v1328, %v1266
        %v1330 = vadd.f32 %v1329, %v1267
        %v1331 = vadd.f32 %v1330, %v1268
        %v1332 = vadd.f32 %v1331, %v1269
        %v1333 = vadd.f32 %v1332, %v1270
        %v1334 = vadd.f32 %v1333, %v1271
        %v1335 = vadd.f32 %v1334, %v1272
        %v1336 = vadd.f32 %v1335, %v1273
        %v1337 = vadd.f32 %v1336, %v1274
        %v1338 = vadd.f32 %v1337, %v1275
        %v1339 = vadd.f32 %v1338, %v1276
        %v1340 = vadd.f32 %v1339, %v1277
        %v1341 = vrot.slane %v1340, 4
        %v1342 = vadd.f32 %v1340, %v1341
        %v1343 = vrot.slane %v1342, 2
        %v1344 = vadd.f32 %v1342, %v1343
        %v1345 = vrot.slane %v1344, 1
        %v1346 = vadd.f32 %v1344, %v1345
        %1347 = vst [vmem:[%s235] sm:$0x1] %v1346
        %v1348 = vpack.c.bf16 %v598, %v598
        %v1349 = vpack.c.bf16 %v600, %v600
        %v1350 = vpack.c.bf16 %v603, %v603
        %v1351 = vpack.c.bf16 %v605, %v605
        %v1352 = vpack.c.bf16 %v608, %v608
        %v1353 = vpack.c.bf16 %v610, %v610
        %v1354 = vpack.c.bf16 %v613, %v613
        %v1355 = vpack.c.bf16 %v615, %v615
        %v1356 = vpack.c.bf16 %v618, %v618
        %v1357 = vpack.c.bf16 %v620, %v620
        %v1358 = vpack.c.bf16 %v623, %v623
        %v1359 = vpack.c.bf16 %v625, %v625
        %v1360 = vpack.c.bf16 %v628, %v628
        %v1361 = vpack.c.bf16 %v630, %v630
        %v1362 = vpack.c.bf16 %v633, %v633
        %v1363 = vpack.c.bf16 %v635, %v635
        %v1364 = vpack.c.bf16 %v638, %v638
        %v1365 = vpack.c.bf16 %v640, %v640
        %v1366 = vpack.c.bf16 %v643, %v643
        %v1367 = vpack.c.bf16 %v645, %v645
        %v1368 = vpack.c.bf16 %v648, %v648
        %v1369 = vpack.c.bf16 %v650, %v650
        %v1370 = vpack.c.bf16 %v653, %v653
        %v1371 = vpack.c.bf16 %v655, %v655
        %v1372 = vpack.c.bf16 %v658, %v658
        %v1373 = vpack.c.bf16 %v660, %v660
        %v1374 = vpack.c.bf16 %v663, %v663
        %v1375 = vpack.c.bf16 %v665, %v665
        %v1376 = vpack.c.bf16 %v668, %v668
        %v1377 = vpack.c.bf16 %v670, %v670
        %v1378 = vpack.c.bf16 %v673, %v673
        %v1379 = vpack.c.bf16 %v675, %v675
        %v1380 = vpack.c.bf16 %v678, %v678
        %v1381 = vpack.c.bf16 %v680, %v680
        %v1382 = vpack.c.bf16 %v683, %v683
        %v1383 = vpack.c.bf16 %v685, %v685
        %v1384 = vpack.c.bf16 %v688, %v688
        %v1385 = vpack.c.bf16 %v690, %v690
        %v1386 = vpack.c.bf16 %v693, %v693
        %v1387 = vpack.c.bf16 %v695, %v695
        %v1388 = vpack.c.bf16 %v698, %v698
        %v1389 = vpack.c.bf16 %v700, %v700
        %v1390 = vpack.c.bf16 %v703, %v703
        %v1391 = vpack.c.bf16 %v705, %v705
        %v1392 = vpack.c.bf16 %v708, %v708
        %v1393 = vpack.c.bf16 %v710, %v710
        %v1394 = vpack.c.bf16 %v713, %v713
        %v1395 = vpack.c.bf16 %v715, %v715
        %v1396 = vpack.c.bf16 %v718, %v718
        %v1397 = vpack.c.bf16 %v720, %v720
        %v1398 = vpack.c.bf16 %v723, %v723
        %v1399 = vpack.c.bf16 %v725, %v725
        %v1400 = vpack.c.bf16 %v728, %v728
        %v1401 = vpack.c.bf16 %v730, %v730
        %v1402 = vpack.c.bf16 %v733, %v733
        %v1403 = vpack.c.bf16 %v735, %v735
        %v1404 = vpack.c.bf16 %v738, %v738
        %v1405 = vpack.c.bf16 %v740, %v740
        %v1406 = vpack.c.bf16 %v743, %v743
        %v1407 = vpack.c.bf16 %v745, %v745
        %v1408 = vpack.c.bf16 %v748, %v748
        %v1409 = vpack.c.bf16 %v750, %v750
        %v1410 = vpack.c.bf16 %v753, %v753
        %v1411 = vpack.c.bf16 %v755, %v755
        %1412 = vst [vmem:[%s200] sm:$0xf] %v1348
        %1413 = vst [vmem:[%s200 + $0x4] sm:$0xf] %v1349
        %1414 = vst [vmem:[%s200 + $0x8] sm:$0xf] %v1350
        %1415 = vst [vmem:[%s200 + $0xc] sm:$0xf] %v1351
        %1416 = vst [vmem:[%s200 + $0x10] sm:$0xf] %v1352
        %1417 = vst [vmem:[%s200 + $0x14] sm:$0xf] %v1353
        %1418 = vst [vmem:[%s200 + $0x18] sm:$0xf] %v1354
        %1419 = vst [vmem:[%s200 + $0x1c] sm:$0xf] %v1355
        %1420 = vst [vmem:[%s200 + $0x20] sm:$0xf] %v1356
        %1421 = vst [vmem:[%s200 + $0x24] sm:$0xf] %v1357
        %1422 = vst [vmem:[%s200 + $0x28] sm:$0xf] %v1358
        %1423 = vst [vmem:[%s200 + $0x2c] sm:$0xf] %v1359
        %1424 = vst [vmem:[%s200 + $0x30] sm:$0xf] %v1360
        %1425 = vst [vmem:[%s200 + $0x34] sm:$0xf] %v1361
        %1426 = vst [vmem:[%s200 + $0x38] sm:$0xf] %v1362
        %1427 = vst [vmem:[%s200 + $0x3c] sm:$0xf] %v1363
        %1428 = vst [vmem:[%s200 + $0x40] sm:$0xf] %v1364
        %1429 = vst [vmem:[%s200 + $0x44] sm:$0xf] %v1365
        %1430 = vst [vmem:[%s200 + $0x48] sm:$0xf] %v1366
        %1431 = vst [vmem:[%s200 + $0x4c] sm:$0xf] %v1367
        %1432 = vst [vmem:[%s200 + $0x50] sm:$0xf] %v1368
        %1433 = vst [vmem:[%s200 + $0x54] sm:$0xf] %v1369
        %1434 = vst [vmem:[%s200 + $0x58] sm:$0xf] %v1370
        %1435 = vst [vmem:[%s200 + $0x5c] sm:$0xf] %v1371
        %1436 = vst [vmem:[%s200 + $0x60] sm:$0xf] %v1372
        %1437 = vst [vmem:[%s200 + $0x64] sm:$0xf] %v1373
        %1438 = vst [vmem:[%s200 + $0x68] sm:$0xf] %v1374
        %1439 = vst [vmem:[%s200 + $0x6c] sm:$0xf] %v1375
        %1440 = vst [vmem:[%s200 + $0x70] sm:$0xf] %v1376
        %1441 = vst [vmem:[%s200 + $0x74] sm:$0xf] %v1377
        %1442 = vst [vmem:[%s200 + $0x78] sm:$0xf] %v1378
        %1443 = vst [vmem:[%s200 + $0x7c] sm:$0xf] %v1379
        %1444 = vst [vmem:[%s200 + $0x80] sm:$0xf] %v1380
        %1445 = vst [vmem:[%s200 + $0x84] sm:$0xf] %v1381
        %1446 = vst [vmem:[%s200 + $0x88] sm:$0xf] %v1382
        %1447 = vst [vmem:[%s200 + $0x8c] sm:$0xf] %v1383
        %1448 = vst [vmem:[%s200 + $0x90] sm:$0xf] %v1384
        %1449 = vst [vmem:[%s200 + $0x94] sm:$0xf] %v1385
        %1450 = vst [vmem:[%s200 + $0x98] sm:$0xf] %v1386
        %1451 = vst [vmem:[%s200 + $0x9c] sm:$0xf] %v1387
        %1452 = vst [vmem:[%s200 + $0xa0] sm:$0xf] %v1388
        %1453 = vst [vmem:[%s200 + $0xa4] sm:$0xf] %v1389
        %1454 = vst [vmem:[%s200 + $0xa8] sm:$0xf] %v1390
        %1455 = vst [vmem:[%s200 + $0xac] sm:$0xf] %v1391
        %1456 = vst [vmem:[%s200 + $0xb0] sm:$0xf] %v1392
        %1457 = vst [vmem:[%s200 + $0xb4] sm:$0xf] %v1393
        %1458 = vst [vmem:[%s200 + $0xb8] sm:$0xf] %v1394
        %1459 = vst [vmem:[%s200 + $0xbc] sm:$0xf] %v1395
        %1460 = vst [vmem:[%s200 + $0xc0] sm:$0xf] %v1396
        %1461 = vst [vmem:[%s200 + $0xc4] sm:$0xf] %v1397
        %1462 = vst [vmem:[%s200 + $0xc8] sm:$0xf] %v1398
        %1463 = vst [vmem:[%s200 + $0xcc] sm:$0xf] %v1399
        %1464 = vst [vmem:[%s200 + $0xd0] sm:$0xf] %v1400
        %1465 = vst [vmem:[%s200 + $0xd4] sm:$0xf] %v1401
        %1466 = vst [vmem:[%s200 + $0xd8] sm:$0xf] %v1402
        %1467 = vst [vmem:[%s200 + $0xdc] sm:$0xf] %v1403
        %1468 = vst [vmem:[%s200 + $0xe0] sm:$0xf] %v1404
        %1469 = vst [vmem:[%s200 + $0xe4] sm:$0xf] %v1405
        %1470 = vst [vmem:[%s200 + $0xe8] sm:$0xf] %v1406
        %1471 = vst [vmem:[%s200 + $0xec] sm:$0xf] %v1407
        %1472 = vst [vmem:[%s200 + $0xf0] sm:$0xf] %v1408
        %1473 = vst [vmem:[%s200 + $0xf4] sm:$0xf] %v1409
        %1474 = vst [vmem:[%s200 + $0xf8] sm:$0xf] %v1410
        %1475 = vst [vmem:[%s200 + $0xfc] sm:$0xf] %v1411
        %s1476 = sand.u32 %s71, 1
        %s1477 = sand.u32 %s71, 1
        %s1478 = smul.addr %s1477, 256
        %s1479 = scalar_lea.vmem [#allocation2], %s1478
        %p1480 = scmp.lt.s32.totalorder %s16, 3
        %s1481 = scalar_select %p1480, %s16, 3
        %s1482 = scalar_lea.vmem %s3, %s1481
        %p1483 = scmp.lt.s32.totalorder %s16, 3
        %s1484 = scalar_select %p1483, %s16, 3
        %s1485 = scalar_lea.vmem %s4, %s1484
        // Predicated region
        $region29: #{discriminator_forward.6} parent=27 // pred_check
          %p1486 = pneg %p81
        $region30: #{discriminator_forward.6} parent=27 // pred_check_branch
          %1488 = sbr.rel (%p1486) target = $region32
        $region31: #{discriminator_forward.6} parent=27 // pred_region
          %s1489 = smul.u32 64, %s16
          %s1490 = ssub.s32 196, %s1489
          %p1491 = scmp.lt.s32.totalorder %s1490, 64
          %s1492 = scalar_select %p1491, %s1490, 64
          %s1493 = smul.u32 4, %s1492
          %p1494 = scmp.ne.s32.totalorder 0, %s1493
          %s1495 = smul.addr %s1489, 4
          %s1496 = scalar_lea.vmem %s2, %s1495
          // Predicated region
          $region33: #{discriminator_forward.6} parent=31 // pred_check
            %p1497 = pneg %p1494
          $region34: #{discriminator_forward.6} parent=31 // pred_check_branch
            %1499 = sbr.rel (%p1497) target = $region36
          $region35: #{discriminator_forward.6} parent=31 // pred_region
            // Predicated region
            $region37: #{discriminator_forward.6} parent=35 // pred_check
              _
            $region38: #{discriminator_forward.6} parent=35 // pred_check_branch
              %1501 = sbr.rel target = $region40
            $region39: #{discriminator_forward.6} parent=35 // pred_region
              // Predicated region
              $region59: #{discriminator_forward.6} parent=39 // pred_check
                _
              $region60: #{discriminator_forward.6} parent=39 // pred_check_branch
                %1613 = sbr.rel (0) target = $region62
              $region61: #{discriminator_forward.6} parent=39 // pred_region
                %s1615 = ssub.s32 16, 1
                %s1616 = sshrl.u32 %s1492, 5
                // While loop
                $region63: #{discriminator_forward.6} parent=61 // loop_pre_header
                  _
                $region64: #{discriminator_forward.6} parent=61 // loop_header
                  %s1618 = sphi 0, %s1620
                  %p1619 = scmp.ge.s32.totalorder %s1618, %s1616
                  %s1623 = sphi 0, %s1692
                  %s1624 = sphi %s1479, %s1695
                  %s1625 = sphi %s1496, %s1696
                $region65: #{discriminator_forward.6} parent=61 // loop_header_branch
                  %1622 = sbr.rel (%p1619) target = $region69
                $region66: #{discriminator_forward.6} parent=61 // loop_body
                  %v1626 = vld [vmem:[%s1624] sm:%s1615]
                  %1627 = vst [vmem:[%s1625] sm:%s1615] %v1626
                  %v1628 = vld [vmem:[%s1624 + $0x4] sm:%s1615]
                  %1629 = vst [vmem:[%s1625 + $0x4] sm:%s1615] %v1628
                  %v1630 = vld [vmem:[%s1624 + $0x8] sm:%s1615]
                  %1631 = vst [vmem:[%s1625 + $0x8] sm:%s1615] %v1630
                  %v1632 = vld [vmem:[%s1624 + $0xc] sm:%s1615]
                  %1633 = vst [vmem:[%s1625 + $0xc] sm:%s1615] %v1632
                  %v1634 = vld [vmem:[%s1624 + $0x10] sm:%s1615]
                  %1635 = vst [vmem:[%s1625 + $0x10] sm:%s1615] %v1634
                  %v1636 = vld [vmem:[%s1624 + $0x14] sm:%s1615]
                  %1637 = vst [vmem:[%s1625 + $0x14] sm:%s1615] %v1636
                  %v1638 = vld [vmem:[%s1624 + $0x18] sm:%s1615]
                  %1639 = vst [vmem:[%s1625 + $0x18] sm:%s1615] %v1638
                  %v1640 = vld [vmem:[%s1624 + $0x1c] sm:%s1615]
                  %1641 = vst [vmem:[%s1625 + $0x1c] sm:%s1615] %v1640
                  %v1642 = vld [vmem:[%s1624 + $0x20] sm:%s1615]
                  %1643 = vst [vmem:[%s1625 + $0x20] sm:%s1615] %v1642
                  %v1644 = vld [vmem:[%s1624 + $0x24] sm:%s1615]
                  %1645 = vst [vmem:[%s1625 + $0x24] sm:%s1615] %v1644
                  %v1646 = vld [vmem:[%s1624 + $0x28] sm:%s1615]
                  %1647 = vst [vmem:[%s1625 + $0x28] sm:%s1615] %v1646
                  %v1648 = vld [vmem:[%s1624 + $0x2c] sm:%s1615]
                  %1649 = vst [vmem:[%s1625 + $0x2c] sm:%s1615] %v1648
                  %v1650 = vld [vmem:[%s1624 + $0x30] sm:%s1615]
                  %1651 = vst [vmem:[%s1625 + $0x30] sm:%s1615] %v1650
                  %v1652 = vld [vmem:[%s1624 + $0x34] sm:%s1615]
                  %1653 = vst [vmem:[%s1625 + $0x34] sm:%s1615] %v1652
                  %v1654 = vld [vmem:[%s1624 + $0x38] sm:%s1615]
                  %1655 = vst [vmem:[%s1625 + $0x38] sm:%s1615] %v1654
                  %v1656 = vld [vmem:[%s1624 + $0x3c] sm:%s1615]
                  %1657 = vst [vmem:[%s1625 + $0x3c] sm:%s1615] %v1656
                  %v1658 = vld [vmem:[%s1624 + $0x40] sm:%s1615]
                  %1659 = vst [vmem:[%s1625 + $0x40] sm:%s1615] %v1658
                  %v1660 = vld [vmem:[%s1624 + $0x44] sm:%s1615]
                  %1661 = vst [vmem:[%s1625 + $0x44] sm:%s1615] %v1660
                  %v1662 = vld [vmem:[%s1624 + $0x48] sm:%s1615]
                  %1663 = vst [vmem:[%s1625 + $0x48] sm:%s1615] %v1662
                  %v1664 = vld [vmem:[%s1624 + $0x4c] sm:%s1615]
                  %1665 = vst [vmem:[%s1625 + $0x4c] sm:%s1615] %v1664
                  %v1666 = vld [vmem:[%s1624 + $0x50] sm:%s1615]
                  %1667 = vst [vmem:[%s1625 + $0x50] sm:%s1615] %v1666
                  %v1668 = vld [vmem:[%s1624 + $0x54] sm:%s1615]
                  %1669 = vst [vmem:[%s1625 + $0x54] sm:%s1615] %v1668
                  %v1670 = vld [vmem:[%s1624 + $0x58] sm:%s1615]
                  %1671 = vst [vmem:[%s1625 + $0x58] sm:%s1615] %v1670
                  %v1672 = vld [vmem:[%s1624 + $0x5c] sm:%s1615]
                  %1673 = vst [vmem:[%s1625 + $0x5c] sm:%s1615] %v1672
                  %v1674 = vld [vmem:[%s1624 + $0x60] sm:%s1615]
                  %1675 = vst [vmem:[%s1625 + $0x60] sm:%s1615] %v1674
                  %v1676 = vld [vmem:[%s1624 + $0x64] sm:%s1615]
                  %1677 = vst [vmem:[%s1625 + $0x64] sm:%s1615] %v1676
                  %v1678 = vld [vmem:[%s1624 + $0x68] sm:%s1615]
                  %1679 = vst [vmem:[%s1625 + $0x68] sm:%s1615] %v1678
                  %v1680 = vld [vmem:[%s1624 + $0x6c] sm:%s1615]
                  %1681 = vst [vmem:[%s1625 + $0x6c] sm:%s1615] %v1680
                  %v1682 = vld [vmem:[%s1624 + $0x70] sm:%s1615]
                  %1683 = vst [vmem:[%s1625 + $0x70] sm:%s1615] %v1682
                  %v1684 = vld [vmem:[%s1624 + $0x74] sm:%s1615]
                  %1685 = vst [vmem:[%s1625 + $0x74] sm:%s1615] %v1684
                  %v1686 = vld [vmem:[%s1624 + $0x78] sm:%s1615]
                  %1687 = vst [vmem:[%s1625 + $0x78] sm:%s1615] %v1686
                  %v1688 = vld [vmem:[%s1624 + $0x7c] sm:%s1615]
                  %1689 = vst [vmem:[%s1625 + $0x7c] sm:%s1615] %v1688
                  %s1690 = sadd.s32 1, %s1623
                  %p1691 = scmp.ge.s32.totalorder %s1690, %s1616
                  %s1692 = scalar_select %p1691, 0, %s1690
                  %s1693 = smul.u32 %s1692, 128
                  %s1694 = smul.u32 %s1692, 128
                  %s1695 = scalar_lea.vmem %s1479, %s1693 [#allocation2]
                  %s1696 = scalar_lea.vmem %s1496, %s1694
                $region67: #{discriminator_forward.6} parent=61 // loop_footer
                  %s1620 = sadd.s32 %s1618, 1
                $region68: #{discriminator_forward.6} parent=61 // loop_footer_branch
                  %1617 = sbr.rel target = $region64
                $region69: #{discriminator_forward.6} parent=61 // loop_exit
                  _
                %s1697 = sshrl.u32 %s1492, 5
                %s1698 = sand.u32 %s1492, 31
                %s1699 = smul.u32 %s1697, 32
                %s1700 = smul.u32 4, %s1699
                %s1701 = scalar_lea.vmem %s1479, %s1700 [#allocation2]
                %s1702 = smul.u32 4, %s1699
                %s1703 = scalar_lea.vmem %s1496, %s1702
                // While loop
                $region70: #{discriminator_forward.6} parent=61 // loop_pre_header
                  _
                $region71: #{discriminator_forward.6} parent=61 // loop_header
                  %s1705 = sphi 0, %s1707
                  %p1706 = scmp.ge.s32.totalorder %s1705, %s1698
                  %s1710 = sphi 0, %s1717
                  %s1711 = sphi %s1701, %s1720
                  %s1712 = sphi %s1703, %s1721
                $region72: #{discriminator_forward.6} parent=61 // loop_header_branch
                  %1709 = sbr.rel (%p1706) target = $region76
                $region73: #{discriminator_forward.6} parent=61 // loop_body
                  %v1713 = vld [vmem:[%s1711] sm:%s1615]
                  %1714 = vst [vmem:[%s1712] sm:%s1615] %v1713
                  %s1715 = sadd.s32 1, %s1710
                  %p1716 = scmp.ge.s32.totalorder %s1715, %s1698
                  %s1717 = scalar_select %p1716, 0, %s1715
                  %s1718 = smul.u32 %s1717, 4
                  %s1719 = smul.u32 %s1717, 4
                  %s1720 = scalar_lea.vmem %s1701, %s1718 [#allocation2]
                  %s1721 = scalar_lea.vmem %s1703, %s1719
                $region74: #{discriminator_forward.6} parent=61 // loop_footer
                  %s1707 = sadd.s32 %s1705, 1
                $region75: #{discriminator_forward.6} parent=61 // loop_footer_branch
                  %1704 = sbr.rel target = $region71
                $region76: #{discriminator_forward.6} parent=61 // loop_exit
                  _
              $region62: #{discriminator_forward.6} parent=39 // pred_fallthru
                _
            $region40: #{discriminator_forward.6} parent=35 // pred_fallthru
              _
            // Predicated region
            $region41: #{discriminator_forward.6} parent=35 // pred_check
              _
            $region42: #{discriminator_forward.6} parent=35 // pred_check_branch
              %1503 = sbr.rel (0) target = $region44
            $region43: #{discriminator_forward.6} parent=35 // pred_region
              %s1505 = ssub.s32 16, 1
              %s1506 = sshrl.u32 %s1492, 5
              // While loop
              $region45: #{discriminator_forward.6} parent=43 // loop_pre_header
                _
              $region46: #{discriminator_forward.6} parent=43 // loop_header
                %s1508 = sphi 0, %s1510
                %p1509 = scmp.ge.s32.totalorder %s1508, %s1506
                %s1513 = sphi 0, %s1582
                %s1514 = sphi %s1479, %s1585
                %s1515 = sphi %s1496, %s1586
              $region47: #{discriminator_forward.6} parent=43 // loop_header_branch
                %1512 = sbr.rel (%p1509) target = $region51
              $region48: #{discriminator_forward.6} parent=43 // loop_body
                %v1516 = vld [vmem:[%s1514] sm:%s1505]
                %1517 = vst [vmem:[%s1515] sm:%s1505] %v1516
                %v1518 = vld [vmem:[%s1514 + $0x4] sm:%s1505]
                %1519 = vst [vmem:[%s1515 + $0x4] sm:%s1505] %v1518
                %v1520 = vld [vmem:[%s1514 + $0x8] sm:%s1505]
                %1521 = vst [vmem:[%s1515 + $0x8] sm:%s1505] %v1520
                %v1522 = vld [vmem:[%s1514 + $0xc] sm:%s1505]
                %1523 = vst [vmem:[%s1515 + $0xc] sm:%s1505] %v1522
                %v1524 = vld [vmem:[%s1514 + $0x10] sm:%s1505]
                %1525 = vst [vmem:[%s1515 + $0x10] sm:%s1505] %v1524
                %v1526 = vld [vmem:[%s1514 + $0x14] sm:%s1505]
                %1527 = vst [vmem:[%s1515 + $0x14] sm:%s1505] %v1526
                %v1528 = vld [vmem:[%s1514 + $0x18] sm:%s1505]
                %1529 = vst [vmem:[%s1515 + $0x18] sm:%s1505] %v1528
                %v1530 = vld [vmem:[%s1514 + $0x1c] sm:%s1505]
                %1531 = vst [vmem:[%s1515 + $0x1c] sm:%s1505] %v1530
                %v1532 = vld [vmem:[%s1514 + $0x20] sm:%s1505]
                %1533 = vst [vmem:[%s1515 + $0x20] sm:%s1505] %v1532
                %v1534 = vld [vmem:[%s1514 + $0x24] sm:%s1505]
                %1535 = vst [vmem:[%s1515 + $0x24] sm:%s1505] %v1534
                %v1536 = vld [vmem:[%s1514 + $0x28] sm:%s1505]
                %1537 = vst [vmem:[%s1515 + $0x28] sm:%s1505] %v1536
                %v1538 = vld [vmem:[%s1514 + $0x2c] sm:%s1505]
                %1539 = vst [vmem:[%s1515 + $0x2c] sm:%s1505] %v1538
                %v1540 = vld [vmem:[%s1514 + $0x30] sm:%s1505]
                %1541 = vst [vmem:[%s1515 + $0x30] sm:%s1505] %v1540
                %v1542 = vld [vmem:[%s1514 + $0x34] sm:%s1505]
                %1543 = vst [vmem:[%s1515 + $0x34] sm:%s1505] %v1542
                %v1544 = vld [vmem:[%s1514 + $0x38] sm:%s1505]
                %1545 = vst [vmem:[%s1515 + $0x38] sm:%s1505] %v1544
                %v1546 = vld [vmem:[%s1514 + $0x3c] sm:%s1505]
                %1547 = vst [vmem:[%s1515 + $0x3c] sm:%s1505] %v1546
                %v1548 = vld [vmem:[%s1514 + $0x40] sm:%s1505]
                %1549 = vst [vmem:[%s1515 + $0x40] sm:%s1505] %v1548
                %v1550 = vld [vmem:[%s1514 + $0x44] sm:%s1505]
                %1551 = vst [vmem:[%s1515 + $0x44] sm:%s1505] %v1550
                %v1552 = vld [vmem:[%s1514 + $0x48] sm:%s1505]
                %1553 = vst [vmem:[%s1515 + $0x48] sm:%s1505] %v1552
                %v1554 = vld [vmem:[%s1514 + $0x4c] sm:%s1505]
                %1555 = vst [vmem:[%s1515 + $0x4c] sm:%s1505] %v1554
                %v1556 = vld [vmem:[%s1514 + $0x50] sm:%s1505]
                %1557 = vst [vmem:[%s1515 + $0x50] sm:%s1505] %v1556
                %v1558 = vld [vmem:[%s1514 + $0x54] sm:%s1505]
                %1559 = vst [vmem:[%s1515 + $0x54] sm:%s1505] %v1558
                %v1560 = vld [vmem:[%s1514 + $0x58] sm:%s1505]
                %1561 = vst [vmem:[%s1515 + $0x58] sm:%s1505] %v1560
                %v1562 = vld [vmem:[%s1514 + $0x5c] sm:%s1505]
                %1563 = vst [vmem:[%s1515 + $0x5c] sm:%s1505] %v1562
                %v1564 = vld [vmem:[%s1514 + $0x60] sm:%s1505]
                %1565 = vst [vmem:[%s1515 + $0x60] sm:%s1505] %v1564
                %v1566 = vld [vmem:[%s1514 + $0x64] sm:%s1505]
                %1567 = vst [vmem:[%s1515 + $0x64] sm:%s1505] %v1566
                %v1568 = vld [vmem:[%s1514 + $0x68] sm:%s1505]
                %1569 = vst [vmem:[%s1515 + $0x68] sm:%s1505] %v1568
                %v1570 = vld [vmem:[%s1514 + $0x6c] sm:%s1505]
                %1571 = vst [vmem:[%s1515 + $0x6c] sm:%s1505] %v1570
                %v1572 = vld [vmem:[%s1514 + $0x70] sm:%s1505]
                %1573 = vst [vmem:[%s1515 + $0x70] sm:%s1505] %v1572
                %v1574 = vld [vmem:[%s1514 + $0x74] sm:%s1505]
                %1575 = vst [vmem:[%s1515 + $0x74] sm:%s1505] %v1574
                %v1576 = vld [vmem:[%s1514 + $0x78] sm:%s1505]
                %1577 = vst [vmem:[%s1515 + $0x78] sm:%s1505] %v1576
                %v1578 = vld [vmem:[%s1514 + $0x7c] sm:%s1505]
                %1579 = vst [vmem:[%s1515 + $0x7c] sm:%s1505] %v1578
                %s1580 = sadd.s32 1, %s1513
                %p1581 = scmp.ge.s32.totalorder %s1580, %s1506
                %s1582 = scalar_select %p1581, 0, %s1580
                %s1583 = smul.u32 %s1582, 128
                %s1584 = smul.u32 %s1582, 128
                %s1585 = scalar_lea.vmem %s1479, %s1583 [#allocation2]
                %s1586 = scalar_lea.vmem %s1496, %s1584
              $region49: #{discriminator_forward.6} parent=43 // loop_footer
                %s1510 = sadd.s32 %s1508, 1
              $region50: #{discriminator_forward.6} parent=43 // loop_footer_branch
                %1507 = sbr.rel target = $region46
              $region51: #{discriminator_forward.6} parent=43 // loop_exit
                _
              %s1587 = sshrl.u32 %s1492, 5
              %s1588 = sand.u32 %s1492, 31
              %s1589 = smul.u32 %s1587, 32
              %s1590 = smul.u32 4, %s1589
              %s1591 = scalar_lea.vmem %s1479, %s1590 [#allocation2]
              %s1592 = smul.u32 4, %s1589
              %s1593 = scalar_lea.vmem %s1496, %s1592
              // While loop
              $region52: #{discriminator_forward.6} parent=43 // loop_pre_header
                _
              $region53: #{discriminator_forward.6} parent=43 // loop_header
                %s1595 = sphi 0, %s1597
                %p1596 = scmp.ge.s32.totalorder %s1595, %s1588
                %s1600 = sphi 0, %s1607
                %s1601 = sphi %s1591, %s1610
                %s1602 = sphi %s1593, %s1611
              $region54: #{discriminator_forward.6} parent=43 // loop_header_branch
                %1599 = sbr.rel (%p1596) target = $region58
              $region55: #{discriminator_forward.6} parent=43 // loop_body
                %v1603 = vld [vmem:[%s1601] sm:%s1505]
                %1604 = vst [vmem:[%s1602] sm:%s1505] %v1603
                %s1605 = sadd.s32 1, %s1600
                %p1606 = scmp.ge.s32.totalorder %s1605, %s1588
                %s1607 = scalar_select %p1606, 0, %s1605
                %s1608 = smul.u32 %s1607, 4
                %s1609 = smul.u32 %s1607, 4
                %s1610 = scalar_lea.vmem %s1591, %s1608 [#allocation2]
                %s1611 = scalar_lea.vmem %s1593, %s1609
              $region56: #{discriminator_forward.6} parent=43 // loop_footer
                %s1597 = sadd.s32 %s1595, 1
              $region57: #{discriminator_forward.6} parent=43 // loop_footer_branch
                %1594 = sbr.rel target = $region53
              $region58: #{discriminator_forward.6} parent=43 // loop_exit
                _
            $region44: #{discriminator_forward.6} parent=35 // pred_fallthru
              _
          $region36: #{discriminator_forward.6} parent=31 // pred_fallthru
            _
          %1722 = vnop
        $region32: #{discriminator_forward.6} parent=27 // pred_fallthru
          _
        // Predicated region
        $region77: #{discriminator_forward.6} parent=27 // pred_check
          %p1723 = pneg %p107
        $region78: #{discriminator_forward.6} parent=27 // pred_check_branch
          %1725 = sbr.rel (%p1723) target = $region80
        $region79: #{discriminator_forward.6} parent=27 // pred_region
          _
        $region80: #{discriminator_forward.6} parent=27 // pred_fallthru
          _
        // Predicated region
        $region81: #{discriminator_forward.6} parent=27 // pred_check
          %p1726 = pneg %p133
        $region82: #{discriminator_forward.6} parent=27 // pred_check_branch
          %1728 = sbr.rel (%p1726) target = $region84
        $region83: #{discriminator_forward.6} parent=27 // pred_region
          _
        $region84: #{discriminator_forward.6} parent=27 // pred_fallthru
          _
      $region28: #{discriminator_forward.6} parent=5 // pred_fallthru
        _
      %p1729 = scmp.le.s32.totalorder 2, %s11
      // Predicated region
      $region85: #{discriminator_forward.6} parent=5 // pred_check
        %p1730 = pneg %p1729
      $region86: #{discriminator_forward.6} parent=5 // pred_check_branch
        %1732 = sbr.rel (%p1730) target = $region88
      $region87: #{discriminator_forward.6} parent=5 // pred_region
        %s1733 = ssub.s32 %s11, 2
        // Predicated region
        $region89: #{discriminator_forward.6} parent=87 // pred_check
          %p1734 = pneg %p87
        $region90: #{discriminator_forward.6} parent=87 // pred_check_branch
          %1736 = sbr.rel (%p1734) target = $region92
        $region91: #{discriminator_forward.6} parent=87 // pred_region
          %s1737 = sand.u32 %s72, 1
          %s1738 = sand.u32 %s72, 1
          %s1739 = smul.addr %s1738, 256
          %s1740 = scalar_lea.vmem [#allocation2], %s1739
        $region92: #{discriminator_forward.6} parent=87 // pred_fallthru
          _
        // Predicated region
        $region93: #{discriminator_forward.6} parent=87 // pred_check
          %p1741 = pneg %p113
        $region94: #{discriminator_forward.6} parent=87 // pred_check_branch
          %1743 = sbr.rel (%p1741) target = $region96
        $region95: #{discriminator_forward.6} parent=87 // pred_region
          %p1744 = scmp.lt.s32.totalorder %s17, 3
          %s1745 = scalar_select %p1744, %s17, 3
          %s1746 = scalar_lea.vmem %s3, %s1745
        $region96: #{discriminator_forward.6} parent=87 // pred_fallthru
          _
        // Predicated region
        $region97: #{discriminator_forward.6} parent=87 // pred_check
          %p1747 = pneg %p139
        $region98: #{discriminator_forward.6} parent=87 // pred_check_branch
          %1749 = sbr.rel (%p1747) target = $region100
        $region99: #{discriminator_forward.6} parent=87 // pred_region
          %p1750 = scmp.lt.s32.totalorder %s17, 3
          %s1751 = scalar_select %p1750, %s17, 3
          %s1752 = scalar_lea.vmem %s4, %s1751
        $region100: #{discriminator_forward.6} parent=87 // pred_fallthru
          _
      $region88: #{discriminator_forward.6} parent=5 // pred_fallthru
        _
    $region6: #{discriminator_forward.6} parent=1 // loop_footer
      %s15 = sadd.s32 1, %s11
    $region7: #{discriminator_forward.6} parent=1 // loop_footer_branch
      %10 = sbr.rel target = $region3
    $region8: #{discriminator_forward.6} parent=1 // loop_exit
      _

// kernel: tile.33
$region0: #{tile.33}
  #allocation0 [shape = 's32[1]{0}', space=sflag, size = 0x4, scoped, tag = 'scoped memory for tile.33']
  %s0 = inlined_call_operand.vmem [shape: f32[16], index: 0, kind: input, shape index: {}]
  %s1 = inlined_call_operand.vmem [shape: f32[16,16], index: 1, kind: output, shape index: {}]
  // Predicated region
  $region2: #{tile.33} parent=0 // pred_check
    _
  $region3: #{tile.33} parent=0 // pred_check_branch
    %3 = sbr.rel (0) target = $region5
  $region4: #{tile.33} parent=0 // pred_region
    _
  $region5: #{tile.33} parent=0 // pred_fallthru
    _
  %v4 = vld [vmem:[%s0] ss:$0 sm:$0xff]
  %5 = vst [vmem:[%s1] sm:$0xff] %v4
  %s6 = scalar_lea.vmem %s1, 8
  %7 = vst [vmem:[%s6] sm:$0xff] %v4

// kernel: tile.34
$region0: #{tile.34}
  %s0 = inlined_call_operand.vmem [shape: f32[16,16], index: 0, kind: input, shape index: {}]
  %s1 = inlined_call_operand.vmem [shape: f32[1,256], index: 1, kind: output, shape index: {}]
  $region1: #{tile.34} parent=0
    #allocation0 [shape = 'u8[8192]{0}', space=vmem, size = 0x2000, scoped, tag = 'scoped mem for output reshape']
    %s2 = smov 3
    %v3 = vld [vmem:[%s0] ss:$8 sm:%s2]
    %vm4 = vcmask 130048
    %5 = vst.msk [vmem:[#allocation0] ss:$8 sm:$0x3] %vm4, %v3
    %s6 = scalar_lea.vmem %s0, 7
    %s7 = smov 3
    %v8 = vld [vmem:[%s6] ss:$8 sm:%s7]
    %9 = vrot.lane.b32.xlu0 %v8, 112
    %v10 = vpop.permute.xlu0 %9
    %vm11 = vcmask 1048448
    %12 = vst.msk [vmem:[#allocation0] ss:$8 sm:$0x3] %vm11, %v10
    %s13 = scalar_lea.vmem %s0, 6
    %s14 = smov 3
    %v15 = vld [vmem:[%s13] ss:$8 sm:%s14]
    %16 = vrot.lane.b32.xlu0 %v15, 96
    %v17 = vpop.permute.xlu0 %16
    %vm18 = vcmask 917248
    %19 = vst.msk [vmem:[#allocation0] ss:$8 sm:$0x3] %vm18, %v17
    %s20 = scalar_lea.vmem %s0, 5
    %s21 = smov 3
    %v22 = vld [vmem:[%s20] ss:$8 sm:%s21]
    %23 = vrot.lane.b32.xlu0 %v22, 80
    %v24 = vpop.permute.xlu0 %23
    %vm25 = vcmask 786048
    %26 = vst.msk [vmem:[#allocation0] ss:$8 sm:$0x3] %vm25, %v24
    %s27 = scalar_lea.vmem %s0, 4
    %s28 = smov 3
    %v29 = vld [vmem:[%s27] ss:$8 sm:%s28]
    %30 = vrot.lane.b32.xlu0 %v29, 64
    %v31 = vpop.permute.xlu0 %30
    %vm32 = vcmask 654848
    %33 = vst.msk [vmem:[#allocation0] ss:$8 sm:$0x3] %vm32, %v31
    %s34 = scalar_lea.vmem %s0, 3
    %s35 = smov 3
    %v36 = vld [vmem:[%s34] ss:$8 sm:%s35]
    %37 = vrot.lane.b32.xlu0 %v36, 48
    %v38 = vpop.permute.xlu0 %37
    %vm39 = vcmask 523648
    %40 = vst.msk [vmem:[#allocation0] ss:$8 sm:$0x3] %vm39, %v38
    %s41 = scalar_lea.vmem %s0, 2
    %s42 = smov 3
    %v43 = vld [vmem:[%s41] ss:$8 sm:%s42]
    %44 = vrot.lane.b32.xlu0 %v43, 32
    %v45 = vpop.permute.xlu0 %44
    %vm46 = vcmask 392448
    %47 = vst.msk [vmem:[#allocation0] ss:$8 sm:$0x3] %vm46, %v45
    %s48 = scalar_lea.vmem %s0, 1
    %s49 = smov 3
    %v50 = vld [vmem:[%s48] ss:$8 sm:%s49]
    %51 = vrot.lane.b32.xlu0 %v50, 16
    %v52 = vpop.permute.xlu0 %51
    %vm53 = vcmask 261248
    %54 = vst.msk [vmem:[#allocation0] ss:$8 sm:$0x3] %vm53, %v52
    %s56 = ssub.s32 2, 1
    %v57 = vld [vmem:[#allocation0] sm:%s56]
    %s59 = ssub.s32 2, 1
    %60 = vst [vmem:[%s1] sm:%s59] %v57
    %s61 = scalar_lea.vmem [#allocation0], 8
    %v62 = vld [vmem:[%s61] sm:%s56]
    %s64 = ssub.s32 2, 1
    %s65 = scalar_lea.vmem %s1, 1
    %66 = vst [vmem:[%s65] sm:%s64] %v62

// kernel: discriminator_forward.7
$region0: #{discriminator_forward.7}
  #allocation0 [shape = 'u32[]', space=smem, size = 0x4, offset = 0x4, fixed_abs, tag = 'smem constant byte address 0x4 - core index']
  #allocation1 [shape = 'u32[72,128]{1,0:T(1,128)}', space=vmem, size = 0x9000, scoped, tag = 'internal scratch']
  %s0 = inlined_call_operand.vmem [shape: bf16[392,256], index: 0, kind: input, shape index: {}]
  %s1 = inlined_call_operand.vmem [shape: bf16[256,128], index: 1, kind: input, shape index: {}]
  %s2 = inlined_call_operand.vmem [shape: f32[1,256], index: 2, kind: input, shape index: {}]
  %s3 = inlined_call_operand.vmem [shape: f32[1,256], index: 3, kind: input, shape index: {}]
  %s4 = inlined_call_operand.vmem [shape: bf16[392,128], index: 4, kind: output, shape index: {0}]
  %s5 = inlined_call_operand.vmem [shape: f32[2,1,128], index: 5, kind: output, shape index: {1}]
  %s6 = inlined_call_operand.vmem [shape: f32[2,1,128], index: 6, kind: output, shape index: {2}]
  %7 = xla_tuple %s4, %s5, %s6
  %s8 = sld [smem:[#allocation0]]
  $region109: #{discriminator_forward.7} parent=0
    _
  %s10 = ssub.s32 1, %s8
  %s11 = scalar_select 0, %s10, %s8
  $region1: #{discriminator_forward.7} parent=0
    #allocation2 [shape = 'u8[106496]{0}', space=vmem, size = 0x1a000, scoped, tag = 'output window, operand 0']
    loop: start=0, step=1, limit=4
    $region2: #{discriminator_forward.7} parent=1 // loop_pre_header
      _
    $region3: #{discriminator_forward.7} parent=1 // loop_header
      %s13 = sphi 0, %s17
      %p14 = scmp.ge.s32.totalorder %s13, 4
      %s23 = sphi 0, %s25
      %s26 = sphi 0, %s23
      %s27 = sphi 0, %s26
      %s43 = sphi 0, %s27
      %s47 = sphi 0, %s47
      %s49 = sphi 0, %s47
      %s50 = sphi 0, %s49
      %s64 = sphi 0, %s50
      %s68 = sphi 0, %s68
      %s70 = sphi 0, %s68
      %s71 = sphi 0, %s70
      %s85 = sphi 0, %s71
      %s89 = sphi 0, %s89
      %s91 = sphi 0, %s89
      %s92 = sphi 0, %s91
      %s106 = sphi 0, %s92
      %s112 = sphi 0, %s114
      %s115 = sphi 0, %s112
      %s116 = sphi 0, %s115
      %s132 = sphi 0, %s116
      %s138 = sphi 0, %s140
      %s141 = sphi 0, %s138
      %s142 = sphi 0, %s141
      %s158 = sphi 0, %s142
      %s164 = sphi 0, %s166
      %s167 = sphi 0, %s164
      %s168 = sphi 0, %s167
      %s184 = sphi 0, %s168
    $region4: #{discriminator_forward.7} parent=1 // loop_header_branch
      %16 = sbr.rel (%p14) target = $region8
    $region5: #{discriminator_forward.7} parent=1 // loop_body
      %s18 = ssub.s32 %s13, 1
      %s19 = ssub.s32 %s13, 2
      %s20 = sadd.s32 %s13, 1
      %s21 = ssub.s32 %s13, %s20
      %p22 = scmp.eq.s32.totalorder %s21, 0
      %s24 = sadd.s32 %s23, 1
      %s25 = scalar_select %p22, %s23, %s24
      %p28 = pneg %p22
      %p29 = scmp.eq.s32.totalorder %s13, 1
      %p30 = por %p28, %p29
      %p31 = scmp.ne.s32.totalorder %s23, %s26
      %p32 = scmp.eq.s32.totalorder %s13, 0
      %p33 = por %p31, %p32
      %p34 = scmp.ne.s32.totalorder %s23, %s26
      %p35 = scmp.eq.s32.totalorder %s18, 1
      %p36 = por %p34, %p35
      %p37 = scmp.ne.s32.totalorder %s26, %s27
      %p38 = scmp.eq.s32.totalorder %s18, 0
      %p39 = por %p37, %p38
      %p40 = scmp.ne.s32.totalorder %s26, %s27
      %p41 = scmp.eq.s32.totalorder %s19, 1
      %p42 = por %p40, %p41
      %p44 = scmp.ne.s32.totalorder %s27, %s43
      %p45 = scmp.eq.s32.totalorder %s19, 0
      %p46 = por %p44, %p45
      %s48 = sadd.s32 %s47, 1
      %p51 = scmp.eq.s32.totalorder %s13, 1
      %p52 = scmp.ne.s32.totalorder %s47, %s49
      %p53 = scmp.eq.s32.totalorder %s13, 0
      %p54 = por %p52, %p53
      %p55 = scmp.ne.s32.totalorder %s47, %s49
      %p56 = scmp.eq.s32.totalorder %s18, 1
      %p57 = por %p55, %p56
      %p58 = scmp.ne.s32.totalorder %s49, %s50
      %p59 = scmp.eq.s32.totalorder %s18, 0
      %p60 = por %p58, %p59
      %p61 = scmp.ne.s32.totalorder %s49, %s50
      %p62 = scmp.eq.s32.totalorder %s19, 1
      %p63 = por %p61, %p62
      %p65 = scmp.ne.s32.totalorder %s50, %s64
      %p66 = scmp.eq.s32.totalorder %s19, 0
      %p67 = por %p65, %p66
      %s69 = sadd.s32 %s68, 1
      %p72 = scmp.eq.s32.totalorder %s13, 1
      %p73 = scmp.ne.s32.totalorder %s68, %s70
      %p74 = scmp.eq.s32.totalorder %s13, 0
      %p75 = por %p73, %p74
      %p76 = scmp.ne.s32.totalorder %s68, %s70
      %p77 = scmp.eq.s32.totalorder %s18, 1
      %p78 = por %p76, %p77
      %p79 = scmp.ne.s32.totalorder %s70, %s71
      %p80 = scmp.eq.s32.totalorder %s18, 0
      %p81 = por %p79, %p80
      %p82 = scmp.ne.s32.totalorder %s70, %s71
      %p83 = scmp.eq.s32.totalorder %s19, 1
      %p84 = por %p82, %p83
      %p86 = scmp.ne.s32.totalorder %s71, %s85
      %p87 = scmp.eq.s32.totalorder %s19, 0
      %p88 = por %p86, %p87
      %s90 = sadd.s32 %s89, 1
      %p93 = scmp.eq.s32.totalorder %s13, 1
      %p94 = scmp.ne.s32.totalorder %s89, %s91
      %p95 = scmp.eq.s32.totalorder %s13, 0
      %p96 = por %p94, %p95
      %p97 = scmp.ne.s32.totalorder %s89, %s91
      %p98 = scmp.eq.s32.totalorder %s18, 1
      %p99 = por %p97, %p98
      %p100 = scmp.ne.s32.totalorder %s91, %s92
      %p101 = scmp.eq.s32.totalorder %s18, 0
      %p102 = por %p100, %p101
      %p103 = scmp.ne.s32.totalorder %s91, %s92
      %p104 = scmp.eq.s32.totalorder %s19, 1
      %p105 = por %p103, %p104
      %p107 = scmp.ne.s32.totalorder %s92, %s106
      %p108 = scmp.eq.s32.totalorder %s19, 0
      %p109 = por %p107, %p108
      %s110 = ssub.s32 %s13, %s20
      %p111 = scmp.eq.s32.totalorder %s110, 0
      %s113 = sadd.s32 %s112, 1
      %s114 = scalar_select %p111, %s112, %s113
      %p117 = pneg %p111
      %p118 = scmp.eq.s32.totalorder %s13, 1
      %p119 = por %p117, %p118
      %p120 = scmp.ne.s32.totalorder %s112, %s115
      %p121 = scmp.eq.s32.totalorder %s13, 0
      %p122 = por %p120, %p121
      %p123 = scmp.ne.s32.totalorder %s112, %s115
      %p124 = scmp.eq.s32.totalorder %s18, 1
      %p125 = por %p123, %p124
      %p126 = scmp.ne.s32.totalorder %s115, %s116
      %p127 = scmp.eq.s32.totalorder %s18, 0
      %p128 = por %p126, %p127
      %p129 = scmp.ne.s32.totalorder %s115, %s116
      %p130 = scmp.eq.s32.totalorder %s19, 1
      %p131 = por %p129, %p130
      %p133 = scmp.ne.s32.totalorder %s116, %s132
      %p134 = scmp.eq.s32.totalorder %s19, 0
      %p135 = por %p133, %p134
      %s136 = ssub.s32 %s13, %s20
      %p137 = scmp.eq.s32.totalorder %s136, 0
      %s139 = sadd.s32 %s138, 1
      %s140 = scalar_select %p137, %s138, %s139
      %p143 = pneg %p137
      %p144 = scmp.eq.s32.totalorder %s13, 1
      %p145 = por %p143, %p144
      %p146 = scmp.ne.s32.totalorder %s138, %s141
      %p147 = scmp.eq.s32.totalorder %s13, 0
      %p148 = por %p146, %p147
      %p149 = scmp.ne.s32.totalorder %s138, %s141
      %p150 = scmp.eq.s32.totalorder %s18, 1
      %p151 = por %p149, %p150
      %p152 = scmp.ne.s32.totalorder %s141, %s142
      %p153 = scmp.eq.s32.totalorder %s18, 0
      %p154 = por %p152, %p153
      %p155 = scmp.ne.s32.totalorder %s141, %s142
      %p156 = scmp.eq.s32.totalorder %s19, 1
      %p157 = por %p155, %p156
      %p159 = scmp.ne.s32.totalorder %s142, %s158
      %p160 = scmp.eq.s32.totalorder %s19, 0
      %p161 = por %p159, %p160
      %s162 = ssub.s32 %s13, %s20
      %p163 = scmp.eq.s32.totalorder %s162, 0
      %s165 = sadd.s32 %s164, 1
      %s166 = scalar_select %p163, %s164, %s165
      %p169 = pneg %p163
      %p170 = scmp.eq.s32.totalorder %s13, 1
      %p171 = por %p169, %p170
      %p172 = scmp.ne.s32.totalorder %s164, %s167
      %p173 = scmp.eq.s32.totalorder %s13, 0
      %p174 = por %p172, %p173
      %p175 = scmp.ne.s32.totalorder %s164, %s167
      %p176 = scmp.eq.s32.totalorder %s18, 1
      %p177 = por %p175, %p176
      %p178 = scmp.ne.s32.totalorder %s167, %s168
      %p179 = scmp.eq.s32.totalorder %s18, 0
      %p180 = por %p178, %p179
      %p181 = scmp.ne.s32.totalorder %s167, %s168
      %p182 = scmp.eq.s32.totalorder %s19, 1
      %p183 = por %p181, %p182
      %p185 = scmp.ne.s32.totalorder %s168, %s184
      %p186 = scmp.eq.s32.totalorder %s19, 0
      %p187 = por %p185, %p186
      %p188 = scmp.le.s32.totalorder 1, %s13
      %p189 = scmp.lt.s32.totalorder %s13, 3
      %p190 = pnand %p188, %p189
      %p191 = pneg %p190
      // Predicated region
      $region9: #{discriminator_forward.7} parent=5 // pred_check
        _
      $region10: #{discriminator_forward.7} parent=5 // pred_check_branch
        %193 = sbr.rel (%p190) target = $region12
      $region11: #{discriminator_forward.7} parent=5 // pred_region
        %s194 = ssub.s32 %s13, 1
        // Predicated region
        $region13: #{discriminator_forward.7} parent=11 // pred_check
          %p195 = pneg %p60
        $region14: #{discriminator_forward.7} parent=11 // pred_check_branch
          %197 = sbr.rel (%p195) target = $region16
        $region15: #{discriminator_forward.7} parent=11 // pred_region
          _
        $region16: #{discriminator_forward.7} parent=11 // pred_fallthru
          _
        // Predicated region
        $region17: #{discriminator_forward.7} parent=11 // pred_check
          %p198 = pneg %p81
        $region18: #{discriminator_forward.7} parent=11 // pred_check_branch
          %200 = sbr.rel (%p198) target = $region20
        $region19: #{discriminator_forward.7} parent=11 // pred_region
          _
        $region20: #{discriminator_forward.7} parent=11 // pred_fallthru
          _
        // Predicated region
        $region21: #{discriminator_forward.7} parent=11 // pred_check
          %p201 = pneg %p102
        $region22: #{discriminator_forward.7} parent=11 // pred_check_branch
          %203 = sbr.rel (%p201) target = $region24
        $region23: #{discriminator_forward.7} parent=11 // pred_region
          _
        $region24: #{discriminator_forward.7} parent=11 // pred_fallthru
          _
      $region12: #{discriminator_forward.7} parent=5 // pred_fallthru
        _
      %p204 = scmp.lt.s32.totalorder %s13, 2
      // Predicated region
      $region25: #{discriminator_forward.7} parent=5 // pred_check
        %p205 = pneg %p204
      $region26: #{discriminator_forward.7} parent=5 // pred_check_branch
        %207 = sbr.rel (%p205) target = $region28
      $region27: #{discriminator_forward.7} parent=5 // pred_region
        // Predicated region
        $region29: #{discriminator_forward.7} parent=27 // pred_check
          %p208 = pneg %p33
        $region30: #{discriminator_forward.7} parent=27 // pred_check_branch
          %210 = sbr.rel (%p208) target = $region32
        $region31: #{discriminator_forward.7} parent=27 // pred_region
          %s211 = smul.u32 26, %s13
          %s212 = ssub.s32 49, %s211
          %p213 = scmp.lt.s32.totalorder %s212, 26
          %s214 = scalar_select %p213, %s212, 26
          %s215 = smul.u32 4, %s214
          %s216 = smul.u32 %s215, 2
          %p217 = scmp.lt.s32.totalorder %s211, 48
          %s218 = scalar_select %p217, %s211, 48
          %s219 = smul.addr %s218, 2
          %s220 = smul.addr %s219, 4
          %s221 = scalar_lea.vmem %s0, %s220
          %s222 = smul.u32 26, %s13
          %s223 = ssub.s32 49, %s222
          %p224 = scmp.lt.s32.totalorder %s223, 26
          %s225 = scalar_select %p224, %s223, 26
          %s226 = smul.u32 4, %s225
          %s227 = smul.u32 %s226, 2
        $region32: #{discriminator_forward.7} parent=27 // pred_fallthru
          _
      $region28: #{discriminator_forward.7} parent=5 // pred_fallthru
        _
      %p228 = scmp.le.s32.totalorder 1, %s13
      %p229 = scmp.lt.s32.totalorder %s13, 3
      %p230 = pnand %p228, %p229
      %p231 = pneg %p230
      // Predicated region
      $region33: #{discriminator_forward.7} parent=5 // pred_check
        _
      $region34: #{discriminator_forward.7} parent=5 // pred_check_branch
        %233 = sbr.rel (%p230) target = $region36
      $region35: #{discriminator_forward.7} parent=5 // pred_region
        %s234 = ssub.s32 %s13, 1
        %s235 = smul.u32 26, %s18
        %s236 = ssub.s32 49, %s235
        %p237 = scmp.lt.s32.totalorder %s236, 26
        %s238 = scalar_select %p237, %s236, 26
        %s239 = smul.u32 4, %s238
        %s240 = smul.u32 %s239, 2
        %p241 = scmp.lt.s32.totalorder %s235, 48
        %s242 = scalar_select %p241, %s235, 48
        %s243 = smul.addr %s242, 2
        %s244 = smul.addr %s243, 4
        %s245 = scalar_lea.vmem %s0, %s244
        %p246 = pneg %p39
        %p247 = pneg %p36
        %p248 = pneg %p60
        %p249 = pneg %p57
        %p250 = pneg %p81
        %p251 = pneg %p78
        %p252 = pneg %p102
        %p253 = pneg %p99
        %p254 = pneg %p128
        %p255 = pneg %p125
        %s256 = sand.u32 %s115, 1
        %s257 = sand.u32 %s115, 1
        %s258 = smul.addr %s257, 104
        %s259 = scalar_lea.vmem [#allocation2], %s258
        %p260 = pneg %p154
        %p261 = pneg %p151
        %p262 = scmp.lt.s32.totalorder %s18, 1
        %s263 = scalar_select %p262, %s18, 1
        %s264 = scalar_lea.vmem %s5, %s263
        %p265 = pneg %p180
        %p266 = pneg %p177
        %p267 = scmp.lt.s32.totalorder %s18, 1
        %s268 = scalar_select %p267, %s18, 1
        %s269 = scalar_lea.vmem %s6, %s268
        %s270 = smul.u32 26, %s18
        %s271 = ssub.s32 49, %s270
        %p272 = scmp.lt.s32.totalorder %s271, 26
        %s273 = scalar_select %p272, %s271, 26
        %s274 = smul.u32 4, %s273
        %s275 = smul.u32 %s274, 2
        %p276 = scmp.lt.s32.totalorder %s270, 48
        %s277 = scalar_select %p276, %s270, 48
        %s278 = smul.addr %s277, 2
        %s279 = smul.addr %s278, 4
        %s280 = scalar_lea.vmem %s0, %s279
        %s281 = smul.u32 26, %s18
        %s282 = ssub.s32 49, %s281
        %p283 = scmp.lt.s32.totalorder %s282, 26
        %s284 = scalar_select %p283, %s282, 26
        %s285 = smul.u32 4, %s284
        %s286 = smul.u32 %s285, 2
        %s287 = smul.u32 26, %s18
        %s288 = ssub.s32 49, %s287
        %p289 = scmp.lt.s32.totalorder %s288, 26
        %s290 = scalar_select %p289, %s288, 26
        %s291 = smul.u32 4, %s290
        %p292 = scmp.lt.s32.totalorder %s18, 1
        %s293 = scalar_select %p292, %s18, 1
        %s294 = scalar_lea.vmem %s5, %s293
        %p295 = scmp.lt.s32.totalorder %s18, 1
        %s296 = scalar_select %p295, %s18, 1
        %s297 = scalar_lea.vmem %s6, %s296
        %v298 = vld [vmem:[%s280] sm:$0xff]
        %v299 = vld [vmem:[%s280 + $0x8] sm:$0xff]
        %v300 = vld [vmem:[%s280 + $0x10] sm:$0xff]
        %v301 = vld [vmem:[%s280 + $0x18] sm:$0xff]
        %v302 = vld [vmem:[%s280 + $0x20] sm:$0xff]
        %v303 = vld [vmem:[%s280 + $0x28] sm:$0xff]
        %v304 = vld [vmem:[%s280 + $0x30] sm:$0xff]
        %v305 = vld [vmem:[%s280 + $0x38] sm:$0xff]
        %v306 = vld [vmem:[%s280 + $0x40] sm:$0xff]
        %v307 = vld [vmem:[%s280 + $0x48] sm:$0xff]
        %v308 = vld [vmem:[%s280 + $0x50] sm:$0xff]
        %v309 = vld [vmem:[%s280 + $0x58] sm:$0xff]
        %v310 = vld [vmem:[%s280 + $0x60] sm:$0xff]
        %v311 = vld [vmem:[%s280 + $0x68] sm:$0xff]
        %v312 = vld [vmem:[%s280 + $0x70] sm:$0xff]
        %v313 = vld [vmem:[%s280 + $0x78] sm:$0xff]
        %v314 = vld [vmem:[%s280 + $0x80] sm:$0xff]
        %v315 = vld [vmem:[%s280 + $0x88] sm:$0xff]
        %v316 = vld [vmem:[%s280 + $0x90] sm:$0xff]
        %v317 = vld [vmem:[%s280 + $0x98] sm:$0xff]
        %v318 = vld [vmem:[%s280 + $0xa0] sm:$0xff]
        %v319 = vld [vmem:[%s280 + $0xa8] sm:$0xff]
        %v320 = vld [vmem:[%s280 + $0xb0] sm:$0xff]
        %v321 = vld [vmem:[%s280 + $0xb8] sm:$0xff]
        %v322 = vld [vmem:[%s280 + $0xc0] sm:$0xff]
        %v323 = vld [vmem:[%s280 + $0xc8] sm:$0xff]
        %v324 = vunpack.c.l.bf16 %v298
        %v325 = vunpack.c.h.bf16 %v298
        %v326 = vunpack.c.l.bf16 %v299
        %v327 = vunpack.c.h.bf16 %v299
        %v328 = vunpack.c.l.bf16 %v300
        %v329 = vunpack.c.h.bf16 %v300
        %v330 = vunpack.c.l.bf16 %v301
        %v331 = vunpack.c.h.bf16 %v301
        %v332 = vunpack.c.l.bf16 %v302
        %v333 = vunpack.c.h.bf16 %v302
        %v334 = vunpack.c.l.bf16 %v303
        %v335 = vunpack.c.h.bf16 %v303
        %v336 = vunpack.c.l.bf16 %v304
        %v337 = vunpack.c.h.bf16 %v304
        %v338 = vunpack.c.l.bf16 %v305
        %v339 = vunpack.c.h.bf16 %v305
        %v340 = vunpack.c.l.bf16 %v306
        %v341 = vunpack.c.h.bf16 %v306
        %v342 = vunpack.c.l.bf16 %v307
        %v343 = vunpack.c.h.bf16 %v307
        %v344 = vunpack.c.l.bf16 %v308
        %v345 = vunpack.c.h.bf16 %v308
        %v346 = vunpack.c.l.bf16 %v309
        %v347 = vunpack.c.h.bf16 %v309
        %v348 = vunpack.c.l.bf16 %v310
        %v349 = vunpack.c.h.bf16 %v310
        %v350 = vunpack.c.l.bf16 %v311
        %v351 = vunpack.c.h.bf16 %v311
        %v352 = vunpack.c.l.bf16 %v312
        %v353 = vunpack.c.h.bf16 %v312
        %v354 = vunpack.c.l.bf16 %v313
        %v355 = vunpack.c.h.bf16 %v313
        %v356 = vunpack.c.l.bf16 %v314
        %v357 = vunpack.c.h.bf16 %v314
        %v358 = vunpack.c.l.bf16 %v315
        %v359 = vunpack.c.h.bf16 %v315
        %v360 = vunpack.c.l.bf16 %v316
        %v361 = vunpack.c.h.bf16 %v316
        %v362 = vunpack.c.l.bf16 %v317
        %v363 = vunpack.c.h.bf16 %v317
        %v364 = vunpack.c.l.bf16 %v318
        %v365 = vunpack.c.h.bf16 %v318
        %v366 = vunpack.c.l.bf16 %v319
        %v367 = vunpack.c.h.bf16 %v319
        %v368 = vunpack.c.l.bf16 %v320
        %v369 = vunpack.c.h.bf16 %v320
        %v370 = vunpack.c.l.bf16 %v321
        %v371 = vunpack.c.h.bf16 %v321
        %v372 = vunpack.c.l.bf16 %v322
        %v373 = vunpack.c.h.bf16 %v322
        %v374 = vunpack.c.l.bf16 %v323
        %v375 = vunpack.c.h.bf16 %v323
        %v376 = vld [vmem:[%s2] sm:$0x3]
        %v378 = vperm.slane %v376, 0
        %v379 = vperm.slane %v376, 1
        %v382 = vmul.f32 %v324, %v378
        %v383 = vmul.f32 %v325, %v379
        %v384 = vmul.f32 %v326, %v378
        %v385 = vmul.f32 %v327, %v379
        %v386 = vmul.f32 %v328, %v378
        %v387 = vmul.f32 %v329, %v379
        %v388 = vmul.f32 %v330, %v378
        %v389 = vmul.f32 %v331, %v379
        %v390 = vmul.f32 %v332, %v378
        %v391 = vmul.f32 %v333, %v379
        %v392 = vmul.f32 %v334, %v378
        %v393 = vmul.f32 %v335, %v379
        %v394 = vmul.f32 %v336, %v378
        %v395 = vmul.f32 %v337, %v379
        %v396 = vmul.f32 %v338, %v378
        %v397 = vmul.f32 %v339, %v379
        %v398 = vmul.f32 %v340, %v378
        %v399 = vmul.f32 %v341, %v379
        %v400 = vmul.f32 %v342, %v378
        %v401 = vmul.f32 %v343, %v379
        %v402 = vmul.f32 %v344, %v378
        %v403 = vmul.f32 %v345, %v379
        %v404 = vmul.f32 %v346, %v378
        %v405 = vmul.f32 %v347, %v379
        %v406 = vmul.f32 %v348, %v378
        %v407 = vmul.f32 %v349, %v379
        %v408 = vmul.f32 %v350, %v378
        %v409 = vmul.f32 %v351, %v379
        %v410 = vmul.f32 %v352, %v378
        %v411 = vmul.f32 %v353, %v379
        %v412 = vmul.f32 %v354, %v378
        %v413 = vmul.f32 %v355, %v379
        %v414 = vmul.f32 %v356, %v378
        %v415 = vmul.f32 %v357, %v379
        %v416 = vmul.f32 %v358, %v378
        %v417 = vmul.f32 %v359, %v379
        %v418 = vmul.f32 %v360, %v378
        %v419 = vmul.f32 %v361, %v379
        %v420 = vmul.f32 %v362, %v378
        %v421 = vmul.f32 %v363, %v379
        %v422 = vmul.f32 %v364, %v378
        %v423 = vmul.f32 %v365, %v379
        %v424 = vmul.f32 %v366, %v378
        %v425 = vmul.f32 %v367, %v379
        %v426 = vmul.f32 %v368, %v378
        %v427 = vmul.f32 %v369, %v379
        %v428 = vmul.f32 %v370, %v378
        %v429 = vmul.f32 %v371, %v379
        %v430 = vmul.f32 %v372, %v378
        %v431 = vmul.f32 %v373, %v379
        %v432 = vmul.f32 %v374, %v378
        %v433 = vmul.f32 %v375, %v379
        %v434 = vld [vmem:[%s3] sm:$0x3]
        %v436 = vperm.slane %v434, 0
        %v437 = vperm.slane %v434, 1
        %v440 = vadd.f32 %v382, %v436
        %v441 = vadd.f32 %v383, %v437
        %v442 = vadd.f32 %v384, %v436
        %v443 = vadd.f32 %v385, %v437
        %v444 = vadd.f32 %v386, %v436
        %v445 = vadd.f32 %v387, %v437
        %v446 = vadd.f32 %v388, %v436
        %v447 = vadd.f32 %v389, %v437
        %v448 = vadd.f32 %v390, %v436
        %v449 = vadd.f32 %v391, %v437
        %v450 = vadd.f32 %v392, %v436
        %v451 = vadd.f32 %v393, %v437
        %v452 = vadd.f32 %v394, %v436
        %v453 = vadd.f32 %v395, %v437
        %v454 = vadd.f32 %v396, %v436
        %v455 = vadd.f32 %v397, %v437
        %v456 = vadd.f32 %v398, %v436
        %v457 = vadd.f32 %v399, %v437
        %v458 = vadd.f32 %v400, %v436
        %v459 = vadd.f32 %v401, %v437
        %v460 = vadd.f32 %v402, %v436
        %v461 = vadd.f32 %v403, %v437
        %v462 = vadd.f32 %v404, %v436
        %v463 = vadd.f32 %v405, %v437
        %v464 = vadd.f32 %v406, %v436
        %v465 = vadd.f32 %v407, %v437
        %v466 = vadd.f32 %v408, %v436
        %v467 = vadd.f32 %v409, %v437
        %v468 = vadd.f32 %v410, %v436
        %v469 = vadd.f32 %v411, %v437
        %v470 = vadd.f32 %v412, %v436
        %v471 = vadd.f32 %v413, %v437
        %v472 = vadd.f32 %v414, %v436
        %v473 = vadd.f32 %v415, %v437
        %v474 = vadd.f32 %v416, %v436
        %v475 = vadd.f32 %v417, %v437
        %v476 = vadd.f32 %v418, %v436
        %v477 = vadd.f32 %v419, %v437
        %v478 = vadd.f32 %v420, %v436
        %v479 = vadd.f32 %v421, %v437
        %v480 = vadd.f32 %v422, %v436
        %v481 = vadd.f32 %v423, %v437
        %v482 = vadd.f32 %v424, %v436
        %v483 = vadd.f32 %v425, %v437
        %v484 = vadd.f32 %v426, %v436
        %v485 = vadd.f32 %v427, %v437
        %v486 = vadd.f32 %v428, %v436
        %v487 = vadd.f32 %v429, %v437
        %v488 = vadd.f32 %v430, %v436
        %v489 = vadd.f32 %v431, %v437
        %v490 = vadd.f32 %v432, %v436
        %v491 = vadd.f32 %v433, %v437
        %v492 = vmul.f32 %v440, 0.2
        %v493 = vmul.f32 %v441, 0.2
        %v494 = vmul.f32 %v442, 0.2
        %v495 = vmul.f32 %v443, 0.2
        %v496 = vmul.f32 %v444, 0.2
        %v497 = vmul.f32 %v445, 0.2
        %v498 = vmul.f32 %v446, 0.2
        %v499 = vmul.f32 %v447, 0.2
        %v500 = vmul.f32 %v448, 0.2
        %v501 = vmul.f32 %v449, 0.2
        %v502 = vmul.f32 %v450, 0.2
        %v503 = vmul.f32 %v451, 0.2
        %v504 = vmul.f32 %v452, 0.2
        %v505 = vmul.f32 %v453, 0.2
        %v506 = vmul.f32 %v454, 0.2
        %v507 = vmul.f32 %v455, 0.2
        %v508 = vmul.f32 %v456, 0.2
        %v509 = vmul.f32 %v457, 0.2
        %v510 = vmul.f32 %v458, 0.2
        %v511 = vmul.f32 %v459, 0.2
        %v512 = vmul.f32 %v460, 0.2
        %v513 = vmul.f32 %v461, 0.2
        %v514 = vmul.f32 %v462, 0.2
        %v515 = vmul.f32 %v463, 0.2
        %v516 = vmul.f32 %v464, 0.2
        %v517 = vmul.f32 %v465, 0.2
        %v518 = vmul.f32 %v466, 0.2
        %v519 = vmul.f32 %v467, 0.2
        %v520 = vmul.f32 %v468, 0.2
        %v521 = vmul.f32 %v469, 0.2
        %v522 = vmul.f32 %v470, 0.2
        %v523 = vmul.f32 %v471, 0.2
        %v524 = vmul.f32 %v472, 0.2
        %v525 = vmul.f32 %v473, 0.2
        %v526 = vmul.f32 %v474, 0.2
        %v527 = vmul.f32 %v475, 0.2
        %v528 = vmul.f32 %v476, 0.2
        %v529 = vmul.f32 %v477, 0.2
        %v530 = vmul.f32 %v478, 0.2
        %v531 = vmul.f32 %v479, 0.2
        %v532 = vmul.f32 %v480, 0.2
        %v533 = vmul.f32 %v481, 0.2
        %v534 = vmul.f32 %v482, 0.2
        %v535 = vmul.f32 %v483, 0.2
        %v536 = vmul.f32 %v484, 0.2
        %v537 = vmul.f32 %v485, 0.2
        %v538 = vmul.f32 %v486, 0.2
        %v539 = vmul.f32 %v487, 0.2
        %v540 = vmul.f32 %v488, 0.2
        %v541 = vmul.f32 %v489, 0.2
        %v542 = vmul.f32 %v490, 0.2
        %v543 = vmul.f32 %v491, 0.2
        %v544 = vmax.f32 %v440, %v492
        %v545 = vmax.f32 %v441, %v493
        %v546 = vmax.f32 %v442, %v494
        %v547 = vmax.f32 %v443, %v495
        %v548 = vmax.f32 %v444, %v496
        %v549 = vmax.f32 %v445, %v497
        %v550 = vmax.f32 %v446, %v498
        %v551 = vmax.f32 %v447, %v499
        %v552 = vmax.f32 %v448, %v500
        %v553 = vmax.f32 %v449, %v501
        %v554 = vmax.f32 %v450, %v502
        %v555 = vmax.f32 %v451, %v503
        %v556 = vmax.f32 %v452, %v504
        %v557 = vmax.f32 %v453, %v505
        %v558 = vmax.f32 %v454, %v506
        %v559 = vmax.f32 %v455, %v507
        %v560 = vmax.f32 %v456, %v508
        %v561 = vmax.f32 %v457, %v509
        %v562 = vmax.f32 %v458, %v510
        %v563 = vmax.f32 %v459, %v511
        %v564 = vmax.f32 %v460, %v512
        %v565 = vmax.f32 %v461, %v513
        %v566 = vmax.f32 %v462, %v514
        %v567 = vmax.f32 %v463, %v515
        %v568 = vmax.f32 %v464, %v516
        %v569 = vmax.f32 %v465, %v517
        %v570 = vmax.f32 %v466, %v518
        %v571 = vmax.f32 %v467, %v519
        %v572 = vmax.f32 %v468, %v520
        %v573 = vmax.f32 %v469, %v521
        %v574 = vmax.f32 %v470, %v522
        %v575 = vmax.f32 %v471, %v523
        %v576 = vmax.f32 %v472, %v524
        %v577 = vmax.f32 %v473, %v525
        %v578 = vmax.f32 %v474, %v526
        %v579 = vmax.f32 %v475, %v527
        %v580 = vmax.f32 %v476, %v528
        %v581 = vmax.f32 %v477, %v529
        %v582 = vmax.f32 %v478, %v530
        %v583 = vmax.f32 %v479, %v531
        %v584 = vmax.f32 %v480, %v532
        %v585 = vmax.f32 %v481, %v533
        %v586 = vmax.f32 %v482, %v534
        %v587 = vmax.f32 %v483, %v535
        %v588 = vmax.f32 %v484, %v536
        %v589 = vmax.f32 %v485, %v537
        %v590 = vmax.f32 %v486, %v538
        %v591 = vmax.f32 %v487, %v539
        %v592 = vmax.f32 %v488, %v540
        %v593 = vmax.f32 %v489, %v541
        %v594 = vmax.f32 %v490, %v542
        %v595 = vmax.f32 %v491, %v543
        %v596 = vpack.c.bf16 %v546, %v544
        %v597 = vpack.c.bf16 %v547, %v545
        %v598 = vpack.c.bf16 %v550, %v548
        %v599 = vpack.c.bf16 %v551, %v549
        %v600 = vpack.c.bf16 %v554, %v552
        %v601 = vpack.c.bf16 %v555, %v553
        %v602 = vpack.c.bf16 %v558, %v556
        %v603 = vpack.c.bf16 %v559, %v557
        %v604 = vpack.c.bf16 %v562, %v560
        %v605 = vpack.c.bf16 %v563, %v561
        %v606 = vpack.c.bf16 %v566, %v564
        %v607 = vpack.c.bf16 %v567, %v565
        %v608 = vpack.c.bf16 %v570, %v568
        %v609 = vpack.c.bf16 %v571, %v569
        %v610 = vpack.c.bf16 %v574, %v572
        %v611 = vpack.c.bf16 %v575, %v573
        %v612 = vpack.c.bf16 %v578, %v576
        %v613 = vpack.c.bf16 %v579, %v577
        %v614 = vpack.c.bf16 %v582, %v580
        %v615 = vpack.c.bf16 %v583, %v581
        %v616 = vpack.c.bf16 %v586, %v584
        %v617 = vpack.c.bf16 %v587, %v585
        %v618 = vpack.c.bf16 %v590, %v588
        %v619 = vpack.c.bf16 %v591, %v589
        %v620 = vpack.c.bf16 %v594, %v592
        %v621 = vpack.c.bf16 %v595, %v593
        %v622 = vld [vmem:[%s1] sm:$0xf]
        %v623 = vld [vmem:[%s1 + $0x4] sm:$0xf]
        %v624 = vld [vmem:[%s1 + $0x8] sm:$0xf]
        %v625 = vld [vmem:[%s1 + $0xc] sm:$0xf]
        %v626 = vld [vmem:[%s1 + $0x10] sm:$0xf]
        %v627 = vld [vmem:[%s1 + $0x14] sm:$0xf]
        %v628 = vld [vmem:[%s1 + $0x18] sm:$0xf]
        %v629 = vld [vmem:[%s1 + $0x1c] sm:$0xf]
        %v630 = vld [vmem:[%s1 + $0x20] sm:$0xf]
        %v631 = vld [vmem:[%s1 + $0x24] sm:$0xf]
        %v632 = vld [vmem:[%s1 + $0x28] sm:$0xf]
        %v633 = vld [vmem:[%s1 + $0x2c] sm:$0xf]
        %v634 = vld [vmem:[%s1 + $0x30] sm:$0xf]
        %v635 = vld [vmem:[%s1 + $0x34] sm:$0xf]
        %v636 = vld [vmem:[%s1 + $0x38] sm:$0xf]
        %v637 = vld [vmem:[%s1 + $0x3c] sm:$0xf]
        %v638 = vld [vmem:[%s1 + $0x40] sm:$0xf]
        %v639 = vld [vmem:[%s1 + $0x44] sm:$0xf]
        %v640 = vld [vmem:[%s1 + $0x48] sm:$0xf]
        %v641 = vld [vmem:[%s1 + $0x4c] sm:$0xf]
        %v642 = vld [vmem:[%s1 + $0x50] sm:$0xf]
        %v643 = vld [vmem:[%s1 + $0x54] sm:$0xf]
        %v644 = vld [vmem:[%s1 + $0x58] sm:$0xf]
        %v645 = vld [vmem:[%s1 + $0x5c] sm:$0xf]
        %v646 = vld [vmem:[%s1 + $0x60] sm:$0xf]
        %v647 = vld [vmem:[%s1 + $0x64] sm:$0xf]
        %v648 = vld [vmem:[%s1 + $0x68] sm:$0xf]
        %v649 = vld [vmem:[%s1 + $0x6c] sm:$0xf]
        %v650 = vld [vmem:[%s1 + $0x70] sm:$0xf]
        %v651 = vld [vmem:[%s1 + $0x74] sm:$0xf]
        %v652 = vld [vmem:[%s1 + $0x78] sm:$0xf]
        %v653 = vld [vmem:[%s1 + $0x7c] sm:$0xf]
        %v686 = vunpack.c.l.b16 %v622
        %v687 = vunpack.c.l.b16 %v623
        %v688 = vunpack.c.l.b16 %v624
        %v689 = vunpack.c.l.b16 %v625
        %v690 = vunpack.c.l.b16 %v626
        %v691 = vunpack.c.l.b16 %v627
        %v692 = vunpack.c.l.b16 %v628
        %v693 = vunpack.c.l.b16 %v629
        %v694 = vunpack.c.l.b16 %v630
        %v695 = vunpack.c.l.b16 %v631
        %v696 = vunpack.c.l.b16 %v632
        %v697 = vunpack.c.l.b16 %v633
        %v698 = vunpack.c.l.b16 %v634
        %v699 = vunpack.c.l.b16 %v635
        %v700 = vunpack.c.l.b16 %v636
        %v701 = vunpack.c.l.b16 %v637
        %v702 = vunpack.c.l.b16 %v638
        %v703 = vunpack.c.l.b16 %v639
        %v704 = vunpack.c.l.b16 %v640
        %v705 = vunpack.c.l.b16 %v641
        %v706 = vunpack.c.l.b16 %v642
        %v707 = vunpack.c.l.b16 %v643
        %v708 = vunpack.c.l.b16 %v644
        %v709 = vunpack.c.l.b16 %v645
        %v710 = vunpack.c.l.b16 %v646
        %v711 = vunpack.c.l.b16 %v647
        %v712 = vunpack.c.l.b16 %v648
        %v713 = vunpack.c.l.b16 %v649
        %v714 = vunpack.c.l.b16 %v650
        %v715 = vunpack.c.l.b16 %v651
        %v716 = vunpack.c.l.b16 %v652
        %v717 = vunpack.c.l.b16 %v653
        %v718 = vpack.c.b16 %v687, %v686
        %v719 = vpack.c.b16 %v689, %v688
        %v720 = vpack.c.b16 %v691, %v690
        %v721 = vpack.c.b16 %v693, %v692
        %v722 = vpack.c.b16 %v695, %v694
        %v723 = vpack.c.b16 %v697, %v696
        %v724 = vpack.c.b16 %v699, %v698
        %v725 = vpack.c.b16 %v701, %v700
        %v726 = vpack.c.b16 %v703, %v702
        %v727 = vpack.c.b16 %v705, %v704
        %v728 = vpack.c.b16 %v707, %v706
        %v729 = vpack.c.b16 %v709, %v708
        %v730 = vpack.c.b16 %v711, %v710
        %v731 = vpack.c.b16 %v713, %v712
        %v732 = vpack.c.b16 %v715, %v714
        %v733 = vpack.c.b16 %v717, %v716
        %750 = vmatpush.bf16.msra.mxu0 %v725
        %751 = vmatpush.bf16.msra.mxu0 %v724
        %752 = vmatpush.bf16.msra.mxu0 %v723
        %753 = vmatpush.bf16.msra.mxu0 %v722
        %754 = vmatpush.bf16.msra.mxu0 %v721
        %755 = vmatpush.bf16.msra.mxu0 %v720
        %756 = vmatpush.bf16.msra.mxu0 %v719
        %757 = vmatpush.bf16.msra.mxu0 %v718
        %758 = vmatmul.bf16.gmra.mxu0 %v596
        %v759 = vpop.f32.mrf.mxu0
        %v760 = vadd.f32 0.0, %v759
        %v761 = vpop.f32.mrf.mxu0
        %v762 = vadd.f32 0.0, %v761
        %763 = vmatmul.bf16.gmra.mxu0 %v598
        %v764 = vpop.f32.mrf.mxu0
        %v765 = vadd.f32 0.0, %v764
        %v766 = vpop.f32.mrf.mxu0
        %v767 = vadd.f32 0.0, %v766
        %768 = vmatmul.bf16.gmra.mxu0 %v600
        %v769 = vpop.f32.mrf.mxu0
        %v770 = vadd.f32 0.0, %v769
        %v771 = vpop.f32.mrf.mxu0
        %v772 = vadd.f32 0.0, %v771
        %773 = vmatmul.bf16.gmra.mxu0 %v602
        %v774 = vpop.f32.mrf.mxu0
        %v775 = vadd.f32 0.0, %v774
        %v776 = vpop.f32.mrf.mxu0
        %v777 = vadd.f32 0.0, %v776
        %778 = vmatmul.bf16.gmra.mxu0 %v604
        %v779 = vpop.f32.mrf.mxu0
        %v780 = vadd.f32 0.0, %v779
        %v781 = vpop.f32.mrf.mxu0
        %v782 = vadd.f32 0.0, %v781
        %783 = vmatmul.bf16.gmra.mxu0 %v606
        %v784 = vpop.f32.mrf.mxu0
        %v785 = vadd.f32 0.0, %v784
        %v786 = vpop.f32.mrf.mxu0
        %v787 = vadd.f32 0.0, %v786
        %788 = vmatmul.bf16.gmra.mxu0 %v608
        %v789 = vpop.f32.mrf.mxu0
        %v790 = vadd.f32 0.0, %v789
        %v791 = vpop.f32.mrf.mxu0
        %v792 = vadd.f32 0.0, %v791
        %793 = vmatmul.bf16.gmra.mxu0 %v610
        %v794 = vpop.f32.mrf.mxu0
        %v795 = vadd.f32 0.0, %v794
        %v796 = vpop.f32.mrf.mxu0
        %v797 = vadd.f32 0.0, %v796
        %798 = vmatmul.bf16.gmra.mxu0 %v612
        %v799 = vpop.f32.mrf.mxu0
        %v800 = vadd.f32 0.0, %v799
        %v801 = vpop.f32.mrf.mxu0
        %v802 = vadd.f32 0.0, %v801
        %803 = vmatmul.bf16.gmra.mxu0 %v614
        %v804 = vpop.f32.mrf.mxu0
        %v805 = vadd.f32 0.0, %v804
        %v806 = vpop.f32.mrf.mxu0
        %v807 = vadd.f32 0.0, %v806
        %808 = vmatmul.bf16.gmra.mxu0 %v616
        %v809 = vpop.f32.mrf.mxu0
        %v810 = vadd.f32 0.0, %v809
        %v811 = vpop.f32.mrf.mxu0
        %v812 = vadd.f32 0.0, %v811
        %813 = vmatmul.bf16.gmra.mxu0 %v618
        %v814 = vpop.f32.mrf.mxu0
        %v815 = vadd.f32 0.0, %v814
        %v816 = vpop.f32.mrf.mxu0
        %v817 = vadd.f32 0.0, %v816
        %818 = vmatmul.bf16.gmra.mxu0 %v620
        %v819 = vpop.f32.mrf.mxu0
        %v820 = vadd.f32 0.0, %v819
        %v821 = vpop.f32.mrf.mxu0
        %v822 = vadd.f32 0.0, %v821
        %823 = vdwg.mxu0
        %824 = vmatpush.bf16.msra.mxu0 %v733
        %825 = vmatpush.bf16.msra.mxu0 %v732
        %826 = vmatpush.bf16.msra.mxu0 %v731
        %827 = vmatpush.bf16.msra.mxu0 %v730
        %828 = vmatpush.bf16.msra.mxu0 %v729
        %829 = vmatpush.bf16.msra.mxu0 %v728
        %830 = vmatpush.bf16.msra.mxu0 %v727
        %831 = vmatpush.bf16.msra.mxu0 %v726
        %832 = vmatmul.bf16.gmra.mxu0 %v597
        %v833 = vpop.f32.mrf.mxu0
        %v834 = vadd.f32 %v760, %v833
        %v835 = vpop.f32.mrf.mxu0
        %v836 = vadd.f32 %v762, %v835
        %837 = vmatmul.bf16.gmra.mxu0 %v599
        %v838 = vpop.f32.mrf.mxu0
        %v839 = vadd.f32 %v765, %v838
        %v840 = vpop.f32.mrf.mxu0
        %v841 = vadd.f32 %v767, %v840
        %842 = vmatmul.bf16.gmra.mxu0 %v601
        %v843 = vpop.f32.mrf.mxu0
        %v844 = vadd.f32 %v770, %v843
        %v845 = vpop.f32.mrf.mxu0
        %v846 = vadd.f32 %v772, %v845
        %847 = vmatmul.bf16.gmra.mxu0 %v603
        %v848 = vpop.f32.mrf.mxu0
        %v849 = vadd.f32 %v775, %v848
        %v850 = vpop.f32.mrf.mxu0
        %v851 = vadd.f32 %v777, %v850
        %852 = vmatmul.bf16.gmra.mxu0 %v605
        %v853 = vpop.f32.mrf.mxu0
        %v854 = vadd.f32 %v780, %v853
        %v855 = vpop.f32.mrf.mxu0
        %v856 = vadd.f32 %v782, %v855
        %857 = vmatmul.bf16.gmra.mxu0 %v607
        %v858 = vpop.f32.mrf.mxu0
        %v859 = vadd.f32 %v785, %v858
        %v860 = vpop.f32.mrf.mxu0
        %v861 = vadd.f32 %v787, %v860
        %862 = vmatmul.bf16.gmra.mxu0 %v609
        %v863 = vpop.f32.mrf.mxu0
        %v864 = vadd.f32 %v790, %v863
        %v865 = vpop.f32.mrf.mxu0
        %v866 = vadd.f32 %v792, %v865
        %867 = vmatmul.bf16.gmra.mxu0 %v611
        %v868 = vpop.f32.mrf.mxu0
        %v869 = vadd.f32 %v795, %v868
        %v870 = vpop.f32.mrf.mxu0
        %v871 = vadd.f32 %v797, %v870
        %872 = vmatmul.bf16.gmra.mxu0 %v613
        %v873 = vpop.f32.mrf.mxu0
        %v874 = vadd.f32 %v800, %v873
        %v875 = vpop.f32.mrf.mxu0
        %v876 = vadd.f32 %v802, %v875
        %877 = vmatmul.bf16.gmra.mxu0 %v615
        %v878 = vpop.f32.mrf.mxu0
        %v879 = vadd.f32 %v805, %v878
        %v880 = vpop.f32.mrf.mxu0
        %v881 = vadd.f32 %v807, %v880
        %882 = vmatmul.bf16.gmra.mxu0 %v617
        %v883 = vpop.f32.mrf.mxu0
        %v884 = vadd.f32 %v810, %v883
        %v885 = vpop.f32.mrf.mxu0
        %v886 = vadd.f32 %v812, %v885
        %887 = vmatmul.bf16.gmra.mxu0 %v619
        %v888 = vpop.f32.mrf.mxu0
        %v889 = vadd.f32 %v815, %v888
        %v890 = vpop.f32.mrf.mxu0
        %v891 = vadd.f32 %v817, %v890
        %892 = vmatmul.bf16.gmra.mxu0 %v621
        %v893 = vpop.f32.mrf.mxu0
        %v894 = vadd.f32 %v820, %v893
        %v895 = vpop.f32.mrf.mxu0
        %v896 = vadd.f32 %v822, %v895
        %897 = vdwg.mxu0
        %v898 = vlaneseq
        %v899 = vshrl.u32 %v898, 7
        %v900 = vadd.s32 %v899, 8
        %v901 = vadd.s32 %v899, 16
        %v902 = vadd.s32 %v899, 24
        %v903 = vadd.s32 %v899, 32
        %v904 = vadd.s32 %v899, 40
        %v905 = vadd.s32 %v899, 48
        %v906 = vadd.s32 %v899, 56
        %v907 = vadd.s32 %v899, 64
        %v908 = vadd.s32 %v899, 72
        %v909 = vadd.s32 %v899, 80
        %v910 = vadd.s32 %v899, 88
        %v911 = vadd.s32 %v899, 96
        %v912 = vadd.s32 %v899, 104
        %v913 = vadd.s32 %v899, 112
        %v914 = vadd.s32 %v899, 120
        %v915 = vadd.s32 %v899, 128
        %v916 = vadd.s32 %v899, 136
        %v917 = vadd.s32 %v899, 144
        %v918 = vadd.s32 %v899, 152
        %v919 = vadd.s32 %v899, 160
        %v920 = vadd.s32 %v899, 168
        %v921 = vadd.s32 %v899, 176
        %v922 = vadd.s32 %v899, 184
        %v923 = vadd.s32 %v899, 192
        %v924 = vadd.s32 %v899, 200
        %s925 = smul.u32 %s18, 208
        %v926 = vstv %s925
        %v927 = vadd.s32 %v899, %v926
        %v928 = vadd.s32 %v900, %v926
        %v929 = vadd.s32 %v901, %v926
        %v930 = vadd.s32 %v902, %v926
        %v931 = vadd.s32 %v903, %v926
        %v932 = vadd.s32 %v904, %v926
        %v933 = vadd.s32 %v905, %v926
        %v934 = vadd.s32 %v906, %v926
        %v935 = vadd.s32 %v907, %v926
        %v936 = vadd.s32 %v908, %v926
        %v937 = vadd.s32 %v909, %v926
        %v938 = vadd.s32 %v910, %v926
        %v939 = vadd.s32 %v911, %v926
        %v940 = vadd.s32 %v912, %v926
        %v941 = vadd.s32 %v913, %v926
        %v942 = vadd.s32 %v914, %v926
        %v943 = vadd.s32 %v915, %v926
        %v944 = vadd.s32 %v916, %v926
        %v945 = vadd.s32 %v917, %v926
        %v946 = vadd.s32 %v918, %v926
        %v947 = vadd.s32 %v919, %v926
        %v948 = vadd.s32 %v920, %v926
        %v949 = vadd.s32 %v921, %v926
        %v950 = vadd.s32 %v922, %v926
        %v951 = vadd.s32 %v923, %v926
        %v952 = vadd.s32 %v924, %v926
        %vm953 = vcmp.lt.s32.totalorder %v927, 392
        %vm954 = vcmp.lt.s32.totalorder %v928, 392
        %vm955 = vcmp.lt.s32.totalorder %v929, 392
        %vm956 = vcmp.lt.s32.totalorder %v930, 392
        %vm957 = vcmp.lt.s32.totalorder %v931, 392
        %vm958 = vcmp.lt.s32.totalorder %v932, 392
        %vm959 = vcmp.lt.s32.totalorder %v933, 392
        %vm960 = vcmp.lt.s32.totalorder %v934, 392
        %vm961 = vcmp.lt.s32.totalorder %v935, 392
        %vm962 = vcmp.lt.s32.totalorder %v936, 392
        %vm963 = vcmp.lt.s32.totalorder %v937, 392
        %vm964 = vcmp.lt.s32.totalorder %v938, 392
        %vm965 = vcmp.lt.s32.totalorder %v939, 392
        %vm966 = vcmp.lt.s32.totalorder %v940, 392
        %vm967 = vcmp.lt.s32.totalorder %v941, 392
        %vm968 = vcmp.lt.s32.totalorder %v942, 392
        %vm969 = vcmp.lt.s32.totalorder %v943, 392
        %vm970 = vcmp.lt.s32.totalorder %v944, 392
        %vm971 = vcmp.lt.s32.totalorder %v945, 392
        %vm972 = vcmp.lt.s32.totalorder %v946, 392
        %vm973 = vcmp.lt.s32.totalorder %v947, 392
        %vm974 = vcmp.lt.s32.totalorder %v948, 392
        %vm975 = vcmp.lt.s32.totalorder %v949, 392
        %vm976 = vcmp.lt.s32.totalorder %v950, 392
        %vm977 = vcmp.lt.s32.totalorder %v951, 392
        %vm978 = vcmp.lt.s32.totalorder %v952, 392
        %v979 = vsel %vm953, 1, 0
        %v980 = vsel %vm954, 1, 0
        %v981 = vsel %vm955, 1, 0
        %v982 = vsel %vm956, 1, 0
        %v983 = vsel %vm957, 1, 0
        %v984 = vsel %vm958, 1, 0
        %v985 = vsel %vm959, 1, 0
        %v986 = vsel %vm960, 1, 0
        %v987 = vsel %vm961, 1, 0
        %v988 = vsel %vm962, 1, 0
        %v989 = vsel %vm963, 1, 0
        %v990 = vsel %vm964, 1, 0
        %v991 = vsel %vm965, 1, 0
        %v992 = vsel %vm966, 1, 0
        %v993 = vsel %vm967, 1, 0
        %v994 = vsel %vm968, 1, 0
        %v995 = vsel %vm969, 1, 0
        %v996 = vsel %vm970, 1, 0
        %v997 = vsel %vm971, 1, 0
        %v998 = vsel %vm972, 1, 0
        %v999 = vsel %vm973, 1, 0
        %v1000 = vsel %vm974, 1, 0
        %v1001 = vsel %vm975, 1, 0
        %v1002 = vsel %vm976, 1, 0
        %v1003 = vsel %vm977, 1, 0
        %v1004 = vsel %vm978, 1, 0
        %vm1005 = vcmp.eq.s32.totalorder %v979, 1
        %vm1006 = vcmp.eq.s32.totalorder %v980, 1
        %vm1007 = vcmp.eq.s32.totalorder %v981, 1
        %vm1008 = vcmp.eq.s32.totalorder %v982, 1
        %vm1009 = vcmp.eq.s32.totalorder %v983, 1
        %vm1010 = vcmp.eq.s32.totalorder %v984, 1
        %vm1011 = vcmp.eq.s32.totalorder %v985, 1
        %vm1012 = vcmp.eq.s32.totalorder %v986, 1
        %vm1013 = vcmp.eq.s32.totalorder %v987, 1
        %vm1014 = vcmp.eq.s32.totalorder %v988, 1
        %vm1015 = vcmp.eq.s32.totalorder %v989, 1
        %vm1016 = vcmp.eq.s32.totalorder %v990, 1
        %vm1017 = vcmp.eq.s32.totalorder %v991, 1
        %vm1018 = vcmp.eq.s32.totalorder %v992, 1
        %vm1019 = vcmp.eq.s32.totalorder %v993, 1
        %vm1020 = vcmp.eq.s32.totalorder %v994, 1
        %vm1021 = vcmp.eq.s32.totalorder %v995, 1
        %vm1022 = vcmp.eq.s32.totalorder %v996, 1
        %vm1023 = vcmp.eq.s32.totalorder %v997, 1
        %vm1024 = vcmp.eq.s32.totalorder %v998, 1
        %vm1025 = vcmp.eq.s32.totalorder %v999, 1
        %vm1026 = vcmp.eq.s32.totalorder %v1000, 1
        %vm1027 = vcmp.eq.s32.totalorder %v1001, 1
        %vm1028 = vcmp.eq.s32.totalorder %v1002, 1
        %vm1029 = vcmp.eq.s32.totalorder %v1003, 1
        %vm1030 = vcmp.eq.s32.totalorder %v1004, 1
        %v1031 = vsel %vm1005, %v834, 0.0
        %v1032 = vsel %vm1006, %v836, 0.0
        %v1033 = vsel %vm1007, %v839, 0.0
        %v1034 = vsel %vm1008, %v841, 0.0
        %v1035 = vsel %vm1009, %v844, 0.0
        %v1036 = vsel %vm1010, %v846, 0.0
        %v1037 = vsel %vm1011, %v849, 0.0
        %v1038 = vsel %vm1012, %v851, 0.0
        %v1039 = vsel %vm1013, %v854, 0.0
        %v1040 = vsel %vm1014, %v856, 0.0
        %v1041 = vsel %vm1015, %v859, 0.0
        %v1042 = vsel %vm1016, %v861, 0.0
        %v1043 = vsel %vm1017, %v864, 0.0
        %v1044 = vsel %vm1018, %v866, 0.0
        %v1045 = vsel %vm1019, %v869, 0.0
        %v1046 = vsel %vm1020, %v871, 0.0
        %v1047 = vsel %vm1021, %v874, 0.0
        %v1048 = vsel %vm1022, %v876, 0.0
        %v1049 = vsel %vm1023, %v879, 0.0
        %v1050 = vsel %vm1024, %v881, 0.0
        %v1051 = vsel %vm1025, %v884, 0.0
        %v1052 = vsel %vm1026, %v886, 0.0
        %v1053 = vsel %vm1027, %v889, 0.0
        %v1054 = vsel %vm1028, %v891, 0.0
        %v1055 = vsel %vm1029, %v894, 0.0
        %v1056 = vsel %vm1030, %v896, 0.0
        %v1057 = vadd.f32 %v1031, %v1032
        %v1058 = vadd.f32 %v1057, %v1033
        %v1059 = vadd.f32 %v1058, %v1034
        %v1060 = vadd.f32 %v1059, %v1035
        %v1061 = vadd.f32 %v1060, %v1036
        %v1062 = vadd.f32 %v1061, %v1037
        %v1063 = vadd.f32 %v1062, %v1038
        %v1064 = vadd.f32 %v1063, %v1039
        %v1065 = vadd.f32 %v1064, %v1040
        %v1066 = vadd.f32 %v1065, %v1041
        %v1067 = vadd.f32 %v1066, %v1042
        %v1068 = vadd.f32 %v1067, %v1043
        %v1069 = vadd.f32 %v1068, %v1044
        %v1070 = vadd.f32 %v1069, %v1045
        %v1071 = vadd.f32 %v1070, %v1046
        %v1072 = vadd.f32 %v1071, %v1047
        %v1073 = vadd.f32 %v1072, %v1048
        %v1074 = vadd.f32 %v1073, %v1049
        %v1075 = vadd.f32 %v1074, %v1050
        %v1076 = vadd.f32 %v1075, %v1051
        %v1077 = vadd.f32 %v1076, %v1052
        %v1078 = vadd.f32 %v1077, %v1053
        %v1079 = vadd.f32 %v1078, %v1054
        %v1080 = vadd.f32 %v1079, %v1055
        %v1081 = vadd.f32 %v1080, %v1056
        %v1082 = vrot.slane %v1081, 4
        %v1083 = vadd.f32 %v1081, %v1082
        %v1084 = vrot.slane %v1083, 2
        %v1085 = vadd.f32 %v1083, %v1084
        %v1086 = vrot.slane %v1085, 1
        %v1087 = vadd.f32 %v1085, %v1086
        %1088 = vst [vmem:[%s294] sm:$0x1] %v1087
        %v1089 = vmul.f32 %v1031, %v1031
        %v1090 = vmul.f32 %v1032, %v1032
        %v1091 = vmul.f32 %v1033, %v1033
        %v1092 = vmul.f32 %v1034, %v1034
        %v1093 = vmul.f32 %v1035, %v1035
        %v1094 = vmul.f32 %v1036, %v1036
        %v1095 = vmul.f32 %v1037, %v1037
        %v1096 = vmul.f32 %v1038, %v1038
        %v1097 = vmul.f32 %v1039, %v1039
        %v1098 = vmul.f32 %v1040, %v1040
        %v1099 = vmul.f32 %v1041, %v1041
        %v1100 = vmul.f32 %v1042, %v1042
        %v1101 = vmul.f32 %v1043, %v1043
        %v1102 = vmul.f32 %v1044, %v1044
        %v1103 = vmul.f32 %v1045, %v1045
        %v1104 = vmul.f32 %v1046, %v1046
        %v1105 = vmul.f32 %v1047, %v1047
        %v1106 = vmul.f32 %v1048, %v1048
        %v1107 = vmul.f32 %v1049, %v1049
        %v1108 = vmul.f32 %v1050, %v1050
        %v1109 = vmul.f32 %v1051, %v1051
        %v1110 = vmul.f32 %v1052, %v1052
        %v1111 = vmul.f32 %v1053, %v1053
        %v1112 = vmul.f32 %v1054, %v1054
        %v1113 = vmul.f32 %v1055, %v1055
        %v1114 = vmul.f32 %v1056, %v1056
        %v1115 = vadd.f32 %v1089, %v1090
        %v1116 = vadd.f32 %v1115, %v1091
        %v1117 = vadd.f32 %v1116, %v1092
        %v1118 = vadd.f32 %v1117, %v1093
        %v1119 = vadd.f32 %v1118, %v1094
        %v1120 = vadd.f32 %v1119, %v1095
        %v1121 = vadd.f32 %v1120, %v1096
        %v1122 = vadd.f32 %v1121, %v1097
        %v1123 = vadd.f32 %v1122, %v1098
        %v1124 = vadd.f32 %v1123, %v1099
        %v1125 = vadd.f32 %v1124, %v1100
        %v1126 = vadd.f32 %v1125, %v1101
        %v1127 = vadd.f32 %v1126, %v1102
        %v1128 = vadd.f32 %v1127, %v1103
        %v1129 = vadd.f32 %v1128, %v1104
        %v1130 = vadd.f32 %v1129, %v1105
        %v1131 = vadd.f32 %v1130, %v1106
        %v1132 = vadd.f32 %v1131, %v1107
        %v1133 = vadd.f32 %v1132, %v1108
        %v1134 = vadd.f32 %v1133, %v1109
        %v1135 = vadd.f32 %v1134, %v1110
        %v1136 = vadd.f32 %v1135, %v1111
        %v1137 = vadd.f32 %v1136, %v1112
        %v1138 = vadd.f32 %v1137, %v1113
        %v1139 = vadd.f32 %v1138, %v1114
        %v1140 = vrot.slane %v1139, 4
        %v1141 = vadd.f32 %v1139, %v1140
        %v1142 = vrot.slane %v1141, 2
        %v1143 = vadd.f32 %v1141, %v1142
        %v1144 = vrot.slane %v1143, 1
        %v1145 = vadd.f32 %v1143, %v1144
        %1146 = vst [vmem:[%s297] sm:$0x1] %v1145
        %v1147 = vpack.c.bf16 %v834, %v834
        %v1148 = vpack.c.bf16 %v836, %v836
        %v1149 = vpack.c.bf16 %v839, %v839
        %v1150 = vpack.c.bf16 %v841, %v841
        %v1151 = vpack.c.bf16 %v844, %v844
        %v1152 = vpack.c.bf16 %v846, %v846
        %v1153 = vpack.c.bf16 %v849, %v849
        %v1154 = vpack.c.bf16 %v851, %v851
        %v1155 = vpack.c.bf16 %v854, %v854
        %v1156 = vpack.c.bf16 %v856, %v856
        %v1157 = vpack.c.bf16 %v859, %v859
        %v1158 = vpack.c.bf16 %v861, %v861
        %v1159 = vpack.c.bf16 %v864, %v864
        %v1160 = vpack.c.bf16 %v866, %v866
        %v1161 = vpack.c.bf16 %v869, %v869
        %v1162 = vpack.c.bf16 %v871, %v871
        %v1163 = vpack.c.bf16 %v874, %v874
        %v1164 = vpack.c.bf16 %v876, %v876
        %v1165 = vpack.c.bf16 %v879, %v879
        %v1166 = vpack.c.bf16 %v881, %v881
        %v1167 = vpack.c.bf16 %v884, %v884
        %v1168 = vpack.c.bf16 %v886, %v886
        %v1169 = vpack.c.bf16 %v889, %v889
        %v1170 = vpack.c.bf16 %v891, %v891
        %v1171 = vpack.c.bf16 %v894, %v894
        %v1172 = vpack.c.bf16 %v896, %v896
        %1173 = vst [vmem:[%s259] sm:$0xf] %v1147
        %1174 = vst [vmem:[%s259 + $0x4] sm:$0xf] %v1148
        %1175 = vst [vmem:[%s259 + $0x8] sm:$0xf] %v1149
        %1176 = vst [vmem:[%s259 + $0xc] sm:$0xf] %v1150
        %1177 = vst [vmem:[%s259 + $0x10] sm:$0xf] %v1151
        %1178 = vst [vmem:[%s259 + $0x14] sm:$0xf] %v1152
        %1179 = vst [vmem:[%s259 + $0x18] sm:$0xf] %v1153
        %1180 = vst [vmem:[%s259 + $0x1c] sm:$0xf] %v1154
        %1181 = vst [vmem:[%s259 + $0x20] sm:$0xf] %v1155
        %1182 = vst [vmem:[%s259 + $0x24] sm:$0xf] %v1156
        %1183 = vst [vmem:[%s259 + $0x28] sm:$0xf] %v1157
        %1184 = vst [vmem:[%s259 + $0x2c] sm:$0xf] %v1158
        %1185 = vst [vmem:[%s259 + $0x30] sm:$0xf] %v1159
        %1186 = vst [vmem:[%s259 + $0x34] sm:$0xf] %v1160
        %1187 = vst [vmem:[%s259 + $0x38] sm:$0xf] %v1161
        %1188 = vst [vmem:[%s259 + $0x3c] sm:$0xf] %v1162
        %1189 = vst [vmem:[%s259 + $0x40] sm:$0xf] %v1163
        %1190 = vst [vmem:[%s259 + $0x44] sm:$0xf] %v1164
        %1191 = vst [vmem:[%s259 + $0x48] sm:$0xf] %v1165
        %1192 = vst [vmem:[%s259 + $0x4c] sm:$0xf] %v1166
        %1193 = vst [vmem:[%s259 + $0x50] sm:$0xf] %v1167
        %1194 = vst [vmem:[%s259 + $0x54] sm:$0xf] %v1168
        %1195 = vst [vmem:[%s259 + $0x58] sm:$0xf] %v1169
        %1196 = vst [vmem:[%s259 + $0x5c] sm:$0xf] %v1170
        %1197 = vst [vmem:[%s259 + $0x60] sm:$0xf] %v1171
        %1198 = vst [vmem:[%s259 + $0x64] sm:$0xf] %v1172
        %s1199 = sand.u32 %s115, 1
        %s1200 = sand.u32 %s115, 1
        %s1201 = smul.addr %s1200, 104
        %s1202 = scalar_lea.vmem [#allocation2], %s1201
        %p1203 = scmp.lt.s32.totalorder %s18, 1
        %s1204 = scalar_select %p1203, %s18, 1
        %s1205 = scalar_lea.vmem %s5, %s1204
        %p1206 = scmp.lt.s32.totalorder %s18, 1
        %s1207 = scalar_select %p1206, %s18, 1
        %s1208 = scalar_lea.vmem %s6, %s1207
        // Predicated region
        $region37: #{discriminator_forward.7} parent=35 // pred_check
          %p1209 = pneg %p125
        $region38: #{discriminator_forward.7} parent=35 // pred_check_branch
          %1211 = sbr.rel (%p1209) target = $region40
        $region39: #{discriminator_forward.7} parent=35 // pred_region
          %s1212 = smul.u32 26, %s18
          %s1213 = ssub.s32 49, %s1212
          %p1214 = scmp.lt.s32.totalorder %s1213, 26
          %s1215 = scalar_select %p1214, %s1213, 26
          %s1216 = smul.u32 4, %s1215
          %p1217 = scmp.ne.s32.totalorder 0, %s1216
          %s1218 = smul.addr %s1212, 4
          %s1219 = scalar_lea.vmem %s4, %s1218
          // Predicated region
          $region41: #{discriminator_forward.7} parent=39 // pred_check
            %p1220 = pneg %p1217
          $region42: #{discriminator_forward.7} parent=39 // pred_check_branch
            %1222 = sbr.rel (%p1220) target = $region44
          $region43: #{discriminator_forward.7} parent=39 // pred_region
            // Predicated region
            $region45: #{discriminator_forward.7} parent=43 // pred_check
              _
            $region46: #{discriminator_forward.7} parent=43 // pred_check_branch
              %1224 = sbr.rel target = $region48
            $region47: #{discriminator_forward.7} parent=43 // pred_region
              // Predicated region
              $region67: #{discriminator_forward.7} parent=47 // pred_check
                _
              $region68: #{discriminator_forward.7} parent=47 // pred_check_branch
                %1325 = sbr.rel (0) target = $region70
              $region69: #{discriminator_forward.7} parent=47 // pred_region
                %s1327 = ssub.s32 16, 1
                %s1328 = sdiv.u32.pop %s1215, 26
                %s1329 = srem.u32.pop %s1215, 26
                // While loop
                $region71: #{discriminator_forward.7} parent=69 // loop_pre_header
                  _
                $region72: #{discriminator_forward.7} parent=69 // loop_header
                  %s1331 = sphi 0, %s1333
                  %p1332 = scmp.ge.s32.totalorder %s1331, %s1328
                  %s1336 = sphi 0, %s1393
                  %s1337 = sphi %s1202, %s1396
                  %s1338 = sphi %s1219, %s1397
                $region73: #{discriminator_forward.7} parent=69 // loop_header_branch
                  %1335 = sbr.rel (%p1332) target = $region77
                $region74: #{discriminator_forward.7} parent=69 // loop_body
                  %v1339 = vld [vmem:[%s1337] sm:%s1327]
                  %1340 = vst [vmem:[%s1338] sm:%s1327] %v1339
                  %v1341 = vld [vmem:[%s1337 + $0x4] sm:%s1327]
                  %1342 = vst [vmem:[%s1338 + $0x4] sm:%s1327] %v1341
                  %v1343 = vld [vmem:[%s1337 + $0x8] sm:%s1327]
                  %1344 = vst [vmem:[%s1338 + $0x8] sm:%s1327] %v1343
                  %v1345 = vld [vmem:[%s1337 + $0xc] sm:%s1327]
                  %1346 = vst [vmem:[%s1338 + $0xc] sm:%s1327] %v1345
                  %v1347 = vld [vmem:[%s1337 + $0x10] sm:%s1327]
                  %1348 = vst [vmem:[%s1338 + $0x10] sm:%s1327] %v1347
                  %v1349 = vld [vmem:[%s1337 + $0x14] sm:%s1327]
                  %1350 = vst [vmem:[%s1338 + $0x14] sm:%s1327] %v1349
                  %v1351 = vld [vmem:[%s1337 + $0x18] sm:%s1327]
                  %1352 = vst [vmem:[%s1338 + $0x18] sm:%s1327] %v1351
                  %v1353 = vld [vmem:[%s1337 + $0x1c] sm:%s1327]
                  %1354 = vst [vmem:[%s1338 + $0x1c] sm:%s1327] %v1353
                  %v1355 = vld [vmem:[%s1337 + $0x20] sm:%s1327]
                  %1356 = vst [vmem:[%s1338 + $0x20] sm:%s1327] %v1355
                  %v1357 = vld [vmem:[%s1337 + $0x24] sm:%s1327]
                  %1358 = vst [vmem:[%s1338 + $0x24] sm:%s1327] %v1357
                  %v1359 = vld [vmem:[%s1337 + $0x28] sm:%s1327]
                  %1360 = vst [vmem:[%s1338 + $0x28] sm:%s1327] %v1359
                  %v1361 = vld [vmem:[%s1337 + $0x2c] sm:%s1327]
                  %1362 = vst [vmem:[%s1338 + $0x2c] sm:%s1327] %v1361
                  %v1363 = vld [vmem:[%s1337 + $0x30] sm:%s1327]
                  %1364 = vst [vmem:[%s1338 + $0x30] sm:%s1327] %v1363
                  %v1365 = vld [vmem:[%s1337 + $0x34] sm:%s1327]
                  %1366 = vst [vmem:[%s1338 + $0x34] sm:%s1327] %v1365
                  %v1367 = vld [vmem:[%s1337 + $0x38] sm:%s1327]
                  %1368 = vst [vmem:[%s1338 + $0x38] sm:%s1327] %v1367
                  %v1369 = vld [vmem:[%s1337 + $0x3c] sm:%s1327]
                  %1370 = vst [vmem:[%s1338 + $0x3c] sm:%s1327] %v1369
                  %v1371 = vld [vmem:[%s1337 + $0x40] sm:%s1327]
                  %1372 = vst [vmem:[%s1338 + $0x40] sm:%s1327] %v1371
                  %v1373 = vld [vmem:[%s1337 + $0x44] sm:%s1327]
                  %1374 = vst [vmem:[%s1338 + $0x44] sm:%s1327] %v1373
                  %v1375 = vld [vmem:[%s1337 + $0x48] sm:%s1327]
                  %1376 = vst [vmem:[%s1338 + $0x48] sm:%s1327] %v1375
                  %v1377 = vld [vmem:[%s1337 + $0x4c] sm:%s1327]
                  %1378 = vst [vmem:[%s1338 + $0x4c] sm:%s1327] %v1377
                  %v1379 = vld [vmem:[%s1337 + $0x50] sm:%s1327]
                  %1380 = vst [vmem:[%s1338 + $0x50] sm:%s1327] %v1379
                  %v1381 = vld [vmem:[%s1337 + $0x54] sm:%s1327]
                  %1382 = vst [vmem:[%s1338 + $0x54] sm:%s1327] %v1381
                  %v1383 = vld [vmem:[%s1337 + $0x58] sm:%s1327]
                  %1384 = vst [vmem:[%s1338 + $0x58] sm:%s1327] %v1383
                  %v1385 = vld [vmem:[%s1337 + $0x5c] sm:%s1327]
                  %1386 = vst [vmem:[%s1338 + $0x5c] sm:%s1327] %v1385
                  %v1387 = vld [vmem:[%s1337 + $0x60] sm:%s1327]
                  %1388 = vst [vmem:[%s1338 + $0x60] sm:%s1327] %v1387
                  %v1389 = vld [vmem:[%s1337 + $0x64] sm:%s1327]
                  %1390 = vst [vmem:[%s1338 + $0x64] sm:%s1327] %v1389
                  %s1391 = sadd.s32 1, %s1336
                  %p1392 = scmp.ge.s32.totalorder %s1391, %s1328
                  %s1393 = scalar_select %p1392, 0, %s1391
                  %s1394 = smul.u32 %s1393, 104
                  %s1395 = smul.u32 %s1393, 104
                  %s1396 = scalar_lea.vmem %s1202, %s1394 [#allocation2]
                  %s1397 = scalar_lea.vmem %s1219, %s1395
                $region75: #{discriminator_forward.7} parent=69 // loop_footer
                  %s1333 = sadd.s32 %s1331, 1
                $region76: #{discriminator_forward.7} parent=69 // loop_footer_branch
                  %1330 = sbr.rel target = $region72
                $region77: #{discriminator_forward.7} parent=69 // loop_exit
                  _
                %s1398 = sdiv.u32.pop %s1215, 26
                %s1399 = srem.u32.pop %s1215, 26
                %s1400 = smul.u32 %s1398, 26
                %s1401 = smul.u32 4, %s1400
                %s1402 = scalar_lea.vmem %s1202, %s1401 [#allocation2]
                %s1403 = smul.u32 4, %s1400
                %s1404 = scalar_lea.vmem %s1219, %s1403
                // While loop
                $region78: #{discriminator_forward.7} parent=69 // loop_pre_header
                  _
                $region79: #{discriminator_forward.7} parent=69 // loop_header
                  %s1406 = sphi 0, %s1408
                  %p1407 = scmp.ge.s32.totalorder %s1406, %s1399
                  %s1411 = sphi 0, %s1418
                  %s1412 = sphi %s1402, %s1421
                  %s1413 = sphi %s1404, %s1422
                $region80: #{discriminator_forward.7} parent=69 // loop_header_branch
                  %1410 = sbr.rel (%p1407) target = $region84
                $region81: #{discriminator_forward.7} parent=69 // loop_body
                  %v1414 = vld [vmem:[%s1412] sm:%s1327]
                  %1415 = vst [vmem:[%s1413] sm:%s1327] %v1414
                  %s1416 = sadd.s32 1, %s1411
                  %p1417 = scmp.ge.s32.totalorder %s1416, %s1399
                  %s1418 = scalar_select %p1417, 0, %s1416
                  %s1419 = smul.u32 %s1418, 4
                  %s1420 = smul.u32 %s1418, 4
                  %s1421 = scalar_lea.vmem %s1402, %s1419 [#allocation2]
                  %s1422 = scalar_lea.vmem %s1404, %s1420
                $region82: #{discriminator_forward.7} parent=69 // loop_footer
                  %s1408 = sadd.s32 %s1406, 1
                $region83: #{discriminator_forward.7} parent=69 // loop_footer_branch
                  %1405 = sbr.rel target = $region79
                $region84: #{discriminator_forward.7} parent=69 // loop_exit
                  _
              $region70: #{discriminator_forward.7} parent=47 // pred_fallthru
                _
            $region48: #{discriminator_forward.7} parent=43 // pred_fallthru
              _
            // Predicated region
            $region49: #{discriminator_forward.7} parent=43 // pred_check
              _
            $region50: #{discriminator_forward.7} parent=43 // pred_check_branch
              %1226 = sbr.rel (0) target = $region52
            $region51: #{discriminator_forward.7} parent=43 // pred_region
              %s1228 = ssub.s32 16, 1
              %s1229 = sdiv.u32.pop %s1215, 26
              %s1230 = srem.u32.pop %s1215, 26
              // While loop
              $region53: #{discriminator_forward.7} parent=51 // loop_pre_header
                _
              $region54: #{discriminator_forward.7} parent=51 // loop_header
                %s1232 = sphi 0, %s1234
                %p1233 = scmp.ge.s32.totalorder %s1232, %s1229
                %s1237 = sphi 0, %s1294
                %s1238 = sphi %s1202, %s1297
                %s1239 = sphi %s1219, %s1298
              $region55: #{discriminator_forward.7} parent=51 // loop_header_branch
                %1236 = sbr.rel (%p1233) target = $region59
              $region56: #{discriminator_forward.7} parent=51 // loop_body
                %v1240 = vld [vmem:[%s1238] sm:%s1228]
                %1241 = vst [vmem:[%s1239] sm:%s1228] %v1240
                %v1242 = vld [vmem:[%s1238 + $0x4] sm:%s1228]
                %1243 = vst [vmem:[%s1239 + $0x4] sm:%s1228] %v1242
                %v1244 = vld [vmem:[%s1238 + $0x8] sm:%s1228]
                %1245 = vst [vmem:[%s1239 + $0x8] sm:%s1228] %v1244
                %v1246 = vld [vmem:[%s1238 + $0xc] sm:%s1228]
                %1247 = vst [vmem:[%s1239 + $0xc] sm:%s1228] %v1246
                %v1248 = vld [vmem:[%s1238 + $0x10] sm:%s1228]
                %1249 = vst [vmem:[%s1239 + $0x10] sm:%s1228] %v1248
                %v1250 = vld [vmem:[%s1238 + $0x14] sm:%s1228]
                %1251 = vst [vmem:[%s1239 + $0x14] sm:%s1228] %v1250
                %v1252 = vld [vmem:[%s1238 + $0x18] sm:%s1228]
                %1253 = vst [vmem:[%s1239 + $0x18] sm:%s1228] %v1252
                %v1254 = vld [vmem:[%s1238 + $0x1c] sm:%s1228]
                %1255 = vst [vmem:[%s1239 + $0x1c] sm:%s1228] %v1254
                %v1256 = vld [vmem:[%s1238 + $0x20] sm:%s1228]
                %1257 = vst [vmem:[%s1239 + $0x20] sm:%s1228] %v1256
                %v1258 = vld [vmem:[%s1238 + $0x24] sm:%s1228]
                %1259 = vst [vmem:[%s1239 + $0x24] sm:%s1228] %v1258
                %v1260 = vld [vmem:[%s1238 + $0x28] sm:%s1228]
                %1261 = vst [vmem:[%s1239 + $0x28] sm:%s1228] %v1260
                %v1262 = vld [vmem:[%s1238 + $0x2c] sm:%s1228]
                %1263 = vst [vmem:[%s1239 + $0x2c] sm:%s1228] %v1262
                %v1264 = vld [vmem:[%s1238 + $0x30] sm:%s1228]
                %1265 = vst [vmem:[%s1239 + $0x30] sm:%s1228] %v1264
                %v1266 = vld [vmem:[%s1238 + $0x34] sm:%s1228]
                %1267 = vst [vmem:[%s1239 + $0x34] sm:%s1228] %v1266
                %v1268 = vld [vmem:[%s1238 + $0x38] sm:%s1228]
                %1269 = vst [vmem:[%s1239 + $0x38] sm:%s1228] %v1268
                %v1270 = vld [vmem:[%s1238 + $0x3c] sm:%s1228]
                %1271 = vst [vmem:[%s1239 + $0x3c] sm:%s1228] %v1270
                %v1272 = vld [vmem:[%s1238 + $0x40] sm:%s1228]
                %1273 = vst [vmem:[%s1239 + $0x40] sm:%s1228] %v1272
                %v1274 = vld [vmem:[%s1238 + $0x44] sm:%s1228]
                %1275 = vst [vmem:[%s1239 + $0x44] sm:%s1228] %v1274
                %v1276 = vld [vmem:[%s1238 + $0x48] sm:%s1228]
                %1277 = vst [vmem:[%s1239 + $0x48] sm:%s1228] %v1276
                %v1278 = vld [vmem:[%s1238 + $0x4c] sm:%s1228]
                %1279 = vst [vmem:[%s1239 + $0x4c] sm:%s1228] %v1278
                %v1280 = vld [vmem:[%s1238 + $0x50] sm:%s1228]
                %1281 = vst [vmem:[%s1239 + $0x50] sm:%s1228] %v1280
                %v1282 = vld [vmem:[%s1238 + $0x54] sm:%s1228]
                %1283 = vst [vmem:[%s1239 + $0x54] sm:%s1228] %v1282
                %v1284 = vld [vmem:[%s1238 + $0x58] sm:%s1228]
                %1285 = vst [vmem:[%s1239 + $0x58] sm:%s1228] %v1284
                %v1286 = vld [vmem:[%s1238 + $0x5c] sm:%s1228]
                %1287 = vst [vmem:[%s1239 + $0x5c] sm:%s1228] %v1286
                %v1288 = vld [vmem:[%s1238 + $0x60] sm:%s1228]
                %1289 = vst [vmem:[%s1239 + $0x60] sm:%s1228] %v1288
                %v1290 = vld [vmem:[%s1238 + $0x64] sm:%s1228]
                %1291 = vst [vmem:[%s1239 + $0x64] sm:%s1228] %v1290
                %s1292 = sadd.s32 1, %s1237
                %p1293 = scmp.ge.s32.totalorder %s1292, %s1229
                %s1294 = scalar_select %p1293, 0, %s1292
                %s1295 = smul.u32 %s1294, 104
                %s1296 = smul.u32 %s1294, 104
                %s1297 = scalar_lea.vmem %s1202, %s1295 [#allocation2]
                %s1298 = scalar_lea.vmem %s1219, %s1296
              $region57: #{discriminator_forward.7} parent=51 // loop_footer
                %s1234 = sadd.s32 %s1232, 1
              $region58: #{discriminator_forward.7} parent=51 // loop_footer_branch
                %1231 = sbr.rel target = $region54
              $region59: #{discriminator_forward.7} parent=51 // loop_exit
                _
              %s1299 = sdiv.u32.pop %s1215, 26
              %s1300 = srem.u32.pop %s1215, 26
              %s1301 = smul.u32 %s1299, 26
              %s1302 = smul.u32 4, %s1301
              %s1303 = scalar_lea.vmem %s1202, %s1302 [#allocation2]
              %s1304 = smul.u32 4, %s1301
              %s1305 = scalar_lea.vmem %s1219, %s1304
              // While loop
              $region60: #{discriminator_forward.7} parent=51 // loop_pre_header
                _
              $region61: #{discriminator_forward.7} parent=51 // loop_header
                %s1307 = sphi 0, %s1309
                %p1308 = scmp.ge.s32.totalorder %s1307, %s1300
                %s1312 = sphi 0, %s1319
                %s1313 = sphi %s1303, %s1322
                %s1314 = sphi %s1305, %s1323
              $region62: #{discriminator_forward.7} parent=51 // loop_header_branch
                %1311 = sbr.rel (%p1308) target = $region66
              $region63: #{discriminator_forward.7} parent=51 // loop_body
                %v1315 = vld [vmem:[%s1313] sm:%s1228]
                %1316 = vst [vmem:[%s1314] sm:%s1228] %v1315
                %s1317 = sadd.s32 1, %s1312
                %p1318 = scmp.ge.s32.totalorder %s1317, %s1300
                %s1319 = scalar_select %p1318, 0, %s1317
                %s1320 = smul.u32 %s1319, 4
                %s1321 = smul.u32 %s1319, 4
                %s1322 = scalar_lea.vmem %s1303, %s1320 [#allocation2]
                %s1323 = scalar_lea.vmem %s1305, %s1321
              $region64: #{discriminator_forward.7} parent=51 // loop_footer
                %s1309 = sadd.s32 %s1307, 1
              $region65: #{discriminator_forward.7} parent=51 // loop_footer_branch
                %1306 = sbr.rel target = $region61
              $region66: #{discriminator_forward.7} parent=51 // loop_exit
                _
            $region52: #{discriminator_forward.7} parent=43 // pred_fallthru
              _
          $region44: #{discriminator_forward.7} parent=39 // pred_fallthru
            _
          %1423 = vnop
        $region40: #{discriminator_forward.7} parent=35 // pred_fallthru
          _
        // Predicated region
        $region85: #{discriminator_forward.7} parent=35 // pred_check
          %p1424 = pneg %p151
        $region86: #{discriminator_forward.7} parent=35 // pred_check_branch
          %1426 = sbr.rel (%p1424) target = $region88
        $region87: #{discriminator_forward.7} parent=35 // pred_region
          _
        $region88: #{discriminator_forward.7} parent=35 // pred_fallthru
          _
        // Predicated region
        $region89: #{discriminator_forward.7} parent=35 // pred_check
          %p1427 = pneg %p177
        $region90: #{discriminator_forward.7} parent=35 // pred_check_branch
          %1429 = sbr.rel (%p1427) target = $region92
        $region91: #{discriminator_forward.7} parent=35 // pred_region
          _
        $region92: #{discriminator_forward.7} parent=35 // pred_fallthru
          _
      $region36: #{discriminator_forward.7} parent=5 // pred_fallthru
        _
      %p1430 = scmp.le.s32.totalorder 2, %s13
      // Predicated region
      $region93: #{discriminator_forward.7} parent=5 // pred_check
        %p1431 = pneg %p1430
      $region94: #{discriminator_forward.7} parent=5 // pred_check_branch
        %1433 = sbr.rel (%p1431) target = $region96
      $region95: #{discriminator_forward.7} parent=5 // pred_region
        %s1434 = ssub.s32 %s13, 2
        // Predicated region
        $region97: #{discriminator_forward.7} parent=95 // pred_check
          %p1435 = pneg %p131
        $region98: #{discriminator_forward.7} parent=95 // pred_check_branch
          %1437 = sbr.rel (%p1435) target = $region100
        $region99: #{discriminator_forward.7} parent=95 // pred_region
          %s1438 = sand.u32 %s116, 1
          %s1439 = sand.u32 %s116, 1
          %s1440 = smul.addr %s1439, 104
          %s1441 = scalar_lea.vmem [#allocation2], %s1440
        $region100: #{discriminator_forward.7} parent=95 // pred_fallthru
          _
        // Predicated region
        $region101: #{discriminator_forward.7} parent=95 // pred_check
          %p1442 = pneg %p157
        $region102: #{discriminator_forward.7} parent=95 // pred_check_branch
          %1444 = sbr.rel (%p1442) target = $region104
        $region103: #{discriminator_forward.7} parent=95 // pred_region
          %p1445 = scmp.lt.s32.totalorder %s19, 1
          %s1446 = scalar_select %p1445, %s19, 1
          %s1447 = scalar_lea.vmem %s5, %s1446
        $region104: #{discriminator_forward.7} parent=95 // pred_fallthru
          _
        // Predicated region
        $region105: #{discriminator_forward.7} parent=95 // pred_check
          %p1448 = pneg %p183
        $region106: #{discriminator_forward.7} parent=95 // pred_check_branch
          %1450 = sbr.rel (%p1448) target = $region108
        $region107: #{discriminator_forward.7} parent=95 // pred_region
          %p1451 = scmp.lt.s32.totalorder %s19, 1
          %s1452 = scalar_select %p1451, %s19, 1
          %s1453 = scalar_lea.vmem %s6, %s1452
        $region108: #{discriminator_forward.7} parent=95 // pred_fallthru
          _
      $region96: #{discriminator_forward.7} parent=5 // pred_fallthru
        _
    $region6: #{discriminator_forward.7} parent=1 // loop_footer
      %s17 = sadd.s32 1, %s13
    $region7: #{discriminator_forward.7} parent=1 // loop_footer_branch
      %12 = sbr.rel target = $region3
    $region8: #{discriminator_forward.7} parent=1 // loop_exit
      _

// kernel: tile.43
$region0: #{tile.43}
  #allocation0 [shape = 's32[1]{0}', space=sflag, size = 0x4, scoped, tag = 'scoped memory for tile.43']
  %s0 = inlined_call_operand.vmem [shape: f32[32], index: 0, kind: input, shape index: {}]
  %s1 = inlined_call_operand.vmem [shape: f32[16,32], index: 1, kind: output, shape index: {}]
  // Predicated region
  $region2: #{tile.43} parent=0 // pred_check
    _
  $region3: #{tile.43} parent=0 // pred_check_branch
    %3 = sbr.rel (0) target = $region5
  $region4: #{tile.43} parent=0 // pred_region
    _
  $region5: #{tile.43} parent=0 // pred_fallthru
    _
  %v4 = vld [vmem:[%s0] ss:$0 sm:$0xff]
  %5 = vst [vmem:[%s1] sm:$0xff] %v4
  %s6 = scalar_lea.vmem %s1, 8
  %7 = vst [vmem:[%s6] sm:$0xff] %v4

// kernel: tile.44
$region0: #{tile.44}
  %s0 = inlined_call_operand.vmem [shape: f32[16,32], index: 0, kind: input, shape index: {}]
  %s1 = inlined_call_operand.vmem [shape: f32[1,512], index: 1, kind: output, shape index: {}]
  $region1: #{tile.44} parent=0
    #allocation0 [shape = 'u8[16384]{0}', space=vmem, size = 0x4000, scoped, tag = 'scoped mem for output reshape']
    %v2 = vld [vmem:[%s0] ss:$4 sm:$0xf]
    %vm3 = vcmask 261120
    %4 = vst.msk [vmem:[#allocation0] ss:$8 sm:$0xf] %vm3, %v2
    %s5 = scalar_lea.vmem %s0, 3
    %v6 = vld [vmem:[%s5] ss:$4 sm:$0xf]
    %7 = vrot.lane.b32.xlu0 %v6, 96
    %v8 = vpop.permute.xlu0 %7
    %vm9 = vcmask 1048320
    %10 = vst.msk [vmem:[#allocation0] ss:$8 sm:$0xf] %vm9, %v8
    %s11 = scalar_lea.vmem %s0, 2
    %v12 = vld [vmem:[%s11] ss:$4 sm:$0xf]
    %13 = vrot.lane.b32.xlu0 %v12, 64
    %v14 = vpop.permute.xlu0 %13
    %vm15 = vcmask 785920
    %16 = vst.msk [vmem:[#allocation0] ss:$8 sm:$0xf] %vm15, %v14
    %s17 = scalar_lea.vmem %s0, 1
    %v18 = vld [vmem:[%s17] ss:$4 sm:$0xf]
    %19 = vrot.lane.b32.xlu0 %v18, 32
    %v20 = vpop.permute.xlu0 %19
    %vm21 = vcmask 523520
    %22 = vst.msk [vmem:[#allocation0] ss:$8 sm:$0xf] %vm21, %v20
    %s24 = ssub.s32 2, 1
    %v25 = vld [vmem:[#allocation0] sm:%s24]
    %s27 = ssub.s32 2, 1
    %28 = vst [vmem:[%s1] sm:%s27] %v25
    %s29 = scalar_lea.vmem [#allocation0], 8
    %v30 = vld [vmem:[%s29] sm:%s24]
    %s32 = ssub.s32 2, 1
    %s33 = scalar_lea.vmem %s1, 1
    %34 = vst [vmem:[%s33] sm:%s32] %v30
    %s35 = scalar_lea.vmem [#allocation0], 16
    %v36 = vld [vmem:[%s35] sm:%s24]
    %s38 = ssub.s32 2, 1
    %s39 = scalar_lea.vmem %s1, 2
    %40 = vst [vmem:[%s39] sm:%s38] %v36
    %s41 = scalar_lea.vmem [#allocation0], 24
    %v42 = vld [vmem:[%s41] sm:%s24]
    %s44 = ssub.s32 2, 1
    %s45 = scalar_lea.vmem %s1, 3
    %46 = vst [vmem:[%s45] sm:%s44] %v42

// kernel: tile.53
$region0: #{tile.53}
  #allocation0 [shape = 's32[1]{0}', space=sflag, size = 0x4, scoped, tag = 'scoped memory for tile.53']
  %s0 = inlined_call_operand.vmem [shape: f32[64], index: 0, kind: input, shape index: {}]
  %s1 = inlined_call_operand.vmem [shape: f32[49,64], index: 1, kind: output, shape index: {}]
  // Predicated region
  $region2: #{tile.53} parent=0 // pred_check
    _
  $region3: #{tile.53} parent=0 // pred_check_branch
    %3 = sbr.rel (0) target = $region5
  $region4: #{tile.53} parent=0 // pred_region
    _
  $region5: #{tile.53} parent=0 // pred_fallthru
    _
  %v4 = vld [vmem:[%s0] ss:$0 sm:$0xff]
  %5 = vst [vmem:[%s1] sm:$0xff] %v4
  %s6 = scalar_lea.vmem %s1, 8
  %7 = vst [vmem:[%s6] sm:$0xff] %v4
  %s8 = scalar_lea.vmem %s1, 16
  %9 = vst [vmem:[%s8] sm:$0xff] %v4
  %s10 = scalar_lea.vmem %s1, 24
  %11 = vst [vmem:[%s10] sm:$0xff] %v4
  %s12 = scalar_lea.vmem %s1, 32
  %13 = vst [vmem:[%s12] sm:$0xff] %v4
  %s14 = scalar_lea.vmem %s1, 40
  %15 = vst [vmem:[%s14] sm:$0xff] %v4
  %s16 = scalar_lea.vmem %s1, 48
  %17 = vst [vmem:[%s16] sm:$0xff] %v4

// kernel: tile.54
$region0: #{tile.54}
  %s0 = inlined_call_operand.vmem [shape: f32[49,64], index: 0, kind: input, shape index: {}]
  %s1 = inlined_call_operand.vmem [shape: f32[1,3136], index: 1, kind: output, shape index: {}]
  $region1: #{tile.54} parent=0
    #allocation0 [shape = 'u8[102400]{0}', space=vmem, size = 0x19000, scoped, tag = 'scoped mem for output reshape']
    %v2 = vld [vmem:[%s0] ss:$2 sm:$0xff]
    %vm3 = vcmask 523264
    %4 = vst.msk [vmem:[#allocation0] ss:$8 sm:$0xf] %vm3, %v2
    %5 = vst.msk [vmem:[#allocation0] ss:$8 sm:$0xf0] %vm3, %v2
    %s6 = scalar_lea.vmem %s0, 16
    %v7 = vld [vmem:[%s6] ss:$2 sm:$0xff]
    %vm8 = vcmask 523264
    %s9 = scalar_lea.vmem [#allocation0], 64
    %10 = vst.msk [vmem:[%s9] ss:$8 sm:$0xf] %vm8, %v7
    %s11 = scalar_lea.vmem [#allocation0], 64
    %12 = vst.msk [vmem:[%s11] ss:$8 sm:$0xf0] %vm8, %v7
    %s13 = scalar_lea.vmem %s0, 32
    %v14 = vld [vmem:[%s13] ss:$2 sm:$0xff]
    %vm15 = vcmask 523264
    %s16 = scalar_lea.vmem [#allocation0], 128
    %17 = vst.msk [vmem:[%s16] ss:$8 sm:$0xf] %vm15, %v14
    %s18 = scalar_lea.vmem [#allocation0], 128
    %19 = vst.msk [vmem:[%s18] ss:$8 sm:$0xf0] %vm15, %v14
    %s20 = scalar_lea.vmem %s0, 48
    %v21 = vld [vmem:[%s20] sm:$0x1]
    %vm22 = vcmask 523264
    %s23 = scalar_lea.vmem [#allocation0], 192
    %24 = vst.msk [vmem:[%s23] sm:$0x1] %vm22, %v21
    %s25 = scalar_lea.vmem %s0, 1
    %v26 = vld [vmem:[%s25] ss:$2 sm:$0xff]
    %27 = vrot.lane.b32.xlu0 %v26, 64
    %v28 = vpop.permute.xlu0 %27
    %vm29 = vcmask 1048064
    %30 = vst.msk [vmem:[#allocation0] ss:$8 sm:$0xf] %vm29, %v28
    %31 = vst.msk [vmem:[#allocation0] ss:$8 sm:$0xf0] %vm29, %v28
    %s32 = scalar_lea.vmem %s0, 17
    %v33 = vld [vmem:[%s32] ss:$2 sm:$0xff]
    %34 = vrot.lane.b32.xlu0 %v33, 64
    %v35 = vpop.permute.xlu0 %34
    %vm36 = vcmask 1048064
    %s37 = scalar_lea.vmem [#allocation0], 64
    %38 = vst.msk [vmem:[%s37] ss:$8 sm:$0xf] %vm36, %v35
    %s39 = scalar_lea.vmem [#allocation0], 64
    %40 = vst.msk [vmem:[%s39] ss:$8 sm:$0xf0] %vm36, %v35
    %s41 = scalar_lea.vmem %s0, 33
    %v42 = vld [vmem:[%s41] ss:$2 sm:$0xff]
    %43 = vrot.lane.b32.xlu0 %v42, 64
    %v44 = vpop.permute.xlu0 %43
    %vm45 = vcmask 1048064
    %s46 = scalar_lea.vmem [#allocation0], 128
    %47 = vst.msk [vmem:[%s46] ss:$8 sm:$0xf] %vm45, %v44
    %s48 = scalar_lea.vmem [#allocation0], 128
    %49 = vst.msk [vmem:[%s48] ss:$8 sm:$0xf0] %vm45, %v44
    %s51 = ssub.s32 2, 1
    %v52 = vld [vmem:[#allocation0] sm:%s51]
    %s54 = ssub.s32 2, 1
    %55 = vst [vmem:[%s1] sm:%s54] %v52
    %s56 = scalar_lea.vmem [#allocation0], 8
    %v57 = vld [vmem:[%s56] sm:%s51]
    %s59 = ssub.s32 2, 1
    %s60 = scalar_lea.vmem %s1, 1
    %61 = vst [vmem:[%s60] sm:%s59] %v57
    %s62 = scalar_lea.vmem [#allocation0], 16
    %v63 = vld [vmem:[%s62] sm:%s51]
    %s65 = ssub.s32 2, 1
    %s66 = scalar_lea.vmem %s1, 2
    %67 = vst [vmem:[%s66] sm:%s65] %v63
    %s68 = scalar_lea.vmem [#allocation0], 24
    %v69 = vld [vmem:[%s68] sm:%s51]
    %s71 = ssub.s32 2, 1
    %s72 = scalar_lea.vmem %s1, 3
    %73 = vst [vmem:[%s72] sm:%s71] %v69
    %s74 = scalar_lea.vmem [#allocation0], 32
    %v75 = vld [vmem:[%s74] sm:%s51]
    %s77 = ssub.s32 2, 1
    %s78 = scalar_lea.vmem %s1, 4
    %79 = vst [vmem:[%s78] sm:%s77] %v75
    %s80 = scalar_lea.vmem [#allocation0], 40
    %v81 = vld [vmem:[%s80] sm:%s51]
    %s83 = ssub.s32 2, 1
    %s84 = scalar_lea.vmem %s1, 5
    %85 = vst [vmem:[%s84] sm:%s83] %v81
    %s86 = scalar_lea.vmem [#allocation0], 48
    %v87 = vld [vmem:[%s86] sm:%s51]
    %s89 = ssub.s32 2, 1
    %s90 = scalar_lea.vmem %s1, 6
    %91 = vst [vmem:[%s90] sm:%s89] %v87
    %s92 = scalar_lea.vmem [#allocation0], 56
    %v93 = vld [vmem:[%s92] sm:%s51]
    %s95 = ssub.s32 2, 1
    %s96 = scalar_lea.vmem %s1, 7
    %97 = vst [vmem:[%s96] sm:%s95] %v93
    %s98 = scalar_lea.vmem [#allocation0], 64
    %v99 = vld [vmem:[%s98] sm:%s51]
    %s101 = ssub.s32 2, 1
    %s102 = scalar_lea.vmem %s1, 8
    %103 = vst [vmem:[%s102] sm:%s101] %v99
    %s104 = scalar_lea.vmem [#allocation0], 72
    %v105 = vld [vmem:[%s104] sm:%s51]
    %s107 = ssub.s32 2, 1
    %s108 = scalar_lea.vmem %s1, 9
    %109 = vst [vmem:[%s108] sm:%s107] %v105
    %s110 = scalar_lea.vmem [#allocation0], 80
    %v111 = vld [vmem:[%s110] sm:%s51]
    %s113 = ssub.s32 2, 1
    %s114 = scalar_lea.vmem %s1, 10
    %115 = vst [vmem:[%s114] sm:%s113] %v111
    %s116 = scalar_lea.vmem [#allocation0], 88
    %v117 = vld [vmem:[%s116] sm:%s51]
    %s119 = ssub.s32 2, 1
    %s120 = scalar_lea.vmem %s1, 11
    %121 = vst [vmem:[%s120] sm:%s119] %v117
    %s122 = scalar_lea.vmem [#allocation0], 96
    %v123 = vld [vmem:[%s122] sm:%s51]
    %s125 = ssub.s32 2, 1
    %s126 = scalar_lea.vmem %s1, 12
    %127 = vst [vmem:[%s126] sm:%s125] %v123
    %s128 = scalar_lea.vmem [#allocation0], 104
    %v129 = vld [vmem:[%s128] sm:%s51]
    %s131 = ssub.s32 2, 1
    %s132 = scalar_lea.vmem %s1, 13
    %133 = vst [vmem:[%s132] sm:%s131] %v129
    %s134 = scalar_lea.vmem [#allocation0], 112
    %v135 = vld [vmem:[%s134] sm:%s51]
    %s137 = ssub.s32 2, 1
    %s138 = scalar_lea.vmem %s1, 14
    %139 = vst [vmem:[%s138] sm:%s137] %v135
    %s140 = scalar_lea.vmem [#allocation0], 120
    %v141 = vld [vmem:[%s140] sm:%s51]
    %s143 = ssub.s32 2, 1
    %s144 = scalar_lea.vmem %s1, 15
    %145 = vst [vmem:[%s144] sm:%s143] %v141
    %s146 = scalar_lea.vmem [#allocation0], 128
    %v147 = vld [vmem:[%s146] sm:%s51]
    %s149 = ssub.s32 2, 1
    %s150 = scalar_lea.vmem %s1, 16
    %151 = vst [vmem:[%s150] sm:%s149] %v147
    %s152 = scalar_lea.vmem [#allocation0], 136
    %v153 = vld [vmem:[%s152] sm:%s51]
    %s155 = ssub.s32 2, 1
    %s156 = scalar_lea.vmem %s1, 17
    %157 = vst [vmem:[%s156] sm:%s155] %v153
    %s158 = scalar_lea.vmem [#allocation0], 144
    %v159 = vld [vmem:[%s158] sm:%s51]
    %s161 = ssub.s32 2, 1
    %s162 = scalar_lea.vmem %s1, 18
    %163 = vst [vmem:[%s162] sm:%s161] %v159
    %s164 = scalar_lea.vmem [#allocation0], 152
    %v165 = vld [vmem:[%s164] sm:%s51]
    %s167 = ssub.s32 2, 1
    %s168 = scalar_lea.vmem %s1, 19
    %169 = vst [vmem:[%s168] sm:%s167] %v165
    %s170 = scalar_lea.vmem [#allocation0], 160
    %v171 = vld [vmem:[%s170] sm:%s51]
    %s173 = ssub.s32 2, 1
    %s174 = scalar_lea.vmem %s1, 20
    %175 = vst [vmem:[%s174] sm:%s173] %v171
    %s176 = scalar_lea.vmem [#allocation0], 168
    %v177 = vld [vmem:[%s176] sm:%s51]
    %s179 = ssub.s32 2, 1
    %s180 = scalar_lea.vmem %s1, 21
    %181 = vst [vmem:[%s180] sm:%s179] %v177
    %s182 = scalar_lea.vmem [#allocation0], 176
    %v183 = vld [vmem:[%s182] sm:%s51]
    %s185 = ssub.s32 2, 1
    %s186 = scalar_lea.vmem %s1, 22
    %187 = vst [vmem:[%s186] sm:%s185] %v183
    %s188 = scalar_lea.vmem [#allocation0], 184
    %v189 = vld [vmem:[%s188] sm:%s51]
    %s191 = ssub.s32 2, 1
    %s192 = scalar_lea.vmem %s1, 23
    %193 = vst [vmem:[%s192] sm:%s191] %v189
    %s194 = scalar_lea.vmem [#allocation0], 192
    %v195 = vld [vmem:[%s194] sm:%s51]
    %s197 = ssub.s32 2, 1
    %s198 = scalar_lea.vmem %s1, 24
    %199 = vst [vmem:[%s198] sm:%s197] %v195

// kernel: discriminator_forward.8
$region0: #{discriminator_forward.8}
  #allocation0 [shape = 'u32[]', space=smem, size = 0x4, offset = 0x4, fixed_abs, tag = 'smem constant byte address 0x4 - core index']
  #allocation1 [shape = 'u32[72,128]{1,0:T(1,128)}', space=vmem, size = 0x9000, scoped, tag = 'internal scratch']
  %s0 = inlined_call_operand.vmem [shape: bf16[98,512], index: 0, kind: input, shape index: {}]
  %s1 = inlined_call_operand.vmem [shape: bf16[512,128], index: 1, kind: input, shape index: {}]
  %s2 = inlined_call_operand.vmem [shape: f32[1,512], index: 2, kind: input, shape index: {}]
  %s3 = inlined_call_operand.vmem [shape: f32[1,512], index: 3, kind: input, shape index: {}]
  %s4 = inlined_call_operand.vmem [shape: bf16[98,128], index: 4, kind: output, shape index: {0}]
  %s5 = inlined_call_operand.vmem [shape: f32[2,1,128], index: 5, kind: output, shape index: {1}]
  %s6 = inlined_call_operand.vmem [shape: f32[2,1,128], index: 6, kind: output, shape index: {2}]
  %7 = xla_tuple %s4, %s5, %s6
  %s8 = sld [smem:[#allocation0]]
  $region109: #{discriminator_forward.8} parent=0
    _
  %s10 = ssub.s32 1, %s8
  %s11 = scalar_select 0, %s10, %s8
  $region1: #{discriminator_forward.8} parent=0
    #allocation2 [shape = 'u8[32768]{0}', space=vmem, size = 0x8000, scoped, tag = 'output window, operand 0']
    loop: start=0, step=1, limit=4
    $region2: #{discriminator_forward.8} parent=1 // loop_pre_header
      _
    $region3: #{discriminator_forward.8} parent=1 // loop_header
      %s13 = sphi 0, %s17
      %p14 = scmp.ge.s32.totalorder %s13, 4
      %s23 = sphi 0, %s25
      %s26 = sphi 0, %s23
      %s27 = sphi 0, %s26
      %s43 = sphi 0, %s27
      %s47 = sphi 0, %s47
      %s49 = sphi 0, %s47
      %s50 = sphi 0, %s49
      %s64 = sphi 0, %s50
      %s68 = sphi 0, %s68
      %s70 = sphi 0, %s68
      %s71 = sphi 0, %s70
      %s85 = sphi 0, %s71
      %s89 = sphi 0, %s89
      %s91 = sphi 0, %s89
      %s92 = sphi 0, %s91
      %s106 = sphi 0, %s92
      %s112 = sphi 0, %s114
      %s115 = sphi 0, %s112
      %s116 = sphi 0, %s115
      %s132 = sphi 0, %s116
      %s138 = sphi 0, %s140
      %s141 = sphi 0, %s138
      %s142 = sphi 0, %s141
      %s158 = sphi 0, %s142
      %s164 = sphi 0, %s166
      %s167 = sphi 0, %s164
      %s168 = sphi 0, %s167
      %s184 = sphi 0, %s168
    $region4: #{discriminator_forward.8} parent=1 // loop_header_branch
      %16 = sbr.rel (%p14) target = $region8
    $region5: #{discriminator_forward.8} parent=1 // loop_body
      %s18 = ssub.s32 %s13, 1
      %s19 = ssub.s32 %s13, 2
      %s20 = sadd.s32 %s13, 1
      %s21 = ssub.s32 %s13, %s20
      %p22 = scmp.eq.s32.totalorder %s21, 0
      %s24 = sadd.s32 %s23, 1
      %s25 = scalar_select %p22, %s23, %s24
      %p28 = pneg %p22
      %p29 = scmp.eq.s32.totalorder %s13, 1
      %p30 = por %p28, %p29
      %p31 = scmp.ne.s32.totalorder %s23, %s26
      %p32 = scmp.eq.s32.totalorder %s13, 0
      %p33 = por %p31, %p32
      %p34 = scmp.ne.s32.totalorder %s23, %s26
      %p35 = scmp.eq.s32.totalorder %s18, 1
      %p36 = por %p34, %p35
      %p37 = scmp.ne.s32.totalorder %s26, %s27
      %p38 = scmp.eq.s32.totalorder %s18, 0
      %p39 = por %p37, %p38
      %p40 = scmp.ne.s32.totalorder %s26, %s27
      %p41 = scmp.eq.s32.totalorder %s19, 1
      %p42 = por %p40, %p41
      %p44 = scmp.ne.s32.totalorder %s27, %s43
      %p45 = scmp.eq.s32.totalorder %s19, 0
      %p46 = por %p44, %p45
      %s48 = sadd.s32 %s47, 1
      %p51 = scmp.eq.s32.totalorder %s13, 1
      %p52 = scmp.ne.s32.totalorder %s47, %s49
      %p53 = scmp.eq.s32.totalorder %s13, 0
      %p54 = por %p52, %p53
      %p55 = scmp.ne.s32.totalorder %s47, %s49
      %p56 = scmp.eq.s32.totalorder %s18, 1
      %p57 = por %p55, %p56
      %p58 = scmp.ne.s32.totalorder %s49, %s50
      %p59 = scmp.eq.s32.totalorder %s18, 0
      %p60 = por %p58, %p59
      %p61 = scmp.ne.s32.totalorder %s49, %s50
      %p62 = scmp.eq.s32.totalorder %s19, 1
      %p63 = por %p61, %p62
      %p65 = scmp.ne.s32.totalorder %s50, %s64
      %p66 = scmp.eq.s32.totalorder %s19, 0
      %p67 = por %p65, %p66
      %s69 = sadd.s32 %s68, 1
      %p72 = scmp.eq.s32.totalorder %s13, 1
      %p73 = scmp.ne.s32.totalorder %s68, %s70
      %p74 = scmp.eq.s32.totalorder %s13, 0
      %p75 = por %p73, %p74
      %p76 = scmp.ne.s32.totalorder %s68, %s70
      %p77 = scmp.eq.s32.totalorder %s18, 1
      %p78 = por %p76, %p77
      %p79 = scmp.ne.s32.totalorder %s70, %s71
      %p80 = scmp.eq.s32.totalorder %s18, 0
      %p81 = por %p79, %p80
      %p82 = scmp.ne.s32.totalorder %s70, %s71
      %p83 = scmp.eq.s32.totalorder %s19, 1
      %p84 = por %p82, %p83
      %p86 = scmp.ne.s32.totalorder %s71, %s85
      %p87 = scmp.eq.s32.totalorder %s19, 0
      %p88 = por %p86, %p87
      %s90 = sadd.s32 %s89, 1
      %p93 = scmp.eq.s32.totalorder %s13, 1
      %p94 = scmp.ne.s32.totalorder %s89, %s91
      %p95 = scmp.eq.s32.totalorder %s13, 0
      %p96 = por %p94, %p95
      %p97 = scmp.ne.s32.totalorder %s89, %s91
      %p98 = scmp.eq.s32.totalorder %s18, 1
      %p99 = por %p97, %p98
      %p100 = scmp.ne.s32.totalorder %s91, %s92
      %p101 = scmp.eq.s32.totalorder %s18, 0
      %p102 = por %p100, %p101
      %p103 = scmp.ne.s32.totalorder %s91, %s92
      %p104 = scmp.eq.s32.totalorder %s19, 1
      %p105 = por %p103, %p104
      %p107 = scmp.ne.s32.totalorder %s92, %s106
      %p108 = scmp.eq.s32.totalorder %s19, 0
      %p109 = por %p107, %p108
      %s110 = ssub.s32 %s13, %s20
      %p111 = scmp.eq.s32.totalorder %s110, 0
      %s113 = sadd.s32 %s112, 1
      %s114 = scalar_select %p111, %s112, %s113
      %p117 = pneg %p111
      %p118 = scmp.eq.s32.totalorder %s13, 1
      %p119 = por %p117, %p118
      %p120 = scmp.ne.s32.totalorder %s112, %s115
      %p121 = scmp.eq.s32.totalorder %s13, 0
      %p122 = por %p120, %p121
      %p123 = scmp.ne.s32.totalorder %s112, %s115
      %p124 = scmp.eq.s32.totalorder %s18, 1
      %p125 = por %p123, %p124
      %p126 = scmp.ne.s32.totalorder %s115, %s116
      %p127 = scmp.eq.s32.totalorder %s18, 0
      %p128 = por %p126, %p127
      %p129 = scmp.ne.s32.totalorder %s115, %s116
      %p130 = scmp.eq.s32.totalorder %s19, 1
      %p131 = por %p129, %p130
      %p133 = scmp.ne.s32.totalorder %s116, %s132
      %p134 = scmp.eq.s32.totalorder %s19, 0
      %p135 = por %p133, %p134
      %s136 = ssub.s32 %s13, %s20
      %p137 = scmp.eq.s32.totalorder %s136, 0
      %s139 = sadd.s32 %s138, 1
      %s140 = scalar_select %p137, %s138, %s139
      %p143 = pneg %p137
      %p144 = scmp.eq.s32.totalorder %s13, 1
      %p145 = por %p143, %p144
      %p146 = scmp.ne.s32.totalorder %s138, %s141
      %p147 = scmp.eq.s32.totalorder %s13, 0
      %p148 = por %p146, %p147
      %p149 = scmp.ne.s32.totalorder %s138, %s141
      %p150 = scmp.eq.s32.totalorder %s18, 1
      %p151 = por %p149, %p150
      %p152 = scmp.ne.s32.totalorder %s141, %s142
      %p153 = scmp.eq.s32.totalorder %s18, 0
      %p154 = por %p152, %p153
      %p155 = scmp.ne.s32.totalorder %s141, %s142
      %p156 = scmp.eq.s32.totalorder %s19, 1
      %p157 = por %p155, %p156
      %p159 = scmp.ne.s32.totalorder %s142, %s158
      %p160 = scmp.eq.s32.totalorder %s19, 0
      %p161 = por %p159, %p160
      %s162 = ssub.s32 %s13, %s20
      %p163 = scmp.eq.s32.totalorder %s162, 0
      %s165 = sadd.s32 %s164, 1
      %s166 = scalar_select %p163, %s164, %s165
      %p169 = pneg %p163
      %p170 = scmp.eq.s32.totalorder %s13, 1
      %p171 = por %p169, %p170
      %p172 = scmp.ne.s32.totalorder %s164, %s167
      %p173 = scmp.eq.s32.totalorder %s13, 0
      %p174 = por %p172, %p173
      %p175 = scmp.ne.s32.totalorder %s164, %s167
      %p176 = scmp.eq.s32.totalorder %s18, 1
      %p177 = por %p175, %p176
      %p178 = scmp.ne.s32.totalorder %s167, %s168
      %p179 = scmp.eq.s32.totalorder %s18, 0
      %p180 = por %p178, %p179
      %p181 = scmp.ne.s32.totalorder %s167, %s168
      %p182 = scmp.eq.s32.totalorder %s19, 1
      %p183 = por %p181, %p182
      %p185 = scmp.ne.s32.totalorder %s168, %s184
      %p186 = scmp.eq.s32.totalorder %s19, 0
      %p187 = por %p185, %p186
      %p188 = scmp.le.s32.totalorder 1, %s13
      %p189 = scmp.lt.s32.totalorder %s13, 3
      %p190 = pnand %p188, %p189
      %p191 = pneg %p190
      // Predicated region
      $region9: #{discriminator_forward.8} parent=5 // pred_check
        _
      $region10: #{discriminator_forward.8} parent=5 // pred_check_branch
        %193 = sbr.rel (%p190) target = $region12
      $region11: #{discriminator_forward.8} parent=5 // pred_region
        %s194 = ssub.s32 %s13, 1
        // Predicated region
        $region13: #{discriminator_forward.8} parent=11 // pred_check
          %p195 = pneg %p60
        $region14: #{discriminator_forward.8} parent=11 // pred_check_branch
          %197 = sbr.rel (%p195) target = $region16
        $region15: #{discriminator_forward.8} parent=11 // pred_region
          _
        $region16: #{discriminator_forward.8} parent=11 // pred_fallthru
          _
        // Predicated region
        $region17: #{discriminator_forward.8} parent=11 // pred_check
          %p198 = pneg %p81
        $region18: #{discriminator_forward.8} parent=11 // pred_check_branch
          %200 = sbr.rel (%p198) target = $region20
        $region19: #{discriminator_forward.8} parent=11 // pred_region
          _
        $region20: #{discriminator_forward.8} parent=11 // pred_fallthru
          _
        // Predicated region
        $region21: #{discriminator_forward.8} parent=11 // pred_check
          %p201 = pneg %p102
        $region22: #{discriminator_forward.8} parent=11 // pred_check_branch
          %203 = sbr.rel (%p201) target = $region24
        $region23: #{discriminator_forward.8} parent=11 // pred_region
          _
        $region24: #{discriminator_forward.8} parent=11 // pred_fallthru
          _
      $region12: #{discriminator_forward.8} parent=5 // pred_fallthru
        _
      %p204 = scmp.lt.s32.totalorder %s13, 2
      // Predicated region
      $region25: #{discriminator_forward.8} parent=5 // pred_check
        %p205 = pneg %p204
      $region26: #{discriminator_forward.8} parent=5 // pred_check_branch
        %207 = sbr.rel (%p205) target = $region28
      $region27: #{discriminator_forward.8} parent=5 // pred_region
        // Predicated region
        $region29: #{discriminator_forward.8} parent=27 // pred_check
          %p208 = pneg %p33
        $region30: #{discriminator_forward.8} parent=27 // pred_check_branch
          %210 = sbr.rel (%p208) target = $region32
        $region31: #{discriminator_forward.8} parent=27 // pred_region
          %s211 = smul.u32 8, %s13
          %s212 = ssub.s32 13, %s211
          %p213 = scmp.lt.s32.totalorder %s212, 8
          %s214 = scalar_select %p213, %s212, 8
          %s215 = smul.u32 4, %s214
          %s216 = smul.u32 %s215, 4
          %p217 = scmp.lt.s32.totalorder %s211, 12
          %s218 = scalar_select %p217, %s211, 12
          %s219 = smul.addr %s218, 4
          %s220 = smul.addr %s219, 4
          %s221 = scalar_lea.vmem %s0, %s220
          %s222 = smul.u32 8, %s13
          %s223 = ssub.s32 13, %s222
          %p224 = scmp.lt.s32.totalorder %s223, 8
          %s225 = scalar_select %p224, %s223, 8
          %s226 = smul.u32 4, %s225
          %s227 = smul.u32 %s226, 4
        $region32: #{discriminator_forward.8} parent=27 // pred_fallthru
          _
      $region28: #{discriminator_forward.8} parent=5 // pred_fallthru
        _
      %p228 = scmp.le.s32.totalorder 1, %s13
      %p229 = scmp.lt.s32.totalorder %s13, 3
      %p230 = pnand %p228, %p229
      %p231 = pneg %p230
      // Predicated region
      $region33: #{discriminator_forward.8} parent=5 // pred_check
        _
      $region34: #{discriminator_forward.8} parent=5 // pred_check_branch
        %233 = sbr.rel (%p230) target = $region36
      $region35: #{discriminator_forward.8} parent=5 // pred_region
        %s234 = ssub.s32 %s13, 1
        %s235 = smul.u32 8, %s18
        %s236 = ssub.s32 13, %s235
        %p237 = scmp.lt.s32.totalorder %s236, 8
        %s238 = scalar_select %p237, %s236, 8
        %s239 = smul.u32 4, %s238
        %s240 = smul.u32 %s239, 4
        %p241 = scmp.lt.s32.totalorder %s235, 12
        %s242 = scalar_select %p241, %s235, 12
        %s243 = smul.addr %s242, 4
        %s244 = smul.addr %s243, 4
        %s245 = scalar_lea.vmem %s0, %s244
        %p246 = pneg %p39
        %p247 = pneg %p36
        %p248 = pneg %p60
        %p249 = pneg %p57
        %p250 = pneg %p81
        %p251 = pneg %p78
        %p252 = pneg %p102
        %p253 = pneg %p99
        %p254 = pneg %p128
        %p255 = pneg %p125
        %s256 = sand.u32 %s115, 1
        %s257 = sand.u32 %s115, 1
        %s258 = smul.addr %s257, 32
        %s259 = scalar_lea.vmem [#allocation2], %s258
        %p260 = pneg %p154
        %p261 = pneg %p151
        %p262 = scmp.lt.s32.totalorder %s18, 1
        %s263 = scalar_select %p262, %s18, 1
        %s264 = scalar_lea.vmem %s5, %s263
        %p265 = pneg %p180
        %p266 = pneg %p177
        %p267 = scmp.lt.s32.totalorder %s18, 1
        %s268 = scalar_select %p267, %s18, 1
        %s269 = scalar_lea.vmem %s6, %s268
        %s270 = smul.u32 8, %s18
        %s271 = ssub.s32 13, %s270
        %p272 = scmp.lt.s32.totalorder %s271, 8
        %s273 = scalar_select %p272, %s271, 8
        %s274 = smul.u32 4, %s273
        %s275 = smul.u32 %s274, 4
        %p276 = scmp.lt.s32.totalorder %s270, 12
        %s277 = scalar_select %p276, %s270, 12
        %s278 = smul.addr %s277, 4
        %s279 = smul.addr %s278, 4
        %s280 = scalar_lea.vmem %s0, %s279
        %s281 = smul.u32 8, %s18
        %s282 = ssub.s32 13, %s281
        %p283 = scmp.lt.s32.totalorder %s282, 8
        %s284 = scalar_select %p283, %s282, 8
        %s285 = smul.u32 4, %s284
        %s286 = smul.u32 %s285, 4
        %s287 = smul.u32 8, %s18
        %s288 = ssub.s32 13, %s287
        %p289 = scmp.lt.s32.totalorder %s288, 8
        %s290 = scalar_select %p289, %s288, 8
        %s291 = smul.u32 4, %s290
        %p292 = scmp.lt.s32.totalorder %s18, 1
        %s293 = scalar_select %p292, %s18, 1
        %s294 = scalar_lea.vmem %s5, %s293
        %p295 = scmp.lt.s32.totalorder %s18, 1
        %s296 = scalar_select %p295, %s18, 1
        %s297 = scalar_lea.vmem %s6, %s296
        %v298 = vld [vmem:[%s280] sm:$0xff]
        %v299 = vld [vmem:[%s280 + $0x8] sm:$0xff]
        %v300 = vld [vmem:[%s280 + $0x10] sm:$0xff]
        %v301 = vld [vmem:[%s280 + $0x18] sm:$0xff]
        %v302 = vld [vmem:[%s280 + $0x20] sm:$0xff]
        %v303 = vld [vmem:[%s280 + $0x28] sm:$0xff]
        %v304 = vld [vmem:[%s280 + $0x30] sm:$0xff]
        %v305 = vld [vmem:[%s280 + $0x38] sm:$0xff]
        %v306 = vld [vmem:[%s280 + $0x40] sm:$0xff]
        %v307 = vld [vmem:[%s280 + $0x48] sm:$0xff]
        %v308 = vld [vmem:[%s280 + $0x50] sm:$0xff]
        %v309 = vld [vmem:[%s280 + $0x58] sm:$0xff]
        %v310 = vld [vmem:[%s280 + $0x60] sm:$0xff]
        %v311 = vld [vmem:[%s280 + $0x68] sm:$0xff]
        %v312 = vld [vmem:[%s280 + $0x70] sm:$0xff]
        %v313 = vld [vmem:[%s280 + $0x78] sm:$0xff]
        %v314 = vunpack.c.l.bf16 %v298
        %v315 = vunpack.c.h.bf16 %v298
        %v316 = vunpack.c.l.bf16 %v299
        %v317 = vunpack.c.h.bf16 %v299
        %v318 = vunpack.c.l.bf16 %v300
        %v319 = vunpack.c.h.bf16 %v300
        %v320 = vunpack.c.l.bf16 %v301
        %v321 = vunpack.c.h.bf16 %v301
        %v322 = vunpack.c.l.bf16 %v302
        %v323 = vunpack.c.h.bf16 %v302
        %v324 = vunpack.c.l.bf16 %v303
        %v325 = vunpack.c.h.bf16 %v303
        %v326 = vunpack.c.l.bf16 %v304
        %v327 = vunpack.c.h.bf16 %v304
        %v328 = vunpack.c.l.bf16 %v305
        %v329 = vunpack.c.h.bf16 %v305
        %v330 = vunpack.c.l.bf16 %v306
        %v331 = vunpack.c.h.bf16 %v306
        %v332 = vunpack.c.l.bf16 %v307
        %v333 = vunpack.c.h.bf16 %v307
        %v334 = vunpack.c.l.bf16 %v308
        %v335 = vunpack.c.h.bf16 %v308
        %v336 = vunpack.c.l.bf16 %v309
        %v337 = vunpack.c.h.bf16 %v309
        %v338 = vunpack.c.l.bf16 %v310
        %v339 = vunpack.c.h.bf16 %v310
        %v340 = vunpack.c.l.bf16 %v311
        %v341 = vunpack.c.h.bf16 %v311
        %v342 = vunpack.c.l.bf16 %v312
        %v343 = vunpack.c.h.bf16 %v312
        %v344 = vunpack.c.l.bf16 %v313
        %v345 = vunpack.c.h.bf16 %v313
        %v346 = vld [vmem:[%s2] sm:$0xf]
        %v348 = vperm.slane %v346, 0
        %v349 = vperm.slane %v346, 1
        %v350 = vperm.slane %v346, 2
        %v351 = vperm.slane %v346, 3
        %v356 = vmul.f32 %v314, %v348
        %v357 = vmul.f32 %v315, %v349
        %v358 = vmul.f32 %v316, %v350
        %v359 = vmul.f32 %v317, %v351
        %v360 = vmul.f32 %v318, %v348
        %v361 = vmul.f32 %v319, %v349
        %v362 = vmul.f32 %v320, %v350
        %v363 = vmul.f32 %v321, %v351
        %v364 = vmul.f32 %v322, %v348
        %v365 = vmul.f32 %v323, %v349
        %v366 = vmul.f32 %v324, %v350
        %v367 = vmul.f32 %v325, %v351
        %v368 = vmul.f32 %v326, %v348
        %v369 = vmul.f32 %v327, %v349
        %v370 = vmul.f32 %v328, %v350
        %v371 = vmul.f32 %v329, %v351
        %v372 = vmul.f32 %v330, %v348
        %v373 = vmul.f32 %v331, %v349
        %v374 = vmul.f32 %v332, %v350
        %v375 = vmul.f32 %v333, %v351
        %v376 = vmul.f32 %v334, %v348
        %v377 = vmul.f32 %v335, %v349
        %v378 = vmul.f32 %v336, %v350
        %v379 = vmul.f32 %v337, %v351
        %v380 = vmul.f32 %v338, %v348
        %v381 = vmul.f32 %v339, %v349
        %v382 = vmul.f32 %v340, %v350
        %v383 = vmul.f32 %v341, %v351
        %v384 = vmul.f32 %v342, %v348
        %v385 = vmul.f32 %v343, %v349
        %v386 = vmul.f32 %v344, %v350
        %v387 = vmul.f32 %v345, %v351
        %v388 = vld [vmem:[%s3] sm:$0xf]
        %v390 = vperm.slane %v388, 0
        %v391 = vperm.slane %v388, 1
        %v392 = vperm.slane %v388, 2
        %v393 = vperm.slane %v388, 3
        %v398 = vadd.f32 %v356, %v390
        %v399 = vadd.f32 %v357, %v391
        %v400 = vadd.f32 %v358, %v392
        %v401 = vadd.f32 %v359, %v393
        %v402 = vadd.f32 %v360, %v390
        %v403 = vadd.f32 %v361, %v391
        %v404 = vadd.f32 %v362, %v392
        %v405 = vadd.f32 %v363, %v393
        %v406 = vadd.f32 %v364, %v390
        %v407 = vadd.f32 %v365, %v391
        %v408 = vadd.f32 %v366, %v392
        %v409 = vadd.f32 %v367, %v393
        %v410 = vadd.f32 %v368, %v390
        %v411 = vadd.f32 %v369, %v391
        %v412 = vadd.f32 %v370, %v392
        %v413 = vadd.f32 %v371, %v393
        %v414 = vadd.f32 %v372, %v390
        %v415 = vadd.f32 %v373, %v391
        %v416 = vadd.f32 %v374, %v392
        %v417 = vadd.f32 %v375, %v393
        %v418 = vadd.f32 %v376, %v390
        %v419 = vadd.f32 %v377, %v391
        %v420 = vadd.f32 %v378, %v392
        %v421 = vadd.f32 %v379, %v393
        %v422 = vadd.f32 %v380, %v390
        %v423 = vadd.f32 %v381, %v391
        %v424 = vadd.f32 %v382, %v392
        %v425 = vadd.f32 %v383, %v393
        %v426 = vadd.f32 %v384, %v390
        %v427 = vadd.f32 %v385, %v391
        %v428 = vadd.f32 %v386, %v392
        %v429 = vadd.f32 %v387, %v393
        %v430 = vmul.f32 %v398, 0.2
        %v431 = vmul.f32 %v399, 0.2
        %v432 = vmul.f32 %v400, 0.2
        %v433 = vmul.f32 %v401, 0.2
        %v434 = vmul.f32 %v402, 0.2
        %v435 = vmul.f32 %v403, 0.2
        %v436 = vmul.f32 %v404, 0.2
        %v437 = vmul.f32 %v405, 0.2
        %v438 = vmul.f32 %v406, 0.2
        %v439 = vmul.f32 %v407, 0.2
        %v440 = vmul.f32 %v408, 0.2
        %v441 = vmul.f32 %v409, 0.2
        %v442 = vmul.f32 %v410, 0.2
        %v443 = vmul.f32 %v411, 0.2
        %v444 = vmul.f32 %v412, 0.2
        %v445 = vmul.f32 %v413, 0.2
        %v446 = vmul.f32 %v414, 0.2
        %v447 = vmul.f32 %v415, 0.2
        %v448 = vmul.f32 %v416, 0.2
        %v449 = vmul.f32 %v417, 0.2
        %v450 = vmul.f32 %v418, 0.2
        %v451 = vmul.f32 %v419, 0.2
        %v452 = vmul.f32 %v420, 0.2
        %v453 = vmul.f32 %v421, 0.2
        %v454 = vmul.f32 %v422, 0.2
        %v455 = vmul.f32 %v423, 0.2
        %v456 = vmul.f32 %v424, 0.2
        %v457 = vmul.f32 %v425, 0.2
        %v458 = vmul.f32 %v426, 0.2
        %v459 = vmul.f32 %v427, 0.2
        %v460 = vmul.f32 %v428, 0.2
        %v461 = vmul.f32 %v429, 0.2
        %v462 = vmax.f32 %v398, %v430
        %v463 = vmax.f32 %v399, %v431
        %v464 = vmax.f32 %v400, %v432
        %v465 = vmax.f32 %v401, %v433
        %v466 = vmax.f32 %v402, %v434
        %v467 = vmax.f32 %v403, %v435
        %v468 = vmax.f32 %v404, %v436
        %v469 = vmax.f32 %v405, %v437
        %v470 = vmax.f32 %v406, %v438
        %v471 = vmax.f32 %v407, %v439
        %v472 = vmax.f32 %v408, %v440
        %v473 = vmax.f32 %v409, %v441
        %v474 = vmax.f32 %v410, %v442
        %v475 = vmax.f32 %v411, %v443
        %v476 = vmax.f32 %v412, %v444
        %v477 = vmax.f32 %v413, %v445
        %v478 = vmax.f32 %v414, %v446
        %v479 = vmax.f32 %v415, %v447
        %v480 = vmax.f32 %v416, %v448
        %v481 = vmax.f32 %v417, %v449
        %v482 = vmax.f32 %v418, %v450
        %v483 = vmax.f32 %v419, %v451
        %v484 = vmax.f32 %v420, %v452
        %v485 = vmax.f32 %v421, %v453
        %v486 = vmax.f32 %v422, %v454
        %v487 = vmax.f32 %v423, %v455
        %v488 = vmax.f32 %v424, %v456
        %v489 = vmax.f32 %v425, %v457
        %v490 = vmax.f32 %v426, %v458
        %v491 = vmax.f32 %v427, %v459
        %v492 = vmax.f32 %v428, %v460
        %v493 = vmax.f32 %v429, %v461
        %v494 = vpack.c.bf16 %v466, %v462
        %v495 = vpack.c.bf16 %v467, %v463
        %v496 = vpack.c.bf16 %v468, %v464
        %v497 = vpack.c.bf16 %v469, %v465
        %v498 = vpack.c.bf16 %v474, %v470
        %v499 = vpack.c.bf16 %v475, %v471
        %v500 = vpack.c.bf16 %v476, %v472
        %v501 = vpack.c.bf16 %v477, %v473
        %v502 = vpack.c.bf16 %v482, %v478
        %v503 = vpack.c.bf16 %v483, %v479
        %v504 = vpack.c.bf16 %v484, %v480
        %v505 = vpack.c.bf16 %v485, %v481
        %v506 = vpack.c.bf16 %v490, %v486
        %v507 = vpack.c.bf16 %v491, %v487
        %v508 = vpack.c.bf16 %v492, %v488
        %v509 = vpack.c.bf16 %v493, %v489
        %v510 = vld [vmem:[%s1] sm:$0xf]
        %v511 = vld [vmem:[%s1 + $0x4] sm:$0xf]
        %v512 = vld [vmem:[%s1 + $0x8] sm:$0xf]
        %v513 = vld [vmem:[%s1 + $0xc] sm:$0xf]
        %v514 = vld [vmem:[%s1 + $0x10] sm:$0xf]
        %v515 = vld [vmem:[%s1 + $0x14] sm:$0xf]
        %v516 = vld [vmem:[%s1 + $0x18] sm:$0xf]
        %v517 = vld [vmem:[%s1 + $0x1c] sm:$0xf]
        %v518 = vld [vmem:[%s1 + $0x20] sm:$0xf]
        %v519 = vld [vmem:[%s1 + $0x24] sm:$0xf]
        %v520 = vld [vmem:[%s1 + $0x28] sm:$0xf]
        %v521 = vld [vmem:[%s1 + $0x2c] sm:$0xf]
        %v522 = vld [vmem:[%s1 + $0x30] sm:$0xf]
        %v523 = vld [vmem:[%s1 + $0x34] sm:$0xf]
        %v524 = vld [vmem:[%s1 + $0x38] sm:$0xf]
        %v525 = vld [vmem:[%s1 + $0x3c] sm:$0xf]
        %v526 = vld [vmem:[%s1 + $0x40] sm:$0xf]
        %v527 = vld [vmem:[%s1 + $0x44] sm:$0xf]
        %v528 = vld [vmem:[%s1 + $0x48] sm:$0xf]
        %v529 = vld [vmem:[%s1 + $0x4c] sm:$0xf]
        %v530 = vld [vmem:[%s1 + $0x50] sm:$0xf]
        %v531 = vld [vmem:[%s1 + $0x54] sm:$0xf]
        %v532 = vld [vmem:[%s1 + $0x58] sm:$0xf]
        %v533 = vld [vmem:[%s1 + $0x5c] sm:$0xf]
        %v534 = vld [vmem:[%s1 + $0x60] sm:$0xf]
        %v535 = vld [vmem:[%s1 + $0x64] sm:$0xf]
        %v536 = vld [vmem:[%s1 + $0x68] sm:$0xf]
        %v537 = vld [vmem:[%s1 + $0x6c] sm:$0xf]
        %v538 = vld [vmem:[%s1 + $0x70] sm:$0xf]
        %v539 = vld [vmem:[%s1 + $0x74] sm:$0xf]
        %v540 = vld [vmem:[%s1 + $0x78] sm:$0xf]
        %v541 = vld [vmem:[%s1 + $0x7c] sm:$0xf]
        %v542 = vld [vmem:[%s1 + $0x80] sm:$0xf]
        %v543 = vld [vmem:[%s1 + $0x84] sm:$0xf]
        %v544 = vld [vmem:[%s1 + $0x88] sm:$0xf]
        %v545 = vld [vmem:[%s1 + $0x8c] sm:$0xf]
        %v546 = vld [vmem:[%s1 + $0x90] sm:$0xf]
        %v547 = vld [vmem:[%s1 + $0x94] sm:$0xf]
        %v548 = vld [vmem:[%s1 + $0x98] sm:$0xf]
        %v549 = vld [vmem:[%s1 + $0x9c] sm:$0xf]
        %v550 = vld [vmem:[%s1 + $0xa0] sm:$0xf]
        %v551 = vld [vmem:[%s1 + $0xa4] sm:$0xf]
        %v552 = vld [vmem:[%s1 + $0xa8] sm:$0xf]
        %v553 = vld [vmem:[%s1 + $0xac] sm:$0xf]
        %v554 = vld [vmem:[%s1 + $0xb0] sm:$0xf]
        %v555 = vld [vmem:[%s1 + $0xb4] sm:$0xf]
        %v556 = vld [vmem:[%s1 + $0xb8] sm:$0xf]
        %v557 = vld [vmem:[%s1 + $0xbc] sm:$0xf]
        %v558 = vld [vmem:[%s1 + $0xc0] sm:$0xf]
        %v559 = vld [vmem:[%s1 + $0xc4] sm:$0xf]
        %v560 = vld [vmem:[%s1 + $0xc8] sm:$0xf]
        %v561 = vld [vmem:[%s1 + $0xcc] sm:$0xf]
        %v562 = vld [vmem:[%s1 + $0xd0] sm:$0xf]
        %v563 = vld [vmem:[%s1 + $0xd4] sm:$0xf]
        %v564 = vld [vmem:[%s1 + $0xd8] sm:$0xf]
        %v565 = vld [vmem:[%s1 + $0xdc] sm:$0xf]
        %v566 = vld [vmem:[%s1 + $0xe0] sm:$0xf]
        %v567 = vld [vmem:[%s1 + $0xe4] sm:$0xf]
        %v568 = vld [vmem:[%s1 + $0xe8] sm:$0xf]
        %v569 = vld [vmem:[%s1 + $0xec] sm:$0xf]
        %v570 = vld [vmem:[%s1 + $0xf0] sm:$0xf]
        %v571 = vld [vmem:[%s1 + $0xf4] sm:$0xf]
        %v572 = vld [vmem:[%s1 + $0xf8] sm:$0xf]
        %v573 = vld [vmem:[%s1 + $0xfc] sm:$0xf]
        %v638 = vunpack.c.l.b16 %v510
        %v639 = vunpack.c.l.b16 %v511
        %v640 = vunpack.c.l.b16 %v512
        %v641 = vunpack.c.l.b16 %v513
        %v642 = vunpack.c.l.b16 %v514
        %v643 = vunpack.c.l.b16 %v515
        %v644 = vunpack.c.l.b16 %v516
        %v645 = vunpack.c.l.b16 %v517
        %v646 = vunpack.c.l.b16 %v518
        %v647 = vunpack.c.l.b16 %v519
        %v648 = vunpack.c.l.b16 %v520
        %v649 = vunpack.c.l.b16 %v521
        %v650 = vunpack.c.l.b16 %v522
        %v651 = vunpack.c.l.b16 %v523
        %v652 = vunpack.c.l.b16 %v524
        %v653 = vunpack.c.l.b16 %v525
        %v654 = vunpack.c.l.b16 %v526
        %v655 = vunpack.c.l.b16 %v527
        %v656 = vunpack.c.l.b16 %v528
        %v657 = vunpack.c.l.b16 %v529
        %v658 = vunpack.c.l.b16 %v530
        %v659 = vunpack.c.l.b16 %v531
        %v660 = vunpack.c.l.b16 %v532
        %v661 = vunpack.c.l.b16 %v533
        %v662 = vunpack.c.l.b16 %v534
        %v663 = vunpack.c.l.b16 %v535
        %v664 = vunpack.c.l.b16 %v536
        %v665 = vunpack.c.l.b16 %v537
        %v666 = vunpack.c.l.b16 %v538
        %v667 = vunpack.c.l.b16 %v539
        %v668 = vunpack.c.l.b16 %v540
        %v669 = vunpack.c.l.b16 %v541
        %v670 = vunpack.c.l.b16 %v542
        %v671 = vunpack.c.l.b16 %v543
        %v672 = vunpack.c.l.b16 %v544
        %v673 = vunpack.c.l.b16 %v545
        %v674 = vunpack.c.l.b16 %v546
        %v675 = vunpack.c.l.b16 %v547
        %v676 = vunpack.c.l.b16 %v548
        %v677 = vunpack.c.l.b16 %v549
        %v678 = vunpack.c.l.b16 %v550
        %v679 = vunpack.c.l.b16 %v551
        %v680 = vunpack.c.l.b16 %v552
        %v681 = vunpack.c.l.b16 %v553
        %v682 = vunpack.c.l.b16 %v554
        %v683 = vunpack.c.l.b16 %v555
        %v684 = vunpack.c.l.b16 %v556
        %v685 = vunpack.c.l.b16 %v557
        %v686 = vunpack.c.l.b16 %v558
        %v687 = vunpack.c.l.b16 %v559
        %v688 = vunpack.c.l.b16 %v560
        %v689 = vunpack.c.l.b16 %v561
        %v690 = vunpack.c.l.b16 %v562
        %v691 = vunpack.c.l.b16 %v563
        %v692 = vunpack.c.l.b16 %v564
        %v693 = vunpack.c.l.b16 %v565
        %v694 = vunpack.c.l.b16 %v566
        %v695 = vunpack.c.l.b16 %v567
        %v696 = vunpack.c.l.b16 %v568
        %v697 = vunpack.c.l.b16 %v569
        %v698 = vunpack.c.l.b16 %v570
        %v699 = vunpack.c.l.b16 %v571
        %v700 = vunpack.c.l.b16 %v572
        %v701 = vunpack.c.l.b16 %v573
        %v702 = vpack.c.b16 %v639, %v638
        %v703 = vpack.c.b16 %v641, %v640
        %v704 = vpack.c.b16 %v643, %v642
        %v705 = vpack.c.b16 %v645, %v644
        %v706 = vpack.c.b16 %v647, %v646
        %v707 = vpack.c.b16 %v649, %v648
        %v708 = vpack.c.b16 %v651, %v650
        %v709 = vpack.c.b16 %v653, %v652
        %v710 = vpack.c.b16 %v655, %v654
        %v711 = vpack.c.b16 %v657, %v656
        %v712 = vpack.c.b16 %v659, %v658
        %v713 = vpack.c.b16 %v661, %v660
        %v714 = vpack.c.b16 %v663, %v662
        %v715 = vpack.c.b16 %v665, %v664
        %v716 = vpack.c.b16 %v667, %v666
        %v717 = vpack.c.b16 %v669, %v668
        %v718 = vpack.c.b16 %v671, %v670
        %v719 = vpack.c.b16 %v673, %v672
        %v720 = vpack.c.b16 %v675, %v674
        %v721 = vpack.c.b16 %v677, %v676
        %v722 = vpack.c.b16 %v679, %v678
        %v723 = vpack.c.b16 %v681, %v680
        %v724 = vpack.c.b16 %v683, %v682
        %v725 = vpack.c.b16 %v685, %v684
        %v726 = vpack.c.b16 %v687, %v686
        %v727 = vpack.c.b16 %v689, %v688
        %v728 = vpack.c.b16 %v691, %v690
        %v729 = vpack.c.b16 %v693, %v692
        %v730 = vpack.c.b16 %v695, %v694
        %v731 = vpack.c.b16 %v697, %v696
        %v732 = vpack.c.b16 %v699, %v698
        %v733 = vpack.c.b16 %v701, %v700
        %766 = vmatpush.bf16.msra.mxu0 %v709
        %767 = vmatpush.bf16.msra.mxu0 %v708
        %768 = vmatpush.bf16.msra.mxu0 %v707
        %769 = vmatpush.bf16.msra.mxu0 %v706
        %770 = vmatpush.bf16.msra.mxu0 %v705
        %771 = vmatpush.bf16.msra.mxu0 %v704
        %772 = vmatpush.bf16.msra.mxu0 %v703
        %773 = vmatpush.bf16.msra.mxu0 %v702
        %774 = vmatmul.bf16.gmra.mxu0 %v494
        %v775 = vpop.f32.mrf.mxu0
        %v776 = vadd.f32 0.0, %v775
        %v777 = vpop.f32.mrf.mxu0
        %v778 = vadd.f32 0.0, %v777
        %779 = vmatmul.bf16.gmra.mxu0 %v498
        %v780 = vpop.f32.mrf.mxu0
        %v781 = vadd.f32 0.0, %v780
        %v782 = vpop.f32.mrf.mxu0
        %v783 = vadd.f32 0.0, %v782
        %784 = vmatmul.bf16.gmra.mxu0 %v502
        %v785 = vpop.f32.mrf.mxu0
        %v786 = vadd.f32 0.0, %v785
        %v787 = vpop.f32.mrf.mxu0
        %v788 = vadd.f32 0.0, %v787
        %789 = vmatmul.bf16.gmra.mxu0 %v506
        %v790 = vpop.f32.mrf.mxu0
        %v791 = vadd.f32 0.0, %v790
        %v792 = vpop.f32.mrf.mxu0
        %v793 = vadd.f32 0.0, %v792
        %794 = vdwg.mxu0
        %795 = vmatpush.bf16.msra.mxu0 %v717
        %796 = vmatpush.bf16.msra.mxu0 %v716
        %797 = vmatpush.bf16.msra.mxu0 %v715
        %798 = vmatpush.bf16.msra.mxu0 %v714
        %799 = vmatpush.bf16.msra.mxu0 %v713
        %800 = vmatpush.bf16.msra.mxu0 %v712
        %801 = vmatpush.bf16.msra.mxu0 %v711
        %802 = vmatpush.bf16.msra.mxu0 %v710
        %803 = vmatmul.bf16.gmra.mxu0 %v495
        %v804 = vpop.f32.mrf.mxu0
        %v805 = vadd.f32 %v776, %v804
        %v806 = vpop.f32.mrf.mxu0
        %v807 = vadd.f32 %v778, %v806
        %808 = vmatmul.bf16.gmra.mxu0 %v499
        %v809 = vpop.f32.mrf.mxu0
        %v810 = vadd.f32 %v781, %v809
        %v811 = vpop.f32.mrf.mxu0
        %v812 = vadd.f32 %v783, %v811
        %813 = vmatmul.bf16.gmra.mxu0 %v503
        %v814 = vpop.f32.mrf.mxu0
        %v815 = vadd.f32 %v786, %v814
        %v816 = vpop.f32.mrf.mxu0
        %v817 = vadd.f32 %v788, %v816
        %818 = vmatmul.bf16.gmra.mxu0 %v507
        %v819 = vpop.f32.mrf.mxu0
        %v820 = vadd.f32 %v791, %v819
        %v821 = vpop.f32.mrf.mxu0
        %v822 = vadd.f32 %v793, %v821
        %823 = vdwg.mxu0
        %824 = vmatpush.bf16.msra.mxu0 %v725
        %825 = vmatpush.bf16.msra.mxu0 %v724
        %826 = vmatpush.bf16.msra.mxu0 %v723
        %827 = vmatpush.bf16.msra.mxu0 %v722
        %828 = vmatpush.bf16.msra.mxu0 %v721
        %829 = vmatpush.bf16.msra.mxu0 %v720
        %830 = vmatpush.bf16.msra.mxu0 %v719
        %831 = vmatpush.bf16.msra.mxu0 %v718
        %832 = vmatmul.bf16.gmra.mxu0 %v496
        %v833 = vpop.f32.mrf.mxu0
        %v834 = vadd.f32 %v805, %v833
        %v835 = vpop.f32.mrf.mxu0
        %v836 = vadd.f32 %v807, %v835
        %837 = vmatmul.bf16.gmra.mxu0 %v500
        %v838 = vpop.f32.mrf.mxu0
        %v839 = vadd.f32 %v810, %v838
        %v840 = vpop.f32.mrf.mxu0
        %v841 = vadd.f32 %v812, %v840
        %842 = vmatmul.bf16.gmra.mxu0 %v504
        %v843 = vpop.f32.mrf.mxu0
        %v844 = vadd.f32 %v815, %v843
        %v845 = vpop.f32.mrf.mxu0
        %v846 = vadd.f32 %v817, %v845
        %847 = vmatmul.bf16.gmra.mxu0 %v508
        %v848 = vpop.f32.mrf.mxu0
        %v849 = vadd.f32 %v820, %v848
        %v850 = vpop.f32.mrf.mxu0
        %v851 = vadd.f32 %v822, %v850
        %852 = vdwg.mxu0
        %853 = vmatpush.bf16.msra.mxu0 %v733
        %854 = vmatpush.bf16.msra.mxu0 %v732
        %855 = vmatpush.bf16.msra.mxu0 %v731
        %856 = vmatpush.bf16.msra.mxu0 %v730
        %857 = vmatpush.bf16.msra.mxu0 %v729
        %858 = vmatpush.bf16.msra.mxu0 %v728
        %859 = vmatpush.bf16.msra.mxu0 %v727
        %860 = vmatpush.bf16.msra.mxu0 %v726
        %861 = vmatmul.bf16.gmra.mxu0 %v497
        %v862 = vpop.f32.mrf.mxu0
        %v863 = vadd.f32 %v834, %v862
        %v864 = vpop.f32.mrf.mxu0
        %v865 = vadd.f32 %v836, %v864
        %866 = vmatmul.bf16.gmra.mxu0 %v501
        %v867 = vpop.f32.mrf.mxu0
        %v868 = vadd.f32 %v839, %v867
        %v869 = vpop.f32.mrf.mxu0
        %v870 = vadd.f32 %v841, %v869
        %871 = vmatmul.bf16.gmra.mxu0 %v505
        %v872 = vpop.f32.mrf.mxu0
        %v873 = vadd.f32 %v844, %v872
        %v874 = vpop.f32.mrf.mxu0
        %v875 = vadd.f32 %v846, %v874
        %876 = vmatmul.bf16.gmra.mxu0 %v509
        %v877 = vpop.f32.mrf.mxu0
        %v878 = vadd.f32 %v849, %v877
        %v879 = vpop.f32.mrf.mxu0
        %v880 = vadd.f32 %v851, %v879
        %881 = vdwg.mxu0
        %v882 = vlaneseq
        %v883 = vshrl.u32 %v882, 7
        %v884 = vadd.s32 %v883, 8
        %v885 = vadd.s32 %v883, 16
        %v886 = vadd.s32 %v883, 24
        %v887 = vadd.s32 %v883, 32
        %v888 = vadd.s32 %v883, 40
        %v889 = vadd.s32 %v883, 48
        %v890 = vadd.s32 %v883, 56
        %s891 = smul.u32 %s18, 64
        %v892 = vstv %s891
        %v893 = vadd.s32 %v883, %v892
        %v894 = vadd.s32 %v884, %v892
        %v895 = vadd.s32 %v885, %v892
        %v896 = vadd.s32 %v886, %v892
        %v897 = vadd.s32 %v887, %v892
        %v898 = vadd.s32 %v888, %v892
        %v899 = vadd.s32 %v889, %v892
        %v900 = vadd.s32 %v890, %v892
        %vm901 = vcmp.lt.s32.totalorder %v893, 98
        %vm902 = vcmp.lt.s32.totalorder %v894, 98
        %vm903 = vcmp.lt.s32.totalorder %v895, 98
        %vm904 = vcmp.lt.s32.totalorder %v896, 98
        %vm905 = vcmp.lt.s32.totalorder %v897, 98
        %vm906 = vcmp.lt.s32.totalorder %v898, 98
        %vm907 = vcmp.lt.s32.totalorder %v899, 98
        %vm908 = vcmp.lt.s32.totalorder %v900, 98
        %v909 = vsel %vm901, 1, 0
        %v910 = vsel %vm902, 1, 0
        %v911 = vsel %vm903, 1, 0
        %v912 = vsel %vm904, 1, 0
        %v913 = vsel %vm905, 1, 0
        %v914 = vsel %vm906, 1, 0
        %v915 = vsel %vm907, 1, 0
        %v916 = vsel %vm908, 1, 0
        %vm917 = vcmp.eq.s32.totalorder %v909, 1
        %vm918 = vcmp.eq.s32.totalorder %v910, 1
        %vm919 = vcmp.eq.s32.totalorder %v911, 1
        %vm920 = vcmp.eq.s32.totalorder %v912, 1
        %vm921 = vcmp.eq.s32.totalorder %v913, 1
        %vm922 = vcmp.eq.s32.totalorder %v914, 1
        %vm923 = vcmp.eq.s32.totalorder %v915, 1
        %vm924 = vcmp.eq.s32.totalorder %v916, 1
        %v925 = vsel %vm917, %v863, 0.0
        %v926 = vsel %vm918, %v865, 0.0
        %v927 = vsel %vm919, %v868, 0.0
        %v928 = vsel %vm920, %v870, 0.0
        %v929 = vsel %vm921, %v873, 0.0
        %v930 = vsel %vm922, %v875, 0.0
        %v931 = vsel %vm923, %v878, 0.0
        %v932 = vsel %vm924, %v880, 0.0
        %v933 = vadd.f32 %v925, %v926
        %v934 = vadd.f32 %v933, %v927
        %v935 = vadd.f32 %v934, %v928
        %v936 = vadd.f32 %v935, %v929
        %v937 = vadd.f32 %v936, %v930
        %v938 = vadd.f32 %v937, %v931
        %v939 = vadd.f32 %v938, %v932
        %v940 = vrot.slane %v939, 4
        %v941 = vadd.f32 %v939, %v940
        %v942 = vrot.slane %v941, 2
        %v943 = vadd.f32 %v941, %v942
        %v944 = vrot.slane %v943, 1
        %v945 = vadd.f32 %v943, %v944
        %946 = vst [vmem:[%s294] sm:$0x1] %v945
        %v947 = vmul.f32 %v925, %v925
        %v948 = vmul.f32 %v926, %v926
        %v949 = vmul.f32 %v927, %v927
        %v950 = vmul.f32 %v928, %v928
        %v951 = vmul.f32 %v929, %v929
        %v952 = vmul.f32 %v930, %v930
        %v953 = vmul.f32 %v931, %v931
        %v954 = vmul.f32 %v932, %v932
        %v955 = vadd.f32 %v947, %v948
        %v956 = vadd.f32 %v955, %v949
        %v957 = vadd.f32 %v956, %v950
        %v958 = vadd.f32 %v957, %v951
        %v959 = vadd.f32 %v958, %v952
        %v960 = vadd.f32 %v959, %v953
        %v961 = vadd.f32 %v960, %v954
        %v962 = vrot.slane %v961, 4
        %v963 = vadd.f32 %v961, %v962
        %v964 = vrot.slane %v963, 2
        %v965 = vadd.f32 %v963, %v964
        %v966 = vrot.slane %v965, 1
        %v967 = vadd.f32 %v965, %v966
        %968 = vst [vmem:[%s297] sm:$0x1] %v967
        %v969 = vpack.c.bf16 %v863, %v863
        %v970 = vpack.c.bf16 %v865, %v865
        %v971 = vpack.c.bf16 %v868, %v868
        %v972 = vpack.c.bf16 %v870, %v870
        %v973 = vpack.c.bf16 %v873, %v873
        %v974 = vpack.c.bf16 %v875, %v875
        %v975 = vpack.c.bf16 %v878, %v878
        %v976 = vpack.c.bf16 %v880, %v880
        %977 = vst [vmem:[%s259] sm:$0xf] %v969
        %978 = vst [vmem:[%s259 + $0x4] sm:$0xf] %v970
        %979 = vst [vmem:[%s259 + $0x8] sm:$0xf] %v971
        %980 = vst [vmem:[%s259 + $0xc] sm:$0xf] %v972
        %981 = vst [vmem:[%s259 + $0x10] sm:$0xf] %v973
        %982 = vst [vmem:[%s259 + $0x14] sm:$0xf] %v974
        %983 = vst [vmem:[%s259 + $0x18] sm:$0xf] %v975
        %984 = vst [vmem:[%s259 + $0x1c] sm:$0xf] %v976
        %s985 = sand.u32 %s115, 1
        %s986 = sand.u32 %s115, 1
        %s987 = smul.addr %s986, 32
        %s988 = scalar_lea.vmem [#allocation2], %s987
        %p989 = scmp.lt.s32.totalorder %s18, 1
        %s990 = scalar_select %p989, %s18, 1
        %s991 = scalar_lea.vmem %s5, %s990
        %p992 = scmp.lt.s32.totalorder %s18, 1
        %s993 = scalar_select %p992, %s18, 1
        %s994 = scalar_lea.vmem %s6, %s993
        // Predicated region
        $region37: #{discriminator_forward.8} parent=35 // pred_check
          %p995 = pneg %p125
        $region38: #{discriminator_forward.8} parent=35 // pred_check_branch
          %997 = sbr.rel (%p995) target = $region40
        $region39: #{discriminator_forward.8} parent=35 // pred_region
          %s998 = smul.u32 8, %s18
          %s999 = ssub.s32 13, %s998
          %p1000 = scmp.lt.s32.totalorder %s999, 8
          %s1001 = scalar_select %p1000, %s999, 8
          %s1002 = smul.u32 4, %s1001
          %p1003 = scmp.ne.s32.totalorder 0, %s1002
          %s1004 = smul.addr %s998, 4
          %s1005 = scalar_lea.vmem %s4, %s1004
          // Predicated region
          $region41: #{discriminator_forward.8} parent=39 // pred_check
            %p1006 = pneg %p1003
          $region42: #{discriminator_forward.8} parent=39 // pred_check_branch
            %1008 = sbr.rel (%p1006) target = $region44
          $region43: #{discriminator_forward.8} parent=39 // pred_region
            // Predicated region
            $region45: #{discriminator_forward.8} parent=43 // pred_check
              _
            $region46: #{discriminator_forward.8} parent=43 // pred_check_branch
              %1010 = sbr.rel target = $region48
            $region47: #{discriminator_forward.8} parent=43 // pred_region
              // Predicated region
              $region67: #{discriminator_forward.8} parent=47 // pred_check
                _
              $region68: #{discriminator_forward.8} parent=47 // pred_check_branch
                %1074 = sbr.rel (0) target = $region70
              $region69: #{discriminator_forward.8} parent=47 // pred_region
                %s1076 = ssub.s32 16, 1
                %s1077 = sshrl.u32 %s1001, 3
                // While loop
                $region71: #{discriminator_forward.8} parent=69 // loop_pre_header
                  _
                $region72: #{discriminator_forward.8} parent=69 // loop_header
                  %s1079 = sphi 0, %s1081
                  %p1080 = scmp.ge.s32.totalorder %s1079, %s1077
                  %s1084 = sphi 0, %s1105
                  %s1085 = sphi %s988, %s1108
                  %s1086 = sphi %s1005, %s1109
                $region73: #{discriminator_forward.8} parent=69 // loop_header_branch
                  %1083 = sbr.rel (%p1080) target = $region77
                $region74: #{discriminator_forward.8} parent=69 // loop_body
                  %v1087 = vld [vmem:[%s1085] sm:%s1076]
                  %1088 = vst [vmem:[%s1086] sm:%s1076] %v1087
                  %v1089 = vld [vmem:[%s1085 + $0x4] sm:%s1076]
                  %1090 = vst [vmem:[%s1086 + $0x4] sm:%s1076] %v1089
                  %v1091 = vld [vmem:[%s1085 + $0x8] sm:%s1076]
                  %1092 = vst [vmem:[%s1086 + $0x8] sm:%s1076] %v1091
                  %v1093 = vld [vmem:[%s1085 + $0xc] sm:%s1076]
                  %1094 = vst [vmem:[%s1086 + $0xc] sm:%s1076] %v1093
                  %v1095 = vld [vmem:[%s1085 + $0x10] sm:%s1076]
                  %1096 = vst [vmem:[%s1086 + $0x10] sm:%s1076] %v1095
                  %v1097 = vld [vmem:[%s1085 + $0x14] sm:%s1076]
                  %1098 = vst [vmem:[%s1086 + $0x14] sm:%s1076] %v1097
                  %v1099 = vld [vmem:[%s1085 + $0x18] sm:%s1076]
                  %1100 = vst [vmem:[%s1086 + $0x18] sm:%s1076] %v1099
                  %v1101 = vld [vmem:[%s1085 + $0x1c] sm:%s1076]
                  %1102 = vst [vmem:[%s1086 + $0x1c] sm:%s1076] %v1101
                  %s1103 = sadd.s32 1, %s1084
                  %p1104 = scmp.ge.s32.totalorder %s1103, %s1077
                  %s1105 = scalar_select %p1104, 0, %s1103
                  %s1106 = smul.u32 %s1105, 32
                  %s1107 = smul.u32 %s1105, 32
                  %s1108 = scalar_lea.vmem %s988, %s1106 [#allocation2]
                  %s1109 = scalar_lea.vmem %s1005, %s1107
                $region75: #{discriminator_forward.8} parent=69 // loop_footer
                  %s1081 = sadd.s32 %s1079, 1
                $region76: #{discriminator_forward.8} parent=69 // loop_footer_branch
                  %1078 = sbr.rel target = $region72
                $region77: #{discriminator_forward.8} parent=69 // loop_exit
                  _
                %s1110 = sshrl.u32 %s1001, 3
                %s1111 = sand.u32 %s1001, 7
                %s1112 = smul.u32 %s1110, 8
                %s1113 = smul.u32 4, %s1112
                %s1114 = scalar_lea.vmem %s988, %s1113 [#allocation2]
                %s1115 = smul.u32 4, %s1112
                %s1116 = scalar_lea.vmem %s1005, %s1115
                // While loop
                $region78: #{discriminator_forward.8} parent=69 // loop_pre_header
                  _
                $region79: #{discriminator_forward.8} parent=69 // loop_header
                  %s1118 = sphi 0, %s1120
                  %p1119 = scmp.ge.s32.totalorder %s1118, %s1111
                  %s1123 = sphi 0, %s1130
                  %s1124 = sphi %s1114, %s1133
                  %s1125 = sphi %s1116, %s1134
                $region80: #{discriminator_forward.8} parent=69 // loop_header_branch
                  %1122 = sbr.rel (%p1119) target = $region84
                $region81: #{discriminator_forward.8} parent=69 // loop_body
                  %v1126 = vld [vmem:[%s1124] sm:%s1076]
                  %1127 = vst [vmem:[%s1125] sm:%s1076] %v1126
                  %s1128 = sadd.s32 1, %s1123
                  %p1129 = scmp.ge.s32.totalorder %s1128, %s1111
                  %s1130 = scalar_select %p1129, 0, %s1128
                  %s1131 = smul.u32 %s1130, 4
                  %s1132 = smul.u32 %s1130, 4
                  %s1133 = scalar_lea.vmem %s1114, %s1131 [#allocation2]
                  %s1134 = scalar_lea.vmem %s1116, %s1132
                $region82: #{discriminator_forward.8} parent=69 // loop_footer
                  %s1120 = sadd.s32 %s1118, 1
                $region83: #{discriminator_forward.8} parent=69 // loop_footer_branch
                  %1117 = sbr.rel target = $region79
                $region84: #{discriminator_forward.8} parent=69 // loop_exit
                  _
              $region70: #{discriminator_forward.8} parent=47 // pred_fallthru
                _
            $region48: #{discriminator_forward.8} parent=43 // pred_fallthru
              _
            // Predicated region
            $region49: #{discriminator_forward.8} parent=43 // pred_check
              _
            $region50: #{discriminator_forward.8} parent=43 // pred_check_branch
              %1012 = sbr.rel (0) target = $region52
            $region51: #{discriminator_forward.8} parent=43 // pred_region
              %s1014 = ssub.s32 16, 1
              %s1015 = sshrl.u32 %s1001, 3
              // While loop
              $region53: #{discriminator_forward.8} parent=51 // loop_pre_header
                _
              $region54: #{discriminator_forward.8} parent=51 // loop_header
                %s1017 = sphi 0, %s1019
                %p1018 = scmp.ge.s32.totalorder %s1017, %s1015
                %s1022 = sphi 0, %s1043
                %s1023 = sphi %s988, %s1046
                %s1024 = sphi %s1005, %s1047
              $region55: #{discriminator_forward.8} parent=51 // loop_header_branch
                %1021 = sbr.rel (%p1018) target = $region59
              $region56: #{discriminator_forward.8} parent=51 // loop_body
                %v1025 = vld [vmem:[%s1023] sm:%s1014]
                %1026 = vst [vmem:[%s1024] sm:%s1014] %v1025
                %v1027 = vld [vmem:[%s1023 + $0x4] sm:%s1014]
                %1028 = vst [vmem:[%s1024 + $0x4] sm:%s1014] %v1027
                %v1029 = vld [vmem:[%s1023 + $0x8] sm:%s1014]
                %1030 = vst [vmem:[%s1024 + $0x8] sm:%s1014] %v1029
                %v1031 = vld [vmem:[%s1023 + $0xc] sm:%s1014]
                %1032 = vst [vmem:[%s1024 + $0xc] sm:%s1014] %v1031
                %v1033 = vld [vmem:[%s1023 + $0x10] sm:%s1014]
                %1034 = vst [vmem:[%s1024 + $0x10] sm:%s1014] %v1033
                %v1035 = vld [vmem:[%s1023 + $0x14] sm:%s1014]
                %1036 = vst [vmem:[%s1024 + $0x14] sm:%s1014] %v1035
                %v1037 = vld [vmem:[%s1023 + $0x18] sm:%s1014]
                %1038 = vst [vmem:[%s1024 + $0x18] sm:%s1014] %v1037
                %v1039 = vld [vmem:[%s1023 + $0x1c] sm:%s1014]
                %1040 = vst [vmem:[%s1024 + $0x1c] sm:%s1014] %v1039
                %s1041 = sadd.s32 1, %s1022
                %p1042 = scmp.ge.s32.totalorder %s1041, %s1015
                %s1043 = scalar_select %p1042, 0, %s1041
                %s1044 = smul.u32 %s1043, 32
                %s1045 = smul.u32 %s1043, 32
                %s1046 = scalar_lea.vmem %s988, %s1044 [#allocation2]
                %s1047 = scalar_lea.vmem %s1005, %s1045
              $region57: #{discriminator_forward.8} parent=51 // loop_footer
                %s1019 = sadd.s32 %s1017, 1
              $region58: #{discriminator_forward.8} parent=51 // loop_footer_branch
                %1016 = sbr.rel target = $region54
              $region59: #{discriminator_forward.8} parent=51 // loop_exit
                _
              %s1048 = sshrl.u32 %s1001, 3
              %s1049 = sand.u32 %s1001, 7
              %s1050 = smul.u32 %s1048, 8
              %s1051 = smul.u32 4, %s1050
              %s1052 = scalar_lea.vmem %s988, %s1051 [#allocation2]
              %s1053 = smul.u32 4, %s1050
              %s1054 = scalar_lea.vmem %s1005, %s1053
              // While loop
              $region60: #{discriminator_forward.8} parent=51 // loop_pre_header
                _
              $region61: #{discriminator_forward.8} parent=51 // loop_header
                %s1056 = sphi 0, %s1058
                %p1057 = scmp.ge.s32.totalorder %s1056, %s1049
                %s1061 = sphi 0, %s1068
                %s1062 = sphi %s1052, %s1071
                %s1063 = sphi %s1054, %s1072
              $region62: #{discriminator_forward.8} parent=51 // loop_header_branch
                %1060 = sbr.rel (%p1057) target = $region66
              $region63: #{discriminator_forward.8} parent=51 // loop_body
                %v1064 = vld [vmem:[%s1062] sm:%s1014]
                %1065 = vst [vmem:[%s1063] sm:%s1014] %v1064
                %s1066 = sadd.s32 1, %s1061
                %p1067 = scmp.ge.s32.totalorder %s1066, %s1049
                %s1068 = scalar_select %p1067, 0, %s1066
                %s1069 = smul.u32 %s1068, 4
                %s1070 = smul.u32 %s1068, 4
                %s1071 = scalar_lea.vmem %s1052, %s1069 [#allocation2]
                %s1072 = scalar_lea.vmem %s1054, %s1070
              $region64: #{discriminator_forward.8} parent=51 // loop_footer
                %s1058 = sadd.s32 %s1056, 1
              $region65: #{discriminator_forward.8} parent=51 // loop_footer_branch
                %1055 = sbr.rel target = $region61
              $region66: #{discriminator_forward.8} parent=51 // loop_exit
                _
            $region52: #{discriminator_forward.8} parent=43 // pred_fallthru
              _
          $region44: #{discriminator_forward.8} parent=39 // pred_fallthru
            _
          %1135 = vnop
        $region40: #{discriminator_forward.8} parent=35 // pred_fallthru
          _
        // Predicated region
        $region85: #{discriminator_forward.8} parent=35 // pred_check
          %p1136 = pneg %p151
        $region86: #{discriminator_forward.8} parent=35 // pred_check_branch
          %1138 = sbr.rel (%p1136) target = $region88
        $region87: #{discriminator_forward.8} parent=35 // pred_region
          _
        $region88: #{discriminator_forward.8} parent=35 // pred_fallthru
          _
        // Predicated region
        $region89: #{discriminator_forward.8} parent=35 // pred_check
          %p1139 = pneg %p177
        $region90: #{discriminator_forward.8} parent=35 // pred_check_branch
          %1141 = sbr.rel (%p1139) target = $region92
        $region91: #{discriminator_forward.8} parent=35 // pred_region
          _
        $region92: #{discriminator_forward.8} parent=35 // pred_fallthru
          _
      $region36: #{discriminator_forward.8} parent=5 // pred_fallthru
        _
      %p1142 = scmp.le.s32.totalorder 2, %s13
      // Predicated region
      $region93: #{discriminator_forward.8} parent=5 // pred_check
        %p1143 = pneg %p1142
      $region94: #{discriminator_forward.8} parent=5 // pred_check_branch
        %1145 = sbr.rel (%p1143) target = $region96
      $region95: #{discriminator_forward.8} parent=5 // pred_region
        %s1146 = ssub.s32 %s13, 2
        // Predicated region
        $region97: #{discriminator_forward.8} parent=95 // pred_check
          %p1147 = pneg %p131
        $region98: #{discriminator_forward.8} parent=95 // pred_check_branch
          %1149 = sbr.rel (%p1147) target = $region100
        $region99: #{discriminator_forward.8} parent=95 // pred_region
          %s1150 = sand.u32 %s116, 1
          %s1151 = sand.u32 %s116, 1
          %s1152 = smul.addr %s1151, 32
          %s1153 = scalar_lea.vmem [#allocation2], %s1152
        $region100: #{discriminator_forward.8} parent=95 // pred_fallthru
          _
        // Predicated region
        $region101: #{discriminator_forward.8} parent=95 // pred_check
          %p1154 = pneg %p157
        $region102: #{discriminator_forward.8} parent=95 // pred_check_branch
          %1156 = sbr.rel (%p1154) target = $region104
        $region103: #{discriminator_forward.8} parent=95 // pred_region
          %p1157 = scmp.lt.s32.totalorder %s19, 1
          %s1158 = scalar_select %p1157, %s19, 1
          %s1159 = scalar_lea.vmem %s5, %s1158
        $region104: #{discriminator_forward.8} parent=95 // pred_fallthru
          _
        // Predicated region
        $region105: #{discriminator_forward.8} parent=95 // pred_check
          %p1160 = pneg %p183
        $region106: #{discriminator_forward.8} parent=95 // pred_check_branch
          %1162 = sbr.rel (%p1160) target = $region108
        $region107: #{discriminator_forward.8} parent=95 // pred_region
          %p1163 = scmp.lt.s32.totalorder %s19, 1
          %s1164 = scalar_select %p1163, %s19, 1
          %s1165 = scalar_lea.vmem %s6, %s1164
        $region108: #{discriminator_forward.8} parent=95 // pred_fallthru
          _
      $region96: #{discriminator_forward.8} parent=5 // pred_fallthru
        _
    $region6: #{discriminator_forward.8} parent=1 // loop_footer
      %s17 = sadd.s32 1, %s13
    $region7: #{discriminator_forward.8} parent=1 // loop_footer_branch
      %12 = sbr.rel target = $region3
    $region8: #{discriminator_forward.8} parent=1 // loop_exit
      _

// kernel: discriminator_forward.9
$region0: #{discriminator_forward.9}
  #allocation0 [shape = 'u32[]', space=smem, size = 0x4, offset = 0x4, fixed_abs, tag = 'smem constant byte address 0x4 - core index']
  #allocation1 [shape = 'u32[72,128]{1,0:T(1,128)}', space=vmem, size = 0x9000, scoped, tag = 'internal scratch']
  %s0 = inlined_call_operand.vmem [shape: bf16[2,3136], index: 0, kind: input, shape index: {}]
  %s1 = inlined_call_operand.vmem [shape: bf16[3136,128], index: 1, kind: input, shape index: {}]
  %s2 = inlined_call_operand.vmem [shape: f32[1,3136], index: 2, kind: input, shape index: {}]
  %s3 = inlined_call_operand.vmem [shape: f32[1,3136], index: 3, kind: input, shape index: {}]
  %s4 = inlined_call_operand.vmem [shape: f32[2,128], index: 4, kind: output, shape index: {}]
  %s5 = sld [smem:[#allocation0]]
  $region56: #{discriminator_forward.9} parent=0
    _
  %s7 = ssub.s32 1, %s5
  %s8 = scalar_select 0, %s7, %s5
  $region1: #{discriminator_forward.9} parent=0
    #allocation2 [shape = 'u8[8192]{0}', space=vmem, size = 0x2000, scoped, tag = 'output window, operand 0, single buffered']
    // Predicated region
    $region2: #{discriminator_forward.9} parent=1 // pred_check
      _
    $region3: #{discriminator_forward.9} parent=1 // pred_check_branch
      %10 = sbr.rel (0) target = $region5
    $region4: #{discriminator_forward.9} parent=1 // pred_region
      _
    $region5: #{discriminator_forward.9} parent=1 // pred_fallthru
      _
    // Predicated region
    $region6: #{discriminator_forward.9} parent=1 // pred_check
      _
    $region7: #{discriminator_forward.9} parent=1 // pred_check_branch
      %12 = sbr.rel (0) target = $region9
    $region8: #{discriminator_forward.9} parent=1 // pred_region
      _
    $region9: #{discriminator_forward.9} parent=1 // pred_fallthru
      _
    // Predicated region
    $region10: #{discriminator_forward.9} parent=1 // pred_check
      _
    $region11: #{discriminator_forward.9} parent=1 // pred_check_branch
      %14 = sbr.rel (0) target = $region13
    $region12: #{discriminator_forward.9} parent=1 // pred_region
      _
    $region13: #{discriminator_forward.9} parent=1 // pred_fallthru
      _
    // Predicated region
    $region14: #{discriminator_forward.9} parent=1 // pred_check
      _
    $region15: #{discriminator_forward.9} parent=1 // pred_check_branch
      %16 = sbr.rel (0) target = $region17
    $region16: #{discriminator_forward.9} parent=1 // pred_region
      _
    $region17: #{discriminator_forward.9} parent=1 // pred_fallthru
      _
    %v18 = vld [vmem:[%s0] sm:$0xff]
    %v19 = vld [vmem:[%s0 + $0x8] sm:$0xff]
    %v20 = vld [vmem:[%s0 + $0x10] sm:$0xff]
    %v21 = vld [vmem:[%s0 + $0x18] sm:$0x1]
    %v22 = vld [vmem:[%s0 + $0x19] sm:$0xff]
    %v23 = vld [vmem:[%s0 + $0x21] sm:$0xff]
    %v24 = vld [vmem:[%s0 + $0x29] sm:$0xff]
    %v25 = vld [vmem:[%s0 + $0x31] sm:$0x1]
    %v26 = vld [vmem:[%s0 + $0x32] sm:$0xff]
    %v27 = vld [vmem:[%s0 + $0x3a] sm:$0xff]
    %v28 = vld [vmem:[%s0 + $0x42] sm:$0xff]
    %v29 = vld [vmem:[%s0 + $0x4a] sm:$0x1]
    %v30 = vld [vmem:[%s0 + $0x4b] sm:$0xff]
    %v31 = vld [vmem:[%s0 + $0x53] sm:$0xff]
    %v32 = vld [vmem:[%s0 + $0x5b] sm:$0xff]
    %v33 = vld [vmem:[%s0 + $0x63] sm:$0x1]
    %v34 = vld [vmem:[%s0 + $0x64] sm:$0xff]
    %v35 = vld [vmem:[%s0 + $0x6c] sm:$0xff]
    %v36 = vld [vmem:[%s0 + $0x74] sm:$0xff]
    %v37 = vld [vmem:[%s0 + $0x7c] sm:$0x1]
    %v38 = vld [vmem:[%s0 + $0x7d] sm:$0xff]
    %v39 = vld [vmem:[%s0 + $0x85] sm:$0xff]
    %v40 = vld [vmem:[%s0 + $0x8d] sm:$0xff]
    %v41 = vld [vmem:[%s0 + $0x95] sm:$0x1]
    %v42 = vld [vmem:[%s0 + $0x96] sm:$0xff]
    %v43 = vld [vmem:[%s0 + $0x9e] sm:$0xff]
    %v44 = vld [vmem:[%s0 + $0xa6] sm:$0xff]
    %v45 = vld [vmem:[%s0 + $0xae] sm:$0x1]
    %v46 = vld [vmem:[%s0 + $0xaf] sm:$0xff]
    %v47 = vld [vmem:[%s0 + $0xb7] sm:$0xff]
    %v48 = vld [vmem:[%s0 + $0xbf] sm:$0xff]
    %v49 = vld [vmem:[%s0 + $0xc7] sm:$0x1]
    %v50 = vunpack.c.l.bf16 %v18
    %v51 = vunpack.c.h.bf16 %v18
    %v52 = vunpack.c.l.bf16 %v19
    %v53 = vunpack.c.h.bf16 %v19
    %v54 = vunpack.c.l.bf16 %v20
    %v55 = vunpack.c.h.bf16 %v20
    %v56 = vunpack.c.l.bf16 %v21
    %v57 = vunpack.c.l.bf16 %v22
    %v58 = vunpack.c.h.bf16 %v22
    %v59 = vunpack.c.l.bf16 %v23
    %v60 = vunpack.c.h.bf16 %v23
    %v61 = vunpack.c.l.bf16 %v24
    %v62 = vunpack.c.h.bf16 %v24
    %v63 = vunpack.c.l.bf16 %v25
    %v64 = vunpack.c.l.bf16 %v26
    %v65 = vunpack.c.h.bf16 %v26
    %v66 = vunpack.c.l.bf16 %v27
    %v67 = vunpack.c.h.bf16 %v27
    %v68 = vunpack.c.l.bf16 %v28
    %v69 = vunpack.c.h.bf16 %v28
    %v70 = vunpack.c.l.bf16 %v29
    %v71 = vunpack.c.l.bf16 %v30
    %v72 = vunpack.c.h.bf16 %v30
    %v73 = vunpack.c.l.bf16 %v31
    %v74 = vunpack.c.h.bf16 %v31
    %v75 = vunpack.c.l.bf16 %v32
    %v76 = vunpack.c.h.bf16 %v32
    %v77 = vunpack.c.l.bf16 %v33
    %v78 = vunpack.c.l.bf16 %v34
    %v79 = vunpack.c.h.bf16 %v34
    %v80 = vunpack.c.l.bf16 %v35
    %v81 = vunpack.c.h.bf16 %v35
    %v82 = vunpack.c.l.bf16 %v36
    %v83 = vunpack.c.h.bf16 %v36
    %v84 = vunpack.c.l.bf16 %v37
    %v85 = vunpack.c.l.bf16 %v38
    %v86 = vunpack.c.h.bf16 %v38
    %v87 = vunpack.c.l.bf16 %v39
    %v88 = vunpack.c.h.bf16 %v39
    %v89 = vunpack.c.l.bf16 %v40
    %v90 = vunpack.c.h.bf16 %v40
    %v91 = vunpack.c.l.bf16 %v41
    %v92 = vunpack.c.l.bf16 %v42
    %v93 = vunpack.c.h.bf16 %v42
    %v94 = vunpack.c.l.bf16 %v43
    %v95 = vunpack.c.h.bf16 %v43
    %v96 = vunpack.c.l.bf16 %v44
    %v97 = vunpack.c.h.bf16 %v44
    %v98 = vunpack.c.l.bf16 %v45
    %v99 = vunpack.c.l.bf16 %v46
    %v100 = vunpack.c.h.bf16 %v46
    %v101 = vunpack.c.l.bf16 %v47
    %v102 = vunpack.c.h.bf16 %v47
    %v103 = vunpack.c.l.bf16 %v48
    %v104 = vunpack.c.h.bf16 %v48
    %v105 = vunpack.c.l.bf16 %v49
    %v106 = vld [vmem:[%s2] sm:$0xff]
    %v107 = vld [vmem:[%s2 + $0x8] sm:$0xff]
    %v108 = vld [vmem:[%s2 + $0x10] sm:$0xff]
    %v109 = vld [vmem:[%s2 + $0x18] sm:$0x1]
    %v114 = vperm.slane %v106, 0
    %v115 = vperm.slane %v106, 1
    %v116 = vperm.slane %v106, 2
    %v117 = vperm.slane %v106, 3
    %v118 = vperm.slane %v106, 4
    %v119 = vperm.slane %v106, 5
    %v120 = vperm.slane %v106, 6
    %v121 = vperm.slane %v106, 7
    %v122 = vperm.slane %v107, 0
    %v123 = vperm.slane %v107, 1
    %v124 = vperm.slane %v107, 2
    %v125 = vperm.slane %v107, 3
    %v126 = vperm.slane %v107, 4
    %v127 = vperm.slane %v107, 5
    %v128 = vperm.slane %v107, 6
    %v129 = vperm.slane %v107, 7
    %v130 = vperm.slane %v108, 0
    %v131 = vperm.slane %v108, 1
    %v132 = vperm.slane %v108, 2
    %v133 = vperm.slane %v108, 3
    %v134 = vperm.slane %v108, 4
    %v135 = vperm.slane %v108, 5
    %v136 = vperm.slane %v108, 6
    %v137 = vperm.slane %v108, 7
    %v138 = vperm.slane %v109, 0
    %v140 = vrot.slane %v115, 6
    %v141 = vrot.slane %v116, 4
    %v142 = vrot.slane %v117, 2
    %v143 = vrot.slane %v119, 6
    %v144 = vrot.slane %v120, 4
    %v145 = vrot.slane %v121, 2
    %v146 = vrot.slane %v123, 6
    %v147 = vrot.slane %v124, 4
    %v148 = vrot.slane %v125, 2
    %v149 = vrot.slane %v127, 6
    %v150 = vrot.slane %v128, 4
    %v151 = vrot.slane %v129, 2
    %v152 = vrot.slane %v131, 6
    %v153 = vrot.slane %v132, 4
    %v154 = vrot.slane %v133, 2
    %v155 = vrot.slane %v135, 6
    %v156 = vrot.slane %v136, 4
    %v157 = vrot.slane %v137, 2
    %vm158 = vcmask 1041408
    %v159 = vsel %vm158, %v114, %v140
    %vm160 = vcmask 1045508
    %v161 = vsel %vm160, %v141, %v142
    %vm162 = vcmask 1043456
    %v163 = vsel %vm162, %v159, %v161
    %v164 = vsel %vm158, %v118, %v143
    %v165 = vsel %vm160, %v144, %v145
    %v166 = vsel %vm162, %v164, %v165
    %v167 = vsel %vm158, %v122, %v146
    %v168 = vsel %vm160, %v147, %v148
    %v169 = vsel %vm162, %v167, %v168
    %v170 = vsel %vm158, %v126, %v149
    %v171 = vsel %vm160, %v150, %v151
    %v172 = vsel %vm162, %v170, %v171
    %v173 = vsel %vm158, %v130, %v152
    %v174 = vsel %vm160, %v153, %v154
    %v175 = vsel %vm162, %v173, %v174
    %v176 = vsel %vm158, %v134, %v155
    %v177 = vsel %vm160, %v156, %v157
    %v178 = vsel %vm162, %v176, %v177
    %vm179 = vcmask 1043458
    %v180 = vsel %vm179, %v114, %v140
    %vm181 = vcmask 1045504
    %v182 = vsel %vm181, %v142, %v141
    %vm183 = vcmask 1045506
    %v184 = vsel %vm183, %v180, %v182
    %v185 = vrot.slane %v184, 2
    %v186 = vsel %vm179, %v118, %v143
    %v187 = vsel %vm181, %v145, %v144
    %v188 = vsel %vm183, %v186, %v187
    %v189 = vrot.slane %v188, 2
    %v190 = vsel %vm179, %v122, %v146
    %v191 = vsel %vm181, %v148, %v147
    %v192 = vsel %vm183, %v190, %v191
    %v193 = vrot.slane %v192, 2
    %v194 = vsel %vm179, %v126, %v149
    %v195 = vsel %vm181, %v151, %v150
    %v196 = vsel %vm183, %v194, %v195
    %v197 = vrot.slane %v196, 2
    %v198 = vsel %vm179, %v130, %v152
    %v199 = vsel %vm181, %v154, %v153
    %v200 = vsel %vm183, %v198, %v199
    %v201 = vrot.slane %v200, 2
    %v202 = vsel %vm179, %v134, %v155
    %v203 = vsel %vm181, %v157, %v156
    %v204 = vsel %vm183, %v202, %v203
    %v205 = vrot.slane %v204, 2
    %v206 = vrot.slane %v138, 2
    %v207 = vsel %vm160, %v114, %v140
    %v208 = vsel %vm158, %v141, %v142
    %v209 = vsel %vm162, %v208, %v207
    %v210 = vrot.slane %v209, 4
    %v211 = vsel %vm160, %v118, %v143
    %v212 = vsel %vm158, %v144, %v145
    %v213 = vsel %vm162, %v212, %v211
    %v214 = vrot.slane %v213, 4
    %v215 = vsel %vm160, %v122, %v146
    %v216 = vsel %vm158, %v147, %v148
    %v217 = vsel %vm162, %v216, %v215
    %v218 = vrot.slane %v217, 4
    %v219 = vsel %vm160, %v126, %v149
    %v220 = vsel %vm158, %v150, %v151
    %v221 = vsel %vm162, %v220, %v219
    %v222 = vrot.slane %v221, 4
    %v223 = vsel %vm160, %v130, %v152
    %v224 = vsel %vm158, %v153, %v154
    %v225 = vsel %vm162, %v224, %v223
    %v226 = vrot.slane %v225, 4
    %v227 = vsel %vm160, %v134, %v155
    %v228 = vsel %vm158, %v156, %v157
    %v229 = vsel %vm162, %v228, %v227
    %v230 = vrot.slane %v229, 4
    %v231 = vrot.slane %v138, 4
    %v232 = vsel %vm181, %v140, %v114
    %v233 = vsel %vm179, %v141, %v142
    %v234 = vsel %vm183, %v233, %v232
    %v235 = vrot.slane %v234, 6
    %v236 = vsel %vm181, %v143, %v118
    %v237 = vsel %vm179, %v144, %v145
    %v238 = vsel %vm183, %v237, %v236
    %v239 = vrot.slane %v238, 6
    %v240 = vsel %vm181, %v146, %v122
    %v241 = vsel %vm179, %v147, %v148
    %v242 = vsel %vm183, %v241, %v240
    %v243 = vrot.slane %v242, 6
    %v244 = vsel %vm181, %v149, %v126
    %v245 = vsel %vm179, %v150, %v151
    %v246 = vsel %vm183, %v245, %v244
    %v247 = vrot.slane %v246, 6
    %v248 = vsel %vm181, %v152, %v130
    %v249 = vsel %vm179, %v153, %v154
    %v250 = vsel %vm183, %v249, %v248
    %v251 = vrot.slane %v250, 6
    %v252 = vsel %vm181, %v155, %v134
    %v253 = vsel %vm179, %v156, %v157
    %v254 = vsel %vm183, %v253, %v252
    %v255 = vrot.slane %v254, 6
    %v256 = vrot.slane %v138, 6
    %v284 = vmul.f32 %v50, %v163
    %v285 = vmul.f32 %v51, %v166
    %v286 = vmul.f32 %v52, %v169
    %v287 = vmul.f32 %v53, %v172
    %v288 = vmul.f32 %v54, %v175
    %v289 = vmul.f32 %v55, %v178
    %v290 = vmul.f32 %v56, %v138
    %v291 = vmul.f32 %v57, %v185
    %v292 = vmul.f32 %v58, %v189
    %v293 = vmul.f32 %v59, %v193
    %v294 = vmul.f32 %v60, %v197
    %v295 = vmul.f32 %v61, %v201
    %v296 = vmul.f32 %v62, %v205
    %v297 = vmul.f32 %v63, %v206
    %v298 = vmul.f32 %v64, %v210
    %v299 = vmul.f32 %v65, %v214
    %v300 = vmul.f32 %v66, %v218
    %v301 = vmul.f32 %v67, %v222
    %v302 = vmul.f32 %v68, %v226
    %v303 = vmul.f32 %v69, %v230
    %v304 = vmul.f32 %v70, %v231
    %v305 = vmul.f32 %v71, %v235
    %v306 = vmul.f32 %v72, %v239
    %v307 = vmul.f32 %v73, %v243
    %v308 = vmul.f32 %v74, %v247
    %v309 = vmul.f32 %v75, %v251
    %v310 = vmul.f32 %v76, %v255
    %v311 = vmul.f32 %v77, %v256
    %v312 = vmul.f32 %v78, %v163
    %v313 = vmul.f32 %v79, %v166
    %v314 = vmul.f32 %v80, %v169
    %v315 = vmul.f32 %v81, %v172
    %v316 = vmul.f32 %v82, %v175
    %v317 = vmul.f32 %v83, %v178
    %v318 = vmul.f32 %v84, %v138
    %v319 = vmul.f32 %v85, %v185
    %v320 = vmul.f32 %v86, %v189
    %v321 = vmul.f32 %v87, %v193
    %v322 = vmul.f32 %v88, %v197
    %v323 = vmul.f32 %v89, %v201
    %v324 = vmul.f32 %v90, %v205
    %v325 = vmul.f32 %v91, %v206
    %v326 = vmul.f32 %v92, %v210
    %v327 = vmul.f32 %v93, %v214
    %v328 = vmul.f32 %v94, %v218
    %v329 = vmul.f32 %v95, %v222
    %v330 = vmul.f32 %v96, %v226
    %v331 = vmul.f32 %v97, %v230
    %v332 = vmul.f32 %v98, %v231
    %v333 = vmul.f32 %v99, %v235
    %v334 = vmul.f32 %v100, %v239
    %v335 = vmul.f32 %v101, %v243
    %v336 = vmul.f32 %v102, %v247
    %v337 = vmul.f32 %v103, %v251
    %v338 = vmul.f32 %v104, %v255
    %v339 = vmul.f32 %v105, %v256
    %v340 = vld [vmem:[%s3] sm:$0xff]
    %v341 = vld [vmem:[%s3 + $0x8] sm:$0xff]
    %v342 = vld [vmem:[%s3 + $0x10] sm:$0xff]
    %v343 = vld [vmem:[%s3 + $0x18] sm:$0x1]
    %v348 = vperm.slane %v340, 0
    %v349 = vperm.slane %v340, 1
    %v350 = vperm.slane %v340, 2
    %v351 = vperm.slane %v340, 3
    %v352 = vperm.slane %v340, 4
    %v353 = vperm.slane %v340, 5
    %v354 = vperm.slane %v340, 6
    %v355 = vperm.slane %v340, 7
    %v356 = vperm.slane %v341, 0
    %v357 = vperm.slane %v341, 1
    %v358 = vperm.slane %v341, 2
    %v359 = vperm.slane %v341, 3
    %v360 = vperm.slane %v341, 4
    %v361 = vperm.slane %v341, 5
    %v362 = vperm.slane %v341, 6
    %v363 = vperm.slane %v341, 7
    %v364 = vperm.slane %v342, 0
    %v365 = vperm.slane %v342, 1
    %v366 = vperm.slane %v342, 2
    %v367 = vperm.slane %v342, 3
    %v368 = vperm.slane %v342, 4
    %v369 = vperm.slane %v342, 5
    %v370 = vperm.slane %v342, 6
    %v371 = vperm.slane %v342, 7
    %v372 = vperm.slane %v343, 0
    %v374 = vrot.slane %v349, 6
    %v375 = vrot.slane %v350, 4
    %v376 = vrot.slane %v351, 2
    %v377 = vrot.slane %v353, 6
    %v378 = vrot.slane %v354, 4
    %v379 = vrot.slane %v355, 2
    %v380 = vrot.slane %v357, 6
    %v381 = vrot.slane %v358, 4
    %v382 = vrot.slane %v359, 2
    %v383 = vrot.slane %v361, 6
    %v384 = vrot.slane %v362, 4
    %v385 = vrot.slane %v363, 2
    %v386 = vrot.slane %v365, 6
    %v387 = vrot.slane %v366, 4
    %v388 = vrot.slane %v367, 2
    %v389 = vrot.slane %v369, 6
    %v390 = vrot.slane %v370, 4
    %v391 = vrot.slane %v371, 2
    %v392 = vsel %vm158, %v348, %v374
    %v393 = vsel %vm160, %v375, %v376
    %v394 = vsel %vm162, %v392, %v393
    %v395 = vsel %vm158, %v352, %v377
    %v396 = vsel %vm160, %v378, %v379
    %v397 = vsel %vm162, %v395, %v396
    %v398 = vsel %vm158, %v356, %v380
    %v399 = vsel %vm160, %v381, %v382
    %v400 = vsel %vm162, %v398, %v399
    %v401 = vsel %vm158, %v360, %v383
    %v402 = vsel %vm160, %v384, %v385
    %v403 = vsel %vm162, %v401, %v402
    %v404 = vsel %vm158, %v364, %v386
    %v405 = vsel %vm160, %v387, %v388
    %v406 = vsel %vm162, %v404, %v405
    %v407 = vsel %vm158, %v368, %v389
    %v408 = vsel %vm160, %v390, %v391
    %v409 = vsel %vm162, %v407, %v408
    %v410 = vsel %vm179, %v348, %v374
    %v411 = vsel %vm181, %v376, %v375
    %v412 = vsel %vm183, %v410, %v411
    %v413 = vrot.slane %v412, 2
    %v414 = vsel %vm179, %v352, %v377
    %v415 = vsel %vm181, %v379, %v378
    %v416 = vsel %vm183, %v414, %v415
    %v417 = vrot.slane %v416, 2
    %v418 = vsel %vm179, %v356, %v380
    %v419 = vsel %vm181, %v382, %v381
    %v420 = vsel %vm183, %v418, %v419
    %v421 = vrot.slane %v420, 2
    %v422 = vsel %vm179, %v360, %v383
    %v423 = vsel %vm181, %v385, %v384
    %v424 = vsel %vm183, %v422, %v423
    %v425 = vrot.slane %v424, 2
    %v426 = vsel %vm179, %v364, %v386
    %v427 = vsel %vm181, %v388, %v387
    %v428 = vsel %vm183, %v426, %v427
    %v429 = vrot.slane %v428, 2
    %v430 = vsel %vm179, %v368, %v389
    %v431 = vsel %vm181, %v391, %v390
    %v432 = vsel %vm183, %v430, %v431
    %v433 = vrot.slane %v432, 2
    %v434 = vrot.slane %v372, 2
    %v435 = vsel %vm160, %v348, %v374
    %v436 = vsel %vm158, %v375, %v376
    %v437 = vsel %vm162, %v436, %v435
    %v438 = vrot.slane %v437, 4
    %v439 = vsel %vm160, %v352, %v377
    %v440 = vsel %vm158, %v378, %v379
    %v441 = vsel %vm162, %v440, %v439
    %v442 = vrot.slane %v441, 4
    %v443 = vsel %vm160, %v356, %v380
    %v444 = vsel %vm158, %v381, %v382
    %v445 = vsel %vm162, %v444, %v443
    %v446 = vrot.slane %v445, 4
    %v447 = vsel %vm160, %v360, %v383
    %v448 = vsel %vm158, %v384, %v385
    %v449 = vsel %vm162, %v448, %v447
    %v450 = vrot.slane %v449, 4
    %v451 = vsel %vm160, %v364, %v386
    %v452 = vsel %vm158, %v387, %v388
    %v453 = vsel %vm162, %v452, %v451
    %v454 = vrot.slane %v453, 4
    %v455 = vsel %vm160, %v368, %v389
    %v456 = vsel %vm158, %v390, %v391
    %v457 = vsel %vm162, %v456, %v455
    %v458 = vrot.slane %v457, 4
    %v459 = vrot.slane %v372, 4
    %v460 = vsel %vm181, %v374, %v348
    %v461 = vsel %vm179, %v375, %v376
    %v462 = vsel %vm183, %v461, %v460
    %v463 = vrot.slane %v462, 6
    %v464 = vsel %vm181, %v377, %v352
    %v465 = vsel %vm179, %v378, %v379
    %v466 = vsel %vm183, %v465, %v464
    %v467 = vrot.slane %v466, 6
    %v468 = vsel %vm181, %v380, %v356
    %v469 = vsel %vm179, %v381, %v382
    %v470 = vsel %vm183, %v469, %v468
    %v471 = vrot.slane %v470, 6
    %v472 = vsel %vm181, %v383, %v360
    %v473 = vsel %vm179, %v384, %v385
    %v474 = vsel %vm183, %v473, %v472
    %v475 = vrot.slane %v474, 6
    %v476 = vsel %vm181, %v386, %v364
    %v477 = vsel %vm179, %v387, %v388
    %v478 = vsel %vm183, %v477, %v476
    %v479 = vrot.slane %v478, 6
    %v480 = vsel %vm181, %v389, %v368
    %v481 = vsel %vm179, %v390, %v391
    %v482 = vsel %vm183, %v481, %v480
    %v483 = vrot.slane %v482, 6
    %v484 = vrot.slane %v372, 6
    %v512 = vadd.f32 %v284, %v394
    %v513 = vadd.f32 %v285, %v397
    %v514 = vadd.f32 %v286, %v400
    %v515 = vadd.f32 %v287, %v403
    %v516 = vadd.f32 %v288, %v406
    %v517 = vadd.f32 %v289, %v409
    %v518 = vadd.f32 %v290, %v372
    %v519 = vadd.f32 %v291, %v413
    %v520 = vadd.f32 %v292, %v417
    %v521 = vadd.f32 %v293, %v421
    %v522 = vadd.f32 %v294, %v425
    %v523 = vadd.f32 %v295, %v429
    %v524 = vadd.f32 %v296, %v433
    %v525 = vadd.f32 %v297, %v434
    %v526 = vadd.f32 %v298, %v438
    %v527 = vadd.f32 %v299, %v442
    %v528 = vadd.f32 %v300, %v446
    %v529 = vadd.f32 %v301, %v450
    %v530 = vadd.f32 %v302, %v454
    %v531 = vadd.f32 %v303, %v458
    %v532 = vadd.f32 %v304, %v459
    %v533 = vadd.f32 %v305, %v463
    %v534 = vadd.f32 %v306, %v467
    %v535 = vadd.f32 %v307, %v471
    %v536 = vadd.f32 %v308, %v475
    %v537 = vadd.f32 %v309, %v479
    %v538 = vadd.f32 %v310, %v483
    %v539 = vadd.f32 %v311, %v484
    %v540 = vadd.f32 %v312, %v394
    %v541 = vadd.f32 %v313, %v397
    %v542 = vadd.f32 %v314, %v400
    %v543 = vadd.f32 %v315, %v403
    %v544 = vadd.f32 %v316, %v406
    %v545 = vadd.f32 %v317, %v409
    %v546 = vadd.f32 %v318, %v372
    %v547 = vadd.f32 %v319, %v413
    %v548 = vadd.f32 %v320, %v417
    %v549 = vadd.f32 %v321, %v421
    %v550 = vadd.f32 %v322, %v425
    %v551 = vadd.f32 %v323, %v429
    %v552 = vadd.f32 %v324, %v433
    %v553 = vadd.f32 %v325, %v434
    %v554 = vadd.f32 %v326, %v438
    %v555 = vadd.f32 %v327, %v442
    %v556 = vadd.f32 %v328, %v446
    %v557 = vadd.f32 %v329, %v450
    %v558 = vadd.f32 %v330, %v454
    %v559 = vadd.f32 %v331, %v458
    %v560 = vadd.f32 %v332, %v459
    %v561 = vadd.f32 %v333, %v463
    %v562 = vadd.f32 %v334, %v467
    %v563 = vadd.f32 %v335, %v471
    %v564 = vadd.f32 %v336, %v475
    %v565 = vadd.f32 %v337, %v479
    %v566 = vadd.f32 %v338, %v483
    %v567 = vadd.f32 %v339, %v484
    %v568 = vmul.f32 %v512, 0.2
    %v569 = vmul.f32 %v513, 0.2
    %v570 = vmul.f32 %v514, 0.2
    %v571 = vmul.f32 %v515, 0.2
    %v572 = vmul.f32 %v516, 0.2
    %v573 = vmul.f32 %v517, 0.2
    %v574 = vmul.f32 %v518, 0.2
    %v575 = vmul.f32 %v519, 0.2
    %v576 = vmul.f32 %v520, 0.2
    %v577 = vmul.f32 %v521, 0.2
    %v578 = vmul.f32 %v522, 0.2
    %v579 = vmul.f32 %v523, 0.2
    %v580 = vmul.f32 %v524, 0.2
    %v581 = vmul.f32 %v525, 0.2
    %v582 = vmul.f32 %v526, 0.2
    %v583 = vmul.f32 %v527, 0.2
    %v584 = vmul.f32 %v528, 0.2
    %v585 = vmul.f32 %v529, 0.2
    %v586 = vmul.f32 %v530, 0.2
    %v587 = vmul.f32 %v531, 0.2
    %v588 = vmul.f32 %v532, 0.2
    %v589 = vmul.f32 %v533, 0.2
    %v590 = vmul.f32 %v534, 0.2
    %v591 = vmul.f32 %v535, 0.2
    %v592 = vmul.f32 %v536, 0.2
    %v593 = vmul.f32 %v537, 0.2
    %v594 = vmul.f32 %v538, 0.2
    %v595 = vmul.f32 %v539, 0.2
    %v596 = vmul.f32 %v540, 0.2
    %v597 = vmul.f32 %v541, 0.2
    %v598 = vmul.f32 %v542, 0.2
    %v599 = vmul.f32 %v543, 0.2
    %v600 = vmul.f32 %v544, 0.2
    %v601 = vmul.f32 %v545, 0.2
    %v602 = vmul.f32 %v546, 0.2
    %v603 = vmul.f32 %v547, 0.2
    %v604 = vmul.f32 %v548, 0.2
    %v605 = vmul.f32 %v549, 0.2
    %v606 = vmul.f32 %v550, 0.2
    %v607 = vmul.f32 %v551, 0.2
    %v608 = vmul.f32 %v552, 0.2
    %v609 = vmul.f32 %v553, 0.2
    %v610 = vmul.f32 %v554, 0.2
    %v611 = vmul.f32 %v555, 0.2
    %v612 = vmul.f32 %v556, 0.2
    %v613 = vmul.f32 %v557, 0.2
    %v614 = vmul.f32 %v558, 0.2
    %v615 = vmul.f32 %v559, 0.2
    %v616 = vmul.f32 %v560, 0.2
    %v617 = vmul.f32 %v561, 0.2
    %v618 = vmul.f32 %v562, 0.2
    %v619 = vmul.f32 %v563, 0.2
    %v620 = vmul.f32 %v564, 0.2
    %v621 = vmul.f32 %v565, 0.2
    %v622 = vmul.f32 %v566, 0.2
    %v623 = vmul.f32 %v567, 0.2
    %v624 = vmax.f32 %v512, %v568
    %v625 = vmax.f32 %v513, %v569
    %v626 = vmax.f32 %v514, %v570
    %v627 = vmax.f32 %v515, %v571
    %v628 = vmax.f32 %v516, %v572
    %v629 = vmax.f32 %v517, %v573
    %v630 = vmax.f32 %v518, %v574
    %v631 = vmax.f32 %v519, %v575
    %v632 = vmax.f32 %v520, %v576
    %v633 = vmax.f32 %v521, %v577
    %v634 = vmax.f32 %v522, %v578
    %v635 = vmax.f32 %v523, %v579
    %v636 = vmax.f32 %v524, %v580
    %v637 = vmax.f32 %v525, %v581
    %v638 = vmax.f32 %v526, %v582
    %v639 = vmax.f32 %v527, %v583
    %v640 = vmax.f32 %v528, %v584
    %v641 = vmax.f32 %v529, %v585
    %v642 = vmax.f32 %v530, %v586
    %v643 = vmax.f32 %v531, %v587
    %v644 = vmax.f32 %v532, %v588
    %v645 = vmax.f32 %v533, %v589
    %v646 = vmax.f32 %v534, %v590
    %v647 = vmax.f32 %v535, %v591
    %v648 = vmax.f32 %v536, %v592
    %v649 = vmax.f32 %v537, %v593
    %v650 = vmax.f32 %v538, %v594
    %v651 = vmax.f32 %v539, %v595
    %v652 = vmax.f32 %v540, %v596
    %v653 = vmax.f32 %v541, %v597
    %v654 = vmax.f32 %v542, %v598
    %v655 = vmax.f32 %v543, %v599
    %v656 = vmax.f32 %v544, %v600
    %v657 = vmax.f32 %v545, %v601
    %v658 = vmax.f32 %v546, %v602
    %v659 = vmax.f32 %v547, %v603
    %v660 = vmax.f32 %v548, %v604
    %v661 = vmax.f32 %v549, %v605
    %v662 = vmax.f32 %v550, %v606
    %v663 = vmax.f32 %v551, %v607
    %v664 = vmax.f32 %v552, %v608
    %v665 = vmax.f32 %v553, %v609
    %v666 = vmax.f32 %v554, %v610
    %v667 = vmax.f32 %v555, %v611
    %v668 = vmax.f32 %v556, %v612
    %v669 = vmax.f32 %v557, %v613
    %v670 = vmax.f32 %v558, %v614
    %v671 = vmax.f32 %v559, %v615
    %v672 = vmax.f32 %v560, %v616
    %v673 = vmax.f32 %v561, %v617
    %v674 = vmax.f32 %v562, %v618
    %v675 = vmax.f32 %v563, %v619
    %v676 = vmax.f32 %v564, %v620
    %v677 = vmax.f32 %v565, %v621
    %v678 = vmax.f32 %v566, %v622
    %v679 = vmax.f32 %v567, %v623
    %736 = vst [vmem:[#allocation1] ss:$4 sm:$0xff] %v624
    %s737 = scalar_lea.vmem [#allocation1], 1
    %738 = vst [vmem:[%s737] ss:$4 sm:$0xff] %v631
    %s739 = scalar_lea.vmem [#allocation1], 2
    %740 = vst [vmem:[%s739] ss:$4 sm:$0xff] %v638
    %s741 = scalar_lea.vmem [#allocation1], 3
    %742 = vst [vmem:[%s741] ss:$4 sm:$0xff] %v645
    %s743 = scalar_lea.vmem [#allocation1], 32
    %744 = vst [vmem:[%s743] ss:$4 sm:$0xff] %v625
    %s745 = scalar_lea.vmem [#allocation1], 33
    %746 = vst [vmem:[%s745] ss:$4 sm:$0xff] %v632
    %s747 = scalar_lea.vmem [#allocation1], 34
    %748 = vst [vmem:[%s747] ss:$4 sm:$0xff] %v639
    %s749 = scalar_lea.vmem [#allocation1], 35
    %750 = vst [vmem:[%s749] ss:$4 sm:$0xff] %v646
    %v751 = vld.sshfl [vmem:[#allocation1] sm:$0xff pattern:$0x73625140]
    %v752 = vld.sshfl [vmem:[#allocation1 + $0x8] sm:$0xff pattern:$0x73625140]
    %v753 = vld.sshfl [vmem:[#allocation1 + $0x10] sm:$0xff pattern:$0x73625140]
    %v754 = vld.sshfl [vmem:[#allocation1 + $0x18] sm:$0xff pattern:$0x73625140]
    %v755 = vld.sshfl [vmem:[#allocation1 + $0x20] sm:$0xff pattern:$0x73625140]
    %v756 = vld.sshfl [vmem:[#allocation1 + $0x28] sm:$0xff pattern:$0x73625140]
    %v757 = vld.sshfl [vmem:[#allocation1 + $0x30] sm:$0xff pattern:$0x73625140]
    %v758 = vld.sshfl [vmem:[#allocation1 + $0x38] sm:$0xff pattern:$0x73625140]
    %759 = vst [vmem:[#allocation1] ss:$4 sm:$0xff] %v626
    %760 = vst [vmem:[%s737] ss:$4 sm:$0xff] %v633
    %761 = vst [vmem:[%s739] ss:$4 sm:$0xff] %v640
    %762 = vst [vmem:[%s741] ss:$4 sm:$0xff] %v647
    %763 = vst [vmem:[%s743] ss:$4 sm:$0xff] %v627
    %764 = vst [vmem:[%s745] ss:$4 sm:$0xff] %v634
    %765 = vst [vmem:[%s747] ss:$4 sm:$0xff] %v641
    %766 = vst [vmem:[%s749] ss:$4 sm:$0xff] %v648
    %v767 = vld.sshfl [vmem:[#allocation1] sm:$0xff pattern:$0x73625140]
    %v768 = vld.sshfl [vmem:[#allocation1 + $0x8] sm:$0xff pattern:$0x73625140]
    %v769 = vld.sshfl [vmem:[#allocation1 + $0x10] sm:$0xff pattern:$0x73625140]
    %v770 = vld.sshfl [vmem:[#allocation1 + $0x18] sm:$0xff pattern:$0x73625140]
    %v771 = vld.sshfl [vmem:[#allocation1 + $0x20] sm:$0xff pattern:$0x73625140]
    %v772 = vld.sshfl [vmem:[#allocation1 + $0x28] sm:$0xff pattern:$0x73625140]
    %v773 = vld.sshfl [vmem:[#allocation1 + $0x30] sm:$0xff pattern:$0x73625140]
    %v774 = vld.sshfl [vmem:[#allocation1 + $0x38] sm:$0xff pattern:$0x73625140]
    %775 = vst [vmem:[#allocation1] ss:$4 sm:$0xff] %v628
    %776 = vst [vmem:[%s737] ss:$4 sm:$0xff] %v635
    %777 = vst [vmem:[%s739] ss:$4 sm:$0xff] %v642
    %778 = vst [vmem:[%s741] ss:$4 sm:$0xff] %v649
    %779 = vst [vmem:[%s743] ss:$4 sm:$0xff] %v629
    %780 = vst [vmem:[%s745] ss:$4 sm:$0xff] %v636
    %781 = vst [vmem:[%s747] ss:$4 sm:$0xff] %v643
    %782 = vst [vmem:[%s749] ss:$4 sm:$0xff] %v650
    %v783 = vld.sshfl [vmem:[#allocation1] sm:$0xff pattern:$0x73625140]
    %v784 = vld.sshfl [vmem:[#allocation1 + $0x8] sm:$0xff pattern:$0x73625140]
    %v785 = vld.sshfl [vmem:[#allocation1 + $0x10] sm:$0xff pattern:$0x73625140]
    %v786 = vld.sshfl [vmem:[#allocation1 + $0x18] sm:$0xff pattern:$0x73625140]
    %v787 = vld.sshfl [vmem:[#allocation1 + $0x20] sm:$0xff pattern:$0x73625140]
    %v788 = vld.sshfl [vmem:[#allocation1 + $0x28] sm:$0xff pattern:$0x73625140]
    %v789 = vld.sshfl [vmem:[#allocation1 + $0x30] sm:$0xff pattern:$0x73625140]
    %v790 = vld.sshfl [vmem:[#allocation1 + $0x38] sm:$0xff pattern:$0x73625140]
    %791 = vst [vmem:[#allocation1] ss:$4 sm:$0xff] %v630
    %792 = vst [vmem:[%s737] ss:$4 sm:$0xff] %v637
    %793 = vst [vmem:[%s739] ss:$4 sm:$0xff] %v644
    %794 = vst [vmem:[%s741] ss:$4 sm:$0xff] %v651
    %795 = vst [vmem:[%s743] ss:$4 sm:$0xff] %v652
    %796 = vst [vmem:[%s745] ss:$4 sm:$0xff] %v659
    %797 = vst [vmem:[%s747] ss:$4 sm:$0xff] %v666
    %798 = vst [vmem:[%s749] ss:$4 sm:$0xff] %v673
    %v799 = vld.sshfl [vmem:[#allocation1] sm:$0xff pattern:$0x73625140]
    %v800 = vld.sshfl [vmem:[#allocation1 + $0x20] sm:$0xff pattern:$0x73625140]
    %v801 = vld.sshfl [vmem:[#allocation1 + $0x28] sm:$0xff pattern:$0x73625140]
    %v802 = vld.sshfl [vmem:[#allocation1 + $0x30] sm:$0xff pattern:$0x73625140]
    %v803 = vld.sshfl [vmem:[#allocation1 + $0x38] sm:$0xff pattern:$0x73625140]
    %804 = vst [vmem:[#allocation1] ss:$4 sm:$0xff] %v653
    %805 = vst [vmem:[%s737] ss:$4 sm:$0xff] %v660
    %806 = vst [vmem:[%s739] ss:$4 sm:$0xff] %v667
    %807 = vst [vmem:[%s741] ss:$4 sm:$0xff] %v674
    %808 = vst [vmem:[%s743] ss:$4 sm:$0xff] %v654
    %809 = vst [vmem:[%s745] ss:$4 sm:$0xff] %v661
    %810 = vst [vmem:[%s747] ss:$4 sm:$0xff] %v668
    %811 = vst [vmem:[%s749] ss:$4 sm:$0xff] %v675
    %v812 = vld.sshfl [vmem:[#allocation1] sm:$0xff pattern:$0x73625140]
    %v813 = vld.sshfl [vmem:[#allocation1 + $0x8] sm:$0xff pattern:$0x73625140]
    %v814 = vld.sshfl [vmem:[#allocation1 + $0x10] sm:$0xff pattern:$0x73625140]
    %v815 = vld.sshfl [vmem:[#allocation1 + $0x18] sm:$0xff pattern:$0x73625140]
    %v816 = vld.sshfl [vmem:[#allocation1 + $0x20] sm:$0xff pattern:$0x73625140]
    %v817 = vld.sshfl [vmem:[#allocation1 + $0x28] sm:$0xff pattern:$0x73625140]
    %v818 = vld.sshfl [vmem:[#allocation1 + $0x30] sm:$0xff pattern:$0x73625140]
    %v819 = vld.sshfl [vmem:[#allocation1 + $0x38] sm:$0xff pattern:$0x73625140]
    %820 = vst [vmem:[#allocation1] ss:$4 sm:$0xff] %v655
    %821 = vst [vmem:[%s737] ss:$4 sm:$0xff] %v662
    %822 = vst [vmem:[%s739] ss:$4 sm:$0xff] %v669
    %823 = vst [vmem:[%s741] ss:$4 sm:$0xff] %v676
    %824 = vst [vmem:[%s743] ss:$4 sm:$0xff] %v656
    %825 = vst [vmem:[%s745] ss:$4 sm:$0xff] %v663
    %826 = vst [vmem:[%s747] ss:$4 sm:$0xff] %v670
    %827 = vst [vmem:[%s749] ss:$4 sm:$0xff] %v677
    %v828 = vld.sshfl [vmem:[#allocation1] sm:$0xff pattern:$0x73625140]
    %v829 = vld.sshfl [vmem:[#allocation1 + $0x8] sm:$0xff pattern:$0x73625140]
    %v830 = vld.sshfl [vmem:[#allocation1 + $0x10] sm:$0xff pattern:$0x73625140]
    %v831 = vld.sshfl [vmem:[#allocation1 + $0x18] sm:$0xff pattern:$0x73625140]
    %v832 = vld.sshfl [vmem:[#allocation1 + $0x20] sm:$0xff pattern:$0x73625140]
    %v833 = vld.sshfl [vmem:[#allocation1 + $0x28] sm:$0xff pattern:$0x73625140]
    %v834 = vld.sshfl [vmem:[#allocation1 + $0x30] sm:$0xff pattern:$0x73625140]
    %v835 = vld.sshfl [vmem:[#allocation1 + $0x38] sm:$0xff pattern:$0x73625140]
    %836 = vst [vmem:[#allocation1] ss:$4 sm:$0xff] %v657
    %837 = vst [vmem:[%s737] ss:$4 sm:$0xff] %v664
    %838 = vst [vmem:[%s739] ss:$4 sm:$0xff] %v671
    %839 = vst [vmem:[%s741] ss:$4 sm:$0xff] %v678
    %840 = vst [vmem:[%s743] ss:$4 sm:$0xff] %v658
    %841 = vst [vmem:[%s745] ss:$4 sm:$0xff] %v665
    %842 = vst [vmem:[%s747] ss:$4 sm:$0xff] %v672
    %843 = vst [vmem:[%s749] ss:$4 sm:$0xff] %v679
    %v844 = vld.sshfl [vmem:[#allocation1] sm:$0xff pattern:$0x73625140]
    %v845 = vld.sshfl [vmem:[#allocation1 + $0x8] sm:$0xff pattern:$0x73625140]
    %v846 = vld.sshfl [vmem:[#allocation1 + $0x10] sm:$0xff pattern:$0x73625140]
    %v847 = vld.sshfl [vmem:[#allocation1 + $0x18] sm:$0xff pattern:$0x73625140]
    %v848 = vld.sshfl [vmem:[#allocation1 + $0x20] sm:$0xff pattern:$0x73625140]
    %v899 = vpack.c.bf16 %v800, %v751
    %v900 = vpack.c.bf16 %v801, %v752
    %v901 = vpack.c.bf16 %v802, %v753
    %v902 = vpack.c.bf16 %v803, %v754
    %v903 = vpack.c.bf16 %v812, %v755
    %v904 = vpack.c.bf16 %v813, %v756
    %v905 = vpack.c.bf16 %v814, %v757
    %v906 = vpack.c.bf16 %v815, %v758
    %v907 = vpack.c.bf16 %v816, %v767
    %v908 = vpack.c.bf16 %v817, %v768
    %v909 = vpack.c.bf16 %v818, %v769
    %v910 = vpack.c.bf16 %v819, %v770
    %v911 = vpack.c.bf16 %v828, %v771
    %v912 = vpack.c.bf16 %v829, %v772
    %v913 = vpack.c.bf16 %v830, %v773
    %v914 = vpack.c.bf16 %v831, %v774
    %v915 = vpack.c.bf16 %v832, %v783
    %v916 = vpack.c.bf16 %v833, %v784
    %v917 = vpack.c.bf16 %v834, %v785
    %v918 = vpack.c.bf16 %v835, %v786
    %v919 = vpack.c.bf16 %v844, %v787
    %v920 = vpack.c.bf16 %v845, %v788
    %v921 = vpack.c.bf16 %v846, %v789
    %v922 = vpack.c.bf16 %v847, %v790
    %v923 = vpack.c.bf16 %v848, %v799
    %v924 = vld [vmem:[%s1] sm:$0xf]
    %v925 = vld [vmem:[%s1 + $0x4] sm:$0xf]
    %v926 = vld [vmem:[%s1 + $0x8] sm:$0xf]
    %v927 = vld [vmem:[%s1 + $0xc] sm:$0xf]
    %v928 = vld [vmem:[%s1 + $0x10] sm:$0xf]
    %v929 = vld [vmem:[%s1 + $0x14] sm:$0xf]
    %v930 = vld [vmem:[%s1 + $0x18] sm:$0xf]
    %v931 = vld [vmem:[%s1 + $0x1c] sm:$0xf]
    %v932 = vld [vmem:[%s1 + $0x20] sm:$0xf]
    %v933 = vld [vmem:[%s1 + $0x24] sm:$0xf]
    %v934 = vld [vmem:[%s1 + $0x28] sm:$0xf]
    %v935 = vld [vmem:[%s1 + $0x2c] sm:$0xf]
    %v936 = vld [vmem:[%s1 + $0x30] sm:$0xf]
    %v937 = vld [vmem:[%s1 + $0x34] sm:$0xf]
    %v938 = vld [vmem:[%s1 + $0x38] sm:$0xf]
    %v939 = vld [vmem:[%s1 + $0x3c] sm:$0xf]
    %v940 = vld [vmem:[%s1 + $0x40] sm:$0xf]
    %v941 = vld [vmem:[%s1 + $0x44] sm:$0xf]
    %v942 = vld [vmem:[%s1 + $0x48] sm:$0xf]
    %v943 = vld [vmem:[%s1 + $0x4c] sm:$0xf]
    %v944 = vld [vmem:[%s1 + $0x50] sm:$0xf]
    %v945 = vld [vmem:[%s1 + $0x54] sm:$0xf]
    %v946 = vld [vmem:[%s1 + $0x58] sm:$0xf]
    %v947 = vld [vmem:[%s1 + $0x5c] sm:$0xf]
    %v948 = vld [vmem:[%s1 + $0x60] sm:$0xf]
    %v949 = vld [vmem:[%s1 + $0x64] sm:$0xf]
    %v950 = vld [vmem:[%s1 + $0x68] sm:$0xf]
    %v951 = vld [vmem:[%s1 + $0x6c] sm:$0xf]
    %v952 = vld [vmem:[%s1 + $0x70] sm:$0xf]
    %v953 = vld [vmem:[%s1 + $0x74] sm:$0xf]
    %v954 = vld [vmem:[%s1 + $0x78] sm:$0xf]
    %v955 = vld [vmem:[%s1 + $0x7c] sm:$0xf]
    %v956 = vld [vmem:[%s1 + $0x80] sm:$0xf]
    %v957 = vld [vmem:[%s1 + $0x84] sm:$0xf]
    %v958 = vld [vmem:[%s1 + $0x88] sm:$0xf]
    %v959 = vld [vmem:[%s1 + $0x8c] sm:$0xf]
    %v960 = vld [vmem:[%s1 + $0x90] sm:$0xf]
    %v961 = vld [vmem:[%s1 + $0x94] sm:$0xf]
    %v962 = vld [vmem:[%s1 + $0x98] sm:$0xf]
    %v963 = vld [vmem:[%s1 + $0x9c] sm:$0xf]
    %v964 = vld [vmem:[%s1 + $0xa0] sm:$0xf]
    %v965 = vld [vmem:[%s1 + $0xa4] sm:$0xf]
    %v966 = vld [vmem:[%s1 + $0xa8] sm:$0xf]
    %v967 = vld [vmem:[%s1 + $0xac] sm:$0xf]
    %v968 = vld [vmem:[%s1 + $0xb0] sm:$0xf]
    %v969 = vld [vmem:[%s1 + $0xb4] sm:$0xf]
    %v970 = vld [vmem:[%s1 + $0xb8] sm:$0xf]
    %v971 = vld [vmem:[%s1 + $0xbc] sm:$0xf]
    %v972 = vld [vmem:[%s1 + $0xc0] sm:$0xf]
    %v973 = vld [vmem:[%s1 + $0xc4] sm:$0xf]
    %v974 = vld [vmem:[%s1 + $0xc8] sm:$0xf]
    %v975 = vld [vmem:[%s1 + $0xcc] sm:$0xf]
    %v976 = vld [vmem:[%s1 + $0xd0] sm:$0xf]
    %v977 = vld [vmem:[%s1 + $0xd4] sm:$0xf]
    %v978 = vld [vmem:[%s1 + $0xd8] sm:$0xf]
    %v979 = vld [vmem:[%s1 + $0xdc] sm:$0xf]
    %v980 = vld [vmem:[%s1 + $0xe0] sm:$0xf]
    %v981 = vld [vmem:[%s1 + $0xe4] sm:$0xf]
    %v982 = vld [vmem:[%s1 + $0xe8] sm:$0xf]
    %v983 = vld [vmem:[%s1 + $0xec] sm:$0xf]
    %v984 = vld [vmem:[%s1 + $0xf0] sm:$0xf]
    %v985 = vld [vmem:[%s1 + $0xf4] sm:$0xf]
    %v986 = vld [vmem:[%s1 + $0xf8] sm:$0xf]
    %v987 = vld [vmem:[%s1 + $0xfc] sm:$0xf]
    %v988 = vld [vmem:[%s1 + $0x100] sm:$0xf]
    %v989 = vld [vmem:[%s1 + $0x104] sm:$0xf]
    %v990 = vld [vmem:[%s1 + $0x108] sm:$0xf]
    %v991 = vld [vmem:[%s1 + $0x10c] sm:$0xf]
    %v992 = vld [vmem:[%s1 + $0x110] sm:$0xf]
    %v993 = vld [vmem:[%s1 + $0x114] sm:$0xf]
    %v994 = vld [vmem:[%s1 + $0x118] sm:$0xf]
    %v995 = vld [vmem:[%s1 + $0x11c] sm:$0xf]
    %v996 = vld [vmem:[%s1 + $0x120] sm:$0xf]
    %v997 = vld [vmem:[%s1 + $0x124] sm:$0xf]
    %v998 = vld [vmem:[%s1 + $0x128] sm:$0xf]
    %v999 = vld [vmem:[%s1 + $0x12c] sm:$0xf]
    %v1000 = vld [vmem:[%s1 + $0x130] sm:$0xf]
    %v1001 = vld [vmem:[%s1 + $0x134] sm:$0xf]
    %v1002 = vld [vmem:[%s1 + $0x138] sm:$0xf]
    %v1003 = vld [vmem:[%s1 + $0x13c] sm:$0xf]
    %v1004 = vld [vmem:[%s1 + $0x140] sm:$0xf]
    %v1005 = vld [vmem:[%s1 + $0x144] sm:$0xf]
    %v1006 = vld [vmem:[%s1 + $0x148] sm:$0xf]
    %v1007 = vld [vmem:[%s1 + $0x14c] sm:$0xf]
    %v1008 = vld [vmem:[%s1 + $0x150] sm:$0xf]
    %v1009 = vld [vmem:[%s1 + $0x154] sm:$0xf]
    %v1010 = vld [vmem:[%s1 + $0x158] sm:$0xf]
    %v1011 = vld [vmem:[%s1 + $0x15c] sm:$0xf]
    %v1012 = vld [vmem:[%s1 + $0x160] sm:$0xf]
    %v1013 = vld [vmem:[%s1 + $0x164] sm:$0xf]
    %v1014 = vld [vmem:[%s1 + $0x168] sm:$0xf]
    %v1015 = vld [vmem:[%s1 + $0x16c] sm:$0xf]
    %v1016 = vld [vmem:[%s1 + $0x170] sm:$0xf]
    %v1017 = vld [vmem:[%s1 + $0x174] sm:$0xf]
    %v1018 = vld [vmem:[%s1 + $0x178] sm:$0xf]
    %v1019 = vld [vmem:[%s1 + $0x17c] sm:$0xf]
    %v1020 = vld [vmem:[%s1 + $0x180] sm:$0xf]
    %v1021 = vld [vmem:[%s1 + $0x184] sm:$0xf]
    %v1022 = vld [vmem:[%s1 + $0x188] sm:$0xf]
    %v1023 = vld [vmem:[%s1 + $0x18c] sm:$0xf]
    %v1024 = vld [vmem:[%s1 + $0x190] sm:$0xf]
    %v1025 = vld [vmem:[%s1 + $0x194] sm:$0xf]
    %v1026 = vld [vmem:[%s1 + $0x198] sm:$0xf]
    %v1027 = vld [vmem:[%s1 + $0x19c] sm:$0xf]
    %v1028 = vld [vmem:[%s1 + $0x1a0] sm:$0xf]
    %v1029 = vld [vmem:[%s1 + $0x1a4] sm:$0xf]
    %v1030 = vld [vmem:[%s1 + $0x1a8] sm:$0xf]
    %v1031 = vld [vmem:[%s1 + $0x1ac] sm:$0xf]
    %v1032 = vld [vmem:[%s1 + $0x1b0] sm:$0xf]
    %v1033 = vld [vmem:[%s1 + $0x1b4] sm:$0xf]
    %v1034 = vld [vmem:[%s1 + $0x1b8] sm:$0xf]
    %v1035 = vld [vmem:[%s1 + $0x1bc] sm:$0xf]
    %v1036 = vld [vmem:[%s1 + $0x1c0] sm:$0xf]
    %v1037 = vld [vmem:[%s1 + $0x1c4] sm:$0xf]
    %v1038 = vld [vmem:[%s1 + $0x1c8] sm:$0xf]
    %v1039 = vld [vmem:[%s1 + $0x1cc] sm:$0xf]
    %v1040 = vld [vmem:[%s1 + $0x1d0] sm:$0xf]
    %v1041 = vld [vmem:[%s1 + $0x1d4] sm:$0xf]
    %v1042 = vld [vmem:[%s1 + $0x1d8] sm:$0xf]
    %v1043 = vld [vmem:[%s1 + $0x1dc] sm:$0xf]
    %v1044 = vld [vmem:[%s1 + $0x1e0] sm:$0xf]
    %v1045 = vld [vmem:[%s1 + $0x1e4] sm:$0xf]
    %v1046 = vld [vmem:[%s1 + $0x1e8] sm:$0xf]
    %v1047 = vld [vmem:[%s1 + $0x1ec] sm:$0xf]
    %v1048 = vld [vmem:[%s1 + $0x1f0] sm:$0xf]
    %v1049 = vld [vmem:[%s1 + $0x1f4] sm:$0xf]
    %v1050 = vld [vmem:[%s1 + $0x1f8] sm:$0xf]
    %v1051 = vld [vmem:[%s1 + $0x1fc] sm:$0xf]
    %v1052 = vld [vmem:[%s1 + $0x200] sm:$0xf]
    %v1053 = vld [vmem:[%s1 + $0x204] sm:$0xf]
    %v1054 = vld [vmem:[%s1 + $0x208] sm:$0xf]
    %v1055 = vld [vmem:[%s1 + $0x20c] sm:$0xf]
    %v1056 = vld [vmem:[%s1 + $0x210] sm:$0xf]
    %v1057 = vld [vmem:[%s1 + $0x214] sm:$0xf]
    %v1058 = vld [vmem:[%s1 + $0x218] sm:$0xf]
    %v1059 = vld [vmem:[%s1 + $0x21c] sm:$0xf]
    %v1060 = vld [vmem:[%s1 + $0x220] sm:$0xf]
    %v1061 = vld [vmem:[%s1 + $0x224] sm:$0xf]
    %v1062 = vld [vmem:[%s1 + $0x228] sm:$0xf]
    %v1063 = vld [vmem:[%s1 + $0x22c] sm:$0xf]
    %v1064 = vld [vmem:[%s1 + $0x230] sm:$0xf]
    %v1065 = vld [vmem:[%s1 + $0x234] sm:$0xf]
    %v1066 = vld [vmem:[%s1 + $0x238] sm:$0xf]
    %v1067 = vld [vmem:[%s1 + $0x23c] sm:$0xf]
    %v1068 = vld [vmem:[%s1 + $0x240] sm:$0xf]
    %v1069 = vld [vmem:[%s1 + $0x244] sm:$0xf]
    %v1070 = vld [vmem:[%s1 + $0x248] sm:$0xf]
    %v1071 = vld [vmem:[%s1 + $0x24c] sm:$0xf]
    %v1072 = vld [vmem:[%s1 + $0x250] sm:$0xf]
    %v1073 = vld [vmem:[%s1 + $0x254] sm:$0xf]
    %v1074 = vld [vmem:[%s1 + $0x258] sm:$0xf]
    %v1075 = vld [vmem:[%s1 + $0x25c] sm:$0xf]
    %v1076 = vld [vmem:[%s1 + $0x260] sm:$0xf]
    %v1077 = vld [vmem:[%s1 + $0x264] sm:$0xf]
    %v1078 = vld [vmem:[%s1 + $0x268] sm:$0xf]
    %v1079 = vld [vmem:[%s1 + $0x26c] sm:$0xf]
    %v1080 = vld [vmem:[%s1 + $0x270] sm:$0xf]
    %v1081 = vld [vmem:[%s1 + $0x274] sm:$0xf]
    %v1082 = vld [vmem:[%s1 + $0x278] sm:$0xf]
    %v1083 = vld [vmem:[%s1 + $0x27c] sm:$0xf]
    %v1084 = vld [vmem:[%s1 + $0x280] sm:$0xf]
    %v1085 = vld [vmem:[%s1 + $0x284] sm:$0xf]
    %v1086 = vld [vmem:[%s1 + $0x288] sm:$0xf]
    %v1087 = vld [vmem:[%s1 + $0x28c] sm:$0xf]
    %v1088 = vld [vmem:[%s1 + $0x290] sm:$0xf]
    %v1089 = vld [vmem:[%s1 + $0x294] sm:$0xf]
    %v1090 = vld [vmem:[%s1 + $0x298] sm:$0xf]
    %v1091 = vld [vmem:[%s1 + $0x29c] sm:$0xf]
    %v1092 = vld [vmem:[%s1 + $0x2a0] sm:$0xf]
    %v1093 = vld [vmem:[%s1 + $0x2a4] sm:$0xf]
    %v1094 = vld [vmem:[%s1 + $0x2a8] sm:$0xf]
    %v1095 = vld [vmem:[%s1 + $0x2ac] sm:$0xf]
    %v1096 = vld [vmem:[%s1 + $0x2b0] sm:$0xf]
    %v1097 = vld [vmem:[%s1 + $0x2b4] sm:$0xf]
    %v1098 = vld [vmem:[%s1 + $0x2b8] sm:$0xf]
    %v1099 = vld [vmem:[%s1 + $0x2bc] sm:$0xf]
    %v1100 = vld [vmem:[%s1 + $0x2c0] sm:$0xf]
    %v1101 = vld [vmem:[%s1 + $0x2c4] sm:$0xf]
    %v1102 = vld [vmem:[%s1 + $0x2c8] sm:$0xf]
    %v1103 = vld [vmem:[%s1 + $0x2cc] sm:$0xf]
    %v1104 = vld [vmem:[%s1 + $0x2d0] sm:$0xf]
    %v1105 = vld [vmem:[%s1 + $0x2d4] sm:$0xf]
    %v1106 = vld [vmem:[%s1 + $0x2d8] sm:$0xf]
    %v1107 = vld [vmem:[%s1 + $0x2dc] sm:$0xf]
    %v1108 = vld [vmem:[%s1 + $0x2e0] sm:$0xf]
    %v1109 = vld [vmem:[%s1 + $0x2e4] sm:$0xf]
    %v1110 = vld [vmem:[%s1 + $0x2e8] sm:$0xf]
    %v1111 = vld [vmem:[%s1 + $0x2ec] sm:$0xf]
    %v1112 = vld [vmem:[%s1 + $0x2f0] sm:$0xf]
    %v1113 = vld [vmem:[%s1 + $0x2f4] sm:$0xf]
    %v1114 = vld [vmem:[%s1 + $0x2f8] sm:$0xf]
    %v1115 = vld [vmem:[%s1 + $0x2fc] sm:$0xf]
    %v1116 = vld [vmem:[%s1 + $0x300] sm:$0xf]
    %v1117 = vld [vmem:[%s1 + $0x304] sm:$0xf]
    %v1118 = vld [vmem:[%s1 + $0x308] sm:$0xf]
    %v1119 = vld [vmem:[%s1 + $0x30c] sm:$0xf]
    %v1120 = vld [vmem:[%s1 + $0x310] sm:$0xf]
    %v1121 = vld [vmem:[%s1 + $0x314] sm:$0xf]
    %v1122 = vld [vmem:[%s1 + $0x318] sm:$0xf]
    %v1123 = vld [vmem:[%s1 + $0x31c] sm:$0xf]
    %v1124 = vld [vmem:[%s1 + $0x320] sm:$0xf]
    %v1125 = vld [vmem:[%s1 + $0x324] sm:$0xf]
    %v1126 = vld [vmem:[%s1 + $0x328] sm:$0xf]
    %v1127 = vld [vmem:[%s1 + $0x32c] sm:$0xf]
    %v1128 = vld [vmem:[%s1 + $0x330] sm:$0xf]
    %v1129 = vld [vmem:[%s1 + $0x334] sm:$0xf]
    %v1130 = vld [vmem:[%s1 + $0x338] sm:$0xf]
    %v1131 = vld [vmem:[%s1 + $0x33c] sm:$0xf]
    %v1132 = vld [vmem:[%s1 + $0x340] sm:$0xf]
    %v1133 = vld [vmem:[%s1 + $0x344] sm:$0xf]
    %v1134 = vld [vmem:[%s1 + $0x348] sm:$0xf]
    %v1135 = vld [vmem:[%s1 + $0x34c] sm:$0xf]
    %v1136 = vld [vmem:[%s1 + $0x350] sm:$0xf]
    %v1137 = vld [vmem:[%s1 + $0x354] sm:$0xf]
    %v1138 = vld [vmem:[%s1 + $0x358] sm:$0xf]
    %v1139 = vld [vmem:[%s1 + $0x35c] sm:$0xf]
    %v1140 = vld [vmem:[%s1 + $0x360] sm:$0xf]
    %v1141 = vld [vmem:[%s1 + $0x364] sm:$0xf]
    %v1142 = vld [vmem:[%s1 + $0x368] sm:$0xf]
    %v1143 = vld [vmem:[%s1 + $0x36c] sm:$0xf]
    %v1144 = vld [vmem:[%s1 + $0x370] sm:$0xf]
    %v1145 = vld [vmem:[%s1 + $0x374] sm:$0xf]
    %v1146 = vld [vmem:[%s1 + $0x378] sm:$0xf]
    %v1147 = vld [vmem:[%s1 + $0x37c] sm:$0xf]
    %v1148 = vld [vmem:[%s1 + $0x380] sm:$0xf]
    %v1149 = vld [vmem:[%s1 + $0x384] sm:$0xf]
    %v1150 = vld [vmem:[%s1 + $0x388] sm:$0xf]
    %v1151 = vld [vmem:[%s1 + $0x38c] sm:$0xf]
    %v1152 = vld [vmem:[%s1 + $0x390] sm:$0xf]
    %v1153 = vld [vmem:[%s1 + $0x394] sm:$0xf]
    %v1154 = vld [vmem:[%s1 + $0x398] sm:$0xf]
    %v1155 = vld [vmem:[%s1 + $0x39c] sm:$0xf]
    %v1156 = vld [vmem:[%s1 + $0x3a0] sm:$0xf]
    %v1157 = vld [vmem:[%s1 + $0x3a4] sm:$0xf]
    %v1158 = vld [vmem:[%s1 + $0x3a8] sm:$0xf]
    %v1159 = vld [vmem:[%s1 + $0x3ac] sm:$0xf]
    %v1160 = vld [vmem:[%s1 + $0x3b0] sm:$0xf]
    %v1161 = vld [vmem:[%s1 + $0x3b4] sm:$0xf]
    %v1162 = vld [vmem:[%s1 + $0x3b8] sm:$0xf]
    %v1163 = vld [vmem:[%s1 + $0x3bc] sm:$0xf]
    %v1164 = vld [vmem:[%s1 + $0x3c0] sm:$0xf]
    %v1165 = vld [vmem:[%s1 + $0x3c4] sm:$0xf]
    %v1166 = vld [vmem:[%s1 + $0x3c8] sm:$0xf]
    %v1167 = vld [vmem:[%s1 + $0x3cc] sm:$0xf]
    %v1168 = vld [vmem:[%s1 + $0x3d0] sm:$0xf]
    %v1169 = vld [vmem:[%s1 + $0x3d4] sm:$0xf]
    %v1170 = vld [vmem:[%s1 + $0x3d8] sm:$0xf]
    %v1171 = vld [vmem:[%s1 + $0x3dc] sm:$0xf]
    %v1172 = vld [vmem:[%s1 + $0x3e0] sm:$0xf]
    %v1173 = vld [vmem:[%s1 + $0x3e4] sm:$0xf]
    %v1174 = vld [vmem:[%s1 + $0x3e8] sm:$0xf]
    %v1175 = vld [vmem:[%s1 + $0x3ec] sm:$0xf]
    %v1176 = vld [vmem:[%s1 + $0x3f0] sm:$0xf]
    %v1177 = vld [vmem:[%s1 + $0x3f4] sm:$0xf]
    %v1178 = vld [vmem:[%s1 + $0x3f8] sm:$0xf]
    %v1179 = vld [vmem:[%s1 + $0x3fc] sm:$0xf]
    %v1180 = vld [vmem:[%s1 + $0x400] sm:$0xf]
    %v1181 = vld [vmem:[%s1 + $0x404] sm:$0xf]
    %v1182 = vld [vmem:[%s1 + $0x408] sm:$0xf]
    %v1183 = vld [vmem:[%s1 + $0x40c] sm:$0xf]
    %v1184 = vld [vmem:[%s1 + $0x410] sm:$0xf]
    %v1185 = vld [vmem:[%s1 + $0x414] sm:$0xf]
    %v1186 = vld [vmem:[%s1 + $0x418] sm:$0xf]
    %v1187 = vld [vmem:[%s1 + $0x41c] sm:$0xf]
    %v1188 = vld [vmem:[%s1 + $0x420] sm:$0xf]
    %v1189 = vld [vmem:[%s1 + $0x424] sm:$0xf]
    %v1190 = vld [vmem:[%s1 + $0x428] sm:$0xf]
    %v1191 = vld [vmem:[%s1 + $0x42c] sm:$0xf]
    %v1192 = vld [vmem:[%s1 + $0x430] sm:$0xf]
    %v1193 = vld [vmem:[%s1 + $0x434] sm:$0xf]
    %v1194 = vld [vmem:[%s1 + $0x438] sm:$0xf]
    %v1195 = vld [vmem:[%s1 + $0x43c] sm:$0xf]
    %v1196 = vld [vmem:[%s1 + $0x440] sm:$0xf]
    %v1197 = vld [vmem:[%s1 + $0x444] sm:$0xf]
    %v1198 = vld [vmem:[%s1 + $0x448] sm:$0xf]
    %v1199 = vld [vmem:[%s1 + $0x44c] sm:$0xf]
    %v1200 = vld [vmem:[%s1 + $0x450] sm:$0xf]
    %v1201 = vld [vmem:[%s1 + $0x454] sm:$0xf]
    %v1202 = vld [vmem:[%s1 + $0x458] sm:$0xf]
    %v1203 = vld [vmem:[%s1 + $0x45c] sm:$0xf]
    %v1204 = vld [vmem:[%s1 + $0x460] sm:$0xf]
    %v1205 = vld [vmem:[%s1 + $0x464] sm:$0xf]
    %v1206 = vld [vmem:[%s1 + $0x468] sm:$0xf]
    %v1207 = vld [vmem:[%s1 + $0x46c] sm:$0xf]
    %v1208 = vld [vmem:[%s1 + $0x470] sm:$0xf]
    %v1209 = vld [vmem:[%s1 + $0x474] sm:$0xf]
    %v1210 = vld [vmem:[%s1 + $0x478] sm:$0xf]
    %v1211 = vld [vmem:[%s1 + $0x47c] sm:$0xf]
    %v1212 = vld [vmem:[%s1 + $0x480] sm:$0xf]
    %v1213 = vld [vmem:[%s1 + $0x484] sm:$0xf]
    %v1214 = vld [vmem:[%s1 + $0x488] sm:$0xf]
    %v1215 = vld [vmem:[%s1 + $0x48c] sm:$0xf]
    %v1216 = vld [vmem:[%s1 + $0x490] sm:$0xf]
    %v1217 = vld [vmem:[%s1 + $0x494] sm:$0xf]
    %v1218 = vld [vmem:[%s1 + $0x498] sm:$0xf]
    %v1219 = vld [vmem:[%s1 + $0x49c] sm:$0xf]
    %v1220 = vld [vmem:[%s1 + $0x4a0] sm:$0xf]
    %v1221 = vld [vmem:[%s1 + $0x4a4] sm:$0xf]
    %v1222 = vld [vmem:[%s1 + $0x4a8] sm:$0xf]
    %v1223 = vld [vmem:[%s1 + $0x4ac] sm:$0xf]
    %v1224 = vld [vmem:[%s1 + $0x4b0] sm:$0xf]
    %v1225 = vld [vmem:[%s1 + $0x4b4] sm:$0xf]
    %v1226 = vld [vmem:[%s1 + $0x4b8] sm:$0xf]
    %v1227 = vld [vmem:[%s1 + $0x4bc] sm:$0xf]
    %v1228 = vld [vmem:[%s1 + $0x4c0] sm:$0xf]
    %v1229 = vld [vmem:[%s1 + $0x4c4] sm:$0xf]
    %v1230 = vld [vmem:[%s1 + $0x4c8] sm:$0xf]
    %v1231 = vld [vmem:[%s1 + $0x4cc] sm:$0xf]
    %v1232 = vld [vmem:[%s1 + $0x4d0] sm:$0xf]
    %v1233 = vld [vmem:[%s1 + $0x4d4] sm:$0xf]
    %v1234 = vld [vmem:[%s1 + $0x4d8] sm:$0xf]
    %v1235 = vld [vmem:[%s1 + $0x4dc] sm:$0xf]
    %v1236 = vld [vmem:[%s1 + $0x4e0] sm:$0xf]
    %v1237 = vld [vmem:[%s1 + $0x4e4] sm:$0xf]
    %v1238 = vld [vmem:[%s1 + $0x4e8] sm:$0xf]
    %v1239 = vld [vmem:[%s1 + $0x4ec] sm:$0xf]
    %v1240 = vld [vmem:[%s1 + $0x4f0] sm:$0xf]
    %v1241 = vld [vmem:[%s1 + $0x4f4] sm:$0xf]
    %v1242 = vld [vmem:[%s1 + $0x4f8] sm:$0xf]
    %v1243 = vld [vmem:[%s1 + $0x4fc] sm:$0xf]
    %v1244 = vld [vmem:[%s1 + $0x500] sm:$0xf]
    %v1245 = vld [vmem:[%s1 + $0x504] sm:$0xf]
    %v1246 = vld [vmem:[%s1 + $0x508] sm:$0xf]
    %v1247 = vld [vmem:[%s1 + $0x50c] sm:$0xf]
    %v1248 = vld [vmem:[%s1 + $0x510] sm:$0xf]
    %v1249 = vld [vmem:[%s1 + $0x514] sm:$0xf]
    %v1250 = vld [vmem:[%s1 + $0x518] sm:$0xf]
    %v1251 = vld [vmem:[%s1 + $0x51c] sm:$0xf]
    %v1252 = vld [vmem:[%s1 + $0x520] sm:$0xf]
    %v1253 = vld [vmem:[%s1 + $0x524] sm:$0xf]
    %v1254 = vld [vmem:[%s1 + $0x528] sm:$0xf]
    %v1255 = vld [vmem:[%s1 + $0x52c] sm:$0xf]
    %v1256 = vld [vmem:[%s1 + $0x530] sm:$0xf]
    %v1257 = vld [vmem:[%s1 + $0x534] sm:$0xf]
    %v1258 = vld [vmem:[%s1 + $0x538] sm:$0xf]
    %v1259 = vld [vmem:[%s1 + $0x53c] sm:$0xf]
    %v1260 = vld [vmem:[%s1 + $0x540] sm:$0xf]
    %v1261 = vld [vmem:[%s1 + $0x544] sm:$0xf]
    %v1262 = vld [vmem:[%s1 + $0x548] sm:$0xf]
    %v1263 = vld [vmem:[%s1 + $0x54c] sm:$0xf]
    %v1264 = vld [vmem:[%s1 + $0x550] sm:$0xf]
    %v1265 = vld [vmem:[%s1 + $0x554] sm:$0xf]
    %v1266 = vld [vmem:[%s1 + $0x558] sm:$0xf]
    %v1267 = vld [vmem:[%s1 + $0x55c] sm:$0xf]
    %v1268 = vld [vmem:[%s1 + $0x560] sm:$0xf]
    %v1269 = vld [vmem:[%s1 + $0x564] sm:$0xf]
    %v1270 = vld [vmem:[%s1 + $0x568] sm:$0xf]
    %v1271 = vld [vmem:[%s1 + $0x56c] sm:$0xf]
    %v1272 = vld [vmem:[%s1 + $0x570] sm:$0xf]
    %v1273 = vld [vmem:[%s1 + $0x574] sm:$0xf]
    %v1274 = vld [vmem:[%s1 + $0x578] sm:$0xf]
    %v1275 = vld [vmem:[%s1 + $0x57c] sm:$0xf]
    %v1276 = vld [vmem:[%s1 + $0x580] sm:$0xf]
    %v1277 = vld [vmem:[%s1 + $0x584] sm:$0xf]
    %v1278 = vld [vmem:[%s1 + $0x588] sm:$0xf]
    %v1279 = vld [vmem:[%s1 + $0x58c] sm:$0xf]
    %v1280 = vld [vmem:[%s1 + $0x590] sm:$0xf]
    %v1281 = vld [vmem:[%s1 + $0x594] sm:$0xf]
    %v1282 = vld [vmem:[%s1 + $0x598] sm:$0xf]
    %v1283 = vld [vmem:[%s1 + $0x59c] sm:$0xf]
    %v1284 = vld [vmem:[%s1 + $0x5a0] sm:$0xf]
    %v1285 = vld [vmem:[%s1 + $0x5a4] sm:$0xf]
    %v1286 = vld [vmem:[%s1 + $0x5a8] sm:$0xf]
    %v1287 = vld [vmem:[%s1 + $0x5ac] sm:$0xf]
    %v1288 = vld [vmem:[%s1 + $0x5b0] sm:$0xf]
    %v1289 = vld [vmem:[%s1 + $0x5b4] sm:$0xf]
    %v1290 = vld [vmem:[%s1 + $0x5b8] sm:$0xf]
    %v1291 = vld [vmem:[%s1 + $0x5bc] sm:$0xf]
    %v1292 = vld [vmem:[%s1 + $0x5c0] sm:$0xf]
    %v1293 = vld [vmem:[%s1 + $0x5c4] sm:$0xf]
    %v1294 = vld [vmem:[%s1 + $0x5c8] sm:$0xf]
    %v1295 = vld [vmem:[%s1 + $0x5cc] sm:$0xf]
    %v1296 = vld [vmem:[%s1 + $0x5d0] sm:$0xf]
    %v1297 = vld [vmem:[%s1 + $0x5d4] sm:$0xf]
    %v1298 = vld [vmem:[%s1 + $0x5d8] sm:$0xf]
    %v1299 = vld [vmem:[%s1 + $0x5dc] sm:$0xf]
    %v1300 = vld [vmem:[%s1 + $0x5e0] sm:$0xf]
    %v1301 = vld [vmem:[%s1 + $0x5e4] sm:$0xf]
    %v1302 = vld [vmem:[%s1 + $0x5e8] sm:$0xf]
    %v1303 = vld [vmem:[%s1 + $0x5ec] sm:$0xf]
    %v1304 = vld [vmem:[%s1 + $0x5f0] sm:$0xf]
    %v1305 = vld [vmem:[%s1 + $0x5f4] sm:$0xf]
    %v1306 = vld [vmem:[%s1 + $0x5f8] sm:$0xf]
    %v1307 = vld [vmem:[%s1 + $0x5fc] sm:$0xf]
    %v1308 = vld [vmem:[%s1 + $0x600] sm:$0xf]
    %v1309 = vld [vmem:[%s1 + $0x604] sm:$0xf]
    %v1310 = vld [vmem:[%s1 + $0x608] sm:$0xf]
    %v1311 = vld [vmem:[%s1 + $0x60c] sm:$0xf]
    %v1312 = vld [vmem:[%s1 + $0x610] sm:$0xf]
    %v1313 = vld [vmem:[%s1 + $0x614] sm:$0xf]
    %v1314 = vld [vmem:[%s1 + $0x618] sm:$0xf]
    %v1315 = vld [vmem:[%s1 + $0x61c] sm:$0xf]
    %v1708 = vunpack.c.l.b16 %v924
    %v1709 = vunpack.c.l.b16 %v925
    %v1710 = vunpack.c.l.b16 %v926
    %v1711 = vunpack.c.l.b16 %v927
    %v1712 = vunpack.c.l.b16 %v928
    %v1713 = vunpack.c.l.b16 %v929
    %v1714 = vunpack.c.l.b16 %v930
    %v1715 = vunpack.c.l.b16 %v931
    %v1716 = vunpack.c.l.b16 %v932
    %v1717 = vunpack.c.l.b16 %v933
    %v1718 = vunpack.c.l.b16 %v934
    %v1719 = vunpack.c.l.b16 %v935
    %v1720 = vunpack.c.l.b16 %v936
    %v1721 = vunpack.c.l.b16 %v937
    %v1722 = vunpack.c.l.b16 %v938
    %v1723 = vunpack.c.l.b16 %v939
    %v1724 = vunpack.c.l.b16 %v940
    %v1725 = vunpack.c.l.b16 %v941
    %v1726 = vunpack.c.l.b16 %v942
    %v1727 = vunpack.c.l.b16 %v943
    %v1728 = vunpack.c.l.b16 %v944
    %v1729 = vunpack.c.l.b16 %v945
    %v1730 = vunpack.c.l.b16 %v946
    %v1731 = vunpack.c.l.b16 %v947
    %v1732 = vunpack.c.l.b16 %v948
    %v1733 = vunpack.c.l.b16 %v949
    %v1734 = vunpack.c.l.b16 %v950
    %v1735 = vunpack.c.l.b16 %v951
    %v1736 = vunpack.c.l.b16 %v952
    %v1737 = vunpack.c.l.b16 %v953
    %v1738 = vunpack.c.l.b16 %v954
    %v1739 = vunpack.c.l.b16 %v955
    %v1740 = vunpack.c.l.b16 %v956
    %v1741 = vunpack.c.l.b16 %v957
    %v1742 = vunpack.c.l.b16 %v958
    %v1743 = vunpack.c.l.b16 %v959
    %v1744 = vunpack.c.l.b16 %v960
    %v1745 = vunpack.c.l.b16 %v961
    %v1746 = vunpack.c.l.b16 %v962
    %v1747 = vunpack.c.l.b16 %v963
    %v1748 = vunpack.c.l.b16 %v964
    %v1749 = vunpack.c.l.b16 %v965
    %v1750 = vunpack.c.l.b16 %v966
    %v1751 = vunpack.c.l.b16 %v967
    %v1752 = vunpack.c.l.b16 %v968
    %v1753 = vunpack.c.l.b16 %v969
    %v1754 = vunpack.c.l.b16 %v970
    %v1755 = vunpack.c.l.b16 %v971
    %v1756 = vunpack.c.l.b16 %v972
    %v1757 = vunpack.c.l.b16 %v973
    %v1758 = vunpack.c.l.b16 %v974
    %v1759 = vunpack.c.l.b16 %v975
    %v1760 = vunpack.c.l.b16 %v976
    %v1761 = vunpack.c.l.b16 %v977
    %v1762 = vunpack.c.l.b16 %v978
    %v1763 = vunpack.c.l.b16 %v979
    %v1764 = vunpack.c.l.b16 %v980
    %v1765 = vunpack.c.l.b16 %v981
    %v1766 = vunpack.c.l.b16 %v982
    %v1767 = vunpack.c.l.b16 %v983
    %v1768 = vunpack.c.l.b16 %v984
    %v1769 = vunpack.c.l.b16 %v985
    %v1770 = vunpack.c.l.b16 %v986
    %v1771 = vunpack.c.l.b16 %v987
    %v1772 = vunpack.c.l.b16 %v988
    %v1773 = vunpack.c.l.b16 %v989
    %v1774 = vunpack.c.l.b16 %v990
    %v1775 = vunpack.c.l.b16 %v991
    %v1776 = vunpack.c.l.b16 %v992
    %v1777 = vunpack.c.l.b16 %v993
    %v1778 = vunpack.c.l.b16 %v994
    %v1779 = vunpack.c.l.b16 %v995
    %v1780 = vunpack.c.l.b16 %v996
    %v1781 = vunpack.c.l.b16 %v997
    %v1782 = vunpack.c.l.b16 %v998
    %v1783 = vunpack.c.l.b16 %v999
    %v1784 = vunpack.c.l.b16 %v1000
    %v1785 = vunpack.c.l.b16 %v1001
    %v1786 = vunpack.c.l.b16 %v1002
    %v1787 = vunpack.c.l.b16 %v1003
    %v1788 = vunpack.c.l.b16 %v1004
    %v1789 = vunpack.c.l.b16 %v1005
    %v1790 = vunpack.c.l.b16 %v1006
    %v1791 = vunpack.c.l.b16 %v1007
    %v1792 = vunpack.c.l.b16 %v1008
    %v1793 = vunpack.c.l.b16 %v1009
    %v1794 = vunpack.c.l.b16 %v1010
    %v1795 = vunpack.c.l.b16 %v1011
    %v1796 = vunpack.c.l.b16 %v1012
    %v1797 = vunpack.c.l.b16 %v1013
    %v1798 = vunpack.c.l.b16 %v1014
    %v1799 = vunpack.c.l.b16 %v1015
    %v1800 = vunpack.c.l.b16 %v1016
    %v1801 = vunpack.c.l.b16 %v1017
    %v1802 = vunpack.c.l.b16 %v1018
    %v1803 = vunpack.c.l.b16 %v1019
    %v1804 = vunpack.c.l.b16 %v1020
    %v1805 = vunpack.c.l.b16 %v1021
    %v1806 = vunpack.c.l.b16 %v1022
    %v1807 = vunpack.c.l.b16 %v1023
    %v1808 = vunpack.c.l.b16 %v1024
    %v1809 = vunpack.c.l.b16 %v1025
    %v1810 = vunpack.c.l.b16 %v1026
    %v1811 = vunpack.c.l.b16 %v1027
    %v1812 = vunpack.c.l.b16 %v1028
    %v1813 = vunpack.c.l.b16 %v1029
    %v1814 = vunpack.c.l.b16 %v1030
    %v1815 = vunpack.c.l.b16 %v1031
    %v1816 = vunpack.c.l.b16 %v1032
    %v1817 = vunpack.c.l.b16 %v1033
    %v1818 = vunpack.c.l.b16 %v1034
    %v1819 = vunpack.c.l.b16 %v1035
    %v1820 = vunpack.c.l.b16 %v1036
    %v1821 = vunpack.c.l.b16 %v1037
    %v1822 = vunpack.c.l.b16 %v1038
    %v1823 = vunpack.c.l.b16 %v1039
    %v1824 = vunpack.c.l.b16 %v1040
    %v1825 = vunpack.c.l.b16 %v1041
    %v1826 = vunpack.c.l.b16 %v1042
    %v1827 = vunpack.c.l.b16 %v1043
    %v1828 = vunpack.c.l.b16 %v1044
    %v1829 = vunpack.c.l.b16 %v1045
    %v1830 = vunpack.c.l.b16 %v1046
    %v1831 = vunpack.c.l.b16 %v1047
    %v1832 = vunpack.c.l.b16 %v1048
    %v1833 = vunpack.c.l.b16 %v1049
    %v1834 = vunpack.c.l.b16 %v1050
    %v1835 = vunpack.c.l.b16 %v1051
    %v1836 = vunpack.c.l.b16 %v1052
    %v1837 = vunpack.c.l.b16 %v1053
    %v1838 = vunpack.c.l.b16 %v1054
    %v1839 = vunpack.c.l.b16 %v1055
    %v1840 = vunpack.c.l.b16 %v1056
    %v1841 = vunpack.c.l.b16 %v1057
    %v1842 = vunpack.c.l.b16 %v1058
    %v1843 = vunpack.c.l.b16 %v1059
    %v1844 = vunpack.c.l.b16 %v1060
    %v1845 = vunpack.c.l.b16 %v1061
    %v1846 = vunpack.c.l.b16 %v1062
    %v1847 = vunpack.c.l.b16 %v1063
    %v1848 = vunpack.c.l.b16 %v1064
    %v1849 = vunpack.c.l.b16 %v1065
    %v1850 = vunpack.c.l.b16 %v1066
    %v1851 = vunpack.c.l.b16 %v1067
    %v1852 = vunpack.c.l.b16 %v1068
    %v1853 = vunpack.c.l.b16 %v1069
    %v1854 = vunpack.c.l.b16 %v1070
    %v1855 = vunpack.c.l.b16 %v1071
    %v1856 = vunpack.c.l.b16 %v1072
    %v1857 = vunpack.c.l.b16 %v1073
    %v1858 = vunpack.c.l.b16 %v1074
    %v1859 = vunpack.c.l.b16 %v1075
    %v1860 = vunpack.c.l.b16 %v1076
    %v1861 = vunpack.c.l.b16 %v1077
    %v1862 = vunpack.c.l.b16 %v1078
    %v1863 = vunpack.c.l.b16 %v1079
    %v1864 = vunpack.c.l.b16 %v1080
    %v1865 = vunpack.c.l.b16 %v1081
    %v1866 = vunpack.c.l.b16 %v1082
    %v1867 = vunpack.c.l.b16 %v1083
    %v1868 = vunpack.c.l.b16 %v1084
    %v1869 = vunpack.c.l.b16 %v1085
    %v1870 = vunpack.c.l.b16 %v1086
    %v1871 = vunpack.c.l.b16 %v1087
    %v1872 = vunpack.c.l.b16 %v1088
    %v1873 = vunpack.c.l.b16 %v1089
    %v1874 = vunpack.c.l.b16 %v1090
    %v1875 = vunpack.c.l.b16 %v1091
    %v1876 = vunpack.c.l.b16 %v1092
    %v1877 = vunpack.c.l.b16 %v1093
    %v1878 = vunpack.c.l.b16 %v1094
    %v1879 = vunpack.c.l.b16 %v1095
    %v1880 = vunpack.c.l.b16 %v1096
    %v1881 = vunpack.c.l.b16 %v1097
    %v1882 = vunpack.c.l.b16 %v1098
    %v1883 = vunpack.c.l.b16 %v1099
    %v1884 = vunpack.c.l.b16 %v1100
    %v1885 = vunpack.c.l.b16 %v1101
    %v1886 = vunpack.c.l.b16 %v1102
    %v1887 = vunpack.c.l.b16 %v1103
    %v1888 = vunpack.c.l.b16 %v1104
    %v1889 = vunpack.c.l.b16 %v1105
    %v1890 = vunpack.c.l.b16 %v1106
    %v1891 = vunpack.c.l.b16 %v1107
    %v1892 = vunpack.c.l.b16 %v1108
    %v1893 = vunpack.c.l.b16 %v1109
    %v1894 = vunpack.c.l.b16 %v1110
    %v1895 = vunpack.c.l.b16 %v1111
    %v1896 = vunpack.c.l.b16 %v1112
    %v1897 = vunpack.c.l.b16 %v1113
    %v1898 = vunpack.c.l.b16 %v1114
    %v1899 = vunpack.c.l.b16 %v1115
    %v1900 = vunpack.c.l.b16 %v1116
    %v1901 = vunpack.c.l.b16 %v1117
    %v1902 = vunpack.c.l.b16 %v1118
    %v1903 = vunpack.c.l.b16 %v1119
    %v1904 = vunpack.c.l.b16 %v1120
    %v1905 = vunpack.c.l.b16 %v1121
    %v1906 = vunpack.c.l.b16 %v1122
    %v1907 = vunpack.c.l.b16 %v1123
    %v1908 = vunpack.c.l.b16 %v1124
    %v1909 = vunpack.c.l.b16 %v1125
    %v1910 = vunpack.c.l.b16 %v1126
    %v1911 = vunpack.c.l.b16 %v1127
    %v1912 = vunpack.c.l.b16 %v1128
    %v1913 = vunpack.c.l.b16 %v1129
    %v1914 = vunpack.c.l.b16 %v1130
    %v1915 = vunpack.c.l.b16 %v1131
    %v1916 = vunpack.c.l.b16 %v1132
    %v1917 = vunpack.c.l.b16 %v1133
    %v1918 = vunpack.c.l.b16 %v1134
    %v1919 = vunpack.c.l.b16 %v1135
    %v1920 = vunpack.c.l.b16 %v1136
    %v1921 = vunpack.c.l.b16 %v1137
    %v1922 = vunpack.c.l.b16 %v1138
    %v1923 = vunpack.c.l.b16 %v1139
    %v1924 = vunpack.c.l.b16 %v1140
    %v1925 = vunpack.c.l.b16 %v1141
    %v1926 = vunpack.c.l.b16 %v1142
    %v1927 = vunpack.c.l.b16 %v1143
    %v1928 = vunpack.c.l.b16 %v1144
    %v1929 = vunpack.c.l.b16 %v1145
    %v1930 = vunpack.c.l.b16 %v1146
    %v1931 = vunpack.c.l.b16 %v1147
    %v1932 = vunpack.c.l.b16 %v1148
    %v1933 = vunpack.c.l.b16 %v1149
    %v1934 = vunpack.c.l.b16 %v1150
    %v1935 = vunpack.c.l.b16 %v1151
    %v1936 = vunpack.c.l.b16 %v1152
    %v1937 = vunpack.c.l.b16 %v1153
    %v1938 = vunpack.c.l.b16 %v1154
    %v1939 = vunpack.c.l.b16 %v1155
    %v1940 = vunpack.c.l.b16 %v1156
    %v1941 = vunpack.c.l.b16 %v1157
    %v1942 = vunpack.c.l.b16 %v1158
    %v1943 = vunpack.c.l.b16 %v1159
    %v1944 = vunpack.c.l.b16 %v1160
    %v1945 = vunpack.c.l.b16 %v1161
    %v1946 = vunpack.c.l.b16 %v1162
    %v1947 = vunpack.c.l.b16 %v1163
    %v1948 = vunpack.c.l.b16 %v1164
    %v1949 = vunpack.c.l.b16 %v1165
    %v1950 = vunpack.c.l.b16 %v1166
    %v1951 = vunpack.c.l.b16 %v1167
    %v1952 = vunpack.c.l.b16 %v1168
    %v1953 = vunpack.c.l.b16 %v1169
    %v1954 = vunpack.c.l.b16 %v1170
    %v1955 = vunpack.c.l.b16 %v1171
    %v1956 = vunpack.c.l.b16 %v1172
    %v1957 = vunpack.c.l.b16 %v1173
    %v1958 = vunpack.c.l.b16 %v1174
    %v1959 = vunpack.c.l.b16 %v1175
    %v1960 = vunpack.c.l.b16 %v1176
    %v1961 = vunpack.c.l.b16 %v1177
    %v1962 = vunpack.c.l.b16 %v1178
    %v1963 = vunpack.c.l.b16 %v1179
    %v1964 = vunpack.c.l.b16 %v1180
    %v1965 = vunpack.c.l.b16 %v1181
    %v1966 = vunpack.c.l.b16 %v1182
    %v1967 = vunpack.c.l.b16 %v1183
    %v1968 = vunpack.c.l.b16 %v1184
    %v1969 = vunpack.c.l.b16 %v1185
    %v1970 = vunpack.c.l.b16 %v1186
    %v1971 = vunpack.c.l.b16 %v1187
    %v1972 = vunpack.c.l.b16 %v1188
    %v1973 = vunpack.c.l.b16 %v1189
    %v1974 = vunpack.c.l.b16 %v1190
    %v1975 = vunpack.c.l.b16 %v1191
    %v1976 = vunpack.c.l.b16 %v1192
    %v1977 = vunpack.c.l.b16 %v1193
    %v1978 = vunpack.c.l.b16 %v1194
    %v1979 = vunpack.c.l.b16 %v1195
    %v1980 = vunpack.c.l.b16 %v1196
    %v1981 = vunpack.c.l.b16 %v1197
    %v1982 = vunpack.c.l.b16 %v1198
    %v1983 = vunpack.c.l.b16 %v1199
    %v1984 = vunpack.c.l.b16 %v1200
    %v1985 = vunpack.c.l.b16 %v1201
    %v1986 = vunpack.c.l.b16 %v1202
    %v1987 = vunpack.c.l.b16 %v1203
    %v1988 = vunpack.c.l.b16 %v1204
    %v1989 = vunpack.c.l.b16 %v1205
    %v1990 = vunpack.c.l.b16 %v1206
    %v1991 = vunpack.c.l.b16 %v1207
    %v1992 = vunpack.c.l.b16 %v1208
    %v1993 = vunpack.c.l.b16 %v1209
    %v1994 = vunpack.c.l.b16 %v1210
    %v1995 = vunpack.c.l.b16 %v1211
    %v1996 = vunpack.c.l.b16 %v1212
    %v1997 = vunpack.c.l.b16 %v1213
    %v1998 = vunpack.c.l.b16 %v1214
    %v1999 = vunpack.c.l.b16 %v1215
    %v2000 = vunpack.c.l.b16 %v1216
    %v2001 = vunpack.c.l.b16 %v1217
    %v2002 = vunpack.c.l.b16 %v1218
    %v2003 = vunpack.c.l.b16 %v1219
    %v2004 = vunpack.c.l.b16 %v1220
    %v2005 = vunpack.c.l.b16 %v1221
    %v2006 = vunpack.c.l.b16 %v1222
    %v2007 = vunpack.c.l.b16 %v1223
    %v2008 = vunpack.c.l.b16 %v1224
    %v2009 = vunpack.c.l.b16 %v1225
    %v2010 = vunpack.c.l.b16 %v1226
    %v2011 = vunpack.c.l.b16 %v1227
    %v2012 = vunpack.c.l.b16 %v1228
    %v2013 = vunpack.c.l.b16 %v1229
    %v2014 = vunpack.c.l.b16 %v1230
    %v2015 = vunpack.c.l.b16 %v1231
    %v2016 = vunpack.c.l.b16 %v1232
    %v2017 = vunpack.c.l.b16 %v1233
    %v2018 = vunpack.c.l.b16 %v1234
    %v2019 = vunpack.c.l.b16 %v1235
    %v2020 = vunpack.c.l.b16 %v1236
    %v2021 = vunpack.c.l.b16 %v1237
    %v2022 = vunpack.c.l.b16 %v1238
    %v2023 = vunpack.c.l.b16 %v1239
    %v2024 = vunpack.c.l.b16 %v1240
    %v2025 = vunpack.c.l.b16 %v1241
    %v2026 = vunpack.c.l.b16 %v1242
    %v2027 = vunpack.c.l.b16 %v1243
    %v2028 = vunpack.c.l.b16 %v1244
    %v2029 = vunpack.c.l.b16 %v1245
    %v2030 = vunpack.c.l.b16 %v1246
    %v2031 = vunpack.c.l.b16 %v1247
    %v2032 = vunpack.c.l.b16 %v1248
    %v2033 = vunpack.c.l.b16 %v1249
    %v2034 = vunpack.c.l.b16 %v1250
    %v2035 = vunpack.c.l.b16 %v1251
    %v2036 = vunpack.c.l.b16 %v1252
    %v2037 = vunpack.c.l.b16 %v1253
    %v2038 = vunpack.c.l.b16 %v1254
    %v2039 = vunpack.c.l.b16 %v1255
    %v2040 = vunpack.c.l.b16 %v1256
    %v2041 = vunpack.c.l.b16 %v1257
    %v2042 = vunpack.c.l.b16 %v1258
    %v2043 = vunpack.c.l.b16 %v1259
    %v2044 = vunpack.c.l.b16 %v1260
    %v2045 = vunpack.c.l.b16 %v1261
    %v2046 = vunpack.c.l.b16 %v1262
    %v2047 = vunpack.c.l.b16 %v1263
    %v2048 = vunpack.c.l.b16 %v1264
    %v2049 = vunpack.c.l.b16 %v1265
    %v2050 = vunpack.c.l.b16 %v1266
    %v2051 = vunpack.c.l.b16 %v1267
    %v2052 = vunpack.c.l.b16 %v1268
    %v2053 = vunpack.c.l.b16 %v1269
    %v2054 = vunpack.c.l.b16 %v1270
    %v2055 = vunpack.c.l.b16 %v1271
    %v2056 = vunpack.c.l.b16 %v1272
    %v2057 = vunpack.c.l.b16 %v1273
    %v2058 = vunpack.c.l.b16 %v1274
    %v2059 = vunpack.c.l.b16 %v1275
    %v2060 = vunpack.c.l.b16 %v1276
    %v2061 = vunpack.c.l.b16 %v1277
    %v2062 = vunpack.c.l.b16 %v1278
    %v2063 = vunpack.c.l.b16 %v1279
    %v2064 = vunpack.c.l.b16 %v1280
    %v2065 = vunpack.c.l.b16 %v1281
    %v2066 = vunpack.c.l.b16 %v1282
    %v2067 = vunpack.c.l.b16 %v1283
    %v2068 = vunpack.c.l.b16 %v1284
    %v2069 = vunpack.c.l.b16 %v1285
    %v2070 = vunpack.c.l.b16 %v1286
    %v2071 = vunpack.c.l.b16 %v1287
    %v2072 = vunpack.c.l.b16 %v1288
    %v2073 = vunpack.c.l.b16 %v1289
    %v2074 = vunpack.c.l.b16 %v1290
    %v2075 = vunpack.c.l.b16 %v1291
    %v2076 = vunpack.c.l.b16 %v1292
    %v2077 = vunpack.c.l.b16 %v1293
    %v2078 = vunpack.c.l.b16 %v1294
    %v2079 = vunpack.c.l.b16 %v1295
    %v2080 = vunpack.c.l.b16 %v1296
    %v2081 = vunpack.c.l.b16 %v1297
    %v2082 = vunpack.c.l.b16 %v1298
    %v2083 = vunpack.c.l.b16 %v1299
    %v2084 = vunpack.c.l.b16 %v1300
    %v2085 = vunpack.c.l.b16 %v1301
    %v2086 = vunpack.c.l.b16 %v1302
    %v2087 = vunpack.c.l.b16 %v1303
    %v2088 = vunpack.c.l.b16 %v1304
    %v2089 = vunpack.c.l.b16 %v1305
    %v2090 = vunpack.c.l.b16 %v1306
    %v2091 = vunpack.c.l.b16 %v1307
    %v2092 = vunpack.c.l.b16 %v1308
    %v2093 = vunpack.c.l.b16 %v1309
    %v2094 = vunpack.c.l.b16 %v1310
    %v2095 = vunpack.c.l.b16 %v1311
    %v2096 = vunpack.c.l.b16 %v1312
    %v2097 = vunpack.c.l.b16 %v1313
    %v2098 = vunpack.c.l.b16 %v1314
    %v2099 = vunpack.c.l.b16 %v1315
    %v2100 = vpack.c.b16 %v1709, %v1708
    %v2101 = vpack.c.b16 %v1711, %v1710
    %v2102 = vpack.c.b16 %v1713, %v1712
    %v2103 = vpack.c.b16 %v1715, %v1714
    %v2104 = vpack.c.b16 %v1717, %v1716
    %v2105 = vpack.c.b16 %v1719, %v1718
    %v2106 = vpack.c.b16 %v1721, %v1720
    %v2107 = vpack.c.b16 %v1723, %v1722
    %v2108 = vpack.c.b16 %v1725, %v1724
    %v2109 = vpack.c.b16 %v1727, %v1726
    %v2110 = vpack.c.b16 %v1729, %v1728
    %v2111 = vpack.c.b16 %v1731, %v1730
    %v2112 = vpack.c.b16 %v1733, %v1732
    %v2113 = vpack.c.b16 %v1735, %v1734
    %v2114 = vpack.c.b16 %v1737, %v1736
    %v2115 = vpack.c.b16 %v1739, %v1738
    %v2116 = vpack.c.b16 %v1741, %v1740
    %v2117 = vpack.c.b16 %v1743, %v1742
    %v2118 = vpack.c.b16 %v1745, %v1744
    %v2119 = vpack.c.b16 %v1747, %v1746
    %v2120 = vpack.c.b16 %v1749, %v1748
    %v2121 = vpack.c.b16 %v1751, %v1750
    %v2122 = vpack.c.b16 %v1753, %v1752
    %v2123 = vpack.c.b16 %v1755, %v1754
    %v2124 = vpack.c.b16 %v1757, %v1756
    %v2125 = vpack.c.b16 %v1759, %v1758
    %v2126 = vpack.c.b16 %v1761, %v1760
    %v2127 = vpack.c.b16 %v1763, %v1762
    %v2128 = vpack.c.b16 %v1765, %v1764
    %v2129 = vpack.c.b16 %v1767, %v1766
    %v2130 = vpack.c.b16 %v1769, %v1768
    %v2131 = vpack.c.b16 %v1771, %v1770
    %v2132 = vpack.c.b16 %v1773, %v1772
    %v2133 = vpack.c.b16 %v1775, %v1774
    %v2134 = vpack.c.b16 %v1777, %v1776
    %v2135 = vpack.c.b16 %v1779, %v1778
    %v2136 = vpack.c.b16 %v1781, %v1780
    %v2137 = vpack.c.b16 %v1783, %v1782
    %v2138 = vpack.c.b16 %v1785, %v1784
    %v2139 = vpack.c.b16 %v1787, %v1786
    %v2140 = vpack.c.b16 %v1789, %v1788
    %v2141 = vpack.c.b16 %v1791, %v1790
    %v2142 = vpack.c.b16 %v1793, %v1792
    %v2143 = vpack.c.b16 %v1795, %v1794
    %v2144 = vpack.c.b16 %v1797, %v1796
    %v2145 = vpack.c.b16 %v1799, %v1798
    %v2146 = vpack.c.b16 %v1801, %v1800
    %v2147 = vpack.c.b16 %v1803, %v1802
    %v2148 = vpack.c.b16 %v1805, %v1804
    %v2149 = vpack.c.b16 %v1807, %v1806
    %v2150 = vpack.c.b16 %v1809, %v1808
    %v2151 = vpack.c.b16 %v1811, %v1810
    %v2152 = vpack.c.b16 %v1813, %v1812
    %v2153 = vpack.c.b16 %v1815, %v1814
    %v2154 = vpack.c.b16 %v1817, %v1816
    %v2155 = vpack.c.b16 %v1819, %v1818
    %v2156 = vpack.c.b16 %v1821, %v1820
    %v2157 = vpack.c.b16 %v1823, %v1822
    %v2158 = vpack.c.b16 %v1825, %v1824
    %v2159 = vpack.c.b16 %v1827, %v1826
    %v2160 = vpack.c.b16 %v1829, %v1828
    %v2161 = vpack.c.b16 %v1831, %v1830
    %v2162 = vpack.c.b16 %v1833, %v1832
    %v2163 = vpack.c.b16 %v1835, %v1834
    %v2164 = vpack.c.b16 %v1837, %v1836
    %v2165 = vpack.c.b16 %v1839, %v1838
    %v2166 = vpack.c.b16 %v1841, %v1840
    %v2167 = vpack.c.b16 %v1843, %v1842
    %v2168 = vpack.c.b16 %v1845, %v1844
    %v2169 = vpack.c.b16 %v1847, %v1846
    %v2170 = vpack.c.b16 %v1849, %v1848
    %v2171 = vpack.c.b16 %v1851, %v1850
    %v2172 = vpack.c.b16 %v1853, %v1852
    %v2173 = vpack.c.b16 %v1855, %v1854
    %v2174 = vpack.c.b16 %v1857, %v1856
    %v2175 = vpack.c.b16 %v1859, %v1858
    %v2176 = vpack.c.b16 %v1861, %v1860
    %v2177 = vpack.c.b16 %v1863, %v1862
    %v2178 = vpack.c.b16 %v1865, %v1864
    %v2179 = vpack.c.b16 %v1867, %v1866
    %v2180 = vpack.c.b16 %v1869, %v1868
    %v2181 = vpack.c.b16 %v1871, %v1870
    %v2182 = vpack.c.b16 %v1873, %v1872
    %v2183 = vpack.c.b16 %v1875, %v1874
    %v2184 = vpack.c.b16 %v1877, %v1876
    %v2185 = vpack.c.b16 %v1879, %v1878
    %v2186 = vpack.c.b16 %v1881, %v1880
    %v2187 = vpack.c.b16 %v1883, %v1882
    %v2188 = vpack.c.b16 %v1885, %v1884
    %v2189 = vpack.c.b16 %v1887, %v1886
    %v2190 = vpack.c.b16 %v1889, %v1888
    %v2191 = vpack.c.b16 %v1891, %v1890
    %v2192 = vpack.c.b16 %v1893, %v1892
    %v2193 = vpack.c.b16 %v1895, %v1894
    %v2194 = vpack.c.b16 %v1897, %v1896
    %v2195 = vpack.c.b16 %v1899, %v1898
    %v2196 = vpack.c.b16 %v1901, %v1900
    %v2197 = vpack.c.b16 %v1903, %v1902
    %v2198 = vpack.c.b16 %v1905, %v1904
    %v2199 = vpack.c.b16 %v1907, %v1906
    %v2200 = vpack.c.b16 %v1909, %v1908
    %v2201 = vpack.c.b16 %v1911, %v1910
    %v2202 = vpack.c.b16 %v1913, %v1912
    %v2203 = vpack.c.b16 %v1915, %v1914
    %v2204 = vpack.c.b16 %v1917, %v1916
    %v2205 = vpack.c.b16 %v1919, %v1918
    %v2206 = vpack.c.b16 %v1921, %v1920
    %v2207 = vpack.c.b16 %v1923, %v1922
    %v2208 = vpack.c.b16 %v1925, %v1924
    %v2209 = vpack.c.b16 %v1927, %v1926
    %v2210 = vpack.c.b16 %v1929, %v1928
    %v2211 = vpack.c.b16 %v1931, %v1930
    %v2212 = vpack.c.b16 %v1933, %v1932
    %v2213 = vpack.c.b16 %v1935, %v1934
    %v2214 = vpack.c.b16 %v1937, %v1936
    %v2215 = vpack.c.b16 %v1939, %v1938
    %v2216 = vpack.c.b16 %v1941, %v1940
    %v2217 = vpack.c.b16 %v1943, %v1942
    %v2218 = vpack.c.b16 %v1945, %v1944
    %v2219 = vpack.c.b16 %v1947, %v1946
    %v2220 = vpack.c.b16 %v1949, %v1948
    %v2221 = vpack.c.b16 %v1951, %v1950
    %v2222 = vpack.c.b16 %v1953, %v1952
    %v2223 = vpack.c.b16 %v1955, %v1954
    %v2224 = vpack.c.b16 %v1957, %v1956
    %v2225 = vpack.c.b16 %v1959, %v1958
    %v2226 = vpack.c.b16 %v1961, %v1960
    %v2227 = vpack.c.b16 %v1963, %v1962
    %v2228 = vpack.c.b16 %v1965, %v1964
    %v2229 = vpack.c.b16 %v1967, %v1966
    %v2230 = vpack.c.b16 %v1969, %v1968
    %v2231 = vpack.c.b16 %v1971, %v1970
    %v2232 = vpack.c.b16 %v1973, %v1972
    %v2233 = vpack.c.b16 %v1975, %v1974
    %v2234 = vpack.c.b16 %v1977, %v1976
    %v2235 = vpack.c.b16 %v1979, %v1978
    %v2236 = vpack.c.b16 %v1981, %v1980
    %v2237 = vpack.c.b16 %v1983, %v1982
    %v2238 = vpack.c.b16 %v1985, %v1984
    %v2239 = vpack.c.b16 %v1987, %v1986
    %v2240 = vpack.c.b16 %v1989, %v1988
    %v2241 = vpack.c.b16 %v1991, %v1990
    %v2242 = vpack.c.b16 %v1993, %v1992
    %v2243 = vpack.c.b16 %v1995, %v1994
    %v2244 = vpack.c.b16 %v1997, %v1996
    %v2245 = vpack.c.b16 %v1999, %v1998
    %v2246 = vpack.c.b16 %v2001, %v2000
    %v2247 = vpack.c.b16 %v2003, %v2002
    %v2248 = vpack.c.b16 %v2005, %v2004
    %v2249 = vpack.c.b16 %v2007, %v2006
    %v2250 = vpack.c.b16 %v2009, %v2008
    %v2251 = vpack.c.b16 %v2011, %v2010
    %v2252 = vpack.c.b16 %v2013, %v2012
    %v2253 = vpack.c.b16 %v2015, %v2014
    %v2254 = vpack.c.b16 %v2017, %v2016
    %v2255 = vpack.c.b16 %v2019, %v2018
    %v2256 = vpack.c.b16 %v2021, %v2020
    %v2257 = vpack.c.b16 %v2023, %v2022
    %v2258 = vpack.c.b16 %v2025, %v2024
    %v2259 = vpack.c.b16 %v2027, %v2026
    %v2260 = vpack.c.b16 %v2029, %v2028
    %v2261 = vpack.c.b16 %v2031, %v2030
    %v2262 = vpack.c.b16 %v2033, %v2032
    %v2263 = vpack.c.b16 %v2035, %v2034
    %v2264 = vpack.c.b16 %v2037, %v2036
    %v2265 = vpack.c.b16 %v2039, %v2038
    %v2266 = vpack.c.b16 %v2041, %v2040
    %v2267 = vpack.c.b16 %v2043, %v2042
    %v2268 = vpack.c.b16 %v2045, %v2044
    %v2269 = vpack.c.b16 %v2047, %v2046
    %v2270 = vpack.c.b16 %v2049, %v2048
    %v2271 = vpack.c.b16 %v2051, %v2050
    %v2272 = vpack.c.b16 %v2053, %v2052
    %v2273 = vpack.c.b16 %v2055, %v2054
    %v2274 = vpack.c.b16 %v2057, %v2056
    %v2275 = vpack.c.b16 %v2059, %v2058
    %v2276 = vpack.c.b16 %v2061, %v2060
    %v2277 = vpack.c.b16 %v2063, %v2062
    %v2278 = vpack.c.b16 %v2065, %v2064
    %v2279 = vpack.c.b16 %v2067, %v2066
    %v2280 = vpack.c.b16 %v2069, %v2068
    %v2281 = vpack.c.b16 %v2071, %v2070
    %v2282 = vpack.c.b16 %v2073, %v2072
    %v2283 = vpack.c.b16 %v2075, %v2074
    %v2284 = vpack.c.b16 %v2077, %v2076
    %v2285 = vpack.c.b16 %v2079, %v2078
    %v2286 = vpack.c.b16 %v2081, %v2080
    %v2287 = vpack.c.b16 %v2083, %v2082
    %v2288 = vpack.c.b16 %v2085, %v2084
    %v2289 = vpack.c.b16 %v2087, %v2086
    %v2290 = vpack.c.b16 %v2089, %v2088
    %v2291 = vpack.c.b16 %v2091, %v2090
    %v2292 = vpack.c.b16 %v2093, %v2092
    %v2293 = vpack.c.b16 %v2095, %v2094
    %v2294 = vpack.c.b16 %v2097, %v2096
    %v2295 = vpack.c.b16 %v2099, %v2098
    %vm2492 = vcmask 523264
    %v2494 = vsel %vm2492, %v923, 0
    %2496 = vmatpush.bf16.msra.mxu0 %v2107
    %2497 = vmatpush.bf16.msra.mxu0 %v2106
    %2498 = vmatpush.bf16.msra.mxu0 %v2105
    %2499 = vmatpush.bf16.msra.mxu0 %v2104
    %2500 = vmatpush.bf16.msra.mxu0 %v2103
    %2501 = vmatpush.bf16.msra.mxu0 %v2102
    %2502 = vmatpush.bf16.msra.mxu0 %v2101
    %2503 = vmatpush.bf16.msra.mxu0 %v2100
    %2504 = vmatmul.bf16.gmra.mxu0 %v899
    %v2505 = vpop.f32.mrf.mxu0
    %v2506 = vadd.f32 0.0, %v2505
    %v2507 = vpop.f32.mrf.mxu0
    %v2508 = vadd.f32 0.0, %v2507
    %2509 = vdwg.mxu0
    %2510 = vmatpush.bf16.msra.mxu0 %v2115
    %2511 = vmatpush.bf16.msra.mxu0 %v2114
    %2512 = vmatpush.bf16.msra.mxu0 %v2113
    %2513 = vmatpush.bf16.msra.mxu0 %v2112
    %2514 = vmatpush.bf16.msra.mxu0 %v2111
    %2515 = vmatpush.bf16.msra.mxu0 %v2110
    %2516 = vmatpush.bf16.msra.mxu0 %v2109
    %2517 = vmatpush.bf16.msra.mxu0 %v2108
    %2518 = vmatmul.bf16.gmra.mxu0 %v900
    %v2519 = vpop.f32.mrf.mxu0
    %v2520 = vadd.f32 %v2506, %v2519
    %v2521 = vpop.f32.mrf.mxu0
    %v2522 = vadd.f32 %v2508, %v2521
    %2523 = vdwg.mxu0
    %2524 = vmatpush.bf16.msra.mxu0 %v2123
    %2525 = vmatpush.bf16.msra.mxu0 %v2122
    %2526 = vmatpush.bf16.msra.mxu0 %v2121
    %2527 = vmatpush.bf16.msra.mxu0 %v2120
    %2528 = vmatpush.bf16.msra.mxu0 %v2119
    %2529 = vmatpush.bf16.msra.mxu0 %v2118
    %2530 = vmatpush.bf16.msra.mxu0 %v2117
    %2531 = vmatpush.bf16.msra.mxu0 %v2116
    %2532 = vmatmul.bf16.gmra.mxu0 %v901
    %v2533 = vpop.f32.mrf.mxu0
    %v2534 = vadd.f32 %v2520, %v2533
    %v2535 = vpop.f32.mrf.mxu0
    %v2536 = vadd.f32 %v2522, %v2535
    %2537 = vdwg.mxu0
    %2538 = vmatpush.bf16.msra.mxu0 %v2131
    %2539 = vmatpush.bf16.msra.mxu0 %v2130
    %2540 = vmatpush.bf16.msra.mxu0 %v2129
    %2541 = vmatpush.bf16.msra.mxu0 %v2128
    %2542 = vmatpush.bf16.msra.mxu0 %v2127
    %2543 = vmatpush.bf16.msra.mxu0 %v2126
    %2544 = vmatpush.bf16.msra.mxu0 %v2125
    %2545 = vmatpush.bf16.msra.mxu0 %v2124
    %2546 = vmatmul.bf16.gmra.mxu0 %v902
    %v2547 = vpop.f32.mrf.mxu0
    %v2548 = vadd.f32 %v2534, %v2547
    %v2549 = vpop.f32.mrf.mxu0
    %v2550 = vadd.f32 %v2536, %v2549
    %2551 = vdwg.mxu0
    %2552 = vmatpush.bf16.msra.mxu0 %v2139
    %2553 = vmatpush.bf16.msra.mxu0 %v2138
    %2554 = vmatpush.bf16.msra.mxu0 %v2137
    %2555 = vmatpush.bf16.msra.mxu0 %v2136
    %2556 = vmatpush.bf16.msra.mxu0 %v2135
    %2557 = vmatpush.bf16.msra.mxu0 %v2134
    %2558 = vmatpush.bf16.msra.mxu0 %v2133
    %2559 = vmatpush.bf16.msra.mxu0 %v2132
    %2560 = vmatmul.bf16.gmra.mxu0 %v903
    %v2561 = vpop.f32.mrf.mxu0
    %v2562 = vadd.f32 %v2548, %v2561
    %v2563 = vpop.f32.mrf.mxu0
    %v2564 = vadd.f32 %v2550, %v2563
    %2565 = vdwg.mxu0
    %2566 = vmatpush.bf16.msra.mxu0 %v2147
    %2567 = vmatpush.bf16.msra.mxu0 %v2146
    %2568 = vmatpush.bf16.msra.mxu0 %v2145
    %2569 = vmatpush.bf16.msra.mxu0 %v2144
    %2570 = vmatpush.bf16.msra.mxu0 %v2143
    %2571 = vmatpush.bf16.msra.mxu0 %v2142
    %2572 = vmatpush.bf16.msra.mxu0 %v2141
    %2573 = vmatpush.bf16.msra.mxu0 %v2140
    %2574 = vmatmul.bf16.gmra.mxu0 %v904
    %v2575 = vpop.f32.mrf.mxu0
    %v2576 = vadd.f32 %v2562, %v2575
    %v2577 = vpop.f32.mrf.mxu0
    %v2578 = vadd.f32 %v2564, %v2577
    %2579 = vdwg.mxu0
    %2580 = vmatpush.bf16.msra.mxu0 %v2155
    %2581 = vmatpush.bf16.msra.mxu0 %v2154
    %2582 = vmatpush.bf16.msra.mxu0 %v2153
    %2583 = vmatpush.bf16.msra.mxu0 %v2152
    %2584 = vmatpush.bf16.msra.mxu0 %v2151
    %2585 = vmatpush.bf16.msra.mxu0 %v2150
    %2586 = vmatpush.bf16.msra.mxu0 %v2149
    %2587 = vmatpush.bf16.msra.mxu0 %v2148
    %2588 = vmatmul.bf16.gmra.mxu0 %v905
    %v2589 = vpop.f32.mrf.mxu0
    %v2590 = vadd.f32 %v2576, %v2589
    %v2591 = vpop.f32.mrf.mxu0
    %v2592 = vadd.f32 %v2578, %v2591
    %2593 = vdwg.mxu0
    %2594 = vmatpush.bf16.msra.mxu0 %v2163
    %2595 = vmatpush.bf16.msra.mxu0 %v2162
    %2596 = vmatpush.bf16.msra.mxu0 %v2161
    %2597 = vmatpush.bf16.msra.mxu0 %v2160
    %2598 = vmatpush.bf16.msra.mxu0 %v2159
    %2599 = vmatpush.bf16.msra.mxu0 %v2158
    %2600 = vmatpush.bf16.msra.mxu0 %v2157
    %2601 = vmatpush.bf16.msra.mxu0 %v2156
    %2602 = vmatmul.bf16.gmra.mxu0 %v906
    %v2603 = vpop.f32.mrf.mxu0
    %v2604 = vadd.f32 %v2590, %v2603
    %v2605 = vpop.f32.mrf.mxu0
    %v2606 = vadd.f32 %v2592, %v2605
    %2607 = vdwg.mxu0
    %2608 = vmatpush.bf16.msra.mxu0 %v2171
    %2609 = vmatpush.bf16.msra.mxu0 %v2170
    %2610 = vmatpush.bf16.msra.mxu0 %v2169
    %2611 = vmatpush.bf16.msra.mxu0 %v2168
    %2612 = vmatpush.bf16.msra.mxu0 %v2167
    %2613 = vmatpush.bf16.msra.mxu0 %v2166
    %2614 = vmatpush.bf16.msra.mxu0 %v2165
    %2615 = vmatpush.bf16.msra.mxu0 %v2164
    %2616 = vmatmul.bf16.gmra.mxu0 %v907
    %v2617 = vpop.f32.mrf.mxu0
    %v2618 = vadd.f32 %v2604, %v2617
    %v2619 = vpop.f32.mrf.mxu0
    %v2620 = vadd.f32 %v2606, %v2619
    %2621 = vdwg.mxu0
    %2622 = vmatpush.bf16.msra.mxu0 %v2179
    %2623 = vmatpush.bf16.msra.mxu0 %v2178
    %2624 = vmatpush.bf16.msra.mxu0 %v2177
    %2625 = vmatpush.bf16.msra.mxu0 %v2176
    %2626 = vmatpush.bf16.msra.mxu0 %v2175
    %2627 = vmatpush.bf16.msra.mxu0 %v2174
    %2628 = vmatpush.bf16.msra.mxu0 %v2173
    %2629 = vmatpush.bf16.msra.mxu0 %v2172
    %2630 = vmatmul.bf16.gmra.mxu0 %v908
    %v2631 = vpop.f32.mrf.mxu0
    %v2632 = vadd.f32 %v2618, %v2631
    %v2633 = vpop.f32.mrf.mxu0
    %v2634 = vadd.f32 %v2620, %v2633
    %2635 = vdwg.mxu0
    %2636 = vmatpush.bf16.msra.mxu0 %v2187
    %2637 = vmatpush.bf16.msra.mxu0 %v2186
    %2638 = vmatpush.bf16.msra.mxu0 %v2185
    %2639 = vmatpush.bf16.msra.mxu0 %v2184
    %2640 = vmatpush.bf16.msra.mxu0 %v2183
    %2641 = vmatpush.bf16.msra.mxu0 %v2182
    %2642 = vmatpush.bf16.msra.mxu0 %v2181
    %2643 = vmatpush.bf16.msra.mxu0 %v2180
    %2644 = vmatmul.bf16.gmra.mxu0 %v909
    %v2645 = vpop.f32.mrf.mxu0
    %v2646 = vadd.f32 %v2632, %v2645
    %v2647 = vpop.f32.mrf.mxu0
    %v2648 = vadd.f32 %v2634, %v2647
    %2649 = vdwg.mxu0
    %2650 = vmatpush.bf16.msra.mxu0 %v2195
    %2651 = vmatpush.bf16.msra.mxu0 %v2194
    %2652 = vmatpush.bf16.msra.mxu0 %v2193
    %2653 = vmatpush.bf16.msra.mxu0 %v2192
    %2654 = vmatpush.bf16.msra.mxu0 %v2191
    %2655 = vmatpush.bf16.msra.mxu0 %v2190
    %2656 = vmatpush.bf16.msra.mxu0 %v2189
    %2657 = vmatpush.bf16.msra.mxu0 %v2188
    %2658 = vmatmul.bf16.gmra.mxu0 %v910
    %v2659 = vpop.f32.mrf.mxu0
    %v2660 = vadd.f32 %v2646, %v2659
    %v2661 = vpop.f32.mrf.mxu0
    %v2662 = vadd.f32 %v2648, %v2661
    %2663 = vdwg.mxu0
    %2664 = vmatpush.bf16.msra.mxu0 %v2203
    %2665 = vmatpush.bf16.msra.mxu0 %v2202
    %2666 = vmatpush.bf16.msra.mxu0 %v2201
    %2667 = vmatpush.bf16.msra.mxu0 %v2200
    %2668 = vmatpush.bf16.msra.mxu0 %v2199
    %2669 = vmatpush.bf16.msra.mxu0 %v2198
    %2670 = vmatpush.bf16.msra.mxu0 %v2197
    %2671 = vmatpush.bf16.msra.mxu0 %v2196
    %2672 = vmatmul.bf16.gmra.mxu0 %v911
    %v2673 = vpop.f32.mrf.mxu0
    %v2674 = vadd.f32 %v2660, %v2673
    %v2675 = vpop.f32.mrf.mxu0
    %v2676 = vadd.f32 %v2662, %v2675
    %2677 = vdwg.mxu0
    %2678 = vmatpush.bf16.msra.mxu0 %v2211
    %2679 = vmatpush.bf16.msra.mxu0 %v2210
    %2680 = vmatpush.bf16.msra.mxu0 %v2209
    %2681 = vmatpush.bf16.msra.mxu0 %v2208
    %2682 = vmatpush.bf16.msra.mxu0 %v2207
    %2683 = vmatpush.bf16.msra.mxu0 %v2206
    %2684 = vmatpush.bf16.msra.mxu0 %v2205
    %2685 = vmatpush.bf16.msra.mxu0 %v2204
    %2686 = vmatmul.bf16.gmra.mxu0 %v912
    %v2687 = vpop.f32.mrf.mxu0
    %v2688 = vadd.f32 %v2674, %v2687
    %v2689 = vpop.f32.mrf.mxu0
    %v2690 = vadd.f32 %v2676, %v2689
    %2691 = vdwg.mxu0
    %2692 = vmatpush.bf16.msra.mxu0 %v2219
    %2693 = vmatpush.bf16.msra.mxu0 %v2218
    %2694 = vmatpush.bf16.msra.mxu0 %v2217
    %2695 = vmatpush.bf16.msra.mxu0 %v2216
    %2696 = vmatpush.bf16.msra.mxu0 %v2215
    %2697 = vmatpush.bf16.msra.mxu0 %v2214
    %2698 = vmatpush.bf16.msra.mxu0 %v2213
    %2699 = vmatpush.bf16.msra.mxu0 %v2212
    %2700 = vmatmul.bf16.gmra.mxu0 %v913
    %v2701 = vpop.f32.mrf.mxu0
    %v2702 = vadd.f32 %v2688, %v2701
    %v2703 = vpop.f32.mrf.mxu0
    %v2704 = vadd.f32 %v2690, %v2703
    %2705 = vdwg.mxu0
    %2706 = vmatpush.bf16.msra.mxu0 %v2227
    %2707 = vmatpush.bf16.msra.mxu0 %v2226
    %2708 = vmatpush.bf16.msra.mxu0 %v2225
    %2709 = vmatpush.bf16.msra.mxu0 %v2224
    %2710 = vmatpush.bf16.msra.mxu0 %v2223
    %2711 = vmatpush.bf16.msra.mxu0 %v2222
    %2712 = vmatpush.bf16.msra.mxu0 %v2221
    %2713 = vmatpush.bf16.msra.mxu0 %v2220
    %2714 = vmatmul.bf16.gmra.mxu0 %v914
    %v2715 = vpop.f32.mrf.mxu0
    %v2716 = vadd.f32 %v2702, %v2715
    %v2717 = vpop.f32.mrf.mxu0
    %v2718 = vadd.f32 %v2704, %v2717
    %2719 = vdwg.mxu0
    %2720 = vmatpush.bf16.msra.mxu0 %v2235
    %2721 = vmatpush.bf16.msra.mxu0 %v2234
    %2722 = vmatpush.bf16.msra.mxu0 %v2233
    %2723 = vmatpush.bf16.msra.mxu0 %v2232
    %2724 = vmatpush.bf16.msra.mxu0 %v2231
    %2725 = vmatpush.bf16.msra.mxu0 %v2230
    %2726 = vmatpush.bf16.msra.mxu0 %v2229
    %2727 = vmatpush.bf16.msra.mxu0 %v2228
    %2728 = vmatmul.bf16.gmra.mxu0 %v915
    %v2729 = vpop.f32.mrf.mxu0
    %v2730 = vadd.f32 %v2716, %v2729
    %v2731 = vpop.f32.mrf.mxu0
    %v2732 = vadd.f32 %v2718, %v2731
    %2733 = vdwg.mxu0
    %2734 = vmatpush.bf16.msra.mxu0 %v2243
    %2735 = vmatpush.bf16.msra.mxu0 %v2242
    %2736 = vmatpush.bf16.msra.mxu0 %v2241
    %2737 = vmatpush.bf16.msra.mxu0 %v2240
    %2738 = vmatpush.bf16.msra.mxu0 %v2239
    %2739 = vmatpush.bf16.msra.mxu0 %v2238
    %2740 = vmatpush.bf16.msra.mxu0 %v2237
    %2741 = vmatpush.bf16.msra.mxu0 %v2236
    %2742 = vmatmul.bf16.gmra.mxu0 %v916
    %v2743 = vpop.f32.mrf.mxu0
    %v2744 = vadd.f32 %v2730, %v2743
    %v2745 = vpop.f32.mrf.mxu0
    %v2746 = vadd.f32 %v2732, %v2745
    %2747 = vdwg.mxu0
    %2748 = vmatpush.bf16.msra.mxu0 %v2251
    %2749 = vmatpush.bf16.msra.mxu0 %v2250
    %2750 = vmatpush.bf16.msra.mxu0 %v2249
    %2751 = vmatpush.bf16.msra.mxu0 %v2248
    %2752 = vmatpush.bf16.msra.mxu0 %v2247
    %2753 = vmatpush.bf16.msra.mxu0 %v2246
    %2754 = vmatpush.bf16.msra.mxu0 %v2245
    %2755 = vmatpush.bf16.msra.mxu0 %v2244
    %2756 = vmatmul.bf16.gmra.mxu0 %v917
    %v2757 = vpop.f32.mrf.mxu0
    %v2758 = vadd.f32 %v2744, %v2757
    %v2759 = vpop.f32.mrf.mxu0
    %v2760 = vadd.f32 %v2746, %v2759
    %2761 = vdwg.mxu0
    %2762 = vmatpush.bf16.msra.mxu0 %v2259
    %2763 = vmatpush.bf16.msra.mxu0 %v2258
    %2764 = vmatpush.bf16.msra.mxu0 %v2257
    %2765 = vmatpush.bf16.msra.mxu0 %v2256
    %2766 = vmatpush.bf16.msra.mxu0 %v2255
    %2767 = vmatpush.bf16.msra.mxu0 %v2254
    %2768 = vmatpush.bf16.msra.mxu0 %v2253
    %2769 = vmatpush.bf16.msra.mxu0 %v2252
    %2770 = vmatmul.bf16.gmra.mxu0 %v918
    %v2771 = vpop.f32.mrf.mxu0
    %v2772 = vadd.f32 %v2758, %v2771
    %v2773 = vpop.f32.mrf.mxu0
    %v2774 = vadd.f32 %v2760, %v2773
    %2775 = vdwg.mxu0
    %2776 = vmatpush.bf16.msra.mxu0 %v2267
    %2777 = vmatpush.bf16.msra.mxu0 %v2266
    %2778 = vmatpush.bf16.msra.mxu0 %v2265
    %2779 = vmatpush.bf16.msra.mxu0 %v2264
    %2780 = vmatpush.bf16.msra.mxu0 %v2263
    %2781 = vmatpush.bf16.msra.mxu0 %v2262
    %2782 = vmatpush.bf16.msra.mxu0 %v2261
    %2783 = vmatpush.bf16.msra.mxu0 %v2260
    %2784 = vmatmul.bf16.gmra.mxu0 %v919
    %v2785 = vpop.f32.mrf.mxu0
    %v2786 = vadd.f32 %v2772, %v2785
    %v2787 = vpop.f32.mrf.mxu0
    %v2788 = vadd.f32 %v2774, %v2787
    %2789 = vdwg.mxu0
    %2790 = vmatpush.bf16.msra.mxu0 %v2275
    %2791 = vmatpush.bf16.msra.mxu0 %v2274
    %2792 = vmatpush.bf16.msra.mxu0 %v2273
    %2793 = vmatpush.bf16.msra.mxu0 %v2272
    %2794 = vmatpush.bf16.msra.mxu0 %v2271
    %2795 = vmatpush.bf16.msra.mxu0 %v2270
    %2796 = vmatpush.bf16.msra.mxu0 %v2269
    %2797 = vmatpush.bf16.msra.mxu0 %v2268
    %2798 = vmatmul.bf16.gmra.mxu0 %v920
    %v2799 = vpop.f32.mrf.mxu0
    %v2800 = vadd.f32 %v2786, %v2799
    %v2801 = vpop.f32.mrf.mxu0
    %v2802 = vadd.f32 %v2788, %v2801
    %2803 = vdwg.mxu0
    %2804 = vmatpush.bf16.msra.mxu0 %v2283
    %2805 = vmatpush.bf16.msra.mxu0 %v2282
    %2806 = vmatpush.bf16.msra.mxu0 %v2281
    %2807 = vmatpush.bf16.msra.mxu0 %v2280
    %2808 = vmatpush.bf16.msra.mxu0 %v2279
    %2809 = vmatpush.bf16.msra.mxu0 %v2278
    %2810 = vmatpush.bf16.msra.mxu0 %v2277
    %2811 = vmatpush.bf16.msra.mxu0 %v2276
    %2812 = vmatmul.bf16.gmra.mxu0 %v921
    %v2813 = vpop.f32.mrf.mxu0
    %v2814 = vadd.f32 %v2800, %v2813
    %v2815 = vpop.f32.mrf.mxu0
    %v2816 = vadd.f32 %v2802, %v2815
    %2817 = vdwg.mxu0
    %2818 = vmatpush.bf16.msra.mxu0 %v2291
    %2819 = vmatpush.bf16.msra.mxu0 %v2290
    %2820 = vmatpush.bf16.msra.mxu0 %v2289
    %2821 = vmatpush.bf16.msra.mxu0 %v2288
    %2822 = vmatpush.bf16.msra.mxu0 %v2287
    %2823 = vmatpush.bf16.msra.mxu0 %v2286
    %2824 = vmatpush.bf16.msra.mxu0 %v2285
    %2825 = vmatpush.bf16.msra.mxu0 %v2284
    %2826 = vmatmul.bf16.gmra.mxu0 %v922
    %v2827 = vpop.f32.mrf.mxu0
    %v2828 = vadd.f32 %v2814, %v2827
    %v2829 = vpop.f32.mrf.mxu0
    %v2830 = vadd.f32 %v2816, %v2829
    %2831 = vdwg.mxu0
    %2832 = vmatpush.bf16.msra.mxu0 0
    %2833 = vmatpush.bf16.msra.mxu0 0
    %2834 = vmatpush.bf16.msra.mxu0 0
    %2835 = vmatpush.bf16.msra.mxu0 0
    %2836 = vmatpush.bf16.msra.mxu0 %v2295
    %2837 = vmatpush.bf16.msra.mxu0 %v2294
    %2838 = vmatpush.bf16.msra.mxu0 %v2293
    %2839 = vmatpush.bf16.msra.mxu0 %v2292
    %2840 = vmatmul.bf16.gmra.mxu0 %v2494
    %v2841 = vpop.f32.mrf.mxu0
    %v2842 = vadd.f32 %v2828, %v2841
    %v2843 = vpop.f32.mrf.mxu0
    %v2844 = vadd.f32 %v2830, %v2843
    %2845 = vdwg.mxu0
    %2846 = vst [vmem:[#allocation2] sm:$0xff] %v2842
    %2847 = vst [vmem:[#allocation2 + $0x8] sm:$0xff] %v2844
    // Predicated region
    $region18: #{discriminator_forward.9} parent=1 // pred_check
      _
    $region19: #{discriminator_forward.9} parent=1 // pred_check_branch
      %2849 = sbr.rel (0) target = $region21
    $region20: #{discriminator_forward.9} parent=1 // pred_region
      // Predicated region
      $region22: #{discriminator_forward.9} parent=20 // pred_check
        _
      $region23: #{discriminator_forward.9} parent=20 // pred_check_branch
        %2851 = sbr.rel (0) target = $region25
      $region24: #{discriminator_forward.9} parent=20 // pred_region
        // Predicated region
        $region26: #{discriminator_forward.9} parent=24 // pred_check
          _
        $region27: #{discriminator_forward.9} parent=24 // pred_check_branch
          %2853 = sbr.rel target = $region29
        $region28: #{discriminator_forward.9} parent=24 // pred_region
          // Predicated region
          $region41: #{discriminator_forward.9} parent=28 // pred_check
            _
          $region42: #{discriminator_forward.9} parent=28 // pred_check_branch
            %2869 = sbr.rel (0) target = $region44
          $region43: #{discriminator_forward.9} parent=28 // pred_region
            %s2871 = ssub.s32 4, 1
            loop: start=0, step=1, limit=1
            $region45: #{discriminator_forward.9} parent=43 // loop_pre_header
              _
            $region46: #{discriminator_forward.9} parent=43 // loop_header
              %s2873 = sphi 0, %s2877
              %p2874 = scmp.ge.s32.totalorder %s2873, 1
              %s2878 = sphi [#allocation2], [#allocation2]
              %s2879 = sphi %s4, %s4
            $region47: #{discriminator_forward.9} parent=43 // loop_header_branch
              %2876 = sbr.rel (%p2874) target = $region51
            $region48: #{discriminator_forward.9} parent=43 // loop_body
              %v2880 = vld [vmem:[%s2878] sm:%s2871]
              %2881 = vst [vmem:[%s2879] sm:%s2871] %v2880
            $region49: #{discriminator_forward.9} parent=43 // loop_footer
              %s2877 = sadd.s32 1, %s2873
            $region50: #{discriminator_forward.9} parent=43 // loop_footer_branch
              %2872 = sbr.rel target = $region46
            $region51: #{discriminator_forward.9} parent=43 // loop_exit
              _
          $region44: #{discriminator_forward.9} parent=28 // pred_fallthru
            _
        $region29: #{discriminator_forward.9} parent=24 // pred_fallthru
          _
        // Predicated region
        $region30: #{discriminator_forward.9} parent=24 // pred_check
          _
        $region31: #{discriminator_forward.9} parent=24 // pred_check_branch
          %2855 = sbr.rel (0) target = $region33
        $region32: #{discriminator_forward.9} parent=24 // pred_region
          %s2857 = ssub.s32 4, 1
          loop: start=0, step=1, limit=1
          $region34: #{discriminator_forward.9} parent=32 // loop_pre_header
            _
          $region35: #{discriminator_forward.9} parent=32 // loop_header
            %s2859 = sphi 0, %s2863
            %p2860 = scmp.ge.s32.totalorder %s2859, 1
            %s2864 = sphi [#allocation2], [#allocation2]
            %s2865 = sphi %s4, %s4
          $region36: #{discriminator_forward.9} parent=32 // loop_header_branch
            %2862 = sbr.rel (%p2860) target = $region40
          $region37: #{discriminator_forward.9} parent=32 // loop_body
            %v2866 = vld [vmem:[%s2864] sm:%s2857]
            %2867 = vst [vmem:[%s2865] sm:%s2857] %v2866
          $region38: #{discriminator_forward.9} parent=32 // loop_footer
            %s2863 = sadd.s32 1, %s2859
          $region39: #{discriminator_forward.9} parent=32 // loop_footer_branch
            %2858 = sbr.rel target = $region35
          $region40: #{discriminator_forward.9} parent=32 // loop_exit
            _
        $region33: #{discriminator_forward.9} parent=24 // pred_fallthru
          _
      $region25: #{discriminator_forward.9} parent=20 // pred_fallthru
        _
      %2882 = vnop
    $region21: #{discriminator_forward.9} parent=1 // pred_fallthru
      _
    // Predicated region
    $region52: #{discriminator_forward.9} parent=1 // pred_check
      _
    $region53: #{discriminator_forward.9} parent=1 // pred_check_branch
      %2884 = sbr.rel (0) target = $region55
    $region54: #{discriminator_forward.9} parent=1 // pred_region
      _
    $region55: #{discriminator_forward.9} parent=1 // pred_fallthru
      _

</llo_original>
